<compile_context>
chip_gen: v7x
topology: tpu7x:2x2x1
jax: 0.10.0
libtpu: 0.0.40
codegen_flags: <defaults>
</compile_context>

<pallas_src>
import functools

import jax
import jax.numpy as jnp
from jax.experimental import pallas as pl
from jax.experimental.pallas import tpu as pltpu


LANE = 128
SUBLANE = 8


def _round_up(x, m):
    return ((x + m - 1) // m) * m


# ----------------------------------------------------------------------------
# Fused Pallas kernel: embedding -> biLSTM x2 -> linear
# ----------------------------------------------------------------------------
def _lstm_model_kernel(idx_ref, emb_ref,
                       l0_wih_ref, l0_whh_ref, l0_b_ref,
                       l1_wih_ref, l1_whh_ref, l1_b_ref,
                       lin_w_ref, lin_b_ref,
                       out_ref,
                       xg_scr, h0_scr, h1_scr,
                       *, T, Bp):
    """Whole forward pass in one invocation, everything VMEM resident.

    idx_ref : (T*Bp, 1) int32 token indices
    emb_ref : (Vp, Ep)  f32 embedding table (zero-padded)
    l*_wih  : (2, I, 4*Hp) bf16   W_ih^T per direction (input dim padded)
    l*_whh  : (2, Hp, 4*Hp) bf16  W_hh^T per direction
    l*_b    : (2, 1, 4*Hp) f32    b_ih + b_hh per direction
    lin_w   : (2*Hp, Lp) bf16 ; lin_b : (1, Lp) f32
    out_ref : (T*Bp, Lp) f32 logits (lane-dense padded)
    scratch : xg (T*Bp,4Hp) f32; h0,h1 (T*Bp,2Hp) f32 (fwd||bwd concat layout)
    """
    Hp = l0_whh_ref.shape[1]
    Vp = emb_ref.shape[0]
    TB = T * Bp

    # ---- Embedding gather as a one-hot matmul (no XLA gather op) -----------
    idx = idx_ref[...]                                           # (TB, 1) i32
    iota = jax.lax.broadcasted_iota(jnp.int32, (TB, Vp), 1)
    onehot = jnp.where(idx == iota, 1.0, 0.0)                    # (TB, Vp) f32
    x0 = jnp.dot(onehot, emb_ref[...],
                 preferred_element_type=jnp.float32)             # (TB, Ep) f32

    def run_layer(x_bf16, wih_ref, whh_ref, b_ref, hout_scr):
        """One bidirectional LSTM layer; writes (TB, 2*Hp) into hout_scr."""
        for d in range(2):                        # 0 = forward, 1 = backward
            # Bulk input projection for ALL timesteps, bias folded in
            # (hoisted off the serial recurrence critical path).
            xg_scr[...] = (
                jnp.dot(x_bf16, wih_ref[d],
                        preferred_element_type=jnp.float32)
                + b_ref[d]
            )                                                    # (TB, 4Hp)
            whh = whh_ref[d]                                     # (Hp, 4Hp) bf16
            h = jnp.zeros((Bp, Hp), jnp.float32)
            c = jnp.zeros((Bp, Hp), jnp.float32)
            for t in range(T):                    # static, fully unrolled
                tt = t if d == 0 else T - 1 - t   # reversed scan for bwd dir
                row = tt * Bp
                gates = (xg_scr[row:row + Bp, :]
                         + jnp.dot(h.astype(jnp.bfloat16), whh,
                                   preferred_element_type=jnp.float32))
                # PyTorch gate order i, f, g, o — lane-aligned 128-wide slabs.
                i = jax.nn.sigmoid(gates[:, 0 * Hp:1 * Hp])
                f = jax.nn.sigmoid(gates[:, 1 * Hp:2 * Hp])
                g = jnp.tanh(gates[:, 2 * Hp:3 * Hp])
                o = jax.nn.sigmoid(gates[:, 3 * Hp:4 * Hp])
                c = f * c + i * g
                h = o * jnp.tanh(c)
                # Write straight into the concatenated fwd||bwd layout.
                hout_scr[row:row + Bp, d * Hp:(d + 1) * Hp] = h

    run_layer(x0.astype(jnp.bfloat16),
              l0_wih_ref, l0_whh_ref, l0_b_ref, h0_scr)
    run_layer(h0_scr[...].astype(jnp.bfloat16),
              l1_wih_ref, l1_whh_ref, l1_b_ref, h1_scr)

    # ---- Final Linear (one MXU op, lane-dense 128-wide padded output) ------
    out_ref[...] = (
        jnp.dot(h1_scr[...].astype(jnp.bfloat16), lin_w_ref[...],
                preferred_element_type=jnp.float32)
        + lin_b_ref[...]
    )


# ----------------------------------------------------------------------------
# Wrapper
# ----------------------------------------------------------------------------
def lstm_model_forward(sentence, params, num_labels):
    """sentence: (T, B) int32 indices -> logits (T, B, num_labels) f32."""
    T, B = sentence.shape
    Bp = _round_up(max(B, SUBLANE), SUBLANE)
    Hp = params["l0_whh"].shape[1]
    Lp = params["lin_w"].shape[1]
    TB = T * Bp

    # Pad batch with index 0; padded rows are sliced off at the end.
    sent_p = jnp.pad(sentence, ((0, 0), (0, Bp - B)))
    idx = sent_p.astype(jnp.int32).reshape(TB, 1)

    vmem = pl.BlockSpec(memory_space=pltpu.MemorySpace.VMEM)
    kernel = functools.partial(_lstm_model_kernel, T=T, Bp=Bp)

    logits_p = pl.pallas_call(
        kernel,
        out_shape=jax.ShapeDtypeStruct((TB, Lp), jnp.float32),
        in_specs=[vmem] * 10,
        out_specs=vmem,
        scratch_shapes=[
            pltpu.VMEM((TB, 4 * Hp), jnp.float32),   # xgates (reused per dir)
            pltpu.VMEM((TB, 2 * Hp), jnp.float32),   # layer-0 fwd||bwd output
            pltpu.VMEM((TB, 2 * Hp), jnp.float32),   # layer-1 fwd||bwd output
        ],
    )(idx, params["emb"],
      params["l0_wih"], params["l0_whh"], params["l0_b"],
      params["l1_wih"], params["l1_whh"], params["l1_b"],
      params["lin_w"], params["lin_b"])

    return logits_p.reshape(T, Bp, Lp)[:, :B, :num_labels]


# ----------------------------------------------------------------------------
# Parameter construction (PyTorch-shaped) + padded / packed layout
# ----------------------------------------------------------------------------
def make_params(key, vocab_size, emb_dim, hidden, num_labels):
    ks = iter(jax.random.split(key, 32))

    def unif(shape, scale):
        return jax.random.uniform(next(ks), shape, jnp.float32, -scale, scale)

    # Embedding.from_pretrained(weights_matrix): forward is a plain row gather.
    emb = unif((vocab_size, emb_dim), 1.0)

    s = 1.0 / jnp.sqrt(hidden)

    def lstm_dir_params(input_size):
        return (
            unif((4 * hidden, input_size), s),   # weight_ih
            unif((4 * hidden, hidden), s),       # weight_hh
            unif((4 * hidden,), s),              # bias_ih
            unif((4 * hidden,), s),              # bias_hh
        )

    sl = 1.0 / jnp.sqrt(2.0 * hidden)
    return {
        "embedding": emb,
        "l0_fwd": lstm_dir_params(emb_dim),
        "l0_bwd": lstm_dir_params(emb_dim),
        "l1_fwd": lstm_dir_params(2 * hidden),
        "l1_bwd": lstm_dir_params(2 * hidden),
        "lin_w": unif((num_labels, 2 * hidden), sl),
        "lin_b": unif((num_labels,), sl),
    }


def pack_params(raw, emb_dim, hidden, vocab, num_labels):
    """Pad H->128, inputs/vocab/labels->multiples of 128; split W_ih / W_hh,
    transpose, fold the two biases, cast weights to bf16 (biases stay f32).

    Padded gate columns have zero weights and zero bias, so padded hidden
    lanes stay exactly zero through the whole recurrence (g=tanh(0)=0, c=0).
    """
    H = hidden
    Hp = _round_up(H, LANE)
    Ep = _round_up(emb_dim, LANE)
    Vp = _round_up(vocab, LANE)
    Lp = _round_up(num_labels, LANE)

    emb = raw["embedding"]                              # (V, E)
    emb_p = jnp.zeros((Vp, Ep), jnp.float32).at[:vocab, :emb_dim].set(emb)

    def pack_dir(params_dir, in_col_map, in_pad):
        w_ih, w_hh, b_ih, b_hh = params_dir             # PyTorch shapes
        Wih = jnp.zeros((in_pad, 4 * Hp), jnp.float32)
        Whh = jnp.zeros((Hp, 4 * Hp), jnp.float32)
        b = jnp.zeros((1, 4 * Hp), jnp.float32)
        for k in range(4):                              # gate order i, f, g, o
            cols = slice(k * Hp, k * Hp + H)
            Wih = Wih.at[in_col_map, cols].set(
                jnp.transpose(w_ih[k * H:(k + 1) * H, :]))
            Whh = Whh.at[:H, cols].set(
                jnp.transpose(w_hh[k * H:(k + 1) * H, :]))
            b = b.at[0, cols].set(
                b_ih[k * H:(k + 1) * H] + b_hh[k * H:(k + 1) * H])
        return Wih, Whh, b

    cmap0 = jnp.arange(emb_dim)                         # emb cols 0..E-1
    cmap1 = jnp.concatenate([jnp.arange(H), Hp + jnp.arange(H)])

    l0f = pack_dir(raw["l0_fwd"], cmap0, Ep)
    l0b = pack_dir(raw["l0_bwd"], cmap0, Ep)
    l1f = pack_dir(raw["l1_fwd"], cmap1, 2 * Hp)
    l1b = pack_dir(raw["l1_bwd"], cmap1, 2 * Hp)

    lw, lb = raw["lin_w"], raw["lin_b"]                 # (L, 2H), (L,)
    W_lin = jnp.zeros((2 * Hp, Lp), jnp.float32)
    W_lin = W_lin.at[0:H, :num_labels].set(jnp.transpose(lw[:, 0:H]))
    W_lin = W_lin.at[Hp:Hp + H, :num_labels].set(jnp.transpose(lw[:, H:2 * H]))
    b_lin = jnp.zeros((1, Lp), jnp.float32).at[0, :num_labels].set(lb)

    bf = lambda x: x.astype(jnp.bfloat16)
    return {
        "emb": emb_p,                                   # f32 (exact gather)
        "l0_wih": bf(jnp.stack([l0f[0], l0b[0]])),
        "l0_whh": bf(jnp.stack([l0f[1], l0b[1]])),
        "l0_b": jnp.stack([l0f[2], l0b[2]]),
        "l1_wih": bf(jnp.stack([l1f[0], l1b[0]])),
        "l1_whh": bf(jnp.stack([l1f[1], l1b[1]])),
        "l1_b": jnp.stack([l1f[2], l1b[2]]),
        "lin_w": bf(W_lin),
        "lin_b": b_lin,
    }


# ----------------------------------------------------------------------------
# Main
# ----------------------------------------------------------------------------
if __name__ == "__main__":
    VOCAB = 20
    EMB_DIM = 50          # LSTM input_size=50
    HIDDEN = 100          # LSTM hidden_size=100
    NUM_LABELS = 5        # len(labels)
    SEQ_LEN = 8
    BATCH = 2

    key = jax.random.PRNGKey(0)
    k_param, k_data = jax.random.split(key)

    raw_params = make_params(k_param, VOCAB, EMB_DIM, HIDDEN, NUM_LABELS)
    packed_params = pack_params(raw_params, EMB_DIM, HIDDEN, VOCAB, NUM_LABELS)

    sentence = jax.random.randint(k_data, (SEQ_LEN, BATCH), 0, VOCAB,
                                  dtype=jnp.int32)

    fwd = jax.jit(functools.partial(lstm_model_forward,
                                    params=packed_params,
                                    num_labels=NUM_LABELS))
    logits = fwd(sentence)
    jax.block_until_ready(logits)

    assert logits.shape == (SEQ_LEN, BATCH, NUM_LABELS), logits.shape
    assert logits.dtype == jnp.float32
    print("KERNEL_OK")
</pallas_src>

<mosaic_0001>
module attributes {stable_mosaic.version = 11 : i64} {
  func.func @_lstm_model_kernel(%arg0: memref<64x1xi32, #tpu.memory_space<vmem>>, %arg1: memref<128x128xf32, #tpu.memory_space<vmem>>, %arg2: memref<2x128x512xbf16, #tpu.memory_space<vmem>>, %arg3: memref<2x128x512xbf16, #tpu.memory_space<vmem>>, %arg4: memref<2x1x512xf32, #tpu.memory_space<vmem>>, %arg5: memref<2x256x512xbf16, #tpu.memory_space<vmem>>, %arg6: memref<2x128x512xbf16, #tpu.memory_space<vmem>>, %arg7: memref<2x1x512xf32, #tpu.memory_space<vmem>>, %arg8: memref<256x128xbf16, #tpu.memory_space<vmem>>, %arg9: memref<1x128xf32, #tpu.memory_space<vmem>>, %arg10: memref<64x128xf32, #tpu.memory_space<vmem>>, %arg11: memref<64x512xf32, #tpu.memory_space<vmem>>, %arg12: memref<64x256xf32, #tpu.memory_space<vmem>>, %arg13: memref<64x256xf32, #tpu.memory_space<vmem>>) attributes {dimension_semantics = [], scalar_prefetch = 0 : i64, scratch_operands = 3 : i64, tpu.core_type = #tpu.core_type<tc>} {
    %c0 = arith.constant 0 : index
    %c0_0 = arith.constant 0 : index
    %0 = vector.load %arg0[%c0, %c0_0] : memref<64x1xi32, #tpu.memory_space<vmem>>, vector<64x1xi32>
    %1 = tpu.iota {dimensions = array<i32: 1>} : vector<64x128xi32>
    %2 = vector.broadcast %0 : vector<64x1xi32> to vector<64x128xi32>
    %3 = arith.cmpi eq, %2, %1 : vector<64x128xi32>
    %cst = arith.constant 1.000000e+00 : f32
    %cst_1 = arith.constant 0.000000e+00 : f32
    %4 = vector.broadcast %cst : f32 to vector<64x128xf32>
    %5 = vector.broadcast %cst_1 : f32 to vector<64x128xf32>
    %6 = arith.select %3, %4, %5 : vector<64x128xi1>, vector<64x128xf32>
    %c0_2 = arith.constant 0 : index
    %c0_3 = arith.constant 0 : index
    %7 = vector.load %arg1[%c0_2, %c0_3] : memref<128x128xf32, #tpu.memory_space<vmem>>, vector<128x128xf32>
    %cst_4 = arith.constant dense<0.000000e+00> : vector<64x128xf32>
    %8 = tpu.matmul %6, %7, %cst_4 {dimension_numbers = #tpu.dot_dimension_numbers<[1], [0], [0], [1], [0, 0, 1, 1], [], []>} : vector<64x128xf32>, vector<128x128xf32>, vector<64x128xf32> -> vector<64x128xf32>
    %9 = arith.truncf %8 : vector<64x128xf32> to vector<64x128xbf16>
    %c0_5 = arith.constant 0 : index
    %c0_6 = arith.constant 0 : index
    %c0_7 = arith.constant 0 : index
    %10 = vector.load %arg2[%c0_5, %c0_6, %c0_7] : memref<2x128x512xbf16, #tpu.memory_space<vmem>>, vector<1x128x512xbf16>
    %11 = vector.shape_cast %10 : vector<1x128x512xbf16> to vector<128x512xbf16>
    %cst_8 = arith.constant dense<0.000000e+00> : vector<64x512xf32>
    %12 = tpu.matmul %9, %11, %cst_8 {dimension_numbers = #tpu.dot_dimension_numbers<[1], [0], [0], [1], [0, 0, 1, 1], [], []>} : vector<64x128xbf16>, vector<128x512xbf16>, vector<64x512xf32> -> vector<64x512xf32>
    %c0_9 = arith.constant 0 : index
    %c0_10 = arith.constant 0 : index
    %c0_11 = arith.constant 0 : index
    %13 = vector.load %arg4[%c0_9, %c0_10, %c0_11] : memref<2x1x512xf32, #tpu.memory_space<vmem>>, vector<1x1x512xf32>
    %14 = vector.shape_cast %13 : vector<1x1x512xf32> to vector<1x512xf32>
    %15 = vector.broadcast %14 : vector<1x512xf32> to vector<64x512xf32>
    %16 = arith.addf %12, %15 : vector<64x512xf32>
    %c0_12 = arith.constant 0 : index
    %c0_13 = arith.constant 0 : index
    %17 = vector.load %arg11[%c0_12, %c0_13] : memref<64x512xf32, #tpu.memory_space<vmem>>, vector<64x512xf32>
    tpu.vector_store %arg11[%c0_12, %c0_13], %16 {strides = array<i32>} : memref<64x512xf32, #tpu.memory_space<vmem>>, vector<64x512xf32>,
    %c0_14 = arith.constant 0 : index
    %c0_15 = arith.constant 0 : index
    %c0_16 = arith.constant 0 : index
    %18 = vector.load %arg3[%c0_14, %c0_15, %c0_16] : memref<2x128x512xbf16, #tpu.memory_space<vmem>>, vector<1x128x512xbf16>
    %19 = vector.shape_cast %18 : vector<1x128x512xbf16> to vector<128x512xbf16>
    %cst_17 = arith.constant 0.000000e+00 : f32
    %20 = vector.broadcast %cst_17 : f32 to vector<8x128xf32>
    %cst_18 = arith.constant 0.000000e+00 : f32
    %21 = vector.broadcast %cst_18 : f32 to vector<8x128xf32>
    %c0_19 = arith.constant 0 : index
    %c0_20 = arith.constant 0 : index
    %22 = vector.load %arg11[%c0_19, %c0_20] : memref<64x512xf32, #tpu.memory_space<vmem>>, vector<8x512xf32>
    %23 = arith.truncf %20 : vector<8x128xf32> to vector<8x128xbf16>
    %cst_21 = arith.constant dense<0.000000e+00> : vector<8x512xf32>
    %24 = tpu.matmul %23, %19, %cst_21 {dimension_numbers = #tpu.dot_dimension_numbers<[1], [0], [0], [1], [0, 0, 1, 1], [], []>} : vector<8x128xbf16>, vector<128x512xbf16>, vector<8x512xf32> -> vector<8x512xf32>
    %25 = arith.addf %22, %24 : vector<8x512xf32>
    %26 = vector.extract_strided_slice %25 {offsets = [0, 0], sizes = [8, 128], strides = [1, 1]} : vector<8x512xf32> to vector<8x128xf32>
    %27 = arith.negf %26 : vector<8x128xf32>
    %28 = math.exp %27 : vector<8x128xf32>
    %cst_22 = arith.constant 1.000000e+00 : f32
    %29 = vector.broadcast %cst_22 : f32 to vector<8x128xf32>
    %30 = arith.addf %29, %28 : vector<8x128xf32>
    %31 = arith.divf %29, %30 : vector<8x128xf32>
    %32 = vector.extract_strided_slice %25 {offsets = [0, 128], sizes = [8, 128], strides = [1, 1]} : vector<8x512xf32> to vector<8x128xf32>
    %33 = arith.negf %32 : vector<8x128xf32>
    %34 = math.exp %33 : vector<8x128xf32>
    %cst_23 = arith.constant 1.000000e+00 : f32
    %35 = vector.broadcast %cst_23 : f32 to vector<8x128xf32>
    %36 = arith.addf %35, %34 : vector<8x128xf32>
    %37 = arith.divf %35, %36 : vector<8x128xf32>
    %38 = vector.extract_strided_slice %25 {offsets = [0, 256], sizes = [8, 128], strides = [1, 1]} : vector<8x512xf32> to vector<8x128xf32>
    %39 = math.tanh %38 : vector<8x128xf32>
    %40 = vector.extract_strided_slice %25 {offsets = [0, 384], sizes = [8, 128], strides = [1, 1]} : vector<8x512xf32> to vector<8x128xf32>
    %41 = arith.negf %40 : vector<8x128xf32>
    %42 = math.exp %41 : vector<8x128xf32>
    %cst_24 = arith.constant 1.000000e+00 : f32
    %43 = vector.broadcast %cst_24 : f32 to vector<8x128xf32>
    %44 = arith.addf %43, %42 : vector<8x128xf32>
    %45 = arith.divf %43, %44 : vector<8x128xf32>
    %46 = arith.mulf %37, %21 : vector<8x128xf32>
    %47 = arith.mulf %31, %39 : vector<8x128xf32>
    %48 = arith.addf %46, %47 : vector<8x128xf32>
    %49 = math.tanh %48 : vector<8x128xf32>
    %50 = arith.mulf %45, %49 : vector<8x128xf32>
    %c0_25 = arith.constant 0 : index
    %c0_26 = arith.constant 0 : index
    %51 = vector.load %arg12[%c0_25, %c0_26] : memref<64x256xf32, #tpu.memory_space<vmem>>, vector<8x128xf32>
    tpu.vector_store %arg12[%c0_25, %c0_26], %50 {strides = array<i32>} : memref<64x256xf32, #tpu.memory_space<vmem>>, vector<8x128xf32>,
    %c8 = arith.constant 8 : index
    %c0_27 = arith.constant 0 : index
    %52 = vector.load %arg11[%c8, %c0_27] : memref<64x512xf32, #tpu.memory_space<vmem>>, vector<8x512xf32>
    %53 = arith.truncf %50 : vector<8x128xf32> to vector<8x128xbf16>
    %cst_28 = arith.constant dense<0.000000e+00> : vector<8x512xf32>
    %54 = tpu.matmul %53, %19, %cst_28 {dimension_numbers = #tpu.dot_dimension_numbers<[1], [0], [0], [1], [0, 0, 1, 1], [], []>} : vector<8x128xbf16>, vector<128x512xbf16>, vector<8x512xf32> -> vector<8x512xf32>
    %55 = arith.addf %52, %54 : vector<8x512xf32>
    %56 = vector.extract_strided_slice %55 {offsets = [0, 0], sizes = [8, 128], strides = [1, 1]} : vector<8x512xf32> to vector<8x128xf32>
    %57 = arith.negf %56 : vector<8x128xf32>
    %58 = math.exp %57 : vector<8x128xf32>
    %cst_29 = arith.constant 1.000000e+00 : f32
    %59 = vector.broadcast %cst_29 : f32 to vector<8x128xf32>
    %60 = arith.addf %59, %58 : vector<8x128xf32>
    %61 = arith.divf %59, %60 : vector<8x128xf32>
    %62 = vector.extract_strided_slice %55 {offsets = [0, 128], sizes = [8, 128], strides = [1, 1]} : vector<8x512xf32> to vector<8x128xf32>
    %63 = arith.negf %62 : vector<8x128xf32>
    %64 = math.exp %63 : vector<8x128xf32>
    %cst_30 = arith.constant 1.000000e+00 : f32
    %65 = vector.broadcast %cst_30 : f32 to vector<8x128xf32>
    %66 = arith.addf %65, %64 : vector<8x128xf32>
    %67 = arith.divf %65, %66 : vector<8x128xf32>
    %68 = vector.extract_strided_slice %55 {offsets = [0, 256], sizes = [8, 128], strides = [1, 1]} : vector<8x512xf32> to vector<8x128xf32>
    %69 = math.tanh %68 : vector<8x128xf32>
    %70 = vector.extract_strided_slice %55 {offsets = [0, 384], sizes = [8, 128], strides = [1, 1]} : vector<8x512xf32> to vector<8x128xf32>
    %71 = arith.negf %70 : vector<8x128xf32>
    %72 = math.exp %71 : vector<8x128xf32>
    %cst_31 = arith.constant 1.000000e+00 : f32
    %73 = vector.broadcast %cst_31 : f32 to vector<8x128xf32>
    %74 = arith.addf %73, %72 : vector<8x128xf32>
    %75 = arith.divf %73, %74 : vector<8x128xf32>
    %76 = arith.mulf %67, %48 : vector<8x128xf32>
    %77 = arith.mulf %61, %69 : vector<8x128xf32>
    %78 = arith.addf %76, %77 : vector<8x128xf32>
    %79 = math.tanh %78 : vector<8x128xf32>
    %80 = arith.mulf %75, %79 : vector<8x128xf32>
    %c8_32 = arith.constant 8 : index
    %c0_33 = arith.constant 0 : index
    %81 = vector.load %arg12[%c8_32, %c0_33] : memref<64x256xf32, #tpu.memory_space<vmem>>, vector<8x128xf32>
    tpu.vector_store %arg12[%c8_32, %c0_33], %80 {strides = array<i32>} : memref<64x256xf32, #tpu.memory_space<vmem>>, vector<8x128xf32>,
    %c16 = arith.constant 16 : index
    %c0_34 = arith.constant 0 : index
    %82 = vector.load %arg11[%c16, %c0_34] : memref<64x512xf32, #tpu.memory_space<vmem>>, vector<8x512xf32>
    %83 = arith.truncf %80 : vector<8x128xf32> to vector<8x128xbf16>
    %cst_35 = arith.constant dense<0.000000e+00> : vector<8x512xf32>
    %84 = tpu.matmul %83, %19, %cst_35 {dimension_numbers = #tpu.dot_dimension_numbers<[1], [0], [0], [1], [0, 0, 1, 1], [], []>} : vector<8x128xbf16>, vector<128x512xbf16>, vector<8x512xf32> -> vector<8x512xf32>
    %85 = arith.addf %82, %84 : vector<8x512xf32>
    %86 = vector.extract_strided_slice %85 {offsets = [0, 0], sizes = [8, 128], strides = [1, 1]} : vector<8x512xf32> to vector<8x128xf32>
    %87 = arith.negf %86 : vector<8x128xf32>
    %88 = math.exp %87 : vector<8x128xf32>
    %cst_36 = arith.constant 1.000000e+00 : f32
    %89 = vector.broadcast %cst_36 : f32 to vector<8x128xf32>
    %90 = arith.addf %89, %88 : vector<8x128xf32>
    %91 = arith.divf %89, %90 : vector<8x128xf32>
    %92 = vector.extract_strided_slice %85 {offsets = [0, 128], sizes = [8, 128], strides = [1, 1]} : vector<8x512xf32> to vector<8x128xf32>
    %93 = arith.negf %92 : vector<8x128xf32>
    %94 = math.exp %93 : vector<8x128xf32>
    %cst_37 = arith.constant 1.000000e+00 : f32
    %95 = vector.broadcast %cst_37 : f32 to vector<8x128xf32>
    %96 = arith.addf %95, %94 : vector<8x128xf32>
    %97 = arith.divf %95, %96 : vector<8x128xf32>
    %98 = vector.extract_strided_slice %85 {offsets = [0, 256], sizes = [8, 128], strides = [1, 1]} : vector<8x512xf32> to vector<8x128xf32>
    %99 = math.tanh %98 : vector<8x128xf32>
    %100 = vector.extract_strided_slice %85 {offsets = [0, 384], sizes = [8, 128], strides = [1, 1]} : vector<8x512xf32> to vector<8x128xf32>
    %101 = arith.negf %100 : vector<8x128xf32>
    %102 = math.exp %101 : vector<8x128xf32>
    %cst_38 = arith.constant 1.000000e+00 : f32
    %103 = vector.broadcast %cst_38 : f32 to vector<8x128xf32>
    %104 = arith.addf %103, %102 : vector<8x128xf32>
    %105 = arith.divf %103, %104 : vector<8x128xf32>
    %106 = arith.mulf %97, %78 : vector<8x128xf32>
    %107 = arith.mulf %91, %99 : vector<8x128xf32>
    %108 = arith.addf %106, %107 : vector<8x128xf32>
    %109 = math.tanh %108 : vector<8x128xf32>
    %110 = arith.mulf %105, %109 : vector<8x128xf32>
    %c16_39 = arith.constant 16 : index
    %c0_40 = arith.constant 0 : index
    %111 = vector.load %arg12[%c16_39, %c0_40] : memref<64x256xf32, #tpu.memory_space<vmem>>, vector<8x128xf32>
    tpu.vector_store %arg12[%c16_39, %c0_40], %110 {strides = array<i32>} : memref<64x256xf32, #tpu.memory_space<vmem>>, vector<8x128xf32>,
    %c24 = arith.constant 24 : index
    %c0_41 = arith.constant 0 : index
    %112 = vector.load %arg11[%c24, %c0_41] : memref<64x512xf32, #tpu.memory_space<vmem>>, vector<8x512xf32>
    %113 = arith.truncf %110 : vector<8x128xf32> to vector<8x128xbf16>
    %cst_42 = arith.constant dense<0.000000e+00> : vector<8x512xf32>
    %114 = tpu.matmul %113, %19, %cst_42 {dimension_numbers = #tpu.dot_dimension_numbers<[1], [0], [0], [1], [0, 0, 1, 1], [], []>} : vector<8x128xbf16>, vector<128x512xbf16>, vector<8x512xf32> -> vector<8x512xf32>
    %115 = arith.addf %112, %114 : vector<8x512xf32>
    %116 = vector.extract_strided_slice %115 {offsets = [0, 0], sizes = [8, 128], strides = [1, 1]} : vector<8x512xf32> to vector<8x128xf32>
    %117 = arith.negf %116 : vector<8x128xf32>
    %118 = math.exp %117 : vector<8x128xf32>
    %cst_43 = arith.constant 1.000000e+00 : f32
    %119 = vector.broadcast %cst_43 : f32 to vector<8x128xf32>
    %120 = arith.addf %119, %118 : vector<8x128xf32>
    %121 = arith.divf %119, %120 : vector<8x128xf32>
    %122 = vector.extract_strided_slice %115 {offsets = [0, 128], sizes = [8, 128], strides = [1, 1]} : vector<8x512xf32> to vector<8x128xf32>
    %123 = arith.negf %122 : vector<8x128xf32>
    %124 = math.exp %123 : vector<8x128xf32>
    %cst_44 = arith.constant 1.000000e+00 : f32
    %125 = vector.broadcast %cst_44 : f32 to vector<8x128xf32>
    %126 = arith.addf %125, %124 : vector<8x128xf32>
    %127 = arith.divf %125, %126 : vector<8x128xf32>
    %128 = vector.extract_strided_slice %115 {offsets = [0, 256], sizes = [8, 128], strides = [1, 1]} : vector<8x512xf32> to vector<8x128xf32>
    %129 = math.tanh %128 : vector<8x128xf32>
    %130 = vector.extract_strided_slice %115 {offsets = [0, 384], sizes = [8, 128], strides = [1, 1]} : vector<8x512xf32> to vector<8x128xf32>
    %131 = arith.negf %130 : vector<8x128xf32>
    %132 = math.exp %131 : vector<8x128xf32>
    %cst_45 = arith.constant 1.000000e+00 : f32
    %133 = vector.broadcast %cst_45 : f32 to vector<8x128xf32>
    %134 = arith.addf %133, %132 : vector<8x128xf32>
    %135 = arith.divf %133, %134 : vector<8x128xf32>
    %136 = arith.mulf %127, %108 : vector<8x128xf32>
    %137 = arith.mulf %121, %129 : vector<8x128xf32>
    %138 = arith.addf %136, %137 : vector<8x128xf32>
    %139 = math.tanh %138 : vector<8x128xf32>
    %140 = arith.mulf %135, %139 : vector<8x128xf32>
    %c24_46 = arith.constant 24 : index
    %c0_47 = arith.constant 0 : index
    %141 = vector.load %arg12[%c24_46, %c0_47] : memref<64x256xf32, #tpu.memory_space<vmem>>, vector<8x128xf32>
    tpu.vector_store %arg12[%c24_46, %c0_47], %140 {strides = array<i32>} : memref<64x256xf32, #tpu.memory_space<vmem>>, vector<8x128xf32>,
    %c32 = arith.constant 32 : index
    %c0_48 = arith.constant 0 : index
    %142 = vector.load %arg11[%c32, %c0_48] : memref<64x512xf32, #tpu.memory_space<vmem>>, vector<8x512xf32>
    %143 = arith.truncf %140 : vector<8x128xf32> to vector<8x128xbf16>
    %cst_49 = arith.constant dense<0.000000e+00> : vector<8x512xf32>
    %144 = tpu.matmul %143, %19, %cst_49 {dimension_numbers = #tpu.dot_dimension_numbers<[1], [0], [0], [1], [0, 0, 1, 1], [], []>} : vector<8x128xbf16>, vector<128x512xbf16>, vector<8x512xf32> -> vector<8x512xf32>
    %145 = arith.addf %142, %144 : vector<8x512xf32>
    %146 = vector.extract_strided_slice %145 {offsets = [0, 0], sizes = [8, 128], strides = [1, 1]} : vector<8x512xf32> to vector<8x128xf32>
    %147 = arith.negf %146 : vector<8x128xf32>
    %148 = math.exp %147 : vector<8x128xf32>
    %cst_50 = arith.constant 1.000000e+00 : f32
    %149 = vector.broadcast %cst_50 : f32 to vector<8x128xf32>
    %150 = arith.addf %149, %148 : vector<8x128xf32>
    %151 = arith.divf %149, %150 : vector<8x128xf32>
    %152 = vector.extract_strided_slice %145 {offsets = [0, 128], sizes = [8, 128], strides = [1, 1]} : vector<8x512xf32> to vector<8x128xf32>
    %153 = arith.negf %152 : vector<8x128xf32>
    %154 = math.exp %153 : vector<8x128xf32>
    %cst_51 = arith.constant 1.000000e+00 : f32
    %155 = vector.broadcast %cst_51 : f32 to vector<8x128xf32>
    %156 = arith.addf %155, %154 : vector<8x128xf32>
    %157 = arith.divf %155, %156 : vector<8x128xf32>
    %158 = vector.extract_strided_slice %145 {offsets = [0, 256], sizes = [8, 128], strides = [1, 1]} : vector<8x512xf32> to vector<8x128xf32>
    %159 = math.tanh %158 : vector<8x128xf32>
    %160 = vector.extract_strided_slice %145 {offsets = [0, 384], sizes = [8, 128], strides = [1, 1]} : vector<8x512xf32> to vector<8x128xf32>
    %161 = arith.negf %160 : vector<8x128xf32>
    %162 = math.exp %161 : vector<8x128xf32>
    %cst_52 = arith.constant 1.000000e+00 : f32
    %163 = vector.broadcast %cst_52 : f32 to vector<8x128xf32>
    %164 = arith.addf %163, %162 : vector<8x128xf32>
    %165 = arith.divf %163, %164 : vector<8x128xf32>
    %166 = arith.mulf %157, %138 : vector<8x128xf32>
    %167 = arith.mulf %151, %159 : vector<8x128xf32>
    %168 = arith.addf %166, %167 : vector<8x128xf32>
    %169 = math.tanh %168 : vector<8x128xf32>
    %170 = arith.mulf %165, %169 : vector<8x128xf32>
    %c32_53 = arith.constant 32 : index
    %c0_54 = arith.constant 0 : index
    %171 = vector.load %arg12[%c32_53, %c0_54] : memref<64x256xf32, #tpu.memory_space<vmem>>, vector<8x128xf32>
    tpu.vector_store %arg12[%c32_53, %c0_54], %170 {strides = array<i32>} : memref<64x256xf32, #tpu.memory_space<vmem>>, vector<8x128xf32>,
    %c40 = arith.constant 40 : index
    %c0_55 = arith.constant 0 : index
    %172 = vector.load %arg11[%c40, %c0_55] : memref<64x512xf32, #tpu.memory_space<vmem>>, vector<8x512xf32>
    %173 = arith.truncf %170 : vector<8x128xf32> to vector<8x128xbf16>
    %cst_56 = arith.constant dense<0.000000e+00> : vector<8x512xf32>
    %174 = tpu.matmul %173, %19, %cst_56 {dimension_numbers = #tpu.dot_dimension_numbers<[1], [0], [0], [1], [0, 0, 1, 1], [], []>} : vector<8x128xbf16>, vector<128x512xbf16>, vector<8x512xf32> -> vector<8x512xf32>
    %175 = arith.addf %172, %174 : vector<8x512xf32>
    %176 = vector.extract_strided_slice %175 {offsets = [0, 0], sizes = [8, 128], strides = [1, 1]} : vector<8x512xf32> to vector<8x128xf32>
    %177 = arith.negf %176 : vector<8x128xf32>
    %178 = math.exp %177 : vector<8x128xf32>
    %cst_57 = arith.constant 1.000000e+00 : f32
    %179 = vector.broadcast %cst_57 : f32 to vector<8x128xf32>
    %180 = arith.addf %179, %178 : vector<8x128xf32>
    %181 = arith.divf %179, %180 : vector<8x128xf32>
    %182 = vector.extract_strided_slice %175 {offsets = [0, 128], sizes = [8, 128], strides = [1, 1]} : vector<8x512xf32> to vector<8x128xf32>
    %183 = arith.negf %182 : vector<8x128xf32>
    %184 = math.exp %183 : vector<8x128xf32>
    %cst_58 = arith.constant 1.000000e+00 : f32
    %185 = vector.broadcast %cst_58 : f32 to vector<8x128xf32>
    %186 = arith.addf %185, %184 : vector<8x128xf32>
    %187 = arith.divf %185, %186 : vector<8x128xf32>
    %188 = vector.extract_strided_slice %175 {offsets = [0, 256], sizes = [8, 128], strides = [1, 1]} : vector<8x512xf32> to vector<8x128xf32>
    %189 = math.tanh %188 : vector<8x128xf32>
    %190 = vector.extract_strided_slice %175 {offsets = [0, 384], sizes = [8, 128], strides = [1, 1]} : vector<8x512xf32> to vector<8x128xf32>
    %191 = arith.negf %190 : vector<8x128xf32>
    %192 = math.exp %191 : vector<8x128xf32>
    %cst_59 = arith.constant 1.000000e+00 : f32
    %193 = vector.broadcast %cst_59 : f32 to vector<8x128xf32>
    %194 = arith.addf %193, %192 : vector<8x128xf32>
    %195 = arith.divf %193, %194 : vector<8x128xf32>
    %196 = arith.mulf %187, %168 : vector<8x128xf32>
    %197 = arith.mulf %181, %189 : vector<8x128xf32>
    %198 = arith.addf %196, %197 : vector<8x128xf32>
    %199 = math.tanh %198 : vector<8x128xf32>
    %200 = arith.mulf %195, %199 : vector<8x128xf32>
    %c40_60 = arith.constant 40 : index
    %c0_61 = arith.constant 0 : index
    %201 = vector.load %arg12[%c40_60, %c0_61] : memref<64x256xf32, #tpu.memory_space<vmem>>, vector<8x128xf32>
    tpu.vector_store %arg12[%c40_60, %c0_61], %200 {strides = array<i32>} : memref<64x256xf32, #tpu.memory_space<vmem>>, vector<8x128xf32>,
    %c48 = arith.constant 48 : index
    %c0_62 = arith.constant 0 : index
    %202 = vector.load %arg11[%c48, %c0_62] : memref<64x512xf32, #tpu.memory_space<vmem>>, vector<8x512xf32>
    %203 = arith.truncf %200 : vector<8x128xf32> to vector<8x128xbf16>
    %cst_63 = arith.constant dense<0.000000e+00> : vector<8x512xf32>
    %204 = tpu.matmul %203, %19, %cst_63 {dimension_numbers = #tpu.dot_dimension_numbers<[1], [0], [0], [1], [0, 0, 1, 1], [], []>} : vector<8x128xbf16>, vector<128x512xbf16>, vector<8x512xf32> -> vector<8x512xf32>
    %205 = arith.addf %202, %204 : vector<8x512xf32>
    %206 = vector.extract_strided_slice %205 {offsets = [0, 0], sizes = [8, 128], strides = [1, 1]} : vector<8x512xf32> to vector<8x128xf32>
    %207 = arith.negf %206 : vector<8x128xf32>
    %208 = math.exp %207 : vector<8x128xf32>
    %cst_64 = arith.constant 1.000000e+00 : f32
    %209 = vector.broadcast %cst_64 : f32 to vector<8x128xf32>
    %210 = arith.addf %209, %208 : vector<8x128xf32>
    %211 = arith.divf %209, %210 : vector<8x128xf32>
    %212 = vector.extract_strided_slice %205 {offsets = [0, 128], sizes = [8, 128], strides = [1, 1]} : vector<8x512xf32> to vector<8x128xf32>
    %213 = arith.negf %212 : vector<8x128xf32>
    %214 = math.exp %213 : vector<8x128xf32>
    %cst_65 = arith.constant 1.000000e+00 : f32
    %215 = vector.broadcast %cst_65 : f32 to vector<8x128xf32>
    %216 = arith.addf %215, %214 : vector<8x128xf32>
    %217 = arith.divf %215, %216 : vector<8x128xf32>
    %218 = vector.extract_strided_slice %205 {offsets = [0, 256], sizes = [8, 128], strides = [1, 1]} : vector<8x512xf32> to vector<8x128xf32>
    %219 = math.tanh %218 : vector<8x128xf32>
    %220 = vector.extract_strided_slice %205 {offsets = [0, 384], sizes = [8, 128], strides = [1, 1]} : vector<8x512xf32> to vector<8x128xf32>
    %221 = arith.negf %220 : vector<8x128xf32>
    %222 = math.exp %221 : vector<8x128xf32>
    %cst_66 = arith.constant 1.000000e+00 : f32
    %223 = vector.broadcast %cst_66 : f32 to vector<8x128xf32>
    %224 = arith.addf %223, %222 : vector<8x128xf32>
    %225 = arith.divf %223, %224 : vector<8x128xf32>
    %226 = arith.mulf %217, %198 : vector<8x128xf32>
    %227 = arith.mulf %211, %219 : vector<8x128xf32>
    %228 = arith.addf %226, %227 : vector<8x128xf32>
    %229 = math.tanh %228 : vector<8x128xf32>
    %230 = arith.mulf %225, %229 : vector<8x128xf32>
    %c48_67 = arith.constant 48 : index
    %c0_68 = arith.constant 0 : index
    %231 = vector.load %arg12[%c48_67, %c0_68] : memref<64x256xf32, #tpu.memory_space<vmem>>, vector<8x128xf32>
    tpu.vector_store %arg12[%c48_67, %c0_68], %230 {strides = array<i32>} : memref<64x256xf32, #tpu.memory_space<vmem>>, vector<8x128xf32>,
    %c56 = arith.constant 56 : index
    %c0_69 = arith.constant 0 : index
    %232 = vector.load %arg11[%c56, %c0_69] : memref<64x512xf32, #tpu.memory_space<vmem>>, vector<8x512xf32>
    %233 = arith.truncf %230 : vector<8x128xf32> to vector<8x128xbf16>
    %cst_70 = arith.constant dense<0.000000e+00> : vector<8x512xf32>
    %234 = tpu.matmul %233, %19, %cst_70 {dimension_numbers = #tpu.dot_dimension_numbers<[1], [0], [0], [1], [0, 0, 1, 1], [], []>} : vector<8x128xbf16>, vector<128x512xbf16>, vector<8x512xf32> -> vector<8x512xf32>
    %235 = arith.addf %232, %234 : vector<8x512xf32>
    %236 = vector.extract_strided_slice %235 {offsets = [0, 0], sizes = [8, 128], strides = [1, 1]} : vector<8x512xf32> to vector<8x128xf32>
    %237 = arith.negf %236 : vector<8x128xf32>
    %238 = math.exp %237 : vector<8x128xf32>
    %cst_71 = arith.constant 1.000000e+00 : f32
    %239 = vector.broadcast %cst_71 : f32 to vector<8x128xf32>
    %240 = arith.addf %239, %238 : vector<8x128xf32>
    %241 = arith.divf %239, %240 : vector<8x128xf32>
    %242 = vector.extract_strided_slice %235 {offsets = [0, 128], sizes = [8, 128], strides = [1, 1]} : vector<8x512xf32> to vector<8x128xf32>
    %243 = arith.negf %242 : vector<8x128xf32>
    %244 = math.exp %243 : vector<8x128xf32>
    %cst_72 = arith.constant 1.000000e+00 : f32
    %245 = vector.broadcast %cst_72 : f32 to vector<8x128xf32>
    %246 = arith.addf %245, %244 : vector<8x128xf32>
    %247 = arith.divf %245, %246 : vector<8x128xf32>
    %248 = vector.extract_strided_slice %235 {offsets = [0, 256], sizes = [8, 128], strides = [1, 1]} : vector<8x512xf32> to vector<8x128xf32>
    %249 = math.tanh %248 : vector<8x128xf32>
    %250 = vector.extract_strided_slice %235 {offsets = [0, 384], sizes = [8, 128], strides = [1, 1]} : vector<8x512xf32> to vector<8x128xf32>
    %251 = arith.negf %250 : vector<8x128xf32>
    %252 = math.exp %251 : vector<8x128xf32>
    %cst_73 = arith.constant 1.000000e+00 : f32
    %253 = vector.broadcast %cst_73 : f32 to vector<8x128xf32>
    %254 = arith.addf %253, %252 : vector<8x128xf32>
    %255 = arith.divf %253, %254 : vector<8x128xf32>
    %256 = arith.mulf %247, %228 : vector<8x128xf32>
    %257 = arith.mulf %241, %249 : vector<8x128xf32>
    %258 = arith.addf %256, %257 : vector<8x128xf32>
    %259 = math.tanh %258 : vector<8x128xf32>
    %260 = arith.mulf %255, %259 : vector<8x128xf32>
    %c56_74 = arith.constant 56 : index
    %c0_75 = arith.constant 0 : index
    %261 = vector.load %arg12[%c56_74, %c0_75] : memref<64x256xf32, #tpu.memory_space<vmem>>, vector<8x128xf32>
    tpu.vector_store %arg12[%c56_74, %c0_75], %260 {strides = array<i32>} : memref<64x256xf32, #tpu.memory_space<vmem>>, vector<8x128xf32>,
    %c1 = arith.constant 1 : index
    %c0_76 = arith.constant 0 : index
    %c0_77 = arith.constant 0 : index
    %262 = vector.load %arg2[%c1, %c0_76, %c0_77] : memref<2x128x512xbf16, #tpu.memory_space<vmem>>, vector<1x128x512xbf16>
    %263 = vector.shape_cast %262 : vector<1x128x512xbf16> to vector<128x512xbf16>
    %cst_78 = arith.constant dense<0.000000e+00> : vector<64x512xf32>
    %264 = tpu.matmul %9, %263, %cst_78 {dimension_numbers = #tpu.dot_dimension_numbers<[1], [0], [0], [1], [0, 0, 1, 1], [], []>} : vector<64x128xbf16>, vector<128x512xbf16>, vector<64x512xf32> -> vector<64x512xf32>
    %c1_79 = arith.constant 1 : index
    %c0_80 = arith.constant 0 : index
    %c0_81 = arith.constant 0 : index
    %265 = vector.load %arg4[%c1_79, %c0_80, %c0_81] : memref<2x1x512xf32, #tpu.memory_space<vmem>>, vector<1x1x512xf32>
    %266 = vector.shape_cast %265 : vector<1x1x512xf32> to vector<1x512xf32>
    %267 = vector.broadcast %266 : vector<1x512xf32> to vector<64x512xf32>
    %268 = arith.addf %264, %267 : vector<64x512xf32>
    %c0_82 = arith.constant 0 : index
    %c0_83 = arith.constant 0 : index
    %269 = vector.load %arg11[%c0_82, %c0_83] : memref<64x512xf32, #tpu.memory_space<vmem>>, vector<64x512xf32>
    tpu.vector_store %arg11[%c0_82, %c0_83], %268 {strides = array<i32>} : memref<64x512xf32, #tpu.memory_space<vmem>>, vector<64x512xf32>,
    %c1_84 = arith.constant 1 : index
    %c0_85 = arith.constant 0 : index
    %c0_86 = arith.constant 0 : index
    %270 = vector.load %arg3[%c1_84, %c0_85, %c0_86] : memref<2x128x512xbf16, #tpu.memory_space<vmem>>, vector<1x128x512xbf16>
    %271 = vector.shape_cast %270 : vector<1x128x512xbf16> to vector<128x512xbf16>
    %cst_87 = arith.constant 0.000000e+00 : f32
    %272 = vector.broadcast %cst_87 : f32 to vector<8x128xf32>
    %cst_88 = arith.constant 0.000000e+00 : f32
    %273 = vector.broadcast %cst_88 : f32 to vector<8x128xf32>
    %c56_89 = arith.constant 56 : index
    %c0_90 = arith.constant 0 : index
    %274 = vector.load %arg11[%c56_89, %c0_90] : memref<64x512xf32, #tpu.memory_space<vmem>>, vector<8x512xf32>
    %275 = arith.truncf %272 : vector<8x128xf32> to vector<8x128xbf16>
    %cst_91 = arith.constant dense<0.000000e+00> : vector<8x512xf32>
    %276 = tpu.matmul %275, %271, %cst_91 {dimension_numbers = #tpu.dot_dimension_numbers<[1], [0], [0], [1], [0, 0, 1, 1], [], []>} : vector<8x128xbf16>, vector<128x512xbf16>, vector<8x512xf32> -> vector<8x512xf32>
    %277 = arith.addf %274, %276 : vector<8x512xf32>
    %278 = vector.extract_strided_slice %277 {offsets = [0, 0], sizes = [8, 128], strides = [1, 1]} : vector<8x512xf32> to vector<8x128xf32>
    %279 = arith.negf %278 : vector<8x128xf32>
    %280 = math.exp %279 : vector<8x128xf32>
    %cst_92 = arith.constant 1.000000e+00 : f32
    %281 = vector.broadcast %cst_92 : f32 to vector<8x128xf32>
    %282 = arith.addf %281, %280 : vector<8x128xf32>
    %283 = arith.divf %281, %282 : vector<8x128xf32>
    %284 = vector.extract_strided_slice %277 {offsets = [0, 128], sizes = [8, 128], strides = [1, 1]} : vector<8x512xf32> to vector<8x128xf32>
    %285 = arith.negf %284 : vector<8x128xf32>
    %286 = math.exp %285 : vector<8x128xf32>
    %cst_93 = arith.constant 1.000000e+00 : f32
    %287 = vector.broadcast %cst_93 : f32 to vector<8x128xf32>
    %288 = arith.addf %287, %286 : vector<8x128xf32>
    %289 = arith.divf %287, %288 : vector<8x128xf32>
    %290 = vector.extract_strided_slice %277 {offsets = [0, 256], sizes = [8, 128], strides = [1, 1]} : vector<8x512xf32> to vector<8x128xf32>
    %291 = math.tanh %290 : vector<8x128xf32>
    %292 = vector.extract_strided_slice %277 {offsets = [0, 384], sizes = [8, 128], strides = [1, 1]} : vector<8x512xf32> to vector<8x128xf32>
    %293 = arith.negf %292 : vector<8x128xf32>
    %294 = math.exp %293 : vector<8x128xf32>
    %cst_94 = arith.constant 1.000000e+00 : f32
    %295 = vector.broadcast %cst_94 : f32 to vector<8x128xf32>
    %296 = arith.addf %295, %294 : vector<8x128xf32>
    %297 = arith.divf %295, %296 : vector<8x128xf32>
    %298 = arith.mulf %289, %273 : vector<8x128xf32>
    %299 = arith.mulf %283, %291 : vector<8x128xf32>
    %300 = arith.addf %298, %299 : vector<8x128xf32>
    %301 = math.tanh %300 : vector<8x128xf32>
    %302 = arith.mulf %297, %301 : vector<8x128xf32>
    %c56_95 = arith.constant 56 : index
    %c128 = arith.constant 128 : index
    %303 = vector.load %arg12[%c56_95, %c128] : memref<64x256xf32, #tpu.memory_space<vmem>>, vector<8x128xf32>
    tpu.vector_store %arg12[%c56_95, %c128], %302 {strides = array<i32>} : memref<64x256xf32, #tpu.memory_space<vmem>>, vector<8x128xf32>,
    %c48_96 = arith.constant 48 : index
    %c0_97 = arith.constant 0 : index
    %304 = vector.load %arg11[%c48_96, %c0_97] : memref<64x512xf32, #tpu.memory_space<vmem>>, vector<8x512xf32>
    %305 = arith.truncf %302 : vector<8x128xf32> to vector<8x128xbf16>
    %cst_98 = arith.constant dense<0.000000e+00> : vector<8x512xf32>
    %306 = tpu.matmul %305, %271, %cst_98 {dimension_numbers = #tpu.dot_dimension_numbers<[1], [0], [0], [1], [0, 0, 1, 1], [], []>} : vector<8x128xbf16>, vector<128x512xbf16>, vector<8x512xf32> -> vector<8x512xf32>
    %307 = arith.addf %304, %306 : vector<8x512xf32>
    %308 = vector.extract_strided_slice %307 {offsets = [0, 0], sizes = [8, 128], strides = [1, 1]} : vector<8x512xf32> to vector<8x128xf32>
    %309 = arith.negf %308 : vector<8x128xf32>
    %310 = math.exp %309 : vector<8x128xf32>
    %cst_99 = arith.constant 1.000000e+00 : f32
    %311 = vector.broadcast %cst_99 : f32 to vector<8x128xf32>
    %312 = arith.addf %311, %310 : vector<8x128xf32>
    %313 = arith.divf %311, %312 : vector<8x128xf32>
    %314 = vector.extract_strided_slice %307 {offsets = [0, 128], sizes = [8, 128], strides = [1, 1]} : vector<8x512xf32> to vector<8x128xf32>
    %315 = arith.negf %314 : vector<8x128xf32>
    %316 = math.exp %315 : vector<8x128xf32>
    %cst_100 = arith.constant 1.000000e+00 : f32
    %317 = vector.broadcast %cst_100 : f32 to vector<8x128xf32>
    %318 = arith.addf %317, %316 : vector<8x128xf32>
    %319 = arith.divf %317, %318 : vector<8x128xf32>
    %320 = vector.extract_strided_slice %307 {offsets = [0, 256], sizes = [8, 128], strides = [1, 1]} : vector<8x512xf32> to vector<8x128xf32>
    %321 = math.tanh %320 : vector<8x128xf32>
    %322 = vector.extract_strided_slice %307 {offsets = [0, 384], sizes = [8, 128], strides = [1, 1]} : vector<8x512xf32> to vector<8x128xf32>
    %323 = arith.negf %322 : vector<8x128xf32>
    %324 = math.exp %323 : vector<8x128xf32>
    %cst_101 = arith.constant 1.000000e+00 : f32
    %325 = vector.broadcast %cst_101 : f32 to vector<8x128xf32>
    %326 = arith.addf %325, %324 : vector<8x128xf32>
    %327 = arith.divf %325, %326 : vector<8x128xf32>
    %328 = arith.mulf %319, %300 : vector<8x128xf32>
    %329 = arith.mulf %313, %321 : vector<8x128xf32>
    %330 = arith.addf %328, %329 : vector<8x128xf32>
    %331 = math.tanh %330 : vector<8x128xf32>
    %332 = arith.mulf %327, %331 : vector<8x128xf32>
    %c48_102 = arith.constant 48 : index
    %c128_103 = arith.constant 128 : index
    %333 = vector.load %arg12[%c48_102, %c128_103] : memref<64x256xf32, #tpu.memory_space<vmem>>, vector<8x128xf32>
    tpu.vector_store %arg12[%c48_102, %c128_103], %332 {strides = array<i32>} : memref<64x256xf32, #tpu.memory_space<vmem>>, vector<8x128xf32>,
    %c40_104 = arith.constant 40 : index
    %c0_105 = arith.constant 0 : index
    %334 = vector.load %arg11[%c40_104, %c0_105] : memref<64x512xf32, #tpu.memory_space<vmem>>, vector<8x512xf32>
    %335 = arith.truncf %332 : vector<8x128xf32> to vector<8x128xbf16>
    %cst_106 = arith.constant dense<0.000000e+00> : vector<8x512xf32>
    %336 = tpu.matmul %335, %271, %cst_106 {dimension_numbers = #tpu.dot_dimension_numbers<[1], [0], [0], [1], [0, 0, 1, 1], [], []>} : vector<8x128xbf16>, vector<128x512xbf16>, vector<8x512xf32> -> vector<8x512xf32>
    %337 = arith.addf %334, %336 : vector<8x512xf32>
    %338 = vector.extract_strided_slice %337 {offsets = [0, 0], sizes = [8, 128], strides = [1, 1]} : vector<8x512xf32> to vector<8x128xf32>
    %339 = arith.negf %338 : vector<8x128xf32>
    %340 = math.exp %339 : vector<8x128xf32>
    %cst_107 = arith.constant 1.000000e+00 : f32
    %341 = vector.broadcast %cst_107 : f32 to vector<8x128xf32>
    %342 = arith.addf %341, %340 : vector<8x128xf32>
    %343 = arith.divf %341, %342 : vector<8x128xf32>
    %344 = vector.extract_strided_slice %337 {offsets = [0, 128], sizes = [8, 128], strides = [1, 1]} : vector<8x512xf32> to vector<8x128xf32>
    %345 = arith.negf %344 : vector<8x128xf32>
    %346 = math.exp %345 : vector<8x128xf32>
    %cst_108 = arith.constant 1.000000e+00 : f32
    %347 = vector.broadcast %cst_108 : f32 to vector<8x128xf32>
    %348 = arith.addf %347, %346 : vector<8x128xf32>
    %349 = arith.divf %347, %348 : vector<8x128xf32>
    %350 = vector.extract_strided_slice %337 {offsets = [0, 256], sizes = [8, 128], strides = [1, 1]} : vector<8x512xf32> to vector<8x128xf32>
    %351 = math.tanh %350 : vector<8x128xf32>
    %352 = vector.extract_strided_slice %337 {offsets = [0, 384], sizes = [8, 128], strides = [1, 1]} : vector<8x512xf32> to vector<8x128xf32>
    %353 = arith.negf %352 : vector<8x128xf32>
    %354 = math.exp %353 : vector<8x128xf32>
    %cst_109 = arith.constant 1.000000e+00 : f32
    %355 = vector.broadcast %cst_109 : f32 to vector<8x128xf32>
    %356 = arith.addf %355, %354 : vector<8x128xf32>
    %357 = arith.divf %355, %356 : vector<8x128xf32>
    %358 = arith.mulf %349, %330 : vector<8x128xf32>
    %359 = arith.mulf %343, %351 : vector<8x128xf32>
    %360 = arith.addf %358, %359 : vector<8x128xf32>
    %361 = math.tanh %360 : vector<8x128xf32>
    %362 = arith.mulf %357, %361 : vector<8x128xf32>
    %c40_110 = arith.constant 40 : index
    %c128_111 = arith.constant 128 : index
    %363 = vector.load %arg12[%c40_110, %c128_111] : memref<64x256xf32, #tpu.memory_space<vmem>>, vector<8x128xf32>
    tpu.vector_store %arg12[%c40_110, %c128_111], %362 {strides = array<i32>} : memref<64x256xf32, #tpu.memory_space<vmem>>, vector<8x128xf32>,
    %c32_112 = arith.constant 32 : index
    %c0_113 = arith.constant 0 : index
    %364 = vector.load %arg11[%c32_112, %c0_113] : memref<64x512xf32, #tpu.memory_space<vmem>>, vector<8x512xf32>
    %365 = arith.truncf %362 : vector<8x128xf32> to vector<8x128xbf16>
    %cst_114 = arith.constant dense<0.000000e+00> : vector<8x512xf32>
    %366 = tpu.matmul %365, %271, %cst_114 {dimension_numbers = #tpu.dot_dimension_numbers<[1], [0], [0], [1], [0, 0, 1, 1], [], []>} : vector<8x128xbf16>, vector<128x512xbf16>, vector<8x512xf32> -> vector<8x512xf32>
    %367 = arith.addf %364, %366 : vector<8x512xf32>
    %368 = vector.extract_strided_slice %367 {offsets = [0, 0], sizes = [8, 128], strides = [1, 1]} : vector<8x512xf32> to vector<8x128xf32>
    %369 = arith.negf %368 : vector<8x128xf32>
    %370 = math.exp %369 : vector<8x128xf32>
    %cst_115 = arith.constant 1.000000e+00 : f32
    %371 = vector.broadcast %cst_115 : f32 to vector<8x128xf32>
    %372 = arith.addf %371, %370 : vector<8x128xf32>
    %373 = arith.divf %371, %372 : vector<8x128xf32>
    %374 = vector.extract_strided_slice %367 {offsets = [0, 128], sizes = [8, 128], strides = [1, 1]} : vector<8x512xf32> to vector<8x128xf32>
    %375 = arith.negf %374 : vector<8x128xf32>
    %376 = math.exp %375 : vector<8x128xf32>
    %cst_116 = arith.constant 1.000000e+00 : f32
    %377 = vector.broadcast %cst_116 : f32 to vector<8x128xf32>
    %378 = arith.addf %377, %376 : vector<8x128xf32>
    %379 = arith.divf %377, %378 : vector<8x128xf32>
    %380 = vector.extract_strided_slice %367 {offsets = [0, 256], sizes = [8, 128], strides = [1, 1]} : vector<8x512xf32> to vector<8x128xf32>
    %381 = math.tanh %380 : vector<8x128xf32>
    %382 = vector.extract_strided_slice %367 {offsets = [0, 384], sizes = [8, 128], strides = [1, 1]} : vector<8x512xf32> to vector<8x128xf32>
    %383 = arith.negf %382 : vector<8x128xf32>
    %384 = math.exp %383 : vector<8x128xf32>
    %cst_117 = arith.constant 1.000000e+00 : f32
    %385 = vector.broadcast %cst_117 : f32 to vector<8x128xf32>
    %386 = arith.addf %385, %384 : vector<8x128xf32>
    %387 = arith.divf %385, %386 : vector<8x128xf32>
    %388 = arith.mulf %379, %360 : vector<8x128xf32>
    %389 = arith.mulf %373, %381 : vector<8x128xf32>
    %390 = arith.addf %388, %389 : vector<8x128xf32>
    %391 = math.tanh %390 : vector<8x128xf32>
    %392 = arith.mulf %387, %391 : vector<8x128xf32>
    %c32_118 = arith.constant 32 : index
    %c128_119 = arith.constant 128 : index
    %393 = vector.load %arg12[%c32_118, %c128_119] : memref<64x256xf32, #tpu.memory_space<vmem>>, vector<8x128xf32>
    tpu.vector_store %arg12[%c32_118, %c128_119], %392 {strides = array<i32>} : memref<64x256xf32, #tpu.memory_space<vmem>>, vector<8x128xf32>,
    %c24_120 = arith.constant 24 : index
    %c0_121 = arith.constant 0 : index
    %394 = vector.load %arg11[%c24_120, %c0_121] : memref<64x512xf32, #tpu.memory_space<vmem>>, vector<8x512xf32>
    %395 = arith.truncf %392 : vector<8x128xf32> to vector<8x128xbf16>
    %cst_122 = arith.constant dense<0.000000e+00> : vector<8x512xf32>
    %396 = tpu.matmul %395, %271, %cst_122 {dimension_numbers = #tpu.dot_dimension_numbers<[1], [0], [0], [1], [0, 0, 1, 1], [], []>} : vector<8x128xbf16>, vector<128x512xbf16>, vector<8x512xf32> -> vector<8x512xf32>
    %397 = arith.addf %394, %396 : vector<8x512xf32>
    %398 = vector.extract_strided_slice %397 {offsets = [0, 0], sizes = [8, 128], strides = [1, 1]} : vector<8x512xf32> to vector<8x128xf32>
    %399 = arith.negf %398 : vector<8x128xf32>
    %400 = math.exp %399 : vector<8x128xf32>
    %cst_123 = arith.constant 1.000000e+00 : f32
    %401 = vector.broadcast %cst_123 : f32 to vector<8x128xf32>
    %402 = arith.addf %401, %400 : vector<8x128xf32>
    %403 = arith.divf %401, %402 : vector<8x128xf32>
    %404 = vector.extract_strided_slice %397 {offsets = [0, 128], sizes = [8, 128], strides = [1, 1]} : vector<8x512xf32> to vector<8x128xf32>
    %405 = arith.negf %404 : vector<8x128xf32>
    %406 = math.exp %405 : vector<8x128xf32>
    %cst_124 = arith.constant 1.000000e+00 : f32
    %407 = vector.broadcast %cst_124 : f32 to vector<8x128xf32>
    %408 = arith.addf %407, %406 : vector<8x128xf32>
    %409 = arith.divf %407, %408 : vector<8x128xf32>
    %410 = vector.extract_strided_slice %397 {offsets = [0, 256], sizes = [8, 128], strides = [1, 1]} : vector<8x512xf32> to vector<8x128xf32>
    %411 = math.tanh %410 : vector<8x128xf32>
    %412 = vector.extract_strided_slice %397 {offsets = [0, 384], sizes = [8, 128], strides = [1, 1]} : vector<8x512xf32> to vector<8x128xf32>
    %413 = arith.negf %412 : vector<8x128xf32>
    %414 = math.exp %413 : vector<8x128xf32>
    %cst_125 = arith.constant 1.000000e+00 : f32
    %415 = vector.broadcast %cst_125 : f32 to vector<8x128xf32>
    %416 = arith.addf %415, %414 : vector<8x128xf32>
    %417 = arith.divf %415, %416 : vector<8x128xf32>
    %418 = arith.mulf %409, %390 : vector<8x128xf32>
    %419 = arith.mulf %403, %411 : vector<8x128xf32>
    %420 = arith.addf %418, %419 : vector<8x128xf32>
    %421 = math.tanh %420 : vector<8x128xf32>
    %422 = arith.mulf %417, %421 : vector<8x128xf32>
    %c24_126 = arith.constant 24 : index
    %c128_127 = arith.constant 128 : index
    %423 = vector.load %arg12[%c24_126, %c128_127] : memref<64x256xf32, #tpu.memory_space<vmem>>, vector<8x128xf32>
    tpu.vector_store %arg12[%c24_126, %c128_127], %422 {strides = array<i32>} : memref<64x256xf32, #tpu.memory_space<vmem>>, vector<8x128xf32>,
    %c16_128 = arith.constant 16 : index
    %c0_129 = arith.constant 0 : index
    %424 = vector.load %arg11[%c16_128, %c0_129] : memref<64x512xf32, #tpu.memory_space<vmem>>, vector<8x512xf32>
    %425 = arith.truncf %422 : vector<8x128xf32> to vector<8x128xbf16>
    %cst_130 = arith.constant dense<0.000000e+00> : vector<8x512xf32>
    %426 = tpu.matmul %425, %271, %cst_130 {dimension_numbers = #tpu.dot_dimension_numbers<[1], [0], [0], [1], [0, 0, 1, 1], [], []>} : vector<8x128xbf16>, vector<128x512xbf16>, vector<8x512xf32> -> vector<8x512xf32>
    %427 = arith.addf %424, %426 : vector<8x512xf32>
    %428 = vector.extract_strided_slice %427 {offsets = [0, 0], sizes = [8, 128], strides = [1, 1]} : vector<8x512xf32> to vector<8x128xf32>
    %429 = arith.negf %428 : vector<8x128xf32>
    %430 = math.exp %429 : vector<8x128xf32>
    %cst_131 = arith.constant 1.000000e+00 : f32
    %431 = vector.broadcast %cst_131 : f32 to vector<8x128xf32>
    %432 = arith.addf %431, %430 : vector<8x128xf32>
    %433 = arith.divf %431, %432 : vector<8x128xf32>
    %434 = vector.extract_strided_slice %427 {offsets = [0, 128], sizes = [8, 128], strides = [1, 1]} : vector<8x512xf32> to vector<8x128xf32>
    %435 = arith.negf %434 : vector<8x128xf32>
    %436 = math.exp %435 : vector<8x128xf32>
    %cst_132 = arith.constant 1.000000e+00 : f32
    %437 = vector.broadcast %cst_132 : f32 to vector<8x128xf32>
    %438 = arith.addf %437, %436 : vector<8x128xf32>
    %439 = arith.divf %437, %438 : vector<8x128xf32>
    %440 = vector.extract_strided_slice %427 {offsets = [0, 256], sizes = [8, 128], strides = [1, 1]} : vector<8x512xf32> to vector<8x128xf32>
    %441 = math.tanh %440 : vector<8x128xf32>
    %442 = vector.extract_strided_slice %427 {offsets = [0, 384], sizes = [8, 128], strides = [1, 1]} : vector<8x512xf32> to vector<8x128xf32>
    %443 = arith.negf %442 : vector<8x128xf32>
    %444 = math.exp %443 : vector<8x128xf32>
    %cst_133 = arith.constant 1.000000e+00 : f32
    %445 = vector.broadcast %cst_133 : f32 to vector<8x128xf32>
    %446 = arith.addf %445, %444 : vector<8x128xf32>
    %447 = arith.divf %445, %446 : vector<8x128xf32>
    %448 = arith.mulf %439, %420 : vector<8x128xf32>
    %449 = arith.mulf %433, %441 : vector<8x128xf32>
    %450 = arith.addf %448, %449 : vector<8x128xf32>
    %451 = math.tanh %450 : vector<8x128xf32>
    %452 = arith.mulf %447, %451 : vector<8x128xf32>
    %c16_134 = arith.constant 16 : index
    %c128_135 = arith.constant 128 : index
    %453 = vector.load %arg12[%c16_134, %c128_135] : memref<64x256xf32, #tpu.memory_space<vmem>>, vector<8x128xf32>
    tpu.vector_store %arg12[%c16_134, %c128_135], %452 {strides = array<i32>} : memref<64x256xf32, #tpu.memory_space<vmem>>, vector<8x128xf32>,
    %c8_136 = arith.constant 8 : index
    %c0_137 = arith.constant 0 : index
    %454 = vector.load %arg11[%c8_136, %c0_137] : memref<64x512xf32, #tpu.memory_space<vmem>>, vector<8x512xf32>
    %455 = arith.truncf %452 : vector<8x128xf32> to vector<8x128xbf16>
    %cst_138 = arith.constant dense<0.000000e+00> : vector<8x512xf32>
    %456 = tpu.matmul %455, %271, %cst_138 {dimension_numbers = #tpu.dot_dimension_numbers<[1], [0], [0], [1], [0, 0, 1, 1], [], []>} : vector<8x128xbf16>, vector<128x512xbf16>, vector<8x512xf32> -> vector<8x512xf32>
    %457 = arith.addf %454, %456 : vector<8x512xf32>
    %458 = vector.extract_strided_slice %457 {offsets = [0, 0], sizes = [8, 128], strides = [1, 1]} : vector<8x512xf32> to vector<8x128xf32>
    %459 = arith.negf %458 : vector<8x128xf32>
    %460 = math.exp %459 : vector<8x128xf32>
    %cst_139 = arith.constant 1.000000e+00 : f32
    %461 = vector.broadcast %cst_139 : f32 to vector<8x128xf32>
    %462 = arith.addf %461, %460 : vector<8x128xf32>
    %463 = arith.divf %461, %462 : vector<8x128xf32>
    %464 = vector.extract_strided_slice %457 {offsets = [0, 128], sizes = [8, 128], strides = [1, 1]} : vector<8x512xf32> to vector<8x128xf32>
    %465 = arith.negf %464 : vector<8x128xf32>
    %466 = math.exp %465 : vector<8x128xf32>
    %cst_140 = arith.constant 1.000000e+00 : f32
    %467 = vector.broadcast %cst_140 : f32 to vector<8x128xf32>
    %468 = arith.addf %467, %466 : vector<8x128xf32>
    %469 = arith.divf %467, %468 : vector<8x128xf32>
    %470 = vector.extract_strided_slice %457 {offsets = [0, 256], sizes = [8, 128], strides = [1, 1]} : vector<8x512xf32> to vector<8x128xf32>
    %471 = math.tanh %470 : vector<8x128xf32>
    %472 = vector.extract_strided_slice %457 {offsets = [0, 384], sizes = [8, 128], strides = [1, 1]} : vector<8x512xf32> to vector<8x128xf32>
    %473 = arith.negf %472 : vector<8x128xf32>
    %474 = math.exp %473 : vector<8x128xf32>
    %cst_141 = arith.constant 1.000000e+00 : f32
    %475 = vector.broadcast %cst_141 : f32 to vector<8x128xf32>
    %476 = arith.addf %475, %474 : vector<8x128xf32>
    %477 = arith.divf %475, %476 : vector<8x128xf32>
    %478 = arith.mulf %469, %450 : vector<8x128xf32>
    %479 = arith.mulf %463, %471 : vector<8x128xf32>
    %480 = arith.addf %478, %479 : vector<8x128xf32>
    %481 = math.tanh %480 : vector<8x128xf32>
    %482 = arith.mulf %477, %481 : vector<8x128xf32>
    %c8_142 = arith.constant 8 : index
    %c128_143 = arith.constant 128 : index
    %483 = vector.load %arg12[%c8_142, %c128_143] : memref<64x256xf32, #tpu.memory_space<vmem>>, vector<8x128xf32>
    tpu.vector_store %arg12[%c8_142, %c128_143], %482 {strides = array<i32>} : memref<64x256xf32, #tpu.memory_space<vmem>>, vector<8x128xf32>,
    %c0_144 = arith.constant 0 : index
    %c0_145 = arith.constant 0 : index
    %484 = vector.load %arg11[%c0_144, %c0_145] : memref<64x512xf32, #tpu.memory_space<vmem>>, vector<8x512xf32>
    %485 = arith.truncf %482 : vector<8x128xf32> to vector<8x128xbf16>
    %cst_146 = arith.constant dense<0.000000e+00> : vector<8x512xf32>
    %486 = tpu.matmul %485, %271, %cst_146 {dimension_numbers = #tpu.dot_dimension_numbers<[1], [0], [0], [1], [0, 0, 1, 1], [], []>} : vector<8x128xbf16>, vector<128x512xbf16>, vector<8x512xf32> -> vector<8x512xf32>
    %487 = arith.addf %484, %486 : vector<8x512xf32>
    %488 = vector.extract_strided_slice %487 {offsets = [0, 0], sizes = [8, 128], strides = [1, 1]} : vector<8x512xf32> to vector<8x128xf32>
    %489 = arith.negf %488 : vector<8x128xf32>
    %490 = math.exp %489 : vector<8x128xf32>
    %cst_147 = arith.constant 1.000000e+00 : f32
    %491 = vector.broadcast %cst_147 : f32 to vector<8x128xf32>
    %492 = arith.addf %491, %490 : vector<8x128xf32>
    %493 = arith.divf %491, %492 : vector<8x128xf32>
    %494 = vector.extract_strided_slice %487 {offsets = [0, 128], sizes = [8, 128], strides = [1, 1]} : vector<8x512xf32> to vector<8x128xf32>
    %495 = arith.negf %494 : vector<8x128xf32>
    %496 = math.exp %495 : vector<8x128xf32>
    %cst_148 = arith.constant 1.000000e+00 : f32
    %497 = vector.broadcast %cst_148 : f32 to vector<8x128xf32>
    %498 = arith.addf %497, %496 : vector<8x128xf32>
    %499 = arith.divf %497, %498 : vector<8x128xf32>
    %500 = vector.extract_strided_slice %487 {offsets = [0, 256], sizes = [8, 128], strides = [1, 1]} : vector<8x512xf32> to vector<8x128xf32>
    %501 = math.tanh %500 : vector<8x128xf32>
    %502 = vector.extract_strided_slice %487 {offsets = [0, 384], sizes = [8, 128], strides = [1, 1]} : vector<8x512xf32> to vector<8x128xf32>
    %503 = arith.negf %502 : vector<8x128xf32>
    %504 = math.exp %503 : vector<8x128xf32>
    %cst_149 = arith.constant 1.000000e+00 : f32
    %505 = vector.broadcast %cst_149 : f32 to vector<8x128xf32>
    %506 = arith.addf %505, %504 : vector<8x128xf32>
    %507 = arith.divf %505, %506 : vector<8x128xf32>
    %508 = arith.mulf %499, %480 : vector<8x128xf32>
    %509 = arith.mulf %493, %501 : vector<8x128xf32>
    %510 = arith.addf %508, %509 : vector<8x128xf32>
    %511 = math.tanh %510 : vector<8x128xf32>
    %512 = arith.mulf %507, %511 : vector<8x128xf32>
    %c0_150 = arith.constant 0 : index
    %c128_151 = arith.constant 128 : index
    %513 = vector.load %arg12[%c0_150, %c128_151] : memref<64x256xf32, #tpu.memory_space<vmem>>, vector<8x128xf32>
    tpu.vector_store %arg12[%c0_150, %c128_151], %512 {strides = array<i32>} : memref<64x256xf32, #tpu.memory_space<vmem>>, vector<8x128xf32>,
    %c0_152 = arith.constant 0 : index
    %c0_153 = arith.constant 0 : index
    %514 = vector.load %arg12[%c0_152, %c0_153] : memref<64x256xf32, #tpu.memory_space<vmem>>, vector<64x256xf32>
    %515 = arith.truncf %514 : vector<64x256xf32> to vector<64x256xbf16>
    %c0_154 = arith.constant 0 : index
    %c0_155 = arith.constant 0 : index
    %c0_156 = arith.constant 0 : index
    %516 = vector.load %arg5[%c0_154, %c0_155, %c0_156] : memref<2x256x512xbf16, #tpu.memory_space<vmem>>, vector<1x256x512xbf16>
    %517 = vector.shape_cast %516 : vector<1x256x512xbf16> to vector<256x512xbf16>
    %cst_157 = arith.constant dense<0.000000e+00> : vector<64x512xf32>
    %518 = tpu.matmul %515, %517, %cst_157 {dimension_numbers = #tpu.dot_dimension_numbers<[1], [0], [0], [1], [0, 0, 1, 1], [], []>} : vector<64x256xbf16>, vector<256x512xbf16>, vector<64x512xf32> -> vector<64x512xf32>
    %c0_158 = arith.constant 0 : index
    %c0_159 = arith.constant 0 : index
    %c0_160 = arith.constant 0 : index
    %519 = vector.load %arg7[%c0_158, %c0_159, %c0_160] : memref<2x1x512xf32, #tpu.memory_space<vmem>>, vector<1x1x512xf32>
    %520 = vector.shape_cast %519 : vector<1x1x512xf32> to vector<1x512xf32>
    %521 = vector.broadcast %520 : vector<1x512xf32> to vector<64x512xf32>
    %522 = arith.addf %518, %521 : vector<64x512xf32>
    %c0_161 = arith.constant 0 : index
    %c0_162 = arith.constant 0 : index
    %523 = vector.load %arg11[%c0_161, %c0_162] : memref<64x512xf32, #tpu.memory_space<vmem>>, vector<64x512xf32>
    tpu.vector_store %arg11[%c0_161, %c0_162], %522 {strides = array<i32>} : memref<64x512xf32, #tpu.memory_space<vmem>>, vector<64x512xf32>,
    %c0_163 = arith.constant 0 : index
    %c0_164 = arith.constant 0 : index
    %c0_165 = arith.constant 0 : index
    %524 = vector.load %arg6[%c0_163, %c0_164, %c0_165] : memref<2x128x512xbf16, #tpu.memory_space<vmem>>, vector<1x128x512xbf16>
    %525 = vector.shape_cast %524 : vector<1x128x512xbf16> to vector<128x512xbf16>
    %cst_166 = arith.constant 0.000000e+00 : f32
    %526 = vector.broadcast %cst_166 : f32 to vector<8x128xf32>
    %cst_167 = arith.constant 0.000000e+00 : f32
    %527 = vector.broadcast %cst_167 : f32 to vector<8x128xf32>
    %c0_168 = arith.constant 0 : index
    %c0_169 = arith.constant 0 : index
    %528 = vector.load %arg11[%c0_168, %c0_169] : memref<64x512xf32, #tpu.memory_space<vmem>>, vector<8x512xf32>
    %529 = arith.truncf %526 : vector<8x128xf32> to vector<8x128xbf16>
    %cst_170 = arith.constant dense<0.000000e+00> : vector<8x512xf32>
    %530 = tpu.matmul %529, %525, %cst_170 {dimension_numbers = #tpu.dot_dimension_numbers<[1], [0], [0], [1], [0, 0, 1, 1], [], []>} : vector<8x128xbf16>, vector<128x512xbf16>, vector<8x512xf32> -> vector<8x512xf32>
    %531 = arith.addf %528, %530 : vector<8x512xf32>
    %532 = vector.extract_strided_slice %531 {offsets = [0, 0], sizes = [8, 128], strides = [1, 1]} : vector<8x512xf32> to vector<8x128xf32>
    %533 = arith.negf %532 : vector<8x128xf32>
    %534 = math.exp %533 : vector<8x128xf32>
    %cst_171 = arith.constant 1.000000e+00 : f32
    %535 = vector.broadcast %cst_171 : f32 to vector<8x128xf32>
    %536 = arith.addf %535, %534 : vector<8x128xf32>
    %537 = arith.divf %535, %536 : vector<8x128xf32>
    %538 = vector.extract_strided_slice %531 {offsets = [0, 128], sizes = [8, 128], strides = [1, 1]} : vector<8x512xf32> to vector<8x128xf32>
    %539 = arith.negf %538 : vector<8x128xf32>
    %540 = math.exp %539 : vector<8x128xf32>
    %cst_172 = arith.constant 1.000000e+00 : f32
    %541 = vector.broadcast %cst_172 : f32 to vector<8x128xf32>
    %542 = arith.addf %541, %540 : vector<8x128xf32>
    %543 = arith.divf %541, %542 : vector<8x128xf32>
    %544 = vector.extract_strided_slice %531 {offsets = [0, 256], sizes = [8, 128], strides = [1, 1]} : vector<8x512xf32> to vector<8x128xf32>
    %545 = math.tanh %544 : vector<8x128xf32>
    %546 = vector.extract_strided_slice %531 {offsets = [0, 384], sizes = [8, 128], strides = [1, 1]} : vector<8x512xf32> to vector<8x128xf32>
    %547 = arith.negf %546 : vector<8x128xf32>
    %548 = math.exp %547 : vector<8x128xf32>
    %cst_173 = arith.constant 1.000000e+00 : f32
    %549 = vector.broadcast %cst_173 : f32 to vector<8x128xf32>
    %550 = arith.addf %549, %548 : vector<8x128xf32>
    %551 = arith.divf %549, %550 : vector<8x128xf32>
    %552 = arith.mulf %543, %527 : vector<8x128xf32>
    %553 = arith.mulf %537, %545 : vector<8x128xf32>
    %554 = arith.addf %552, %553 : vector<8x128xf32>
    %555 = math.tanh %554 : vector<8x128xf32>
    %556 = arith.mulf %551, %555 : vector<8x128xf32>
    %c0_174 = arith.constant 0 : index
    %c0_175 = arith.constant 0 : index
    %557 = vector.load %arg13[%c0_174, %c0_175] : memref<64x256xf32, #tpu.memory_space<vmem>>, vector<8x128xf32>
    tpu.vector_store %arg13[%c0_174, %c0_175], %556 {strides = array<i32>} : memref<64x256xf32, #tpu.memory_space<vmem>>, vector<8x128xf32>,
    %c8_176 = arith.constant 8 : index
    %c0_177 = arith.constant 0 : index
    %558 = vector.load %arg11[%c8_176, %c0_177] : memref<64x512xf32, #tpu.memory_space<vmem>>, vector<8x512xf32>
    %559 = arith.truncf %556 : vector<8x128xf32> to vector<8x128xbf16>
    %cst_178 = arith.constant dense<0.000000e+00> : vector<8x512xf32>
    %560 = tpu.matmul %559, %525, %cst_178 {dimension_numbers = #tpu.dot_dimension_numbers<[1], [0], [0], [1], [0, 0, 1, 1], [], []>} : vector<8x128xbf16>, vector<128x512xbf16>, vector<8x512xf32> -> vector<8x512xf32>
    %561 = arith.addf %558, %560 : vector<8x512xf32>
    %562 = vector.extract_strided_slice %561 {offsets = [0, 0], sizes = [8, 128], strides = [1, 1]} : vector<8x512xf32> to vector<8x128xf32>
    %563 = arith.negf %562 : vector<8x128xf32>
    %564 = math.exp %563 : vector<8x128xf32>
    %cst_179 = arith.constant 1.000000e+00 : f32
    %565 = vector.broadcast %cst_179 : f32 to vector<8x128xf32>
    %566 = arith.addf %565, %564 : vector<8x128xf32>
    %567 = arith.divf %565, %566 : vector<8x128xf32>
    %568 = vector.extract_strided_slice %561 {offsets = [0, 128], sizes = [8, 128], strides = [1, 1]} : vector<8x512xf32> to vector<8x128xf32>
    %569 = arith.negf %568 : vector<8x128xf32>
    %570 = math.exp %569 : vector<8x128xf32>
    %cst_180 = arith.constant 1.000000e+00 : f32
    %571 = vector.broadcast %cst_180 : f32 to vector<8x128xf32>
    %572 = arith.addf %571, %570 : vector<8x128xf32>
    %573 = arith.divf %571, %572 : vector<8x128xf32>
    %574 = vector.extract_strided_slice %561 {offsets = [0, 256], sizes = [8, 128], strides = [1, 1]} : vector<8x512xf32> to vector<8x128xf32>
    %575 = math.tanh %574 : vector<8x128xf32>
    %576 = vector.extract_strided_slice %561 {offsets = [0, 384], sizes = [8, 128], strides = [1, 1]} : vector<8x512xf32> to vector<8x128xf32>
    %577 = arith.negf %576 : vector<8x128xf32>
    %578 = math.exp %577 : vector<8x128xf32>
    %cst_181 = arith.constant 1.000000e+00 : f32
    %579 = vector.broadcast %cst_181 : f32 to vector<8x128xf32>
    %580 = arith.addf %579, %578 : vector<8x128xf32>
    %581 = arith.divf %579, %580 : vector<8x128xf32>
    %582 = arith.mulf %573, %554 : vector<8x128xf32>
    %583 = arith.mulf %567, %575 : vector<8x128xf32>
    %584 = arith.addf %582, %583 : vector<8x128xf32>
    %585 = math.tanh %584 : vector<8x128xf32>
    %586 = arith.mulf %581, %585 : vector<8x128xf32>
    %c8_182 = arith.constant 8 : index
    %c0_183 = arith.constant 0 : index
    %587 = vector.load %arg13[%c8_182, %c0_183] : memref<64x256xf32, #tpu.memory_space<vmem>>, vector<8x128xf32>
    tpu.vector_store %arg13[%c8_182, %c0_183], %586 {strides = array<i32>} : memref<64x256xf32, #tpu.memory_space<vmem>>, vector<8x128xf32>,
    %c16_184 = arith.constant 16 : index
    %c0_185 = arith.constant 0 : index
    %588 = vector.load %arg11[%c16_184, %c0_185] : memref<64x512xf32, #tpu.memory_space<vmem>>, vector<8x512xf32>
    %589 = arith.truncf %586 : vector<8x128xf32> to vector<8x128xbf16>
    %cst_186 = arith.constant dense<0.000000e+00> : vector<8x512xf32>
    %590 = tpu.matmul %589, %525, %cst_186 {dimension_numbers = #tpu.dot_dimension_numbers<[1], [0], [0], [1], [0, 0, 1, 1], [], []>} : vector<8x128xbf16>, vector<128x512xbf16>, vector<8x512xf32> -> vector<8x512xf32>
    %591 = arith.addf %588, %590 : vector<8x512xf32>
    %592 = vector.extract_strided_slice %591 {offsets = [0, 0], sizes = [8, 128], strides = [1, 1]} : vector<8x512xf32> to vector<8x128xf32>
    %593 = arith.negf %592 : vector<8x128xf32>
    %594 = math.exp %593 : vector<8x128xf32>
    %cst_187 = arith.constant 1.000000e+00 : f32
    %595 = vector.broadcast %cst_187 : f32 to vector<8x128xf32>
    %596 = arith.addf %595, %594 : vector<8x128xf32>
    %597 = arith.divf %595, %596 : vector<8x128xf32>
    %598 = vector.extract_strided_slice %591 {offsets = [0, 128], sizes = [8, 128], strides = [1, 1]} : vector<8x512xf32> to vector<8x128xf32>
    %599 = arith.negf %598 : vector<8x128xf32>
    %600 = math.exp %599 : vector<8x128xf32>
    %cst_188 = arith.constant 1.000000e+00 : f32
    %601 = vector.broadcast %cst_188 : f32 to vector<8x128xf32>
    %602 = arith.addf %601, %600 : vector<8x128xf32>
    %603 = arith.divf %601, %602 : vector<8x128xf32>
    %604 = vector.extract_strided_slice %591 {offsets = [0, 256], sizes = [8, 128], strides = [1, 1]} : vector<8x512xf32> to vector<8x128xf32>
    %605 = math.tanh %604 : vector<8x128xf32>
    %606 = vector.extract_strided_slice %591 {offsets = [0, 384], sizes = [8, 128], strides = [1, 1]} : vector<8x512xf32> to vector<8x128xf32>
    %607 = arith.negf %606 : vector<8x128xf32>
    %608 = math.exp %607 : vector<8x128xf32>
    %cst_189 = arith.constant 1.000000e+00 : f32
    %609 = vector.broadcast %cst_189 : f32 to vector<8x128xf32>
    %610 = arith.addf %609, %608 : vector<8x128xf32>
    %611 = arith.divf %609, %610 : vector<8x128xf32>
    %612 = arith.mulf %603, %584 : vector<8x128xf32>
    %613 = arith.mulf %597, %605 : vector<8x128xf32>
    %614 = arith.addf %612, %613 : vector<8x128xf32>
    %615 = math.tanh %614 : vector<8x128xf32>
    %616 = arith.mulf %611, %615 : vector<8x128xf32>
    %c16_190 = arith.constant 16 : index
    %c0_191 = arith.constant 0 : index
    %617 = vector.load %arg13[%c16_190, %c0_191] : memref<64x256xf32, #tpu.memory_space<vmem>>, vector<8x128xf32>
    tpu.vector_store %arg13[%c16_190, %c0_191], %616 {strides = array<i32>} : memref<64x256xf32, #tpu.memory_space<vmem>>, vector<8x128xf32>,
    %c24_192 = arith.constant 24 : index
    %c0_193 = arith.constant 0 : index
    %618 = vector.load %arg11[%c24_192, %c0_193] : memref<64x512xf32, #tpu.memory_space<vmem>>, vector<8x512xf32>
    %619 = arith.truncf %616 : vector<8x128xf32> to vector<8x128xbf16>
    %cst_194 = arith.constant dense<0.000000e+00> : vector<8x512xf32>
    %620 = tpu.matmul %619, %525, %cst_194 {dimension_numbers = #tpu.dot_dimension_numbers<[1], [0], [0], [1], [0, 0, 1, 1], [], []>} : vector<8x128xbf16>, vector<128x512xbf16>, vector<8x512xf32> -> vector<8x512xf32>
    %621 = arith.addf %618, %620 : vector<8x512xf32>
    %622 = vector.extract_strided_slice %621 {offsets = [0, 0], sizes = [8, 128], strides = [1, 1]} : vector<8x512xf32> to vector<8x128xf32>
    %623 = arith.negf %622 : vector<8x128xf32>
    %624 = math.exp %623 : vector<8x128xf32>
    %cst_195 = arith.constant 1.000000e+00 : f32
    %625 = vector.broadcast %cst_195 : f32 to vector<8x128xf32>
    %626 = arith.addf %625, %624 : vector<8x128xf32>
    %627 = arith.divf %625, %626 : vector<8x128xf32>
    %628 = vector.extract_strided_slice %621 {offsets = [0, 128], sizes = [8, 128], strides = [1, 1]} : vector<8x512xf32> to vector<8x128xf32>
    %629 = arith.negf %628 : vector<8x128xf32>
    %630 = math.exp %629 : vector<8x128xf32>
    %cst_196 = arith.constant 1.000000e+00 : f32
    %631 = vector.broadcast %cst_196 : f32 to vector<8x128xf32>
    %632 = arith.addf %631, %630 : vector<8x128xf32>
    %633 = arith.divf %631, %632 : vector<8x128xf32>
    %634 = vector.extract_strided_slice %621 {offsets = [0, 256], sizes = [8, 128], strides = [1, 1]} : vector<8x512xf32> to vector<8x128xf32>
    %635 = math.tanh %634 : vector<8x128xf32>
    %636 = vector.extract_strided_slice %621 {offsets = [0, 384], sizes = [8, 128], strides = [1, 1]} : vector<8x512xf32> to vector<8x128xf32>
    %637 = arith.negf %636 : vector<8x128xf32>
    %638 = math.exp %637 : vector<8x128xf32>
    %cst_197 = arith.constant 1.000000e+00 : f32
    %639 = vector.broadcast %cst_197 : f32 to vector<8x128xf32>
    %640 = arith.addf %639, %638 : vector<8x128xf32>
    %641 = arith.divf %639, %640 : vector<8x128xf32>
    %642 = arith.mulf %633, %614 : vector<8x128xf32>
    %643 = arith.mulf %627, %635 : vector<8x128xf32>
    %644 = arith.addf %642, %643 : vector<8x128xf32>
    %645 = math.tanh %644 : vector<8x128xf32>
    %646 = arith.mulf %641, %645 : vector<8x128xf32>
    %c24_198 = arith.constant 24 : index
    %c0_199 = arith.constant 0 : index
    %647 = vector.load %arg13[%c24_198, %c0_199] : memref<64x256xf32, #tpu.memory_space<vmem>>, vector<8x128xf32>
    tpu.vector_store %arg13[%c24_198, %c0_199], %646 {strides = array<i32>} : memref<64x256xf32, #tpu.memory_space<vmem>>, vector<8x128xf32>,
    %c32_200 = arith.constant 32 : index
    %c0_201 = arith.constant 0 : index
    %648 = vector.load %arg11[%c32_200, %c0_201] : memref<64x512xf32, #tpu.memory_space<vmem>>, vector<8x512xf32>
    %649 = arith.truncf %646 : vector<8x128xf32> to vector<8x128xbf16>
    %cst_202 = arith.constant dense<0.000000e+00> : vector<8x512xf32>
    %650 = tpu.matmul %649, %525, %cst_202 {dimension_numbers = #tpu.dot_dimension_numbers<[1], [0], [0], [1], [0, 0, 1, 1], [], []>} : vector<8x128xbf16>, vector<128x512xbf16>, vector<8x512xf32> -> vector<8x512xf32>
    %651 = arith.addf %648, %650 : vector<8x512xf32>
    %652 = vector.extract_strided_slice %651 {offsets = [0, 0], sizes = [8, 128], strides = [1, 1]} : vector<8x512xf32> to vector<8x128xf32>
    %653 = arith.negf %652 : vector<8x128xf32>
    %654 = math.exp %653 : vector<8x128xf32>
    %cst_203 = arith.constant 1.000000e+00 : f32
    %655 = vector.broadcast %cst_203 : f32 to vector<8x128xf32>
    %656 = arith.addf %655, %654 : vector<8x128xf32>
    %657 = arith.divf %655, %656 : vector<8x128xf32>
    %658 = vector.extract_strided_slice %651 {offsets = [0, 128], sizes = [8, 128], strides = [1, 1]} : vector<8x512xf32> to vector<8x128xf32>
    %659 = arith.negf %658 : vector<8x128xf32>
    %660 = math.exp %659 : vector<8x128xf32>
    %cst_204 = arith.constant 1.000000e+00 : f32
    %661 = vector.broadcast %cst_204 : f32 to vector<8x128xf32>
    %662 = arith.addf %661, %660 : vector<8x128xf32>
    %663 = arith.divf %661, %662 : vector<8x128xf32>
    %664 = vector.extract_strided_slice %651 {offsets = [0, 256], sizes = [8, 128], strides = [1, 1]} : vector<8x512xf32> to vector<8x128xf32>
    %665 = math.tanh %664 : vector<8x128xf32>
    %666 = vector.extract_strided_slice %651 {offsets = [0, 384], sizes = [8, 128], strides = [1, 1]} : vector<8x512xf32> to vector<8x128xf32>
    %667 = arith.negf %666 : vector<8x128xf32>
    %668 = math.exp %667 : vector<8x128xf32>
    %cst_205 = arith.constant 1.000000e+00 : f32
    %669 = vector.broadcast %cst_205 : f32 to vector<8x128xf32>
    %670 = arith.addf %669, %668 : vector<8x128xf32>
    %671 = arith.divf %669, %670 : vector<8x128xf32>
    %672 = arith.mulf %663, %644 : vector<8x128xf32>
    %673 = arith.mulf %657, %665 : vector<8x128xf32>
    %674 = arith.addf %672, %673 : vector<8x128xf32>
    %675 = math.tanh %674 : vector<8x128xf32>
    %676 = arith.mulf %671, %675 : vector<8x128xf32>
    %c32_206 = arith.constant 32 : index
    %c0_207 = arith.constant 0 : index
    %677 = vector.load %arg13[%c32_206, %c0_207] : memref<64x256xf32, #tpu.memory_space<vmem>>, vector<8x128xf32>
    tpu.vector_store %arg13[%c32_206, %c0_207], %676 {strides = array<i32>} : memref<64x256xf32, #tpu.memory_space<vmem>>, vector<8x128xf32>,
    %c40_208 = arith.constant 40 : index
    %c0_209 = arith.constant 0 : index
    %678 = vector.load %arg11[%c40_208, %c0_209] : memref<64x512xf32, #tpu.memory_space<vmem>>, vector<8x512xf32>
    %679 = arith.truncf %676 : vector<8x128xf32> to vector<8x128xbf16>
    %cst_210 = arith.constant dense<0.000000e+00> : vector<8x512xf32>
    %680 = tpu.matmul %679, %525, %cst_210 {dimension_numbers = #tpu.dot_dimension_numbers<[1], [0], [0], [1], [0, 0, 1, 1], [], []>} : vector<8x128xbf16>, vector<128x512xbf16>, vector<8x512xf32> -> vector<8x512xf32>
    %681 = arith.addf %678, %680 : vector<8x512xf32>
    %682 = vector.extract_strided_slice %681 {offsets = [0, 0], sizes = [8, 128], strides = [1, 1]} : vector<8x512xf32> to vector<8x128xf32>
    %683 = arith.negf %682 : vector<8x128xf32>
    %684 = math.exp %683 : vector<8x128xf32>
    %cst_211 = arith.constant 1.000000e+00 : f32
    %685 = vector.broadcast %cst_211 : f32 to vector<8x128xf32>
    %686 = arith.addf %685, %684 : vector<8x128xf32>
    %687 = arith.divf %685, %686 : vector<8x128xf32>
    %688 = vector.extract_strided_slice %681 {offsets = [0, 128], sizes = [8, 128], strides = [1, 1]} : vector<8x512xf32> to vector<8x128xf32>
    %689 = arith.negf %688 : vector<8x128xf32>
    %690 = math.exp %689 : vector<8x128xf32>
    %cst_212 = arith.constant 1.000000e+00 : f32
    %691 = vector.broadcast %cst_212 : f32 to vector<8x128xf32>
    %692 = arith.addf %691, %690 : vector<8x128xf32>
    %693 = arith.divf %691, %692 : vector<8x128xf32>
    %694 = vector.extract_strided_slice %681 {offsets = [0, 256], sizes = [8, 128], strides = [1, 1]} : vector<8x512xf32> to vector<8x128xf32>
    %695 = math.tanh %694 : vector<8x128xf32>
    %696 = vector.extract_strided_slice %681 {offsets = [0, 384], sizes = [8, 128], strides = [1, 1]} : vector<8x512xf32> to vector<8x128xf32>
    %697 = arith.negf %696 : vector<8x128xf32>
    %698 = math.exp %697 : vector<8x128xf32>
    %cst_213 = arith.constant 1.000000e+00 : f32
    %699 = vector.broadcast %cst_213 : f32 to vector<8x128xf32>
    %700 = arith.addf %699, %698 : vector<8x128xf32>
    %701 = arith.divf %699, %700 : vector<8x128xf32>
    %702 = arith.mulf %693, %674 : vector<8x128xf32>
    %703 = arith.mulf %687, %695 : vector<8x128xf32>
    %704 = arith.addf %702, %703 : vector<8x128xf32>
    %705 = math.tanh %704 : vector<8x128xf32>
    %706 = arith.mulf %701, %705 : vector<8x128xf32>
    %c40_214 = arith.constant 40 : index
    %c0_215 = arith.constant 0 : index
    %707 = vector.load %arg13[%c40_214, %c0_215] : memref<64x256xf32, #tpu.memory_space<vmem>>, vector<8x128xf32>
    tpu.vector_store %arg13[%c40_214, %c0_215], %706 {strides = array<i32>} : memref<64x256xf32, #tpu.memory_space<vmem>>, vector<8x128xf32>,
    %c48_216 = arith.constant 48 : index
    %c0_217 = arith.constant 0 : index
    %708 = vector.load %arg11[%c48_216, %c0_217] : memref<64x512xf32, #tpu.memory_space<vmem>>, vector<8x512xf32>
    %709 = arith.truncf %706 : vector<8x128xf32> to vector<8x128xbf16>
    %cst_218 = arith.constant dense<0.000000e+00> : vector<8x512xf32>
    %710 = tpu.matmul %709, %525, %cst_218 {dimension_numbers = #tpu.dot_dimension_numbers<[1], [0], [0], [1], [0, 0, 1, 1], [], []>} : vector<8x128xbf16>, vector<128x512xbf16>, vector<8x512xf32> -> vector<8x512xf32>
    %711 = arith.addf %708, %710 : vector<8x512xf32>
    %712 = vector.extract_strided_slice %711 {offsets = [0, 0], sizes = [8, 128], strides = [1, 1]} : vector<8x512xf32> to vector<8x128xf32>
    %713 = arith.negf %712 : vector<8x128xf32>
    %714 = math.exp %713 : vector<8x128xf32>
    %cst_219 = arith.constant 1.000000e+00 : f32
    %715 = vector.broadcast %cst_219 : f32 to vector<8x128xf32>
    %716 = arith.addf %715, %714 : vector<8x128xf32>
    %717 = arith.divf %715, %716 : vector<8x128xf32>
    %718 = vector.extract_strided_slice %711 {offsets = [0, 128], sizes = [8, 128], strides = [1, 1]} : vector<8x512xf32> to vector<8x128xf32>
    %719 = arith.negf %718 : vector<8x128xf32>
    %720 = math.exp %719 : vector<8x128xf32>
    %cst_220 = arith.constant 1.000000e+00 : f32
    %721 = vector.broadcast %cst_220 : f32 to vector<8x128xf32>
    %722 = arith.addf %721, %720 : vector<8x128xf32>
    %723 = arith.divf %721, %722 : vector<8x128xf32>
    %724 = vector.extract_strided_slice %711 {offsets = [0, 256], sizes = [8, 128], strides = [1, 1]} : vector<8x512xf32> to vector<8x128xf32>
    %725 = math.tanh %724 : vector<8x128xf32>
    %726 = vector.extract_strided_slice %711 {offsets = [0, 384], sizes = [8, 128], strides = [1, 1]} : vector<8x512xf32> to vector<8x128xf32>
    %727 = arith.negf %726 : vector<8x128xf32>
    %728 = math.exp %727 : vector<8x128xf32>
    %cst_221 = arith.constant 1.000000e+00 : f32
    %729 = vector.broadcast %cst_221 : f32 to vector<8x128xf32>
    %730 = arith.addf %729, %728 : vector<8x128xf32>
    %731 = arith.divf %729, %730 : vector<8x128xf32>
    %732 = arith.mulf %723, %704 : vector<8x128xf32>
    %733 = arith.mulf %717, %725 : vector<8x128xf32>
    %734 = arith.addf %732, %733 : vector<8x128xf32>
    %735 = math.tanh %734 : vector<8x128xf32>
    %736 = arith.mulf %731, %735 : vector<8x128xf32>
    %c48_222 = arith.constant 48 : index
    %c0_223 = arith.constant 0 : index
    %737 = vector.load %arg13[%c48_222, %c0_223] : memref<64x256xf32, #tpu.memory_space<vmem>>, vector<8x128xf32>
    tpu.vector_store %arg13[%c48_222, %c0_223], %736 {strides = array<i32>} : memref<64x256xf32, #tpu.memory_space<vmem>>, vector<8x128xf32>,
    %c56_224 = arith.constant 56 : index
    %c0_225 = arith.constant 0 : index
    %738 = vector.load %arg11[%c56_224, %c0_225] : memref<64x512xf32, #tpu.memory_space<vmem>>, vector<8x512xf32>
    %739 = arith.truncf %736 : vector<8x128xf32> to vector<8x128xbf16>
    %cst_226 = arith.constant dense<0.000000e+00> : vector<8x512xf32>
    %740 = tpu.matmul %739, %525, %cst_226 {dimension_numbers = #tpu.dot_dimension_numbers<[1], [0], [0], [1], [0, 0, 1, 1], [], []>} : vector<8x128xbf16>, vector<128x512xbf16>, vector<8x512xf32> -> vector<8x512xf32>
    %741 = arith.addf %738, %740 : vector<8x512xf32>
    %742 = vector.extract_strided_slice %741 {offsets = [0, 0], sizes = [8, 128], strides = [1, 1]} : vector<8x512xf32> to vector<8x128xf32>
    %743 = arith.negf %742 : vector<8x128xf32>
    %744 = math.exp %743 : vector<8x128xf32>
    %cst_227 = arith.constant 1.000000e+00 : f32
    %745 = vector.broadcast %cst_227 : f32 to vector<8x128xf32>
    %746 = arith.addf %745, %744 : vector<8x128xf32>
    %747 = arith.divf %745, %746 : vector<8x128xf32>
    %748 = vector.extract_strided_slice %741 {offsets = [0, 128], sizes = [8, 128], strides = [1, 1]} : vector<8x512xf32> to vector<8x128xf32>
    %749 = arith.negf %748 : vector<8x128xf32>
    %750 = math.exp %749 : vector<8x128xf32>
    %cst_228 = arith.constant 1.000000e+00 : f32
    %751 = vector.broadcast %cst_228 : f32 to vector<8x128xf32>
    %752 = arith.addf %751, %750 : vector<8x128xf32>
    %753 = arith.divf %751, %752 : vector<8x128xf32>
    %754 = vector.extract_strided_slice %741 {offsets = [0, 256], sizes = [8, 128], strides = [1, 1]} : vector<8x512xf32> to vector<8x128xf32>
    %755 = math.tanh %754 : vector<8x128xf32>
    %756 = vector.extract_strided_slice %741 {offsets = [0, 384], sizes = [8, 128], strides = [1, 1]} : vector<8x512xf32> to vector<8x128xf32>
    %757 = arith.negf %756 : vector<8x128xf32>
    %758 = math.exp %757 : vector<8x128xf32>
    %cst_229 = arith.constant 1.000000e+00 : f32
    %759 = vector.broadcast %cst_229 : f32 to vector<8x128xf32>
    %760 = arith.addf %759, %758 : vector<8x128xf32>
    %761 = arith.divf %759, %760 : vector<8x128xf32>
    %762 = arith.mulf %753, %734 : vector<8x128xf32>
    %763 = arith.mulf %747, %755 : vector<8x128xf32>
    %764 = arith.addf %762, %763 : vector<8x128xf32>
    %765 = math.tanh %764 : vector<8x128xf32>
    %766 = arith.mulf %761, %765 : vector<8x128xf32>
    %c56_230 = arith.constant 56 : index
    %c0_231 = arith.constant 0 : index
    %767 = vector.load %arg13[%c56_230, %c0_231] : memref<64x256xf32, #tpu.memory_space<vmem>>, vector<8x128xf32>
    tpu.vector_store %arg13[%c56_230, %c0_231], %766 {strides = array<i32>} : memref<64x256xf32, #tpu.memory_space<vmem>>, vector<8x128xf32>,
    %c1_232 = arith.constant 1 : index
    %c0_233 = arith.constant 0 : index
    %c0_234 = arith.constant 0 : index
    %768 = vector.load %arg5[%c1_232, %c0_233, %c0_234] : memref<2x256x512xbf16, #tpu.memory_space<vmem>>, vector<1x256x512xbf16>
    %769 = vector.shape_cast %768 : vector<1x256x512xbf16> to vector<256x512xbf16>
    %cst_235 = arith.constant dense<0.000000e+00> : vector<64x512xf32>
    %770 = tpu.matmul %515, %769, %cst_235 {dimension_numbers = #tpu.dot_dimension_numbers<[1], [0], [0], [1], [0, 0, 1, 1], [], []>} : vector<64x256xbf16>, vector<256x512xbf16>, vector<64x512xf32> -> vector<64x512xf32>
    %c1_236 = arith.constant 1 : index
    %c0_237 = arith.constant 0 : index
    %c0_238 = arith.constant 0 : index
    %771 = vector.load %arg7[%c1_236, %c0_237, %c0_238] : memref<2x1x512xf32, #tpu.memory_space<vmem>>, vector<1x1x512xf32>
    %772 = vector.shape_cast %771 : vector<1x1x512xf32> to vector<1x512xf32>
    %773 = vector.broadcast %772 : vector<1x512xf32> to vector<64x512xf32>
    %774 = arith.addf %770, %773 : vector<64x512xf32>
    %c0_239 = arith.constant 0 : index
    %c0_240 = arith.constant 0 : index
    %775 = vector.load %arg11[%c0_239, %c0_240] : memref<64x512xf32, #tpu.memory_space<vmem>>, vector<64x512xf32>
    tpu.vector_store %arg11[%c0_239, %c0_240], %774 {strides = array<i32>} : memref<64x512xf32, #tpu.memory_space<vmem>>, vector<64x512xf32>,
    %c1_241 = arith.constant 1 : index
    %c0_242 = arith.constant 0 : index
    %c0_243 = arith.constant 0 : index
    %776 = vector.load %arg6[%c1_241, %c0_242, %c0_243] : memref<2x128x512xbf16, #tpu.memory_space<vmem>>, vector<1x128x512xbf16>
    %777 = vector.shape_cast %776 : vector<1x128x512xbf16> to vector<128x512xbf16>
    %cst_244 = arith.constant 0.000000e+00 : f32
    %778 = vector.broadcast %cst_244 : f32 to vector<8x128xf32>
    %cst_245 = arith.constant 0.000000e+00 : f32
    %779 = vector.broadcast %cst_245 : f32 to vector<8x128xf32>
    %c56_246 = arith.constant 56 : index
    %c0_247 = arith.constant 0 : index
    %780 = vector.load %arg11[%c56_246, %c0_247] : memref<64x512xf32, #tpu.memory_space<vmem>>, vector<8x512xf32>
    %781 = arith.truncf %778 : vector<8x128xf32> to vector<8x128xbf16>
    %cst_248 = arith.constant dense<0.000000e+00> : vector<8x512xf32>
    %782 = tpu.matmul %781, %777, %cst_248 {dimension_numbers = #tpu.dot_dimension_numbers<[1], [0], [0], [1], [0, 0, 1, 1], [], []>} : vector<8x128xbf16>, vector<128x512xbf16>, vector<8x512xf32> -> vector<8x512xf32>
    %783 = arith.addf %780, %782 : vector<8x512xf32>
    %784 = vector.extract_strided_slice %783 {offsets = [0, 0], sizes = [8, 128], strides = [1, 1]} : vector<8x512xf32> to vector<8x128xf32>
    %785 = arith.negf %784 : vector<8x128xf32>
    %786 = math.exp %785 : vector<8x128xf32>
    %cst_249 = arith.constant 1.000000e+00 : f32
    %787 = vector.broadcast %cst_249 : f32 to vector<8x128xf32>
    %788 = arith.addf %787, %786 : vector<8x128xf32>
    %789 = arith.divf %787, %788 : vector<8x128xf32>
    %790 = vector.extract_strided_slice %783 {offsets = [0, 128], sizes = [8, 128], strides = [1, 1]} : vector<8x512xf32> to vector<8x128xf32>
    %791 = arith.negf %790 : vector<8x128xf32>
    %792 = math.exp %791 : vector<8x128xf32>
    %cst_250 = arith.constant 1.000000e+00 : f32
    %793 = vector.broadcast %cst_250 : f32 to vector<8x128xf32>
    %794 = arith.addf %793, %792 : vector<8x128xf32>
    %795 = arith.divf %793, %794 : vector<8x128xf32>
    %796 = vector.extract_strided_slice %783 {offsets = [0, 256], sizes = [8, 128], strides = [1, 1]} : vector<8x512xf32> to vector<8x128xf32>
    %797 = math.tanh %796 : vector<8x128xf32>
    %798 = vector.extract_strided_slice %783 {offsets = [0, 384], sizes = [8, 128], strides = [1, 1]} : vector<8x512xf32> to vector<8x128xf32>
    %799 = arith.negf %798 : vector<8x128xf32>
    %800 = math.exp %799 : vector<8x128xf32>
    %cst_251 = arith.constant 1.000000e+00 : f32
    %801 = vector.broadcast %cst_251 : f32 to vector<8x128xf32>
    %802 = arith.addf %801, %800 : vector<8x128xf32>
    %803 = arith.divf %801, %802 : vector<8x128xf32>
    %804 = arith.mulf %795, %779 : vector<8x128xf32>
    %805 = arith.mulf %789, %797 : vector<8x128xf32>
    %806 = arith.addf %804, %805 : vector<8x128xf32>
    %807 = math.tanh %806 : vector<8x128xf32>
    %808 = arith.mulf %803, %807 : vector<8x128xf32>
    %c56_252 = arith.constant 56 : index
    %c128_253 = arith.constant 128 : index
    %809 = vector.load %arg13[%c56_252, %c128_253] : memref<64x256xf32, #tpu.memory_space<vmem>>, vector<8x128xf32>
    tpu.vector_store %arg13[%c56_252, %c128_253], %808 {strides = array<i32>} : memref<64x256xf32, #tpu.memory_space<vmem>>, vector<8x128xf32>,
    %c48_254 = arith.constant 48 : index
    %c0_255 = arith.constant 0 : index
    %810 = vector.load %arg11[%c48_254, %c0_255] : memref<64x512xf32, #tpu.memory_space<vmem>>, vector<8x512xf32>
    %811 = arith.truncf %808 : vector<8x128xf32> to vector<8x128xbf16>
    %cst_256 = arith.constant dense<0.000000e+00> : vector<8x512xf32>
    %812 = tpu.matmul %811, %777, %cst_256 {dimension_numbers = #tpu.dot_dimension_numbers<[1], [0], [0], [1], [0, 0, 1, 1], [], []>} : vector<8x128xbf16>, vector<128x512xbf16>, vector<8x512xf32> -> vector<8x512xf32>
    %813 = arith.addf %810, %812 : vector<8x512xf32>
    %814 = vector.extract_strided_slice %813 {offsets = [0, 0], sizes = [8, 128], strides = [1, 1]} : vector<8x512xf32> to vector<8x128xf32>
    %815 = arith.negf %814 : vector<8x128xf32>
    %816 = math.exp %815 : vector<8x128xf32>
    %cst_257 = arith.constant 1.000000e+00 : f32
    %817 = vector.broadcast %cst_257 : f32 to vector<8x128xf32>
    %818 = arith.addf %817, %816 : vector<8x128xf32>
    %819 = arith.divf %817, %818 : vector<8x128xf32>
    %820 = vector.extract_strided_slice %813 {offsets = [0, 128], sizes = [8, 128], strides = [1, 1]} : vector<8x512xf32> to vector<8x128xf32>
    %821 = arith.negf %820 : vector<8x128xf32>
    %822 = math.exp %821 : vector<8x128xf32>
    %cst_258 = arith.constant 1.000000e+00 : f32
    %823 = vector.broadcast %cst_258 : f32 to vector<8x128xf32>
    %824 = arith.addf %823, %822 : vector<8x128xf32>
    %825 = arith.divf %823, %824 : vector<8x128xf32>
    %826 = vector.extract_strided_slice %813 {offsets = [0, 256], sizes = [8, 128], strides = [1, 1]} : vector<8x512xf32> to vector<8x128xf32>
    %827 = math.tanh %826 : vector<8x128xf32>
    %828 = vector.extract_strided_slice %813 {offsets = [0, 384], sizes = [8, 128], strides = [1, 1]} : vector<8x512xf32> to vector<8x128xf32>
    %829 = arith.negf %828 : vector<8x128xf32>
    %830 = math.exp %829 : vector<8x128xf32>
    %cst_259 = arith.constant 1.000000e+00 : f32
    %831 = vector.broadcast %cst_259 : f32 to vector<8x128xf32>
    %832 = arith.addf %831, %830 : vector<8x128xf32>
    %833 = arith.divf %831, %832 : vector<8x128xf32>
    %834 = arith.mulf %825, %806 : vector<8x128xf32>
    %835 = arith.mulf %819, %827 : vector<8x128xf32>
    %836 = arith.addf %834, %835 : vector<8x128xf32>
    %837 = math.tanh %836 : vector<8x128xf32>
    %838 = arith.mulf %833, %837 : vector<8x128xf32>
    %c48_260 = arith.constant 48 : index
    %c128_261 = arith.constant 128 : index
    %839 = vector.load %arg13[%c48_260, %c128_261] : memref<64x256xf32, #tpu.memory_space<vmem>>, vector<8x128xf32>
    tpu.vector_store %arg13[%c48_260, %c128_261], %838 {strides = array<i32>} : memref<64x256xf32, #tpu.memory_space<vmem>>, vector<8x128xf32>,
    %c40_262 = arith.constant 40 : index
    %c0_263 = arith.constant 0 : index
    %840 = vector.load %arg11[%c40_262, %c0_263] : memref<64x512xf32, #tpu.memory_space<vmem>>, vector<8x512xf32>
    %841 = arith.truncf %838 : vector<8x128xf32> to vector<8x128xbf16>
    %cst_264 = arith.constant dense<0.000000e+00> : vector<8x512xf32>
    %842 = tpu.matmul %841, %777, %cst_264 {dimension_numbers = #tpu.dot_dimension_numbers<[1], [0], [0], [1], [0, 0, 1, 1], [], []>} : vector<8x128xbf16>, vector<128x512xbf16>, vector<8x512xf32> -> vector<8x512xf32>
    %843 = arith.addf %840, %842 : vector<8x512xf32>
    %844 = vector.extract_strided_slice %843 {offsets = [0, 0], sizes = [8, 128], strides = [1, 1]} : vector<8x512xf32> to vector<8x128xf32>
    %845 = arith.negf %844 : vector<8x128xf32>
    %846 = math.exp %845 : vector<8x128xf32>
    %cst_265 = arith.constant 1.000000e+00 : f32
    %847 = vector.broadcast %cst_265 : f32 to vector<8x128xf32>
    %848 = arith.addf %847, %846 : vector<8x128xf32>
    %849 = arith.divf %847, %848 : vector<8x128xf32>
    %850 = vector.extract_strided_slice %843 {offsets = [0, 128], sizes = [8, 128], strides = [1, 1]} : vector<8x512xf32> to vector<8x128xf32>
    %851 = arith.negf %850 : vector<8x128xf32>
    %852 = math.exp %851 : vector<8x128xf32>
    %cst_266 = arith.constant 1.000000e+00 : f32
    %853 = vector.broadcast %cst_266 : f32 to vector<8x128xf32>
    %854 = arith.addf %853, %852 : vector<8x128xf32>
    %855 = arith.divf %853, %854 : vector<8x128xf32>
    %856 = vector.extract_strided_slice %843 {offsets = [0, 256], sizes = [8, 128], strides = [1, 1]} : vector<8x512xf32> to vector<8x128xf32>
    %857 = math.tanh %856 : vector<8x128xf32>
    %858 = vector.extract_strided_slice %843 {offsets = [0, 384], sizes = [8, 128], strides = [1, 1]} : vector<8x512xf32> to vector<8x128xf32>
    %859 = arith.negf %858 : vector<8x128xf32>
    %860 = math.exp %859 : vector<8x128xf32>
    %cst_267 = arith.constant 1.000000e+00 : f32
    %861 = vector.broadcast %cst_267 : f32 to vector<8x128xf32>
    %862 = arith.addf %861, %860 : vector<8x128xf32>
    %863 = arith.divf %861, %862 : vector<8x128xf32>
    %864 = arith.mulf %855, %836 : vector<8x128xf32>
    %865 = arith.mulf %849, %857 : vector<8x128xf32>
    %866 = arith.addf %864, %865 : vector<8x128xf32>
    %867 = math.tanh %866 : vector<8x128xf32>
    %868 = arith.mulf %863, %867 : vector<8x128xf32>
    %c40_268 = arith.constant 40 : index
    %c128_269 = arith.constant 128 : index
    %869 = vector.load %arg13[%c40_268, %c128_269] : memref<64x256xf32, #tpu.memory_space<vmem>>, vector<8x128xf32>
    tpu.vector_store %arg13[%c40_268, %c128_269], %868 {strides = array<i32>} : memref<64x256xf32, #tpu.memory_space<vmem>>, vector<8x128xf32>,
    %c32_270 = arith.constant 32 : index
    %c0_271 = arith.constant 0 : index
    %870 = vector.load %arg11[%c32_270, %c0_271] : memref<64x512xf32, #tpu.memory_space<vmem>>, vector<8x512xf32>
    %871 = arith.truncf %868 : vector<8x128xf32> to vector<8x128xbf16>
    %cst_272 = arith.constant dense<0.000000e+00> : vector<8x512xf32>
    %872 = tpu.matmul %871, %777, %cst_272 {dimension_numbers = #tpu.dot_dimension_numbers<[1], [0], [0], [1], [0, 0, 1, 1], [], []>} : vector<8x128xbf16>, vector<128x512xbf16>, vector<8x512xf32> -> vector<8x512xf32>
    %873 = arith.addf %870, %872 : vector<8x512xf32>
    %874 = vector.extract_strided_slice %873 {offsets = [0, 0], sizes = [8, 128], strides = [1, 1]} : vector<8x512xf32> to vector<8x128xf32>
    %875 = arith.negf %874 : vector<8x128xf32>
    %876 = math.exp %875 : vector<8x128xf32>
    %cst_273 = arith.constant 1.000000e+00 : f32
    %877 = vector.broadcast %cst_273 : f32 to vector<8x128xf32>
    %878 = arith.addf %877, %876 : vector<8x128xf32>
    %879 = arith.divf %877, %878 : vector<8x128xf32>
    %880 = vector.extract_strided_slice %873 {offsets = [0, 128], sizes = [8, 128], strides = [1, 1]} : vector<8x512xf32> to vector<8x128xf32>
    %881 = arith.negf %880 : vector<8x128xf32>
    %882 = math.exp %881 : vector<8x128xf32>
    %cst_274 = arith.constant 1.000000e+00 : f32
    %883 = vector.broadcast %cst_274 : f32 to vector<8x128xf32>
    %884 = arith.addf %883, %882 : vector<8x128xf32>
    %885 = arith.divf %883, %884 : vector<8x128xf32>
    %886 = vector.extract_strided_slice %873 {offsets = [0, 256], sizes = [8, 128], strides = [1, 1]} : vector<8x512xf32> to vector<8x128xf32>
    %887 = math.tanh %886 : vector<8x128xf32>
    %888 = vector.extract_strided_slice %873 {offsets = [0, 384], sizes = [8, 128], strides = [1, 1]} : vector<8x512xf32> to vector<8x128xf32>
    %889 = arith.negf %888 : vector<8x128xf32>
    %890 = math.exp %889 : vector<8x128xf32>
    %cst_275 = arith.constant 1.000000e+00 : f32
    %891 = vector.broadcast %cst_275 : f32 to vector<8x128xf32>
    %892 = arith.addf %891, %890 : vector<8x128xf32>
    %893 = arith.divf %891, %892 : vector<8x128xf32>
    %894 = arith.mulf %885, %866 : vector<8x128xf32>
    %895 = arith.mulf %879, %887 : vector<8x128xf32>
    %896 = arith.addf %894, %895 : vector<8x128xf32>
    %897 = math.tanh %896 : vector<8x128xf32>
    %898 = arith.mulf %893, %897 : vector<8x128xf32>
    %c32_276 = arith.constant 32 : index
    %c128_277 = arith.constant 128 : index
    %899 = vector.load %arg13[%c32_276, %c128_277] : memref<64x256xf32, #tpu.memory_space<vmem>>, vector<8x128xf32>
    tpu.vector_store %arg13[%c32_276, %c128_277], %898 {strides = array<i32>} : memref<64x256xf32, #tpu.memory_space<vmem>>, vector<8x128xf32>,
    %c24_278 = arith.constant 24 : index
    %c0_279 = arith.constant 0 : index
    %900 = vector.load %arg11[%c24_278, %c0_279] : memref<64x512xf32, #tpu.memory_space<vmem>>, vector<8x512xf32>
    %901 = arith.truncf %898 : vector<8x128xf32> to vector<8x128xbf16>
    %cst_280 = arith.constant dense<0.000000e+00> : vector<8x512xf32>
    %902 = tpu.matmul %901, %777, %cst_280 {dimension_numbers = #tpu.dot_dimension_numbers<[1], [0], [0], [1], [0, 0, 1, 1], [], []>} : vector<8x128xbf16>, vector<128x512xbf16>, vector<8x512xf32> -> vector<8x512xf32>
    %903 = arith.addf %900, %902 : vector<8x512xf32>
    %904 = vector.extract_strided_slice %903 {offsets = [0, 0], sizes = [8, 128], strides = [1, 1]} : vector<8x512xf32> to vector<8x128xf32>
    %905 = arith.negf %904 : vector<8x128xf32>
    %906 = math.exp %905 : vector<8x128xf32>
    %cst_281 = arith.constant 1.000000e+00 : f32
    %907 = vector.broadcast %cst_281 : f32 to vector<8x128xf32>
    %908 = arith.addf %907, %906 : vector<8x128xf32>
    %909 = arith.divf %907, %908 : vector<8x128xf32>
    %910 = vector.extract_strided_slice %903 {offsets = [0, 128], sizes = [8, 128], strides = [1, 1]} : vector<8x512xf32> to vector<8x128xf32>
    %911 = arith.negf %910 : vector<8x128xf32>
    %912 = math.exp %911 : vector<8x128xf32>
    %cst_282 = arith.constant 1.000000e+00 : f32
    %913 = vector.broadcast %cst_282 : f32 to vector<8x128xf32>
    %914 = arith.addf %913, %912 : vector<8x128xf32>
    %915 = arith.divf %913, %914 : vector<8x128xf32>
    %916 = vector.extract_strided_slice %903 {offsets = [0, 256], sizes = [8, 128], strides = [1, 1]} : vector<8x512xf32> to vector<8x128xf32>
    %917 = math.tanh %916 : vector<8x128xf32>
    %918 = vector.extract_strided_slice %903 {offsets = [0, 384], sizes = [8, 128], strides = [1, 1]} : vector<8x512xf32> to vector<8x128xf32>
    %919 = arith.negf %918 : vector<8x128xf32>
    %920 = math.exp %919 : vector<8x128xf32>
    %cst_283 = arith.constant 1.000000e+00 : f32
    %921 = vector.broadcast %cst_283 : f32 to vector<8x128xf32>
    %922 = arith.addf %921, %920 : vector<8x128xf32>
    %923 = arith.divf %921, %922 : vector<8x128xf32>
    %924 = arith.mulf %915, %896 : vector<8x128xf32>
    %925 = arith.mulf %909, %917 : vector<8x128xf32>
    %926 = arith.addf %924, %925 : vector<8x128xf32>
    %927 = math.tanh %926 : vector<8x128xf32>
    %928 = arith.mulf %923, %927 : vector<8x128xf32>
    %c24_284 = arith.constant 24 : index
    %c128_285 = arith.constant 128 : index
    %929 = vector.load %arg13[%c24_284, %c128_285] : memref<64x256xf32, #tpu.memory_space<vmem>>, vector<8x128xf32>
    tpu.vector_store %arg13[%c24_284, %c128_285], %928 {strides = array<i32>} : memref<64x256xf32, #tpu.memory_space<vmem>>, vector<8x128xf32>,
    %c16_286 = arith.constant 16 : index
    %c0_287 = arith.constant 0 : index
    %930 = vector.load %arg11[%c16_286, %c0_287] : memref<64x512xf32, #tpu.memory_space<vmem>>, vector<8x512xf32>
    %931 = arith.truncf %928 : vector<8x128xf32> to vector<8x128xbf16>
    %cst_288 = arith.constant dense<0.000000e+00> : vector<8x512xf32>
    %932 = tpu.matmul %931, %777, %cst_288 {dimension_numbers = #tpu.dot_dimension_numbers<[1], [0], [0], [1], [0, 0, 1, 1], [], []>} : vector<8x128xbf16>, vector<128x512xbf16>, vector<8x512xf32> -> vector<8x512xf32>
    %933 = arith.addf %930, %932 : vector<8x512xf32>
    %934 = vector.extract_strided_slice %933 {offsets = [0, 0], sizes = [8, 128], strides = [1, 1]} : vector<8x512xf32> to vector<8x128xf32>
    %935 = arith.negf %934 : vector<8x128xf32>
    %936 = math.exp %935 : vector<8x128xf32>
    %cst_289 = arith.constant 1.000000e+00 : f32
    %937 = vector.broadcast %cst_289 : f32 to vector<8x128xf32>
    %938 = arith.addf %937, %936 : vector<8x128xf32>
    %939 = arith.divf %937, %938 : vector<8x128xf32>
    %940 = vector.extract_strided_slice %933 {offsets = [0, 128], sizes = [8, 128], strides = [1, 1]} : vector<8x512xf32> to vector<8x128xf32>
    %941 = arith.negf %940 : vector<8x128xf32>
    %942 = math.exp %941 : vector<8x128xf32>
    %cst_290 = arith.constant 1.000000e+00 : f32
    %943 = vector.broadcast %cst_290 : f32 to vector<8x128xf32>
    %944 = arith.addf %943, %942 : vector<8x128xf32>
    %945 = arith.divf %943, %944 : vector<8x128xf32>
    %946 = vector.extract_strided_slice %933 {offsets = [0, 256], sizes = [8, 128], strides = [1, 1]} : vector<8x512xf32> to vector<8x128xf32>
    %947 = math.tanh %946 : vector<8x128xf32>
    %948 = vector.extract_strided_slice %933 {offsets = [0, 384], sizes = [8, 128], strides = [1, 1]} : vector<8x512xf32> to vector<8x128xf32>
    %949 = arith.negf %948 : vector<8x128xf32>
    %950 = math.exp %949 : vector<8x128xf32>
    %cst_291 = arith.constant 1.000000e+00 : f32
    %951 = vector.broadcast %cst_291 : f32 to vector<8x128xf32>
    %952 = arith.addf %951, %950 : vector<8x128xf32>
    %953 = arith.divf %951, %952 : vector<8x128xf32>
    %954 = arith.mulf %945, %926 : vector<8x128xf32>
    %955 = arith.mulf %939, %947 : vector<8x128xf32>
    %956 = arith.addf %954, %955 : vector<8x128xf32>
    %957 = math.tanh %956 : vector<8x128xf32>
    %958 = arith.mulf %953, %957 : vector<8x128xf32>
    %c16_292 = arith.constant 16 : index
    %c128_293 = arith.constant 128 : index
    %959 = vector.load %arg13[%c16_292, %c128_293] : memref<64x256xf32, #tpu.memory_space<vmem>>, vector<8x128xf32>
    tpu.vector_store %arg13[%c16_292, %c128_293], %958 {strides = array<i32>} : memref<64x256xf32, #tpu.memory_space<vmem>>, vector<8x128xf32>,
    %c8_294 = arith.constant 8 : index
    %c0_295 = arith.constant 0 : index
    %960 = vector.load %arg11[%c8_294, %c0_295] : memref<64x512xf32, #tpu.memory_space<vmem>>, vector<8x512xf32>
    %961 = arith.truncf %958 : vector<8x128xf32> to vector<8x128xbf16>
    %cst_296 = arith.constant dense<0.000000e+00> : vector<8x512xf32>
    %962 = tpu.matmul %961, %777, %cst_296 {dimension_numbers = #tpu.dot_dimension_numbers<[1], [0], [0], [1], [0, 0, 1, 1], [], []>} : vector<8x128xbf16>, vector<128x512xbf16>, vector<8x512xf32> -> vector<8x512xf32>
    %963 = arith.addf %960, %962 : vector<8x512xf32>
    %964 = vector.extract_strided_slice %963 {offsets = [0, 0], sizes = [8, 128], strides = [1, 1]} : vector<8x512xf32> to vector<8x128xf32>
    %965 = arith.negf %964 : vector<8x128xf32>
    %966 = math.exp %965 : vector<8x128xf32>
    %cst_297 = arith.constant 1.000000e+00 : f32
    %967 = vector.broadcast %cst_297 : f32 to vector<8x128xf32>
    %968 = arith.addf %967, %966 : vector<8x128xf32>
    %969 = arith.divf %967, %968 : vector<8x128xf32>
    %970 = vector.extract_strided_slice %963 {offsets = [0, 128], sizes = [8, 128], strides = [1, 1]} : vector<8x512xf32> to vector<8x128xf32>
    %971 = arith.negf %970 : vector<8x128xf32>
    %972 = math.exp %971 : vector<8x128xf32>
    %cst_298 = arith.constant 1.000000e+00 : f32
    %973 = vector.broadcast %cst_298 : f32 to vector<8x128xf32>
    %974 = arith.addf %973, %972 : vector<8x128xf32>
    %975 = arith.divf %973, %974 : vector<8x128xf32>
    %976 = vector.extract_strided_slice %963 {offsets = [0, 256], sizes = [8, 128], strides = [1, 1]} : vector<8x512xf32> to vector<8x128xf32>
    %977 = math.tanh %976 : vector<8x128xf32>
    %978 = vector.extract_strided_slice %963 {offsets = [0, 384], sizes = [8, 128], strides = [1, 1]} : vector<8x512xf32> to vector<8x128xf32>
    %979 = arith.negf %978 : vector<8x128xf32>
    %980 = math.exp %979 : vector<8x128xf32>
    %cst_299 = arith.constant 1.000000e+00 : f32
    %981 = vector.broadcast %cst_299 : f32 to vector<8x128xf32>
    %982 = arith.addf %981, %980 : vector<8x128xf32>
    %983 = arith.divf %981, %982 : vector<8x128xf32>
    %984 = arith.mulf %975, %956 : vector<8x128xf32>
    %985 = arith.mulf %969, %977 : vector<8x128xf32>
    %986 = arith.addf %984, %985 : vector<8x128xf32>
    %987 = math.tanh %986 : vector<8x128xf32>
    %988 = arith.mulf %983, %987 : vector<8x128xf32>
    %c8_300 = arith.constant 8 : index
    %c128_301 = arith.constant 128 : index
    %989 = vector.load %arg13[%c8_300, %c128_301] : memref<64x256xf32, #tpu.memory_space<vmem>>, vector<8x128xf32>
    tpu.vector_store %arg13[%c8_300, %c128_301], %988 {strides = array<i32>} : memref<64x256xf32, #tpu.memory_space<vmem>>, vector<8x128xf32>,
    %c0_302 = arith.constant 0 : index
    %c0_303 = arith.constant 0 : index
    %990 = vector.load %arg11[%c0_302, %c0_303] : memref<64x512xf32, #tpu.memory_space<vmem>>, vector<8x512xf32>
    %991 = arith.truncf %988 : vector<8x128xf32> to vector<8x128xbf16>
    %cst_304 = arith.constant dense<0.000000e+00> : vector<8x512xf32>
    %992 = tpu.matmul %991, %777, %cst_304 {dimension_numbers = #tpu.dot_dimension_numbers<[1], [0], [0], [1], [0, 0, 1, 1], [], []>} : vector<8x128xbf16>, vector<128x512xbf16>, vector<8x512xf32> -> vector<8x512xf32>
    %993 = arith.addf %990, %992 : vector<8x512xf32>
    %994 = vector.extract_strided_slice %993 {offsets = [0, 0], sizes = [8, 128], strides = [1, 1]} : vector<8x512xf32> to vector<8x128xf32>
    %995 = arith.negf %994 : vector<8x128xf32>
    %996 = math.exp %995 : vector<8x128xf32>
    %cst_305 = arith.constant 1.000000e+00 : f32
    %997 = vector.broadcast %cst_305 : f32 to vector<8x128xf32>
    %998 = arith.addf %997, %996 : vector<8x128xf32>
    %999 = arith.divf %997, %998 : vector<8x128xf32>
    %1000 = vector.extract_strided_slice %993 {offsets = [0, 128], sizes = [8, 128], strides = [1, 1]} : vector<8x512xf32> to vector<8x128xf32>
    %1001 = arith.negf %1000 : vector<8x128xf32>
    %1002 = math.exp %1001 : vector<8x128xf32>
    %cst_306 = arith.constant 1.000000e+00 : f32
    %1003 = vector.broadcast %cst_306 : f32 to vector<8x128xf32>
    %1004 = arith.addf %1003, %1002 : vector<8x128xf32>
    %1005 = arith.divf %1003, %1004 : vector<8x128xf32>
    %1006 = vector.extract_strided_slice %993 {offsets = [0, 256], sizes = [8, 128], strides = [1, 1]} : vector<8x512xf32> to vector<8x128xf32>
    %1007 = math.tanh %1006 : vector<8x128xf32>
    %1008 = vector.extract_strided_slice %993 {offsets = [0, 384], sizes = [8, 128], strides = [1, 1]} : vector<8x512xf32> to vector<8x128xf32>
    %1009 = arith.negf %1008 : vector<8x128xf32>
    %1010 = math.exp %1009 : vector<8x128xf32>
    %cst_307 = arith.constant 1.000000e+00 : f32
    %1011 = vector.broadcast %cst_307 : f32 to vector<8x128xf32>
    %1012 = arith.addf %1011, %1010 : vector<8x128xf32>
    %1013 = arith.divf %1011, %1012 : vector<8x128xf32>
    %1014 = arith.mulf %1005, %986 : vector<8x128xf32>
    %1015 = arith.mulf %999, %1007 : vector<8x128xf32>
    %1016 = arith.addf %1014, %1015 : vector<8x128xf32>
    %1017 = math.tanh %1016 : vector<8x128xf32>
    %1018 = arith.mulf %1013, %1017 : vector<8x128xf32>
    %c0_308 = arith.constant 0 : index
    %c128_309 = arith.constant 128 : index
    %1019 = vector.load %arg13[%c0_308, %c128_309] : memref<64x256xf32, #tpu.memory_space<vmem>>, vector<8x128xf32>
    tpu.vector_store %arg13[%c0_308, %c128_309], %1018 {strides = array<i32>} : memref<64x256xf32, #tpu.memory_space<vmem>>, vector<8x128xf32>,
    %c0_310 = arith.constant 0 : index
    %c0_311 = arith.constant 0 : index
    %1020 = vector.load %arg13[%c0_310, %c0_311] : memref<64x256xf32, #tpu.memory_space<vmem>>, vector<64x256xf32>
    %1021 = arith.truncf %1020 : vector<64x256xf32> to vector<64x256xbf16>
    %c0_312 = arith.constant 0 : index
    %c0_313 = arith.constant 0 : index
    %1022 = vector.load %arg8[%c0_312, %c0_313] : memref<256x128xbf16, #tpu.memory_space<vmem>>, vector<256x128xbf16>
    %cst_314 = arith.constant dense<0.000000e+00> : vector<64x128xf32>
    %1023 = tpu.matmul %1021, %1022, %cst_314 {dimension_numbers = #tpu.dot_dimension_numbers<[1], [0], [0], [1], [0, 0, 1, 1], [], []>} : vector<64x256xbf16>, vector<256x128xbf16>, vector<64x128xf32> -> vector<64x128xf32>
    %c0_315 = arith.constant 0 : index
    %c0_316 = arith.constant 0 : index
    %1024 = vector.load %arg9[%c0_315, %c0_316] : memref<1x128xf32, #tpu.memory_space<vmem>>, vector<1x128xf32>
    %1025 = vector.broadcast %1024 : vector<1x128xf32> to vector<64x128xf32>
    %1026 = arith.addf %1023, %1025 : vector<64x128xf32>
    %c0_317 = arith.constant 0 : index
    %c0_318 = arith.constant 0 : index
    %1027 = vector.load %arg10[%c0_317, %c0_318] : memref<64x128xf32, #tpu.memory_space<vmem>>, vector<64x128xf32>
    tpu.vector_store %arg10[%c0_317, %c0_318], %1026 {strides = array<i32>} : memref<64x128xf32, #tpu.memory_space<vmem>>, vector<64x128xf32>,
    return
  }
}

</mosaic_0001>

<llo_original>
// kernel: lstm_model_forward.1
$region0: #{lstm_model_forward.1}
  #allocation0 [shape = 'u32[]', space=smem, size = 0x4, offset = 0x4, fixed_abs, tag = 'smem constant byte address 0x4 - core index']
  #allocation1 [shape = 'u32[144,128]{1,0:T(1,128)}', space=vmem, size = 0x12000, scoped, tag = 'internal scratch']
  #allocation2 [shape = 'f32[64,512]{1,0:T(8,128)}', space=vmem, size = 0x20000, scoped, tag = 'scratch operand']
  #allocation3 [shape = 'f32[64,256]{1,0:T(8,128)}', space=vmem, size = 0x10000, scoped, tag = 'scratch operand']
  #allocation4 [shape = 'f32[64,256]{1,0:T(8,128)}', space=vmem, size = 0x10000, scoped, tag = 'scratch operand']
  %s0 = inlined_call_operand.vmem [shape: s32[64,1], index: 0, kind: input, shape index: {}]
  %s1 = inlined_call_operand.vmem [shape: f32[128,128], index: 1, kind: input, shape index: {}]
  %s2 = inlined_call_operand.vmem [shape: bf16[2,128,512], index: 2, kind: input, shape index: {}]
  %s3 = inlined_call_operand.vmem [shape: bf16[2,128,512], index: 3, kind: input, shape index: {}]
  %s4 = inlined_call_operand.vmem [shape: f32[2,1,512], index: 4, kind: input, shape index: {}]
  %s5 = inlined_call_operand.vmem [shape: bf16[2,256,512], index: 5, kind: input, shape index: {}]
  %s6 = inlined_call_operand.vmem [shape: bf16[2,128,512], index: 6, kind: input, shape index: {}]
  %s7 = inlined_call_operand.vmem [shape: f32[2,1,512], index: 7, kind: input, shape index: {}]
  %s8 = inlined_call_operand.vmem [shape: bf16[256,128], index: 8, kind: input, shape index: {}]
  %s9 = inlined_call_operand.vmem [shape: f32[1,128], index: 9, kind: input, shape index: {}]
  %s10 = inlined_call_operand.vmem [shape: f32[64,128], index: 10, kind: output, shape index: {}]
  %s11 = sld [smem:[#allocation0]]
  $region50: #{lstm_model_forward.1} parent=0
    _
  %s13 = ssub.s32 1, %s11
  %s14 = scalar_select 0, %s13, %s11
  // Predicated region
  $region2: #{lstm_model_forward.1} parent=0 // pred_check
    _
  $region3: #{lstm_model_forward.1} parent=0 // pred_check_branch
    %16 = sbr.rel (0) target = $region5
  $region4: #{lstm_model_forward.1} parent=0 // pred_region
    _
  $region5: #{lstm_model_forward.1} parent=0 // pred_fallthru
    _
  // Predicated region
  $region6: #{lstm_model_forward.1} parent=0 // pred_check
    _
  $region7: #{lstm_model_forward.1} parent=0 // pred_check_branch
    %18 = sbr.rel (0) target = $region9
  $region8: #{lstm_model_forward.1} parent=0 // pred_region
    _
  $region9: #{lstm_model_forward.1} parent=0 // pred_fallthru
    _
  // Predicated region
  $region10: #{lstm_model_forward.1} parent=0 // pred_check
    _
  $region11: #{lstm_model_forward.1} parent=0 // pred_check_branch
    %20 = sbr.rel (0) target = $region13
  $region12: #{lstm_model_forward.1} parent=0 // pred_region
    _
  $region13: #{lstm_model_forward.1} parent=0 // pred_fallthru
    _
  // Predicated region
  $region14: #{lstm_model_forward.1} parent=0 // pred_check
    _
  $region15: #{lstm_model_forward.1} parent=0 // pred_check_branch
    %22 = sbr.rel (0) target = $region17
  $region16: #{lstm_model_forward.1} parent=0 // pred_region
    _
  $region17: #{lstm_model_forward.1} parent=0 // pred_fallthru
    _
  // Predicated region
  $region18: #{lstm_model_forward.1} parent=0 // pred_check
    _
  $region19: #{lstm_model_forward.1} parent=0 // pred_check_branch
    %24 = sbr.rel (0) target = $region21
  $region20: #{lstm_model_forward.1} parent=0 // pred_region
    _
  $region21: #{lstm_model_forward.1} parent=0 // pred_fallthru
    _
  // Predicated region
  $region22: #{lstm_model_forward.1} parent=0 // pred_check
    _
  $region23: #{lstm_model_forward.1} parent=0 // pred_check_branch
    %26 = sbr.rel (0) target = $region25
  $region24: #{lstm_model_forward.1} parent=0 // pred_region
    _
  $region25: #{lstm_model_forward.1} parent=0 // pred_fallthru
    _
  // Predicated region
  $region26: #{lstm_model_forward.1} parent=0 // pred_check
    _
  $region27: #{lstm_model_forward.1} parent=0 // pred_check_branch
    %28 = sbr.rel (0) target = $region29
  $region28: #{lstm_model_forward.1} parent=0 // pred_region
    _
  $region29: #{lstm_model_forward.1} parent=0 // pred_fallthru
    _
  // Predicated region
  $region30: #{lstm_model_forward.1} parent=0 // pred_check
    _
  $region31: #{lstm_model_forward.1} parent=0 // pred_check_branch
    %30 = sbr.rel (0) target = $region33
  $region32: #{lstm_model_forward.1} parent=0 // pred_region
    _
  $region33: #{lstm_model_forward.1} parent=0 // pred_fallthru
    _
  // Predicated region
  $region34: #{lstm_model_forward.1} parent=0 // pred_check
    _
  $region35: #{lstm_model_forward.1} parent=0 // pred_check_branch
    %32 = sbr.rel (0) target = $region37
  $region36: #{lstm_model_forward.1} parent=0 // pred_region
    _
  $region37: #{lstm_model_forward.1} parent=0 // pred_fallthru
    _
  // Predicated region
  $region38: #{lstm_model_forward.1} parent=0 // pred_check
    _
  $region39: #{lstm_model_forward.1} parent=0 // pred_check_branch
    %34 = sbr.rel (0) target = $region41
  $region40: #{lstm_model_forward.1} parent=0 // pred_region
    _
  $region41: #{lstm_model_forward.1} parent=0 // pred_fallthru
    _
  %v36 = vld [vmem:[%s0] sm:$0xff]
  %v37 = vld [vmem:[%s0 + $0x8] sm:$0xff]
  %v38 = vld [vmem:[%s0 + $0x10] sm:$0xff]
  %v39 = vld [vmem:[%s0 + $0x18] sm:$0xff]
  %v40 = vld [vmem:[%s0 + $0x20] sm:$0xff]
  %v41 = vld [vmem:[%s0 + $0x28] sm:$0xff]
  %v42 = vld [vmem:[%s0 + $0x30] sm:$0xff]
  %v43 = vld [vmem:[%s0 + $0x38] sm:$0xff]
  %v44 = vlaneseq
  %v45 = vand.u32 %v44, 127
  %46 = vset.pattern.permute.xlu0 0
  %47 = vperm.xlu0 %46, %v36
  %v48 = vpop.permute.xlu0 %47
  %49 = vset.pattern.permute.xlu0 0
  %50 = vperm.xlu0 %49, %v37
  %v51 = vpop.permute.xlu0 %50
  %52 = vset.pattern.permute.xlu0 0
  %53 = vperm.xlu0 %52, %v38
  %v54 = vpop.permute.xlu0 %53
  %55 = vset.pattern.permute.xlu0 0
  %56 = vperm.xlu0 %55, %v39
  %v57 = vpop.permute.xlu0 %56
  %58 = vset.pattern.permute.xlu0 0
  %59 = vperm.xlu0 %58, %v40
  %v60 = vpop.permute.xlu0 %59
  %61 = vset.pattern.permute.xlu0 0
  %62 = vperm.xlu0 %61, %v41
  %v63 = vpop.permute.xlu0 %62
  %64 = vset.pattern.permute.xlu0 0
  %65 = vperm.xlu0 %64, %v42
  %v66 = vpop.permute.xlu0 %65
  %67 = vset.pattern.permute.xlu0 0
  %68 = vperm.xlu0 %67, %v43
  %v69 = vpop.permute.xlu0 %68
  %vm70 = vcmp.eq.s32.totalorder %v48, %v45
  %vm71 = vcmp.eq.s32.totalorder %v51, %v45
  %vm72 = vcmp.eq.s32.totalorder %v54, %v45
  %vm73 = vcmp.eq.s32.totalorder %v57, %v45
  %vm74 = vcmp.eq.s32.totalorder %v60, %v45
  %vm75 = vcmp.eq.s32.totalorder %v63, %v45
  %vm76 = vcmp.eq.s32.totalorder %v66, %v45
  %vm77 = vcmp.eq.s32.totalorder %v69, %v45
  %v78 = vsel %vm70, 1.0, 0.0
  %v79 = vsel %vm71, 1.0, 0.0
  %v80 = vsel %vm72, 1.0, 0.0
  %v81 = vsel %vm73, 1.0, 0.0
  %v82 = vsel %vm74, 1.0, 0.0
  %v83 = vsel %vm75, 1.0, 0.0
  %v84 = vsel %vm76, 1.0, 0.0
  %v85 = vsel %vm77, 1.0, 0.0
  %v86 = vld [vmem:[%s1] sm:$0xff]
  %v87 = vld [vmem:[%s1 + $0x8] sm:$0xff]
  %v88 = vld [vmem:[%s1 + $0x10] sm:$0xff]
  %v89 = vld [vmem:[%s1 + $0x18] sm:$0xff]
  %v90 = vld [vmem:[%s1 + $0x20] sm:$0xff]
  %v91 = vld [vmem:[%s1 + $0x28] sm:$0xff]
  %v92 = vld [vmem:[%s1 + $0x30] sm:$0xff]
  %v93 = vld [vmem:[%s1 + $0x38] sm:$0xff]
  %v94 = vld [vmem:[%s1 + $0x40] sm:$0xff]
  %v95 = vld [vmem:[%s1 + $0x48] sm:$0xff]
  %v96 = vld [vmem:[%s1 + $0x50] sm:$0xff]
  %v97 = vld [vmem:[%s1 + $0x58] sm:$0xff]
  %v98 = vld [vmem:[%s1 + $0x60] sm:$0xff]
  %v99 = vld [vmem:[%s1 + $0x68] sm:$0xff]
  %v100 = vld [vmem:[%s1 + $0x70] sm:$0xff]
  %v101 = vld [vmem:[%s1 + $0x78] sm:$0xff]
  %102 = vmatprep.subr.mxu0 0.0
  %103 = vmatpush1.msra.mxu0 %v86
  %104 = vmatprep.subr.mxu0 0.0
  %105 = vmatpush1.msra.mxu0 %v87
  %106 = vmatprep.subr.mxu0 0.0
  %107 = vmatpush1.msra.mxu0 %v88
  %108 = vmatprep.subr.mxu0 0.0
  %109 = vmatpush1.msra.mxu0 %v89
  %110 = vmatprep.subr.mxu0 0.0
  %111 = vmatpush1.msra.mxu0 %v90
  %112 = vmatprep.subr.mxu0 0.0
  %113 = vmatpush1.msra.mxu0 %v91
  %114 = vmatprep.subr.mxu0 0.0
  %115 = vmatpush1.msra.mxu0 %v92
  %116 = vmatprep.subr.mxu0 0.0
  %117 = vmatpush1.msra.mxu0 %v93
  %118 = vmatprep.subr.mxu0 0.0
  %119 = vmatpush1.msra.mxu0 %v94
  %120 = vmatprep.subr.mxu0 0.0
  %121 = vmatpush1.msra.mxu0 %v95
  %122 = vmatprep.subr.mxu0 0.0
  %123 = vmatpush1.msra.mxu0 %v96
  %124 = vmatprep.subr.mxu0 0.0
  %125 = vmatpush1.msra.mxu0 %v97
  %126 = vmatprep.subr.mxu0 0.0
  %127 = vmatpush1.msra.mxu0 %v98
  %128 = vmatprep.subr.mxu0 0.0
  %129 = vmatpush1.msra.mxu0 %v99
  %130 = vmatprep.subr.mxu0 0.0
  %131 = vmatpush1.msra.mxu0 %v100
  %132 = vmatprep.subr.mxu0 0.0
  %133 = vmatpush1.msra.mxu0 %v101
  %134 = vmatprep.subr.mxu0 0.0
  %135 = vmatpush1.msra.mxu0 0.0
  %136 = vmatprep.subr.mxu0 0.0
  %137 = vmatpush1.msra.mxu0 0.0
  %138 = vmatprep.subr.mxu0 0.0
  %139 = vmatpush1.msra.mxu0 0.0
  %140 = vmatprep.subr.mxu0 0.0
  %141 = vmatpush1.msra.mxu0 0.0
  %142 = vmatprep.subr.mxu0 0.0
  %143 = vmatpush1.msra.mxu0 0.0
  %144 = vmatprep.subr.mxu0 0.0
  %145 = vmatpush1.msra.mxu0 0.0
  %146 = vmatprep.subr.mxu0 0.0
  %147 = vmatpush1.msra.mxu0 0.0
  %148 = vmatprep.subr.mxu0 0.0
  %149 = vmatpush1.msra.mxu0 0.0
  %150 = vmatprep.subr.mxu0 0.0
  %151 = vmatpush1.msra.mxu0 0.0
  %152 = vmatprep.subr.mxu0 0.0
  %153 = vmatpush1.msra.mxu0 0.0
  %154 = vmatprep.subr.mxu0 0.0
  %155 = vmatpush1.msra.mxu0 0.0
  %156 = vmatprep.subr.mxu0 0.0
  %157 = vmatpush1.msra.mxu0 0.0
  %158 = vmatprep.subr.mxu0 0.0
  %159 = vmatpush1.msra.mxu0 0.0
  %160 = vmatprep.subr.mxu0 0.0
  %161 = vmatpush1.msra.mxu0 0.0
  %162 = vmatprep.subr.mxu0 0.0
  %163 = vmatpush1.msra.mxu0 0.0
  %164 = vmatprep.subr.mxu0 0.0
  %165 = vmatpush1.msra.mxu0 0.0
  %166 = vmatprep.mubr.f32.mxu0 0.0
  %167 = vmatmul.mubr.f32.gmra.mrb[0].mxu0 %v78
  %v168 = vpop.f32.mrb[0].mxu0
  %v169 = vadd.f32 0.0, %v168
  %v170 = vpop.f32.mrb[0].mxu0
  %171 = vmatprep.mubr.f32.mxu0 0.0
  %172 = vmatmul.mubr.f32.gmra.mrb[0].mxu0 %v79
  %v173 = vpop.f32.mrb[0].mxu0
  %v174 = vadd.f32 0.0, %v173
  %v175 = vpop.f32.mrb[0].mxu0
  %176 = vmatprep.mubr.f32.mxu0 0.0
  %177 = vmatmul.mubr.f32.gmra.mrb[0].mxu0 %v80
  %v178 = vpop.f32.mrb[0].mxu0
  %v179 = vadd.f32 0.0, %v178
  %v180 = vpop.f32.mrb[0].mxu0
  %181 = vmatprep.mubr.f32.mxu0 0.0
  %182 = vmatmul.mubr.f32.gmra.mrb[0].mxu0 %v81
  %v183 = vpop.f32.mrb[0].mxu0
  %v184 = vadd.f32 0.0, %v183
  %v185 = vpop.f32.mrb[0].mxu0
  %186 = vmatprep.mubr.f32.mxu0 0.0
  %187 = vmatmul.mubr.f32.gmra.mrb[0].mxu0 %v82
  %v188 = vpop.f32.mrb[0].mxu0
  %v189 = vadd.f32 0.0, %v188
  %v190 = vpop.f32.mrb[0].mxu0
  %191 = vmatprep.mubr.f32.mxu0 0.0
  %192 = vmatmul.mubr.f32.gmra.mrb[0].mxu0 %v83
  %v193 = vpop.f32.mrb[0].mxu0
  %v194 = vadd.f32 0.0, %v193
  %v195 = vpop.f32.mrb[0].mxu0
  %196 = vmatprep.mubr.f32.mxu0 0.0
  %197 = vmatmul.mubr.f32.gmra.mrb[0].mxu0 %v84
  %v198 = vpop.f32.mrb[0].mxu0
  %v199 = vadd.f32 0.0, %v198
  %v200 = vpop.f32.mrb[0].mxu0
  %201 = vmatprep.mubr.f32.mxu0 0.0
  %202 = vmatmul.mubr.f32.gmra.mrb[0].mxu0 %v85
  %v203 = vpop.f32.mrb[0].mxu0
  %v204 = vadd.f32 0.0, %v203
  %v205 = vpop.f32.mrb[0].mxu0
  %206 = vdwg.mxu0
  %v207 = vpack.c.bf16 %v174, %v169
  %v208 = vpack.c.bf16 %v184, %v179
  %v209 = vpack.c.bf16 %v194, %v189
  %v210 = vpack.c.bf16 %v204, %v199
  %v211 = vld [vmem:[%s2] sm:$0xff]
  %v212 = vld [vmem:[%s2 + $0x8] sm:$0xff]
  %v213 = vld [vmem:[%s2 + $0x10] sm:$0xff]
  %v214 = vld [vmem:[%s2 + $0x18] sm:$0xff]
  %v215 = vld [vmem:[%s2 + $0x20] sm:$0xff]
  %v216 = vld [vmem:[%s2 + $0x28] sm:$0xff]
  %v217 = vld [vmem:[%s2 + $0x30] sm:$0xff]
  %v218 = vld [vmem:[%s2 + $0x38] sm:$0xff]
  %v219 = vld [vmem:[%s2 + $0x40] sm:$0xff]
  %v220 = vld [vmem:[%s2 + $0x48] sm:$0xff]
  %v221 = vld [vmem:[%s2 + $0x50] sm:$0xff]
  %v222 = vld [vmem:[%s2 + $0x58] sm:$0xff]
  %v223 = vld [vmem:[%s2 + $0x60] sm:$0xff]
  %v224 = vld [vmem:[%s2 + $0x68] sm:$0xff]
  %v225 = vld [vmem:[%s2 + $0x70] sm:$0xff]
  %v226 = vld [vmem:[%s2 + $0x78] sm:$0xff]
  %v227 = vld [vmem:[%s2 + $0x80] sm:$0xff]
  %v228 = vld [vmem:[%s2 + $0x88] sm:$0xff]
  %v229 = vld [vmem:[%s2 + $0x90] sm:$0xff]
  %v230 = vld [vmem:[%s2 + $0x98] sm:$0xff]
  %v231 = vld [vmem:[%s2 + $0xa0] sm:$0xff]
  %v232 = vld [vmem:[%s2 + $0xa8] sm:$0xff]
  %v233 = vld [vmem:[%s2 + $0xb0] sm:$0xff]
  %v234 = vld [vmem:[%s2 + $0xb8] sm:$0xff]
  %v235 = vld [vmem:[%s2 + $0xc0] sm:$0xff]
  %v236 = vld [vmem:[%s2 + $0xc8] sm:$0xff]
  %v237 = vld [vmem:[%s2 + $0xd0] sm:$0xff]
  %v238 = vld [vmem:[%s2 + $0xd8] sm:$0xff]
  %v239 = vld [vmem:[%s2 + $0xe0] sm:$0xff]
  %v240 = vld [vmem:[%s2 + $0xe8] sm:$0xff]
  %v241 = vld [vmem:[%s2 + $0xf0] sm:$0xff]
  %v242 = vld [vmem:[%s2 + $0xf8] sm:$0xff]
  %v243 = vld [vmem:[%s4] sm:$0xf]
  %v245 = vlaneseq
  %v246 = vshrl.u32 %v245, 7
  %v247 = vsub.s32 0, %v246
  %v248 = vrot.slane %v243, %v247
  %v249 = vlaneseq
  %v250 = vshrl.u32 %v249, 7
  %v251 = vsub.s32 1, %v250
  %v252 = vrot.slane %v243, %v251
  %v253 = vlaneseq
  %v254 = vshrl.u32 %v253, 7
  %v255 = vsub.s32 2, %v254
  %v256 = vrot.slane %v243, %v255
  %v257 = vlaneseq
  %v258 = vshrl.u32 %v257, 7
  %v259 = vsub.s32 3, %v258
  %v260 = vrot.slane %v243, %v259
  %v297 = vunpack.c.l.b16 %v211
  %v298 = vunpack.c.h.b16 %v211
  %v299 = vunpack.c.l.b16 %v212
  %v300 = vunpack.c.h.b16 %v212
  %v301 = vunpack.c.l.b16 %v213
  %v302 = vunpack.c.h.b16 %v213
  %v303 = vunpack.c.l.b16 %v214
  %v304 = vunpack.c.h.b16 %v214
  %v305 = vunpack.c.l.b16 %v215
  %v306 = vunpack.c.h.b16 %v215
  %v307 = vunpack.c.l.b16 %v216
  %v308 = vunpack.c.h.b16 %v216
  %v309 = vunpack.c.l.b16 %v217
  %v310 = vunpack.c.h.b16 %v217
  %v311 = vunpack.c.l.b16 %v218
  %v312 = vunpack.c.h.b16 %v218
  %v313 = vunpack.c.l.b16 %v219
  %v314 = vunpack.c.h.b16 %v219
  %v315 = vunpack.c.l.b16 %v220
  %v316 = vunpack.c.h.b16 %v220
  %v317 = vunpack.c.l.b16 %v221
  %v318 = vunpack.c.h.b16 %v221
  %v319 = vunpack.c.l.b16 %v222
  %v320 = vunpack.c.h.b16 %v222
  %v321 = vunpack.c.l.b16 %v223
  %v322 = vunpack.c.h.b16 %v223
  %v323 = vunpack.c.l.b16 %v224
  %v324 = vunpack.c.h.b16 %v224
  %v325 = vunpack.c.l.b16 %v225
  %v326 = vunpack.c.h.b16 %v225
  %v327 = vunpack.c.l.b16 %v226
  %v328 = vunpack.c.h.b16 %v226
  %v329 = vunpack.c.l.b16 %v227
  %v330 = vunpack.c.h.b16 %v227
  %v331 = vunpack.c.l.b16 %v228
  %v332 = vunpack.c.h.b16 %v228
  %v333 = vunpack.c.l.b16 %v229
  %v334 = vunpack.c.h.b16 %v229
  %v335 = vunpack.c.l.b16 %v230
  %v336 = vunpack.c.h.b16 %v230
  %v337 = vunpack.c.l.b16 %v231
  %v338 = vunpack.c.h.b16 %v231
  %v339 = vunpack.c.l.b16 %v232
  %v340 = vunpack.c.h.b16 %v232
  %v341 = vunpack.c.l.b16 %v233
  %v342 = vunpack.c.h.b16 %v233
  %v343 = vunpack.c.l.b16 %v234
  %v344 = vunpack.c.h.b16 %v234
  %v345 = vunpack.c.l.b16 %v235
  %v346 = vunpack.c.h.b16 %v235
  %v347 = vunpack.c.l.b16 %v236
  %v348 = vunpack.c.h.b16 %v236
  %v349 = vunpack.c.l.b16 %v237
  %v350 = vunpack.c.h.b16 %v237
  %v351 = vunpack.c.l.b16 %v238
  %v352 = vunpack.c.h.b16 %v238
  %v353 = vunpack.c.l.b16 %v239
  %v354 = vunpack.c.h.b16 %v239
  %v355 = vunpack.c.l.b16 %v240
  %v356 = vunpack.c.h.b16 %v240
  %v357 = vunpack.c.l.b16 %v241
  %v358 = vunpack.c.h.b16 %v241
  %v359 = vunpack.c.l.b16 %v242
  %v360 = vunpack.c.h.b16 %v242
  %v361 = vpack.c.b16 %v301, %v297
  %v362 = vpack.c.b16 %v302, %v298
  %v363 = vpack.c.b16 %v303, %v299
  %v364 = vpack.c.b16 %v304, %v300
  %v365 = vpack.c.b16 %v309, %v305
  %v366 = vpack.c.b16 %v310, %v306
  %v367 = vpack.c.b16 %v311, %v307
  %v368 = vpack.c.b16 %v312, %v308
  %v369 = vpack.c.b16 %v317, %v313
  %v370 = vpack.c.b16 %v318, %v314
  %v371 = vpack.c.b16 %v319, %v315
  %v372 = vpack.c.b16 %v320, %v316
  %v373 = vpack.c.b16 %v325, %v321
  %v374 = vpack.c.b16 %v326, %v322
  %v375 = vpack.c.b16 %v327, %v323
  %v376 = vpack.c.b16 %v328, %v324
  %v377 = vpack.c.b16 %v333, %v329
  %v378 = vpack.c.b16 %v334, %v330
  %v379 = vpack.c.b16 %v335, %v331
  %v380 = vpack.c.b16 %v336, %v332
  %v381 = vpack.c.b16 %v341, %v337
  %v382 = vpack.c.b16 %v342, %v338
  %v383 = vpack.c.b16 %v343, %v339
  %v384 = vpack.c.b16 %v344, %v340
  %v385 = vpack.c.b16 %v349, %v345
  %v386 = vpack.c.b16 %v350, %v346
  %v387 = vpack.c.b16 %v351, %v347
  %v388 = vpack.c.b16 %v352, %v348
  %v389 = vpack.c.b16 %v357, %v353
  %v390 = vpack.c.b16 %v358, %v354
  %v391 = vpack.c.b16 %v359, %v355
  %v392 = vpack.c.b16 %v360, %v356
  %425 = vmatprep.subr.bf16.mxu0 %v362
  %426 = vmatpush1.bf16.msra.mxu0 %v361
  %427 = vmatprep.subr.bf16.mxu0 %v366
  %428 = vmatpush1.bf16.msra.mxu0 %v365
  %429 = vmatprep.subr.bf16.mxu0 %v370
  %430 = vmatpush1.bf16.msra.mxu0 %v369
  %431 = vmatprep.subr.bf16.mxu0 %v374
  %432 = vmatpush1.bf16.msra.mxu0 %v373
  %433 = vmatprep.subr.bf16.mxu0 %v378
  %434 = vmatpush1.bf16.msra.mxu0 %v377
  %435 = vmatprep.subr.bf16.mxu0 %v382
  %436 = vmatpush1.bf16.msra.mxu0 %v381
  %437 = vmatprep.subr.bf16.mxu0 %v386
  %438 = vmatpush1.bf16.msra.mxu0 %v385
  %439 = vmatprep.subr.bf16.mxu0 %v390
  %440 = vmatpush1.bf16.msra.mxu0 %v389
  %441 = vmatprep.subr.bf16.mxu0 0
  %442 = vmatpush1.bf16.msra.mxu0 0
  %443 = vmatprep.subr.bf16.mxu0 0
  %444 = vmatpush1.bf16.msra.mxu0 0
  %445 = vmatprep.subr.bf16.mxu0 0
  %446 = vmatpush1.bf16.msra.mxu0 0
  %447 = vmatprep.subr.bf16.mxu0 0
  %448 = vmatpush1.bf16.msra.mxu0 0
  %449 = vmatprep.subr.bf16.mxu0 0
  %450 = vmatpush1.bf16.msra.mxu0 0
  %451 = vmatprep.subr.bf16.mxu0 0
  %452 = vmatpush1.bf16.msra.mxu0 0
  %453 = vmatprep.subr.bf16.mxu0 0
  %454 = vmatpush1.bf16.msra.mxu0 0
  %455 = vmatprep.subr.bf16.mxu0 0
  %456 = vmatpush1.bf16.msra.mxu0 0
  %457 = vmatprep.mubr.bf16.mxu0 0
  %458 = vmatmul.mubr.bf16.gmra.mrb[0].mxu0 %v207
  %v459 = vpop.f32.mrb[0].mxu0
  %v460 = vadd.f32 %v248, %v459
  %v461 = vpop.f32.mrb[0].mxu0
  %v462 = vadd.f32 %v252, %v461
  %v463 = vpop.f32.mrb[0].mxu0
  %v464 = vadd.f32 %v248, %v463
  %v465 = vpop.f32.mrb[0].mxu0
  %v466 = vadd.f32 %v252, %v465
  %467 = vmatprep.mubr.bf16.mxu0 0
  %468 = vmatmul.mubr.bf16.gmra.mrb[0].mxu0 %v208
  %v469 = vpop.f32.mrb[0].mxu0
  %v470 = vadd.f32 %v248, %v469
  %v471 = vpop.f32.mrb[0].mxu0
  %v472 = vadd.f32 %v252, %v471
  %v473 = vpop.f32.mrb[0].mxu0
  %v474 = vadd.f32 %v248, %v473
  %v475 = vpop.f32.mrb[0].mxu0
  %v476 = vadd.f32 %v252, %v475
  %477 = vmatprep.mubr.bf16.mxu0 0
  %478 = vmatmul.mubr.bf16.gmra.mrb[0].mxu0 %v209
  %v479 = vpop.f32.mrb[0].mxu0
  %v480 = vadd.f32 %v248, %v479
  %v481 = vpop.f32.mrb[0].mxu0
  %v482 = vadd.f32 %v252, %v481
  %v483 = vpop.f32.mrb[0].mxu0
  %v484 = vadd.f32 %v248, %v483
  %v485 = vpop.f32.mrb[0].mxu0
  %v486 = vadd.f32 %v252, %v485
  %487 = vmatprep.mubr.bf16.mxu0 0
  %488 = vmatmul.mubr.bf16.gmra.mrb[0].mxu0 %v210
  %v489 = vpop.f32.mrb[0].mxu0
  %v490 = vadd.f32 %v248, %v489
  %v491 = vpop.f32.mrb[0].mxu0
  %v492 = vadd.f32 %v252, %v491
  %v493 = vpop.f32.mrb[0].mxu0
  %v494 = vadd.f32 %v248, %v493
  %v495 = vpop.f32.mrb[0].mxu0
  %v496 = vadd.f32 %v252, %v495
  %497 = vdwg.mxu0
  %498 = vmatprep.subr.bf16.mxu0 %v364
  %499 = vmatpush1.bf16.msra.mxu0 %v363
  %500 = vmatprep.subr.bf16.mxu0 %v368
  %501 = vmatpush1.bf16.msra.mxu0 %v367
  %502 = vmatprep.subr.bf16.mxu0 %v372
  %503 = vmatpush1.bf16.msra.mxu0 %v371
  %504 = vmatprep.subr.bf16.mxu0 %v376
  %505 = vmatpush1.bf16.msra.mxu0 %v375
  %506 = vmatprep.subr.bf16.mxu0 %v380
  %507 = vmatpush1.bf16.msra.mxu0 %v379
  %508 = vmatprep.subr.bf16.mxu0 %v384
  %509 = vmatpush1.bf16.msra.mxu0 %v383
  %510 = vmatprep.subr.bf16.mxu0 %v388
  %511 = vmatpush1.bf16.msra.mxu0 %v387
  %512 = vmatprep.subr.bf16.mxu0 %v392
  %513 = vmatpush1.bf16.msra.mxu0 %v391
  %514 = vmatprep.subr.bf16.mxu0 0
  %515 = vmatpush1.bf16.msra.mxu0 0
  %516 = vmatprep.subr.bf16.mxu0 0
  %517 = vmatpush1.bf16.msra.mxu0 0
  %518 = vmatprep.subr.bf16.mxu0 0
  %519 = vmatpush1.bf16.msra.mxu0 0
  %520 = vmatprep.subr.bf16.mxu0 0
  %521 = vmatpush1.bf16.msra.mxu0 0
  %522 = vmatprep.subr.bf16.mxu0 0
  %523 = vmatpush1.bf16.msra.mxu0 0
  %524 = vmatprep.subr.bf16.mxu0 0
  %525 = vmatpush1.bf16.msra.mxu0 0
  %526 = vmatprep.subr.bf16.mxu0 0
  %527 = vmatpush1.bf16.msra.mxu0 0
  %528 = vmatprep.subr.bf16.mxu0 0
  %529 = vmatpush1.bf16.msra.mxu0 0
  %530 = vmatprep.mubr.bf16.mxu0 0
  %531 = vmatmul.mubr.bf16.gmra.mrb[0].mxu0 %v207
  %v532 = vpop.f32.mrb[0].mxu0
  %v533 = vadd.f32 %v256, %v532
  %v534 = vpop.f32.mrb[0].mxu0
  %v535 = vadd.f32 %v260, %v534
  %v536 = vpop.f32.mrb[0].mxu0
  %v537 = vadd.f32 %v256, %v536
  %v538 = vpop.f32.mrb[0].mxu0
  %v539 = vadd.f32 %v260, %v538
  %540 = vmatprep.mubr.bf16.mxu0 0
  %541 = vmatmul.mubr.bf16.gmra.mrb[0].mxu0 %v208
  %v542 = vpop.f32.mrb[0].mxu0
  %v543 = vadd.f32 %v256, %v542
  %v544 = vpop.f32.mrb[0].mxu0
  %v545 = vadd.f32 %v260, %v544
  %v546 = vpop.f32.mrb[0].mxu0
  %v547 = vadd.f32 %v256, %v546
  %v548 = vpop.f32.mrb[0].mxu0
  %v549 = vadd.f32 %v260, %v548
  %550 = vmatprep.mubr.bf16.mxu0 0
  %551 = vmatmul.mubr.bf16.gmra.mrb[0].mxu0 %v209
  %v552 = vpop.f32.mrb[0].mxu0
  %v553 = vadd.f32 %v256, %v552
  %v554 = vpop.f32.mrb[0].mxu0
  %v555 = vadd.f32 %v260, %v554
  %v556 = vpop.f32.mrb[0].mxu0
  %v557 = vadd.f32 %v256, %v556
  %v558 = vpop.f32.mrb[0].mxu0
  %v559 = vadd.f32 %v260, %v558
  %560 = vmatprep.mubr.bf16.mxu0 0
  %561 = vmatmul.mubr.bf16.gmra.mrb[0].mxu0 %v210
  %v562 = vpop.f32.mrb[0].mxu0
  %v563 = vadd.f32 %v256, %v562
  %v564 = vpop.f32.mrb[0].mxu0
  %v565 = vadd.f32 %v260, %v564
  %v566 = vpop.f32.mrb[0].mxu0
  %v567 = vadd.f32 %v256, %v566
  %v568 = vpop.f32.mrb[0].mxu0
  %v569 = vadd.f32 %v260, %v568
  %570 = vdwg.mxu0
  %571 = vst [vmem:[#allocation2] sm:$0xff] %v460
  %572 = vst [vmem:[#allocation2 + $0x8] sm:$0xff] %v462
  %573 = vst [vmem:[#allocation2 + $0x10] sm:$0xff] %v533
  %574 = vst [vmem:[#allocation2 + $0x18] sm:$0xff] %v535
  %575 = vst [vmem:[#allocation2 + $0x20] sm:$0xff] %v464
  %576 = vst [vmem:[#allocation2 + $0x28] sm:$0xff] %v466
  %577 = vst [vmem:[#allocation2 + $0x30] sm:$0xff] %v537
  %578 = vst [vmem:[#allocation2 + $0x38] sm:$0xff] %v539
  %579 = vst [vmem:[#allocation2 + $0x40] sm:$0xff] %v470
  %580 = vst [vmem:[#allocation2 + $0x48] sm:$0xff] %v472
  %581 = vst [vmem:[#allocation2 + $0x50] sm:$0xff] %v543
  %582 = vst [vmem:[#allocation2 + $0x58] sm:$0xff] %v545
  %583 = vst [vmem:[#allocation2 + $0x60] sm:$0xff] %v474
  %584 = vst [vmem:[#allocation2 + $0x68] sm:$0xff] %v476
  %585 = vst [vmem:[#allocation2 + $0x70] sm:$0xff] %v547
  %586 = vst [vmem:[#allocation2 + $0x78] sm:$0xff] %v549
  %587 = vst [vmem:[#allocation2 + $0x80] sm:$0xff] %v480
  %588 = vst [vmem:[#allocation2 + $0x88] sm:$0xff] %v482
  %589 = vst [vmem:[#allocation2 + $0x90] sm:$0xff] %v553
  %590 = vst [vmem:[#allocation2 + $0x98] sm:$0xff] %v555
  %591 = vst [vmem:[#allocation2 + $0xa0] sm:$0xff] %v484
  %592 = vst [vmem:[#allocation2 + $0xa8] sm:$0xff] %v486
  %593 = vst [vmem:[#allocation2 + $0xb0] sm:$0xff] %v557
  %594 = vst [vmem:[#allocation2 + $0xb8] sm:$0xff] %v559
  %595 = vst [vmem:[#allocation2 + $0xc0] sm:$0xff] %v490
  %596 = vst [vmem:[#allocation2 + $0xc8] sm:$0xff] %v492
  %597 = vst [vmem:[#allocation2 + $0xd0] sm:$0xff] %v563
  %598 = vst [vmem:[#allocation2 + $0xd8] sm:$0xff] %v565
  %599 = vst [vmem:[#allocation2 + $0xe0] sm:$0xff] %v494
  %600 = vst [vmem:[#allocation2 + $0xe8] sm:$0xff] %v496
  %601 = vst [vmem:[#allocation2 + $0xf0] sm:$0xff] %v567
  %602 = vst [vmem:[#allocation2 + $0xf8] sm:$0xff] %v569
  %v603 = vld [vmem:[%s3] sm:$0xff]
  %v604 = vld [vmem:[%s3 + $0x8] sm:$0xff]
  %v605 = vld [vmem:[%s3 + $0x10] sm:$0xff]
  %v606 = vld [vmem:[%s3 + $0x18] sm:$0xff]
  %v607 = vld [vmem:[%s3 + $0x20] sm:$0xff]
  %v608 = vld [vmem:[%s3 + $0x28] sm:$0xff]
  %v609 = vld [vmem:[%s3 + $0x30] sm:$0xff]
  %v610 = vld [vmem:[%s3 + $0x38] sm:$0xff]
  %v611 = vld [vmem:[%s3 + $0x40] sm:$0xff]
  %v612 = vld [vmem:[%s3 + $0x48] sm:$0xff]
  %v613 = vld [vmem:[%s3 + $0x50] sm:$0xff]
  %v614 = vld [vmem:[%s3 + $0x58] sm:$0xff]
  %v615 = vld [vmem:[%s3 + $0x60] sm:$0xff]
  %v616 = vld [vmem:[%s3 + $0x68] sm:$0xff]
  %v617 = vld [vmem:[%s3 + $0x70] sm:$0xff]
  %v618 = vld [vmem:[%s3 + $0x78] sm:$0xff]
  %v619 = vld [vmem:[%s3 + $0x80] sm:$0xff]
  %v620 = vld [vmem:[%s3 + $0x88] sm:$0xff]
  %v621 = vld [vmem:[%s3 + $0x90] sm:$0xff]
  %v622 = vld [vmem:[%s3 + $0x98] sm:$0xff]
  %v623 = vld [vmem:[%s3 + $0xa0] sm:$0xff]
  %v624 = vld [vmem:[%s3 + $0xa8] sm:$0xff]
  %v625 = vld [vmem:[%s3 + $0xb0] sm:$0xff]
  %v626 = vld [vmem:[%s3 + $0xb8] sm:$0xff]
  %v627 = vld [vmem:[%s3 + $0xc0] sm:$0xff]
  %v628 = vld [vmem:[%s3 + $0xc8] sm:$0xff]
  %v629 = vld [vmem:[%s3 + $0xd0] sm:$0xff]
  %v630 = vld [vmem:[%s3 + $0xd8] sm:$0xff]
  %v631 = vld [vmem:[%s3 + $0xe0] sm:$0xff]
  %v632 = vld [vmem:[%s3 + $0xe8] sm:$0xff]
  %v633 = vld [vmem:[%s3 + $0xf0] sm:$0xff]
  %v634 = vld [vmem:[%s3 + $0xf8] sm:$0xff]
  %v635 = vld [vmem:[#allocation2] sm:$0xff]
  %v636 = vld [vmem:[#allocation2 + $0x8] sm:$0xff]
  %v637 = vld [vmem:[#allocation2 + $0x10] sm:$0xff]
  %v638 = vld [vmem:[#allocation2 + $0x18] sm:$0xff]
  %v671 = vunpack.c.l.b16 %v603
  %v672 = vunpack.c.h.b16 %v603
  %v673 = vunpack.c.l.b16 %v604
  %v674 = vunpack.c.h.b16 %v604
  %v675 = vunpack.c.l.b16 %v605
  %v676 = vunpack.c.h.b16 %v605
  %v677 = vunpack.c.l.b16 %v606
  %v678 = vunpack.c.h.b16 %v606
  %v679 = vunpack.c.l.b16 %v607
  %v680 = vunpack.c.h.b16 %v607
  %v681 = vunpack.c.l.b16 %v608
  %v682 = vunpack.c.h.b16 %v608
  %v683 = vunpack.c.l.b16 %v609
  %v684 = vunpack.c.h.b16 %v609
  %v685 = vunpack.c.l.b16 %v610
  %v686 = vunpack.c.h.b16 %v610
  %v687 = vunpack.c.l.b16 %v611
  %v688 = vunpack.c.h.b16 %v611
  %v689 = vunpack.c.l.b16 %v612
  %v690 = vunpack.c.h.b16 %v612
  %v691 = vunpack.c.l.b16 %v613
  %v692 = vunpack.c.h.b16 %v613
  %v693 = vunpack.c.l.b16 %v614
  %v694 = vunpack.c.h.b16 %v614
  %v695 = vunpack.c.l.b16 %v615
  %v696 = vunpack.c.h.b16 %v615
  %v697 = vunpack.c.l.b16 %v616
  %v698 = vunpack.c.h.b16 %v616
  %v699 = vunpack.c.l.b16 %v617
  %v700 = vunpack.c.h.b16 %v617
  %v701 = vunpack.c.l.b16 %v618
  %v702 = vunpack.c.h.b16 %v618
  %v703 = vunpack.c.l.b16 %v619
  %v704 = vunpack.c.h.b16 %v619
  %v705 = vunpack.c.l.b16 %v620
  %v706 = vunpack.c.h.b16 %v620
  %v707 = vunpack.c.l.b16 %v621
  %v708 = vunpack.c.h.b16 %v621
  %v709 = vunpack.c.l.b16 %v622
  %v710 = vunpack.c.h.b16 %v622
  %v711 = vunpack.c.l.b16 %v623
  %v712 = vunpack.c.h.b16 %v623
  %v713 = vunpack.c.l.b16 %v624
  %v714 = vunpack.c.h.b16 %v624
  %v715 = vunpack.c.l.b16 %v625
  %v716 = vunpack.c.h.b16 %v625
  %v717 = vunpack.c.l.b16 %v626
  %v718 = vunpack.c.h.b16 %v626
  %v719 = vunpack.c.l.b16 %v627
  %v720 = vunpack.c.h.b16 %v627
  %v721 = vunpack.c.l.b16 %v628
  %v722 = vunpack.c.h.b16 %v628
  %v723 = vunpack.c.l.b16 %v629
  %v724 = vunpack.c.h.b16 %v629
  %v725 = vunpack.c.l.b16 %v630
  %v726 = vunpack.c.h.b16 %v630
  %v727 = vunpack.c.l.b16 %v631
  %v728 = vunpack.c.h.b16 %v631
  %v729 = vunpack.c.l.b16 %v632
  %v730 = vunpack.c.h.b16 %v632
  %v731 = vunpack.c.l.b16 %v633
  %v732 = vunpack.c.h.b16 %v633
  %v733 = vunpack.c.l.b16 %v634
  %v734 = vunpack.c.h.b16 %v634
  %v735 = vpack.c.b16 %v675, %v671
  %v736 = vpack.c.b16 %v676, %v672
  %v737 = vpack.c.b16 %v677, %v673
  %v738 = vpack.c.b16 %v678, %v674
  %v739 = vpack.c.b16 %v683, %v679
  %v740 = vpack.c.b16 %v684, %v680
  %v741 = vpack.c.b16 %v685, %v681
  %v742 = vpack.c.b16 %v686, %v682
  %v743 = vpack.c.b16 %v691, %v687
  %v744 = vpack.c.b16 %v692, %v688
  %v745 = vpack.c.b16 %v693, %v689
  %v746 = vpack.c.b16 %v694, %v690
  %v747 = vpack.c.b16 %v699, %v695
  %v748 = vpack.c.b16 %v700, %v696
  %v749 = vpack.c.b16 %v701, %v697
  %v750 = vpack.c.b16 %v702, %v698
  %v751 = vpack.c.b16 %v707, %v703
  %v752 = vpack.c.b16 %v708, %v704
  %v753 = vpack.c.b16 %v709, %v705
  %v754 = vpack.c.b16 %v710, %v706
  %v755 = vpack.c.b16 %v715, %v711
  %v756 = vpack.c.b16 %v716, %v712
  %v757 = vpack.c.b16 %v717, %v713
  %v758 = vpack.c.b16 %v718, %v714
  %v759 = vpack.c.b16 %v723, %v719
  %v760 = vpack.c.b16 %v724, %v720
  %v761 = vpack.c.b16 %v725, %v721
  %v762 = vpack.c.b16 %v726, %v722
  %v763 = vpack.c.b16 %v731, %v727
  %v764 = vpack.c.b16 %v732, %v728
  %v765 = vpack.c.b16 %v733, %v729
  %v766 = vpack.c.b16 %v734, %v730
  %799 = vmatprep.subr.bf16.mxu0 %v736
  %800 = vmatpush1.bf16.msra.mxu0 %v735
  %801 = vmatprep.subr.bf16.mxu0 %v740
  %802 = vmatpush1.bf16.msra.mxu0 %v739
  %803 = vmatprep.subr.bf16.mxu0 %v744
  %804 = vmatpush1.bf16.msra.mxu0 %v743
  %805 = vmatprep.subr.bf16.mxu0 %v748
  %806 = vmatpush1.bf16.msra.mxu0 %v747
  %807 = vmatprep.subr.bf16.mxu0 %v752
  %808 = vmatpush1.bf16.msra.mxu0 %v751
  %809 = vmatprep.subr.bf16.mxu0 %v756
  %810 = vmatpush1.bf16.msra.mxu0 %v755
  %811 = vmatprep.subr.bf16.mxu0 %v760
  %812 = vmatpush1.bf16.msra.mxu0 %v759
  %813 = vmatprep.subr.bf16.mxu0 %v764
  %814 = vmatpush1.bf16.msra.mxu0 %v763
  %815 = vmatprep.subr.bf16.mxu0 0
  %816 = vmatpush1.bf16.msra.mxu0 0
  %817 = vmatprep.subr.bf16.mxu0 0
  %818 = vmatpush1.bf16.msra.mxu0 0
  %819 = vmatprep.subr.bf16.mxu0 0
  %820 = vmatpush1.bf16.msra.mxu0 0
  %821 = vmatprep.subr.bf16.mxu0 0
  %822 = vmatpush1.bf16.msra.mxu0 0
  %823 = vmatprep.subr.bf16.mxu0 0
  %824 = vmatpush1.bf16.msra.mxu0 0
  %825 = vmatprep.subr.bf16.mxu0 0
  %826 = vmatpush1.bf16.msra.mxu0 0
  %827 = vmatprep.subr.bf16.mxu0 0
  %828 = vmatpush1.bf16.msra.mxu0 0
  %829 = vmatprep.subr.bf16.mxu0 0
  %830 = vmatpush1.bf16.msra.mxu0 0
  %831 = vmatprep.mubr.bf16.mxu0 0
  %832 = vmatmul.mubr.bf16.gmra.mrb[0].mxu0 0
  %v833 = vpop.f32.mrb[0].mxu0
  %v834 = vadd.f32 0.0, %v833
  %v835 = vpop.f32.mrb[0].mxu0
  %v836 = vadd.f32 0.0, %v835
  %v837 = vpop.f32.mrb[0].mxu0
  %v838 = vpop.f32.mrb[0].mxu0
  %839 = vdwg.mxu0
  %840 = vmatprep.subr.bf16.mxu0 %v738
  %841 = vmatpush1.bf16.msra.mxu0 %v737
  %842 = vmatprep.subr.bf16.mxu0 %v742
  %843 = vmatpush1.bf16.msra.mxu0 %v741
  %844 = vmatprep.subr.bf16.mxu0 %v746
  %845 = vmatpush1.bf16.msra.mxu0 %v745
  %846 = vmatprep.subr.bf16.mxu0 %v750
  %847 = vmatpush1.bf16.msra.mxu0 %v749
  %848 = vmatprep.subr.bf16.mxu0 %v754
  %849 = vmatpush1.bf16.msra.mxu0 %v753
  %850 = vmatprep.subr.bf16.mxu0 %v758
  %851 = vmatpush1.bf16.msra.mxu0 %v757
  %852 = vmatprep.subr.bf16.mxu0 %v762
  %853 = vmatpush1.bf16.msra.mxu0 %v761
  %854 = vmatprep.subr.bf16.mxu0 %v766
  %855 = vmatpush1.bf16.msra.mxu0 %v765
  %856 = vmatprep.subr.bf16.mxu0 0
  %857 = vmatpush1.bf16.msra.mxu0 0
  %858 = vmatprep.subr.bf16.mxu0 0
  %859 = vmatpush1.bf16.msra.mxu0 0
  %860 = vmatprep.subr.bf16.mxu0 0
  %861 = vmatpush1.bf16.msra.mxu0 0
  %862 = vmatprep.subr.bf16.mxu0 0
  %863 = vmatpush1.bf16.msra.mxu0 0
  %864 = vmatprep.subr.bf16.mxu0 0
  %865 = vmatpush1.bf16.msra.mxu0 0
  %866 = vmatprep.subr.bf16.mxu0 0
  %867 = vmatpush1.bf16.msra.mxu0 0
  %868 = vmatprep.subr.bf16.mxu0 0
  %869 = vmatpush1.bf16.msra.mxu0 0
  %870 = vmatprep.subr.bf16.mxu0 0
  %871 = vmatpush1.bf16.msra.mxu0 0
  %872 = vmatprep.mubr.bf16.mxu0 0
  %873 = vmatmul.mubr.bf16.gmra.mrb[0].mxu0 0
  %v874 = vpop.f32.mrb[0].mxu0
  %v875 = vadd.f32 0.0, %v874
  %v876 = vpop.f32.mrb[0].mxu0
  %v877 = vadd.f32 0.0, %v876
  %v878 = vpop.f32.mrb[0].mxu0
  %v879 = vpop.f32.mrb[0].mxu0
  %880 = vdwg.mxu0
  %v881 = vadd.f32 %v635, %v834
  %v882 = vadd.f32 %v636, %v836
  %v883 = vadd.f32 %v637, %v875
  %v884 = vadd.f32 %v638, %v877
  %v885 = vxor.u32 %v881, 2147483648
  %v886 = vmul.f32 %v885, 1.442695
  %v887 = vpow.pop %v886
  %v888 = vadd.f32 %v887, 1.0
  %v889 = vrcp.pop %v888
  %v890 = vmul.f32 1.0, %v889
  %v891 = vxor.u32 %v882, 2147483648
  %v892 = vmul.f32 %v891, 1.442695
  %v893 = vpow.pop %v892
  %v894 = vadd.f32 %v893, 1.0
  %v895 = vrcp.pop %v894
  %v896 = vmul.f32 1.0, %v895
  %v897 = vtanh.pop %v883
  %v898 = vxor.u32 %v884, 2147483648
  %v899 = vmul.f32 %v898, 1.442695
  %v900 = vpow.pop %v899
  %v901 = vadd.f32 %v900, 1.0
  %v902 = vrcp.pop %v901
  %v903 = vmul.f32 1.0, %v902
  %v904 = vmul.f32 %v896, 0.0
  %v905 = vmul.f32 %v890, %v897
  %v906 = vadd.f32 %v904, %v905
  %v907 = vtanh.pop %v906
  %v908 = vmul.f32 %v903, %v907
  %909 = vst [vmem:[#allocation3] sm:$0xff] %v908
  %v910 = vld [vmem:[#allocation2 + $0x20] sm:$0xff]
  %v911 = vld [vmem:[#allocation2 + $0x28] sm:$0xff]
  %v912 = vld [vmem:[#allocation2 + $0x30] sm:$0xff]
  %v913 = vld [vmem:[#allocation2 + $0x38] sm:$0xff]
  %v914 = vpack.c.bf16 %v908, %v908
  %915 = vmatprep.subr.bf16.mxu0 %v736
  %916 = vmatpush1.bf16.msra.mxu0 %v735
  %917 = vmatprep.subr.bf16.mxu0 %v740
  %918 = vmatpush1.bf16.msra.mxu0 %v739
  %919 = vmatprep.subr.bf16.mxu0 %v744
  %920 = vmatpush1.bf16.msra.mxu0 %v743
  %921 = vmatprep.subr.bf16.mxu0 %v748
  %922 = vmatpush1.bf16.msra.mxu0 %v747
  %923 = vmatprep.subr.bf16.mxu0 %v752
  %924 = vmatpush1.bf16.msra.mxu0 %v751
  %925 = vmatprep.subr.bf16.mxu0 %v756
  %926 = vmatpush1.bf16.msra.mxu0 %v755
  %927 = vmatprep.subr.bf16.mxu0 %v760
  %928 = vmatpush1.bf16.msra.mxu0 %v759
  %929 = vmatprep.subr.bf16.mxu0 %v764
  %930 = vmatpush1.bf16.msra.mxu0 %v763
  %931 = vmatprep.subr.bf16.mxu0 0
  %932 = vmatpush1.bf16.msra.mxu0 0
  %933 = vmatprep.subr.bf16.mxu0 0
  %934 = vmatpush1.bf16.msra.mxu0 0
  %935 = vmatprep.subr.bf16.mxu0 0
  %936 = vmatpush1.bf16.msra.mxu0 0
  %937 = vmatprep.subr.bf16.mxu0 0
  %938 = vmatpush1.bf16.msra.mxu0 0
  %939 = vmatprep.subr.bf16.mxu0 0
  %940 = vmatpush1.bf16.msra.mxu0 0
  %941 = vmatprep.subr.bf16.mxu0 0
  %942 = vmatpush1.bf16.msra.mxu0 0
  %943 = vmatprep.subr.bf16.mxu0 0
  %944 = vmatpush1.bf16.msra.mxu0 0
  %945 = vmatprep.subr.bf16.mxu0 0
  %946 = vmatpush1.bf16.msra.mxu0 0
  %947 = vmatprep.mubr.bf16.mxu0 0
  %948 = vmatmul.mubr.bf16.gmra.mrb[0].mxu0 %v914
  %v949 = vpop.f32.mrb[0].mxu0
  %v950 = vadd.f32 0.0, %v949
  %v951 = vpop.f32.mrb[0].mxu0
  %v952 = vadd.f32 0.0, %v951
  %v953 = vpop.f32.mrb[0].mxu0
  %v954 = vpop.f32.mrb[0].mxu0
  %955 = vdwg.mxu0
  %956 = vmatprep.subr.bf16.mxu0 %v738
  %957 = vmatpush1.bf16.msra.mxu0 %v737
  %958 = vmatprep.subr.bf16.mxu0 %v742
  %959 = vmatpush1.bf16.msra.mxu0 %v741
  %960 = vmatprep.subr.bf16.mxu0 %v746
  %961 = vmatpush1.bf16.msra.mxu0 %v745
  %962 = vmatprep.subr.bf16.mxu0 %v750
  %963 = vmatpush1.bf16.msra.mxu0 %v749
  %964 = vmatprep.subr.bf16.mxu0 %v754
  %965 = vmatpush1.bf16.msra.mxu0 %v753
  %966 = vmatprep.subr.bf16.mxu0 %v758
  %967 = vmatpush1.bf16.msra.mxu0 %v757
  %968 = vmatprep.subr.bf16.mxu0 %v762
  %969 = vmatpush1.bf16.msra.mxu0 %v761
  %970 = vmatprep.subr.bf16.mxu0 %v766
  %971 = vmatpush1.bf16.msra.mxu0 %v765
  %972 = vmatprep.subr.bf16.mxu0 0
  %973 = vmatpush1.bf16.msra.mxu0 0
  %974 = vmatprep.subr.bf16.mxu0 0
  %975 = vmatpush1.bf16.msra.mxu0 0
  %976 = vmatprep.subr.bf16.mxu0 0
  %977 = vmatpush1.bf16.msra.mxu0 0
  %978 = vmatprep.subr.bf16.mxu0 0
  %979 = vmatpush1.bf16.msra.mxu0 0
  %980 = vmatprep.subr.bf16.mxu0 0
  %981 = vmatpush1.bf16.msra.mxu0 0
  %982 = vmatprep.subr.bf16.mxu0 0
  %983 = vmatpush1.bf16.msra.mxu0 0
  %984 = vmatprep.subr.bf16.mxu0 0
  %985 = vmatpush1.bf16.msra.mxu0 0
  %986 = vmatprep.subr.bf16.mxu0 0
  %987 = vmatpush1.bf16.msra.mxu0 0
  %988 = vmatprep.mubr.bf16.mxu0 0
  %989 = vmatmul.mubr.bf16.gmra.mrb[0].mxu0 %v914
  %v990 = vpop.f32.mrb[0].mxu0
  %v991 = vadd.f32 0.0, %v990
  %v992 = vpop.f32.mrb[0].mxu0
  %v993 = vadd.f32 0.0, %v992
  %v994 = vpop.f32.mrb[0].mxu0
  %v995 = vpop.f32.mrb[0].mxu0
  %996 = vdwg.mxu0
  %v997 = vadd.f32 %v910, %v950
  %v998 = vadd.f32 %v911, %v952
  %v999 = vadd.f32 %v912, %v991
  %v1000 = vadd.f32 %v913, %v993
  %v1001 = vxor.u32 %v997, 2147483648
  %v1002 = vmul.f32 %v1001, 1.442695
  %v1003 = vpow.pop %v1002
  %v1004 = vadd.f32 %v1003, 1.0
  %v1005 = vrcp.pop %v1004
  %v1006 = vmul.f32 1.0, %v1005
  %v1007 = vxor.u32 %v998, 2147483648
  %v1008 = vmul.f32 %v1007, 1.442695
  %v1009 = vpow.pop %v1008
  %v1010 = vadd.f32 %v1009, 1.0
  %v1011 = vrcp.pop %v1010
  %v1012 = vmul.f32 1.0, %v1011
  %v1013 = vtanh.pop %v999
  %v1014 = vxor.u32 %v1000, 2147483648
  %v1015 = vmul.f32 %v1014, 1.442695
  %v1016 = vpow.pop %v1015
  %v1017 = vadd.f32 %v1016, 1.0
  %v1018 = vrcp.pop %v1017
  %v1019 = vmul.f32 1.0, %v1018
  %v1020 = vmul.f32 %v1012, %v906
  %v1021 = vmul.f32 %v1006, %v1013
  %v1022 = vadd.f32 %v1020, %v1021
  %v1023 = vtanh.pop %v1022
  %v1024 = vmul.f32 %v1019, %v1023
  %1025 = vst [vmem:[#allocation3 + $0x10] sm:$0xff] %v1024
  %v1026 = vld [vmem:[#allocation2 + $0x40] sm:$0xff]
  %v1027 = vld [vmem:[#allocation2 + $0x48] sm:$0xff]
  %v1028 = vld [vmem:[#allocation2 + $0x50] sm:$0xff]
  %v1029 = vld [vmem:[#allocation2 + $0x58] sm:$0xff]
  %v1030 = vpack.c.bf16 %v1024, %v1024
  %1031 = vmatprep.subr.bf16.mxu0 %v736
  %1032 = vmatpush1.bf16.msra.mxu0 %v735
  %1033 = vmatprep.subr.bf16.mxu0 %v740
  %1034 = vmatpush1.bf16.msra.mxu0 %v739
  %1035 = vmatprep.subr.bf16.mxu0 %v744
  %1036 = vmatpush1.bf16.msra.mxu0 %v743
  %1037 = vmatprep.subr.bf16.mxu0 %v748
  %1038 = vmatpush1.bf16.msra.mxu0 %v747
  %1039 = vmatprep.subr.bf16.mxu0 %v752
  %1040 = vmatpush1.bf16.msra.mxu0 %v751
  %1041 = vmatprep.subr.bf16.mxu0 %v756
  %1042 = vmatpush1.bf16.msra.mxu0 %v755
  %1043 = vmatprep.subr.bf16.mxu0 %v760
  %1044 = vmatpush1.bf16.msra.mxu0 %v759
  %1045 = vmatprep.subr.bf16.mxu0 %v764
  %1046 = vmatpush1.bf16.msra.mxu0 %v763
  %1047 = vmatprep.subr.bf16.mxu0 0
  %1048 = vmatpush1.bf16.msra.mxu0 0
  %1049 = vmatprep.subr.bf16.mxu0 0
  %1050 = vmatpush1.bf16.msra.mxu0 0
  %1051 = vmatprep.subr.bf16.mxu0 0
  %1052 = vmatpush1.bf16.msra.mxu0 0
  %1053 = vmatprep.subr.bf16.mxu0 0
  %1054 = vmatpush1.bf16.msra.mxu0 0
  %1055 = vmatprep.subr.bf16.mxu0 0
  %1056 = vmatpush1.bf16.msra.mxu0 0
  %1057 = vmatprep.subr.bf16.mxu0 0
  %1058 = vmatpush1.bf16.msra.mxu0 0
  %1059 = vmatprep.subr.bf16.mxu0 0
  %1060 = vmatpush1.bf16.msra.mxu0 0
  %1061 = vmatprep.subr.bf16.mxu0 0
  %1062 = vmatpush1.bf16.msra.mxu0 0
  %1063 = vmatprep.mubr.bf16.mxu0 0
  %1064 = vmatmul.mubr.bf16.gmra.mrb[0].mxu0 %v1030
  %v1065 = vpop.f32.mrb[0].mxu0
  %v1066 = vadd.f32 0.0, %v1065
  %v1067 = vpop.f32.mrb[0].mxu0
  %v1068 = vadd.f32 0.0, %v1067
  %v1069 = vpop.f32.mrb[0].mxu0
  %v1070 = vpop.f32.mrb[0].mxu0
  %1071 = vdwg.mxu0
  %1072 = vmatprep.subr.bf16.mxu0 %v738
  %1073 = vmatpush1.bf16.msra.mxu0 %v737
  %1074 = vmatprep.subr.bf16.mxu0 %v742
  %1075 = vmatpush1.bf16.msra.mxu0 %v741
  %1076 = vmatprep.subr.bf16.mxu0 %v746
  %1077 = vmatpush1.bf16.msra.mxu0 %v745
  %1078 = vmatprep.subr.bf16.mxu0 %v750
  %1079 = vmatpush1.bf16.msra.mxu0 %v749
  %1080 = vmatprep.subr.bf16.mxu0 %v754
  %1081 = vmatpush1.bf16.msra.mxu0 %v753
  %1082 = vmatprep.subr.bf16.mxu0 %v758
  %1083 = vmatpush1.bf16.msra.mxu0 %v757
  %1084 = vmatprep.subr.bf16.mxu0 %v762
  %1085 = vmatpush1.bf16.msra.mxu0 %v761
  %1086 = vmatprep.subr.bf16.mxu0 %v766
  %1087 = vmatpush1.bf16.msra.mxu0 %v765
  %1088 = vmatprep.subr.bf16.mxu0 0
  %1089 = vmatpush1.bf16.msra.mxu0 0
  %1090 = vmatprep.subr.bf16.mxu0 0
  %1091 = vmatpush1.bf16.msra.mxu0 0
  %1092 = vmatprep.subr.bf16.mxu0 0
  %1093 = vmatpush1.bf16.msra.mxu0 0
  %1094 = vmatprep.subr.bf16.mxu0 0
  %1095 = vmatpush1.bf16.msra.mxu0 0
  %1096 = vmatprep.subr.bf16.mxu0 0
  %1097 = vmatpush1.bf16.msra.mxu0 0
  %1098 = vmatprep.subr.bf16.mxu0 0
  %1099 = vmatpush1.bf16.msra.mxu0 0
  %1100 = vmatprep.subr.bf16.mxu0 0
  %1101 = vmatpush1.bf16.msra.mxu0 0
  %1102 = vmatprep.subr.bf16.mxu0 0
  %1103 = vmatpush1.bf16.msra.mxu0 0
  %1104 = vmatprep.mubr.bf16.mxu0 0
  %1105 = vmatmul.mubr.bf16.gmra.mrb[0].mxu0 %v1030
  %v1106 = vpop.f32.mrb[0].mxu0
  %v1107 = vadd.f32 0.0, %v1106
  %v1108 = vpop.f32.mrb[0].mxu0
  %v1109 = vadd.f32 0.0, %v1108
  %v1110 = vpop.f32.mrb[0].mxu0
  %v1111 = vpop.f32.mrb[0].mxu0
  %1112 = vdwg.mxu0
  %v1113 = vadd.f32 %v1026, %v1066
  %v1114 = vadd.f32 %v1027, %v1068
  %v1115 = vadd.f32 %v1028, %v1107
  %v1116 = vadd.f32 %v1029, %v1109
  %v1117 = vxor.u32 %v1113, 2147483648
  %v1118 = vmul.f32 %v1117, 1.442695
  %v1119 = vpow.pop %v1118
  %v1120 = vadd.f32 %v1119, 1.0
  %v1121 = vrcp.pop %v1120
  %v1122 = vmul.f32 1.0, %v1121
  %v1123 = vxor.u32 %v1114, 2147483648
  %v1124 = vmul.f32 %v1123, 1.442695
  %v1125 = vpow.pop %v1124
  %v1126 = vadd.f32 %v1125, 1.0
  %v1127 = vrcp.pop %v1126
  %v1128 = vmul.f32 1.0, %v1127
  %v1129 = vtanh.pop %v1115
  %v1130 = vxor.u32 %v1116, 2147483648
  %v1131 = vmul.f32 %v1130, 1.442695
  %v1132 = vpow.pop %v1131
  %v1133 = vadd.f32 %v1132, 1.0
  %v1134 = vrcp.pop %v1133
  %v1135 = vmul.f32 1.0, %v1134
  %v1136 = vmul.f32 %v1128, %v1022
  %v1137 = vmul.f32 %v1122, %v1129
  %v1138 = vadd.f32 %v1136, %v1137
  %v1139 = vtanh.pop %v1138
  %v1140 = vmul.f32 %v1135, %v1139
  %1141 = vst [vmem:[#allocation3 + $0x20] sm:$0xff] %v1140
  %v1142 = vld [vmem:[#allocation2 + $0x60] sm:$0xff]
  %v1143 = vld [vmem:[#allocation2 + $0x68] sm:$0xff]
  %v1144 = vld [vmem:[#allocation2 + $0x70] sm:$0xff]
  %v1145 = vld [vmem:[#allocation2 + $0x78] sm:$0xff]
  %v1146 = vpack.c.bf16 %v1140, %v1140
  %1147 = vmatprep.subr.bf16.mxu0 %v736
  %1148 = vmatpush1.bf16.msra.mxu0 %v735
  %1149 = vmatprep.subr.bf16.mxu0 %v740
  %1150 = vmatpush1.bf16.msra.mxu0 %v739
  %1151 = vmatprep.subr.bf16.mxu0 %v744
  %1152 = vmatpush1.bf16.msra.mxu0 %v743
  %1153 = vmatprep.subr.bf16.mxu0 %v748
  %1154 = vmatpush1.bf16.msra.mxu0 %v747
  %1155 = vmatprep.subr.bf16.mxu0 %v752
  %1156 = vmatpush1.bf16.msra.mxu0 %v751
  %1157 = vmatprep.subr.bf16.mxu0 %v756
  %1158 = vmatpush1.bf16.msra.mxu0 %v755
  %1159 = vmatprep.subr.bf16.mxu0 %v760
  %1160 = vmatpush1.bf16.msra.mxu0 %v759
  %1161 = vmatprep.subr.bf16.mxu0 %v764
  %1162 = vmatpush1.bf16.msra.mxu0 %v763
  %1163 = vmatprep.subr.bf16.mxu0 0
  %1164 = vmatpush1.bf16.msra.mxu0 0
  %1165 = vmatprep.subr.bf16.mxu0 0
  %1166 = vmatpush1.bf16.msra.mxu0 0
  %1167 = vmatprep.subr.bf16.mxu0 0
  %1168 = vmatpush1.bf16.msra.mxu0 0
  %1169 = vmatprep.subr.bf16.mxu0 0
  %1170 = vmatpush1.bf16.msra.mxu0 0
  %1171 = vmatprep.subr.bf16.mxu0 0
  %1172 = vmatpush1.bf16.msra.mxu0 0
  %1173 = vmatprep.subr.bf16.mxu0 0
  %1174 = vmatpush1.bf16.msra.mxu0 0
  %1175 = vmatprep.subr.bf16.mxu0 0
  %1176 = vmatpush1.bf16.msra.mxu0 0
  %1177 = vmatprep.subr.bf16.mxu0 0
  %1178 = vmatpush1.bf16.msra.mxu0 0
  %1179 = vmatprep.mubr.bf16.mxu0 0
  %1180 = vmatmul.mubr.bf16.gmra.mrb[0].mxu0 %v1146
  %v1181 = vpop.f32.mrb[0].mxu0
  %v1182 = vadd.f32 0.0, %v1181
  %v1183 = vpop.f32.mrb[0].mxu0
  %v1184 = vadd.f32 0.0, %v1183
  %v1185 = vpop.f32.mrb[0].mxu0
  %v1186 = vpop.f32.mrb[0].mxu0
  %1187 = vdwg.mxu0
  %1188 = vmatprep.subr.bf16.mxu0 %v738
  %1189 = vmatpush1.bf16.msra.mxu0 %v737
  %1190 = vmatprep.subr.bf16.mxu0 %v742
  %1191 = vmatpush1.bf16.msra.mxu0 %v741
  %1192 = vmatprep.subr.bf16.mxu0 %v746
  %1193 = vmatpush1.bf16.msra.mxu0 %v745
  %1194 = vmatprep.subr.bf16.mxu0 %v750
  %1195 = vmatpush1.bf16.msra.mxu0 %v749
  %1196 = vmatprep.subr.bf16.mxu0 %v754
  %1197 = vmatpush1.bf16.msra.mxu0 %v753
  %1198 = vmatprep.subr.bf16.mxu0 %v758
  %1199 = vmatpush1.bf16.msra.mxu0 %v757
  %1200 = vmatprep.subr.bf16.mxu0 %v762
  %1201 = vmatpush1.bf16.msra.mxu0 %v761
  %1202 = vmatprep.subr.bf16.mxu0 %v766
  %1203 = vmatpush1.bf16.msra.mxu0 %v765
  %1204 = vmatprep.subr.bf16.mxu0 0
  %1205 = vmatpush1.bf16.msra.mxu0 0
  %1206 = vmatprep.subr.bf16.mxu0 0
  %1207 = vmatpush1.bf16.msra.mxu0 0
  %1208 = vmatprep.subr.bf16.mxu0 0
  %1209 = vmatpush1.bf16.msra.mxu0 0
  %1210 = vmatprep.subr.bf16.mxu0 0
  %1211 = vmatpush1.bf16.msra.mxu0 0
  %1212 = vmatprep.subr.bf16.mxu0 0
  %1213 = vmatpush1.bf16.msra.mxu0 0
  %1214 = vmatprep.subr.bf16.mxu0 0
  %1215 = vmatpush1.bf16.msra.mxu0 0
  %1216 = vmatprep.subr.bf16.mxu0 0
  %1217 = vmatpush1.bf16.msra.mxu0 0
  %1218 = vmatprep.subr.bf16.mxu0 0
  %1219 = vmatpush1.bf16.msra.mxu0 0
  %1220 = vmatprep.mubr.bf16.mxu0 0
  %1221 = vmatmul.mubr.bf16.gmra.mrb[0].mxu0 %v1146
  %v1222 = vpop.f32.mrb[0].mxu0
  %v1223 = vadd.f32 0.0, %v1222
  %v1224 = vpop.f32.mrb[0].mxu0
  %v1225 = vadd.f32 0.0, %v1224
  %v1226 = vpop.f32.mrb[0].mxu0
  %v1227 = vpop.f32.mrb[0].mxu0
  %1228 = vdwg.mxu0
  %v1229 = vadd.f32 %v1142, %v1182
  %v1230 = vadd.f32 %v1143, %v1184
  %v1231 = vadd.f32 %v1144, %v1223
  %v1232 = vadd.f32 %v1145, %v1225
  %v1233 = vxor.u32 %v1229, 2147483648
  %v1234 = vmul.f32 %v1233, 1.442695
  %v1235 = vpow.pop %v1234
  %v1236 = vadd.f32 %v1235, 1.0
  %v1237 = vrcp.pop %v1236
  %v1238 = vmul.f32 1.0, %v1237
  %v1239 = vxor.u32 %v1230, 2147483648
  %v1240 = vmul.f32 %v1239, 1.442695
  %v1241 = vpow.pop %v1240
  %v1242 = vadd.f32 %v1241, 1.0
  %v1243 = vrcp.pop %v1242
  %v1244 = vmul.f32 1.0, %v1243
  %v1245 = vtanh.pop %v1231
  %v1246 = vxor.u32 %v1232, 2147483648
  %v1247 = vmul.f32 %v1246, 1.442695
  %v1248 = vpow.pop %v1247
  %v1249 = vadd.f32 %v1248, 1.0
  %v1250 = vrcp.pop %v1249
  %v1251 = vmul.f32 1.0, %v1250
  %v1252 = vmul.f32 %v1244, %v1138
  %v1253 = vmul.f32 %v1238, %v1245
  %v1254 = vadd.f32 %v1252, %v1253
  %v1255 = vtanh.pop %v1254
  %v1256 = vmul.f32 %v1251, %v1255
  %1257 = vst [vmem:[#allocation3 + $0x30] sm:$0xff] %v1256
  %v1258 = vld [vmem:[#allocation2 + $0x80] sm:$0xff]
  %v1259 = vld [vmem:[#allocation2 + $0x88] sm:$0xff]
  %v1260 = vld [vmem:[#allocation2 + $0x90] sm:$0xff]
  %v1261 = vld [vmem:[#allocation2 + $0x98] sm:$0xff]
  %v1262 = vpack.c.bf16 %v1256, %v1256
  %1263 = vmatprep.subr.bf16.mxu0 %v736
  %1264 = vmatpush1.bf16.msra.mxu0 %v735
  %1265 = vmatprep.subr.bf16.mxu0 %v740
  %1266 = vmatpush1.bf16.msra.mxu0 %v739
  %1267 = vmatprep.subr.bf16.mxu0 %v744
  %1268 = vmatpush1.bf16.msra.mxu0 %v743
  %1269 = vmatprep.subr.bf16.mxu0 %v748
  %1270 = vmatpush1.bf16.msra.mxu0 %v747
  %1271 = vmatprep.subr.bf16.mxu0 %v752
  %1272 = vmatpush1.bf16.msra.mxu0 %v751
  %1273 = vmatprep.subr.bf16.mxu0 %v756
  %1274 = vmatpush1.bf16.msra.mxu0 %v755
  %1275 = vmatprep.subr.bf16.mxu0 %v760
  %1276 = vmatpush1.bf16.msra.mxu0 %v759
  %1277 = vmatprep.subr.bf16.mxu0 %v764
  %1278 = vmatpush1.bf16.msra.mxu0 %v763
  %1279 = vmatprep.subr.bf16.mxu0 0
  %1280 = vmatpush1.bf16.msra.mxu0 0
  %1281 = vmatprep.subr.bf16.mxu0 0
  %1282 = vmatpush1.bf16.msra.mxu0 0
  %1283 = vmatprep.subr.bf16.mxu0 0
  %1284 = vmatpush1.bf16.msra.mxu0 0
  %1285 = vmatprep.subr.bf16.mxu0 0
  %1286 = vmatpush1.bf16.msra.mxu0 0
  %1287 = vmatprep.subr.bf16.mxu0 0
  %1288 = vmatpush1.bf16.msra.mxu0 0
  %1289 = vmatprep.subr.bf16.mxu0 0
  %1290 = vmatpush1.bf16.msra.mxu0 0
  %1291 = vmatprep.subr.bf16.mxu0 0
  %1292 = vmatpush1.bf16.msra.mxu0 0
  %1293 = vmatprep.subr.bf16.mxu0 0
  %1294 = vmatpush1.bf16.msra.mxu0 0
  %1295 = vmatprep.mubr.bf16.mxu0 0
  %1296 = vmatmul.mubr.bf16.gmra.mrb[0].mxu0 %v1262
  %v1297 = vpop.f32.mrb[0].mxu0
  %v1298 = vadd.f32 0.0, %v1297
  %v1299 = vpop.f32.mrb[0].mxu0
  %v1300 = vadd.f32 0.0, %v1299
  %v1301 = vpop.f32.mrb[0].mxu0
  %v1302 = vpop.f32.mrb[0].mxu0
  %1303 = vdwg.mxu0
  %1304 = vmatprep.subr.bf16.mxu0 %v738
  %1305 = vmatpush1.bf16.msra.mxu0 %v737
  %1306 = vmatprep.subr.bf16.mxu0 %v742
  %1307 = vmatpush1.bf16.msra.mxu0 %v741
  %1308 = vmatprep.subr.bf16.mxu0 %v746
  %1309 = vmatpush1.bf16.msra.mxu0 %v745
  %1310 = vmatprep.subr.bf16.mxu0 %v750
  %1311 = vmatpush1.bf16.msra.mxu0 %v749
  %1312 = vmatprep.subr.bf16.mxu0 %v754
  %1313 = vmatpush1.bf16.msra.mxu0 %v753
  %1314 = vmatprep.subr.bf16.mxu0 %v758
  %1315 = vmatpush1.bf16.msra.mxu0 %v757
  %1316 = vmatprep.subr.bf16.mxu0 %v762
  %1317 = vmatpush1.bf16.msra.mxu0 %v761
  %1318 = vmatprep.subr.bf16.mxu0 %v766
  %1319 = vmatpush1.bf16.msra.mxu0 %v765
  %1320 = vmatprep.subr.bf16.mxu0 0
  %1321 = vmatpush1.bf16.msra.mxu0 0
  %1322 = vmatprep.subr.bf16.mxu0 0
  %1323 = vmatpush1.bf16.msra.mxu0 0
  %1324 = vmatprep.subr.bf16.mxu0 0
  %1325 = vmatpush1.bf16.msra.mxu0 0
  %1326 = vmatprep.subr.bf16.mxu0 0
  %1327 = vmatpush1.bf16.msra.mxu0 0
  %1328 = vmatprep.subr.bf16.mxu0 0
  %1329 = vmatpush1.bf16.msra.mxu0 0
  %1330 = vmatprep.subr.bf16.mxu0 0
  %1331 = vmatpush1.bf16.msra.mxu0 0
  %1332 = vmatprep.subr.bf16.mxu0 0
  %1333 = vmatpush1.bf16.msra.mxu0 0
  %1334 = vmatprep.subr.bf16.mxu0 0
  %1335 = vmatpush1.bf16.msra.mxu0 0
  %1336 = vmatprep.mubr.bf16.mxu0 0
  %1337 = vmatmul.mubr.bf16.gmra.mrb[0].mxu0 %v1262
  %v1338 = vpop.f32.mrb[0].mxu0
  %v1339 = vadd.f32 0.0, %v1338
  %v1340 = vpop.f32.mrb[0].mxu0
  %v1341 = vadd.f32 0.0, %v1340
  %v1342 = vpop.f32.mrb[0].mxu0
  %v1343 = vpop.f32.mrb[0].mxu0
  %1344 = vdwg.mxu0
  %v1345 = vadd.f32 %v1258, %v1298
  %v1346 = vadd.f32 %v1259, %v1300
  %v1347 = vadd.f32 %v1260, %v1339
  %v1348 = vadd.f32 %v1261, %v1341
  %v1349 = vxor.u32 %v1345, 2147483648
  %v1350 = vmul.f32 %v1349, 1.442695
  %v1351 = vpow.pop %v1350
  %v1352 = vadd.f32 %v1351, 1.0
  %v1353 = vrcp.pop %v1352
  %v1354 = vmul.f32 1.0, %v1353
  %v1355 = vxor.u32 %v1346, 2147483648
  %v1356 = vmul.f32 %v1355, 1.442695
  %v1357 = vpow.pop %v1356
  %v1358 = vadd.f32 %v1357, 1.0
  %v1359 = vrcp.pop %v1358
  %v1360 = vmul.f32 1.0, %v1359
  %v1361 = vtanh.pop %v1347
  %v1362 = vxor.u32 %v1348, 2147483648
  %v1363 = vmul.f32 %v1362, 1.442695
  %v1364 = vpow.pop %v1363
  %v1365 = vadd.f32 %v1364, 1.0
  %v1366 = vrcp.pop %v1365
  %v1367 = vmul.f32 1.0, %v1366
  %v1368 = vmul.f32 %v1360, %v1254
  %v1369 = vmul.f32 %v1354, %v1361
  %v1370 = vadd.f32 %v1368, %v1369
  %v1371 = vtanh.pop %v1370
  %v1372 = vmul.f32 %v1367, %v1371
  %1373 = vst [vmem:[#allocation3 + $0x40] sm:$0xff] %v1372
  %v1374 = vld [vmem:[#allocation2 + $0xa0] sm:$0xff]
  %v1375 = vld [vmem:[#allocation2 + $0xa8] sm:$0xff]
  %v1376 = vld [vmem:[#allocation2 + $0xb0] sm:$0xff]
  %v1377 = vld [vmem:[#allocation2 + $0xb8] sm:$0xff]
  %v1378 = vpack.c.bf16 %v1372, %v1372
  %1379 = vmatprep.subr.bf16.mxu0 %v736
  %1380 = vmatpush1.bf16.msra.mxu0 %v735
  %1381 = vmatprep.subr.bf16.mxu0 %v740
  %1382 = vmatpush1.bf16.msra.mxu0 %v739
  %1383 = vmatprep.subr.bf16.mxu0 %v744
  %1384 = vmatpush1.bf16.msra.mxu0 %v743
  %1385 = vmatprep.subr.bf16.mxu0 %v748
  %1386 = vmatpush1.bf16.msra.mxu0 %v747
  %1387 = vmatprep.subr.bf16.mxu0 %v752
  %1388 = vmatpush1.bf16.msra.mxu0 %v751
  %1389 = vmatprep.subr.bf16.mxu0 %v756
  %1390 = vmatpush1.bf16.msra.mxu0 %v755
  %1391 = vmatprep.subr.bf16.mxu0 %v760
  %1392 = vmatpush1.bf16.msra.mxu0 %v759
  %1393 = vmatprep.subr.bf16.mxu0 %v764
  %1394 = vmatpush1.bf16.msra.mxu0 %v763
  %1395 = vmatprep.subr.bf16.mxu0 0
  %1396 = vmatpush1.bf16.msra.mxu0 0
  %1397 = vmatprep.subr.bf16.mxu0 0
  %1398 = vmatpush1.bf16.msra.mxu0 0
  %1399 = vmatprep.subr.bf16.mxu0 0
  %1400 = vmatpush1.bf16.msra.mxu0 0
  %1401 = vmatprep.subr.bf16.mxu0 0
  %1402 = vmatpush1.bf16.msra.mxu0 0
  %1403 = vmatprep.subr.bf16.mxu0 0
  %1404 = vmatpush1.bf16.msra.mxu0 0
  %1405 = vmatprep.subr.bf16.mxu0 0
  %1406 = vmatpush1.bf16.msra.mxu0 0
  %1407 = vmatprep.subr.bf16.mxu0 0
  %1408 = vmatpush1.bf16.msra.mxu0 0
  %1409 = vmatprep.subr.bf16.mxu0 0
  %1410 = vmatpush1.bf16.msra.mxu0 0
  %1411 = vmatprep.mubr.bf16.mxu0 0
  %1412 = vmatmul.mubr.bf16.gmra.mrb[0].mxu0 %v1378
  %v1413 = vpop.f32.mrb[0].mxu0
  %v1414 = vadd.f32 0.0, %v1413
  %v1415 = vpop.f32.mrb[0].mxu0
  %v1416 = vadd.f32 0.0, %v1415
  %v1417 = vpop.f32.mrb[0].mxu0
  %v1418 = vpop.f32.mrb[0].mxu0
  %1419 = vdwg.mxu0
  %1420 = vmatprep.subr.bf16.mxu0 %v738
  %1421 = vmatpush1.bf16.msra.mxu0 %v737
  %1422 = vmatprep.subr.bf16.mxu0 %v742
  %1423 = vmatpush1.bf16.msra.mxu0 %v741
  %1424 = vmatprep.subr.bf16.mxu0 %v746
  %1425 = vmatpush1.bf16.msra.mxu0 %v745
  %1426 = vmatprep.subr.bf16.mxu0 %v750
  %1427 = vmatpush1.bf16.msra.mxu0 %v749
  %1428 = vmatprep.subr.bf16.mxu0 %v754
  %1429 = vmatpush1.bf16.msra.mxu0 %v753
  %1430 = vmatprep.subr.bf16.mxu0 %v758
  %1431 = vmatpush1.bf16.msra.mxu0 %v757
  %1432 = vmatprep.subr.bf16.mxu0 %v762
  %1433 = vmatpush1.bf16.msra.mxu0 %v761
  %1434 = vmatprep.subr.bf16.mxu0 %v766
  %1435 = vmatpush1.bf16.msra.mxu0 %v765
  %1436 = vmatprep.subr.bf16.mxu0 0
  %1437 = vmatpush1.bf16.msra.mxu0 0
  %1438 = vmatprep.subr.bf16.mxu0 0
  %1439 = vmatpush1.bf16.msra.mxu0 0
  %1440 = vmatprep.subr.bf16.mxu0 0
  %1441 = vmatpush1.bf16.msra.mxu0 0
  %1442 = vmatprep.subr.bf16.mxu0 0
  %1443 = vmatpush1.bf16.msra.mxu0 0
  %1444 = vmatprep.subr.bf16.mxu0 0
  %1445 = vmatpush1.bf16.msra.mxu0 0
  %1446 = vmatprep.subr.bf16.mxu0 0
  %1447 = vmatpush1.bf16.msra.mxu0 0
  %1448 = vmatprep.subr.bf16.mxu0 0
  %1449 = vmatpush1.bf16.msra.mxu0 0
  %1450 = vmatprep.subr.bf16.mxu0 0
  %1451 = vmatpush1.bf16.msra.mxu0 0
  %1452 = vmatprep.mubr.bf16.mxu0 0
  %1453 = vmatmul.mubr.bf16.gmra.mrb[0].mxu0 %v1378
  %v1454 = vpop.f32.mrb[0].mxu0
  %v1455 = vadd.f32 0.0, %v1454
  %v1456 = vpop.f32.mrb[0].mxu0
  %v1457 = vadd.f32 0.0, %v1456
  %v1458 = vpop.f32.mrb[0].mxu0
  %v1459 = vpop.f32.mrb[0].mxu0
  %1460 = vdwg.mxu0
  %v1461 = vadd.f32 %v1374, %v1414
  %v1462 = vadd.f32 %v1375, %v1416
  %v1463 = vadd.f32 %v1376, %v1455
  %v1464 = vadd.f32 %v1377, %v1457
  %v1465 = vxor.u32 %v1461, 2147483648
  %v1466 = vmul.f32 %v1465, 1.442695
  %v1467 = vpow.pop %v1466
  %v1468 = vadd.f32 %v1467, 1.0
  %v1469 = vrcp.pop %v1468
  %v1470 = vmul.f32 1.0, %v1469
  %v1471 = vxor.u32 %v1462, 2147483648
  %v1472 = vmul.f32 %v1471, 1.442695
  %v1473 = vpow.pop %v1472
  %v1474 = vadd.f32 %v1473, 1.0
  %v1475 = vrcp.pop %v1474
  %v1476 = vmul.f32 1.0, %v1475
  %v1477 = vtanh.pop %v1463
  %v1478 = vxor.u32 %v1464, 2147483648
  %v1479 = vmul.f32 %v1478, 1.442695
  %v1480 = vpow.pop %v1479
  %v1481 = vadd.f32 %v1480, 1.0
  %v1482 = vrcp.pop %v1481
  %v1483 = vmul.f32 1.0, %v1482
  %v1484 = vmul.f32 %v1476, %v1370
  %v1485 = vmul.f32 %v1470, %v1477
  %v1486 = vadd.f32 %v1484, %v1485
  %v1487 = vtanh.pop %v1486
  %v1488 = vmul.f32 %v1483, %v1487
  %1489 = vst [vmem:[#allocation3 + $0x50] sm:$0xff] %v1488
  %v1490 = vld [vmem:[#allocation2 + $0xc0] sm:$0xff]
  %v1491 = vld [vmem:[#allocation2 + $0xc8] sm:$0xff]
  %v1492 = vld [vmem:[#allocation2 + $0xd0] sm:$0xff]
  %v1493 = vld [vmem:[#allocation2 + $0xd8] sm:$0xff]
  %v1494 = vpack.c.bf16 %v1488, %v1488
  %1495 = vmatprep.subr.bf16.mxu0 %v736
  %1496 = vmatpush1.bf16.msra.mxu0 %v735
  %1497 = vmatprep.subr.bf16.mxu0 %v740
  %1498 = vmatpush1.bf16.msra.mxu0 %v739
  %1499 = vmatprep.subr.bf16.mxu0 %v744
  %1500 = vmatpush1.bf16.msra.mxu0 %v743
  %1501 = vmatprep.subr.bf16.mxu0 %v748
  %1502 = vmatpush1.bf16.msra.mxu0 %v747
  %1503 = vmatprep.subr.bf16.mxu0 %v752
  %1504 = vmatpush1.bf16.msra.mxu0 %v751
  %1505 = vmatprep.subr.bf16.mxu0 %v756
  %1506 = vmatpush1.bf16.msra.mxu0 %v755
  %1507 = vmatprep.subr.bf16.mxu0 %v760
  %1508 = vmatpush1.bf16.msra.mxu0 %v759
  %1509 = vmatprep.subr.bf16.mxu0 %v764
  %1510 = vmatpush1.bf16.msra.mxu0 %v763
  %1511 = vmatprep.subr.bf16.mxu0 0
  %1512 = vmatpush1.bf16.msra.mxu0 0
  %1513 = vmatprep.subr.bf16.mxu0 0
  %1514 = vmatpush1.bf16.msra.mxu0 0
  %1515 = vmatprep.subr.bf16.mxu0 0
  %1516 = vmatpush1.bf16.msra.mxu0 0
  %1517 = vmatprep.subr.bf16.mxu0 0
  %1518 = vmatpush1.bf16.msra.mxu0 0
  %1519 = vmatprep.subr.bf16.mxu0 0
  %1520 = vmatpush1.bf16.msra.mxu0 0
  %1521 = vmatprep.subr.bf16.mxu0 0
  %1522 = vmatpush1.bf16.msra.mxu0 0
  %1523 = vmatprep.subr.bf16.mxu0 0
  %1524 = vmatpush1.bf16.msra.mxu0 0
  %1525 = vmatprep.subr.bf16.mxu0 0
  %1526 = vmatpush1.bf16.msra.mxu0 0
  %1527 = vmatprep.mubr.bf16.mxu0 0
  %1528 = vmatmul.mubr.bf16.gmra.mrb[0].mxu0 %v1494
  %v1529 = vpop.f32.mrb[0].mxu0
  %v1530 = vadd.f32 0.0, %v1529
  %v1531 = vpop.f32.mrb[0].mxu0
  %v1532 = vadd.f32 0.0, %v1531
  %v1533 = vpop.f32.mrb[0].mxu0
  %v1534 = vpop.f32.mrb[0].mxu0
  %1535 = vdwg.mxu0
  %1536 = vmatprep.subr.bf16.mxu0 %v738
  %1537 = vmatpush1.bf16.msra.mxu0 %v737
  %1538 = vmatprep.subr.bf16.mxu0 %v742
  %1539 = vmatpush1.bf16.msra.mxu0 %v741
  %1540 = vmatprep.subr.bf16.mxu0 %v746
  %1541 = vmatpush1.bf16.msra.mxu0 %v745
  %1542 = vmatprep.subr.bf16.mxu0 %v750
  %1543 = vmatpush1.bf16.msra.mxu0 %v749
  %1544 = vmatprep.subr.bf16.mxu0 %v754
  %1545 = vmatpush1.bf16.msra.mxu0 %v753
  %1546 = vmatprep.subr.bf16.mxu0 %v758
  %1547 = vmatpush1.bf16.msra.mxu0 %v757
  %1548 = vmatprep.subr.bf16.mxu0 %v762
  %1549 = vmatpush1.bf16.msra.mxu0 %v761
  %1550 = vmatprep.subr.bf16.mxu0 %v766
  %1551 = vmatpush1.bf16.msra.mxu0 %v765
  %1552 = vmatprep.subr.bf16.mxu0 0
  %1553 = vmatpush1.bf16.msra.mxu0 0
  %1554 = vmatprep.subr.bf16.mxu0 0
  %1555 = vmatpush1.bf16.msra.mxu0 0
  %1556 = vmatprep.subr.bf16.mxu0 0
  %1557 = vmatpush1.bf16.msra.mxu0 0
  %1558 = vmatprep.subr.bf16.mxu0 0
  %1559 = vmatpush1.bf16.msra.mxu0 0
  %1560 = vmatprep.subr.bf16.mxu0 0
  %1561 = vmatpush1.bf16.msra.mxu0 0
  %1562 = vmatprep.subr.bf16.mxu0 0
  %1563 = vmatpush1.bf16.msra.mxu0 0
  %1564 = vmatprep.subr.bf16.mxu0 0
  %1565 = vmatpush1.bf16.msra.mxu0 0
  %1566 = vmatprep.subr.bf16.mxu0 0
  %1567 = vmatpush1.bf16.msra.mxu0 0
  %1568 = vmatprep.mubr.bf16.mxu0 0
  %1569 = vmatmul.mubr.bf16.gmra.mrb[0].mxu0 %v1494
  %v1570 = vpop.f32.mrb[0].mxu0
  %v1571 = vadd.f32 0.0, %v1570
  %v1572 = vpop.f32.mrb[0].mxu0
  %v1573 = vadd.f32 0.0, %v1572
  %v1574 = vpop.f32.mrb[0].mxu0
  %v1575 = vpop.f32.mrb[0].mxu0
  %1576 = vdwg.mxu0
  %v1577 = vadd.f32 %v1490, %v1530
  %v1578 = vadd.f32 %v1491, %v1532
  %v1579 = vadd.f32 %v1492, %v1571
  %v1580 = vadd.f32 %v1493, %v1573
  %v1581 = vxor.u32 %v1577, 2147483648
  %v1582 = vmul.f32 %v1581, 1.442695
  %v1583 = vpow.pop %v1582
  %v1584 = vadd.f32 %v1583, 1.0
  %v1585 = vrcp.pop %v1584
  %v1586 = vmul.f32 1.0, %v1585
  %v1587 = vxor.u32 %v1578, 2147483648
  %v1588 = vmul.f32 %v1587, 1.442695
  %v1589 = vpow.pop %v1588
  %v1590 = vadd.f32 %v1589, 1.0
  %v1591 = vrcp.pop %v1590
  %v1592 = vmul.f32 1.0, %v1591
  %v1593 = vtanh.pop %v1579
  %v1594 = vxor.u32 %v1580, 2147483648
  %v1595 = vmul.f32 %v1594, 1.442695
  %v1596 = vpow.pop %v1595
  %v1597 = vadd.f32 %v1596, 1.0
  %v1598 = vrcp.pop %v1597
  %v1599 = vmul.f32 1.0, %v1598
  %v1600 = vmul.f32 %v1592, %v1486
  %v1601 = vmul.f32 %v1586, %v1593
  %v1602 = vadd.f32 %v1600, %v1601
  %v1603 = vtanh.pop %v1602
  %v1604 = vmul.f32 %v1599, %v1603
  %1605 = vst [vmem:[#allocation3 + $0x60] sm:$0xff] %v1604
  %v1606 = vld [vmem:[#allocation2 + $0xe0] sm:$0xff]
  %v1607 = vld [vmem:[#allocation2 + $0xe8] sm:$0xff]
  %v1608 = vld [vmem:[#allocation2 + $0xf0] sm:$0xff]
  %v1609 = vld [vmem:[#allocation2 + $0xf8] sm:$0xff]
  %v1610 = vpack.c.bf16 %v1604, %v1604
  %1611 = vmatprep.subr.bf16.mxu0 %v736
  %1612 = vmatpush1.bf16.msra.mxu0 %v735
  %1613 = vmatprep.subr.bf16.mxu0 %v740
  %1614 = vmatpush1.bf16.msra.mxu0 %v739
  %1615 = vmatprep.subr.bf16.mxu0 %v744
  %1616 = vmatpush1.bf16.msra.mxu0 %v743
  %1617 = vmatprep.subr.bf16.mxu0 %v748
  %1618 = vmatpush1.bf16.msra.mxu0 %v747
  %1619 = vmatprep.subr.bf16.mxu0 %v752
  %1620 = vmatpush1.bf16.msra.mxu0 %v751
  %1621 = vmatprep.subr.bf16.mxu0 %v756
  %1622 = vmatpush1.bf16.msra.mxu0 %v755
  %1623 = vmatprep.subr.bf16.mxu0 %v760
  %1624 = vmatpush1.bf16.msra.mxu0 %v759
  %1625 = vmatprep.subr.bf16.mxu0 %v764
  %1626 = vmatpush1.bf16.msra.mxu0 %v763
  %1627 = vmatprep.subr.bf16.mxu0 0
  %1628 = vmatpush1.bf16.msra.mxu0 0
  %1629 = vmatprep.subr.bf16.mxu0 0
  %1630 = vmatpush1.bf16.msra.mxu0 0
  %1631 = vmatprep.subr.bf16.mxu0 0
  %1632 = vmatpush1.bf16.msra.mxu0 0
  %1633 = vmatprep.subr.bf16.mxu0 0
  %1634 = vmatpush1.bf16.msra.mxu0 0
  %1635 = vmatprep.subr.bf16.mxu0 0
  %1636 = vmatpush1.bf16.msra.mxu0 0
  %1637 = vmatprep.subr.bf16.mxu0 0
  %1638 = vmatpush1.bf16.msra.mxu0 0
  %1639 = vmatprep.subr.bf16.mxu0 0
  %1640 = vmatpush1.bf16.msra.mxu0 0
  %1641 = vmatprep.subr.bf16.mxu0 0
  %1642 = vmatpush1.bf16.msra.mxu0 0
  %1643 = vmatprep.mubr.bf16.mxu0 0
  %1644 = vmatmul.mubr.bf16.gmra.mrb[0].mxu0 %v1610
  %v1645 = vpop.f32.mrb[0].mxu0
  %v1646 = vadd.f32 0.0, %v1645
  %v1647 = vpop.f32.mrb[0].mxu0
  %v1648 = vadd.f32 0.0, %v1647
  %v1649 = vpop.f32.mrb[0].mxu0
  %v1650 = vpop.f32.mrb[0].mxu0
  %1651 = vdwg.mxu0
  %1652 = vmatprep.subr.bf16.mxu0 %v738
  %1653 = vmatpush1.bf16.msra.mxu0 %v737
  %1654 = vmatprep.subr.bf16.mxu0 %v742
  %1655 = vmatpush1.bf16.msra.mxu0 %v741
  %1656 = vmatprep.subr.bf16.mxu0 %v746
  %1657 = vmatpush1.bf16.msra.mxu0 %v745
  %1658 = vmatprep.subr.bf16.mxu0 %v750
  %1659 = vmatpush1.bf16.msra.mxu0 %v749
  %1660 = vmatprep.subr.bf16.mxu0 %v754
  %1661 = vmatpush1.bf16.msra.mxu0 %v753
  %1662 = vmatprep.subr.bf16.mxu0 %v758
  %1663 = vmatpush1.bf16.msra.mxu0 %v757
  %1664 = vmatprep.subr.bf16.mxu0 %v762
  %1665 = vmatpush1.bf16.msra.mxu0 %v761
  %1666 = vmatprep.subr.bf16.mxu0 %v766
  %1667 = vmatpush1.bf16.msra.mxu0 %v765
  %1668 = vmatprep.subr.bf16.mxu0 0
  %1669 = vmatpush1.bf16.msra.mxu0 0
  %1670 = vmatprep.subr.bf16.mxu0 0
  %1671 = vmatpush1.bf16.msra.mxu0 0
  %1672 = vmatprep.subr.bf16.mxu0 0
  %1673 = vmatpush1.bf16.msra.mxu0 0
  %1674 = vmatprep.subr.bf16.mxu0 0
  %1675 = vmatpush1.bf16.msra.mxu0 0
  %1676 = vmatprep.subr.bf16.mxu0 0
  %1677 = vmatpush1.bf16.msra.mxu0 0
  %1678 = vmatprep.subr.bf16.mxu0 0
  %1679 = vmatpush1.bf16.msra.mxu0 0
  %1680 = vmatprep.subr.bf16.mxu0 0
  %1681 = vmatpush1.bf16.msra.mxu0 0
  %1682 = vmatprep.subr.bf16.mxu0 0
  %1683 = vmatpush1.bf16.msra.mxu0 0
  %1684 = vmatprep.mubr.bf16.mxu0 0
  %1685 = vmatmul.mubr.bf16.gmra.mrb[0].mxu0 %v1610
  %v1686 = vpop.f32.mrb[0].mxu0
  %v1687 = vadd.f32 0.0, %v1686
  %v1688 = vpop.f32.mrb[0].mxu0
  %v1689 = vadd.f32 0.0, %v1688
  %v1690 = vpop.f32.mrb[0].mxu0
  %v1691 = vpop.f32.mrb[0].mxu0
  %1692 = vdwg.mxu0
  %v1693 = vadd.f32 %v1606, %v1646
  %v1694 = vadd.f32 %v1607, %v1648
  %v1695 = vadd.f32 %v1608, %v1687
  %v1696 = vadd.f32 %v1609, %v1689
  %v1697 = vxor.u32 %v1693, 2147483648
  %v1698 = vmul.f32 %v1697, 1.442695
  %v1699 = vpow.pop %v1698
  %v1700 = vadd.f32 %v1699, 1.0
  %v1701 = vrcp.pop %v1700
  %v1702 = vmul.f32 1.0, %v1701
  %v1703 = vxor.u32 %v1694, 2147483648
  %v1704 = vmul.f32 %v1703, 1.442695
  %v1705 = vpow.pop %v1704
  %v1706 = vadd.f32 %v1705, 1.0
  %v1707 = vrcp.pop %v1706
  %v1708 = vmul.f32 1.0, %v1707
  %v1709 = vtanh.pop %v1695
  %v1710 = vxor.u32 %v1696, 2147483648
  %v1711 = vmul.f32 %v1710, 1.442695
  %v1712 = vpow.pop %v1711
  %v1713 = vadd.f32 %v1712, 1.0
  %v1714 = vrcp.pop %v1713
  %v1715 = vmul.f32 1.0, %v1714
  %v1716 = vmul.f32 %v1708, %v1602
  %v1717 = vmul.f32 %v1702, %v1709
  %v1718 = vadd.f32 %v1716, %v1717
  %v1719 = vtanh.pop %v1718
  %v1720 = vmul.f32 %v1715, %v1719
  %1721 = vst [vmem:[#allocation3 + $0x70] sm:$0xff] %v1720
  %s1722 = scalar_lea.vmem %s2, 256
  %v1723 = vld [vmem:[%s1722] sm:$0xff]
  %v1724 = vld [vmem:[%s1722 + $0x8] sm:$0xff]
  %v1725 = vld [vmem:[%s1722 + $0x10] sm:$0xff]
  %v1726 = vld [vmem:[%s1722 + $0x18] sm:$0xff]
  %v1727 = vld [vmem:[%s1722 + $0x20] sm:$0xff]
  %v1728 = vld [vmem:[%s1722 + $0x28] sm:$0xff]
  %v1729 = vld [vmem:[%s1722 + $0x30] sm:$0xff]
  %v1730 = vld [vmem:[%s1722 + $0x38] sm:$0xff]
  %v1731 = vld [vmem:[%s1722 + $0x40] sm:$0xff]
  %v1732 = vld [vmem:[%s1722 + $0x48] sm:$0xff]
  %v1733 = vld [vmem:[%s1722 + $0x50] sm:$0xff]
  %v1734 = vld [vmem:[%s1722 + $0x58] sm:$0xff]
  %v1735 = vld [vmem:[%s1722 + $0x60] sm:$0xff]
  %v1736 = vld [vmem:[%s1722 + $0x68] sm:$0xff]
  %v1737 = vld [vmem:[%s1722 + $0x70] sm:$0xff]
  %v1738 = vld [vmem:[%s1722 + $0x78] sm:$0xff]
  %v1739 = vld [vmem:[%s1722 + $0x80] sm:$0xff]
  %v1740 = vld [vmem:[%s1722 + $0x88] sm:$0xff]
  %v1741 = vld [vmem:[%s1722 + $0x90] sm:$0xff]
  %v1742 = vld [vmem:[%s1722 + $0x98] sm:$0xff]
  %v1743 = vld [vmem:[%s1722 + $0xa0] sm:$0xff]
  %v1744 = vld [vmem:[%s1722 + $0xa8] sm:$0xff]
  %v1745 = vld [vmem:[%s1722 + $0xb0] sm:$0xff]
  %v1746 = vld [vmem:[%s1722 + $0xb8] sm:$0xff]
  %v1747 = vld [vmem:[%s1722 + $0xc0] sm:$0xff]
  %v1748 = vld [vmem:[%s1722 + $0xc8] sm:$0xff]
  %v1749 = vld [vmem:[%s1722 + $0xd0] sm:$0xff]
  %v1750 = vld [vmem:[%s1722 + $0xd8] sm:$0xff]
  %v1751 = vld [vmem:[%s1722 + $0xe0] sm:$0xff]
  %v1752 = vld [vmem:[%s1722 + $0xe8] sm:$0xff]
  %v1753 = vld [vmem:[%s1722 + $0xf0] sm:$0xff]
  %v1754 = vld [vmem:[%s1722 + $0xf8] sm:$0xff]
  %s1755 = scalar_lea.vmem %s4, 4
  %v1756 = vld [vmem:[%s1755] sm:$0xf]
  %v1758 = vlaneseq
  %v1759 = vshrl.u32 %v1758, 7
  %v1760 = vsub.s32 0, %v1759
  %v1761 = vrot.slane %v1756, %v1760
  %v1762 = vlaneseq
  %v1763 = vshrl.u32 %v1762, 7
  %v1764 = vsub.s32 1, %v1763
  %v1765 = vrot.slane %v1756, %v1764
  %v1766 = vlaneseq
  %v1767 = vshrl.u32 %v1766, 7
  %v1768 = vsub.s32 2, %v1767
  %v1769 = vrot.slane %v1756, %v1768
  %v1770 = vlaneseq
  %v1771 = vshrl.u32 %v1770, 7
  %v1772 = vsub.s32 3, %v1771
  %v1773 = vrot.slane %v1756, %v1772
  %v1810 = vunpack.c.l.b16 %v1723
  %v1811 = vunpack.c.h.b16 %v1723
  %v1812 = vunpack.c.l.b16 %v1724
  %v1813 = vunpack.c.h.b16 %v1724
  %v1814 = vunpack.c.l.b16 %v1725
  %v1815 = vunpack.c.h.b16 %v1725
  %v1816 = vunpack.c.l.b16 %v1726
  %v1817 = vunpack.c.h.b16 %v1726
  %v1818 = vunpack.c.l.b16 %v1727
  %v1819 = vunpack.c.h.b16 %v1727
  %v1820 = vunpack.c.l.b16 %v1728
  %v1821 = vunpack.c.h.b16 %v1728
  %v1822 = vunpack.c.l.b16 %v1729
  %v1823 = vunpack.c.h.b16 %v1729
  %v1824 = vunpack.c.l.b16 %v1730
  %v1825 = vunpack.c.h.b16 %v1730
  %v1826 = vunpack.c.l.b16 %v1731
  %v1827 = vunpack.c.h.b16 %v1731
  %v1828 = vunpack.c.l.b16 %v1732
  %v1829 = vunpack.c.h.b16 %v1732
  %v1830 = vunpack.c.l.b16 %v1733
  %v1831 = vunpack.c.h.b16 %v1733
  %v1832 = vunpack.c.l.b16 %v1734
  %v1833 = vunpack.c.h.b16 %v1734
  %v1834 = vunpack.c.l.b16 %v1735
  %v1835 = vunpack.c.h.b16 %v1735
  %v1836 = vunpack.c.l.b16 %v1736
  %v1837 = vunpack.c.h.b16 %v1736
  %v1838 = vunpack.c.l.b16 %v1737
  %v1839 = vunpack.c.h.b16 %v1737
  %v1840 = vunpack.c.l.b16 %v1738
  %v1841 = vunpack.c.h.b16 %v1738
  %v1842 = vunpack.c.l.b16 %v1739
  %v1843 = vunpack.c.h.b16 %v1739
  %v1844 = vunpack.c.l.b16 %v1740
  %v1845 = vunpack.c.h.b16 %v1740
  %v1846 = vunpack.c.l.b16 %v1741
  %v1847 = vunpack.c.h.b16 %v1741
  %v1848 = vunpack.c.l.b16 %v1742
  %v1849 = vunpack.c.h.b16 %v1742
  %v1850 = vunpack.c.l.b16 %v1743
  %v1851 = vunpack.c.h.b16 %v1743
  %v1852 = vunpack.c.l.b16 %v1744
  %v1853 = vunpack.c.h.b16 %v1744
  %v1854 = vunpack.c.l.b16 %v1745
  %v1855 = vunpack.c.h.b16 %v1745
  %v1856 = vunpack.c.l.b16 %v1746
  %v1857 = vunpack.c.h.b16 %v1746
  %v1858 = vunpack.c.l.b16 %v1747
  %v1859 = vunpack.c.h.b16 %v1747
  %v1860 = vunpack.c.l.b16 %v1748
  %v1861 = vunpack.c.h.b16 %v1748
  %v1862 = vunpack.c.l.b16 %v1749
  %v1863 = vunpack.c.h.b16 %v1749
  %v1864 = vunpack.c.l.b16 %v1750
  %v1865 = vunpack.c.h.b16 %v1750
  %v1866 = vunpack.c.l.b16 %v1751
  %v1867 = vunpack.c.h.b16 %v1751
  %v1868 = vunpack.c.l.b16 %v1752
  %v1869 = vunpack.c.h.b16 %v1752
  %v1870 = vunpack.c.l.b16 %v1753
  %v1871 = vunpack.c.h.b16 %v1753
  %v1872 = vunpack.c.l.b16 %v1754
  %v1873 = vunpack.c.h.b16 %v1754
  %v1874 = vpack.c.b16 %v1814, %v1810
  %v1875 = vpack.c.b16 %v1815, %v1811
  %v1876 = vpack.c.b16 %v1816, %v1812
  %v1877 = vpack.c.b16 %v1817, %v1813
  %v1878 = vpack.c.b16 %v1822, %v1818
  %v1879 = vpack.c.b16 %v1823, %v1819
  %v1880 = vpack.c.b16 %v1824, %v1820
  %v1881 = vpack.c.b16 %v1825, %v1821
  %v1882 = vpack.c.b16 %v1830, %v1826
  %v1883 = vpack.c.b16 %v1831, %v1827
  %v1884 = vpack.c.b16 %v1832, %v1828
  %v1885 = vpack.c.b16 %v1833, %v1829
  %v1886 = vpack.c.b16 %v1838, %v1834
  %v1887 = vpack.c.b16 %v1839, %v1835
  %v1888 = vpack.c.b16 %v1840, %v1836
  %v1889 = vpack.c.b16 %v1841, %v1837
  %v1890 = vpack.c.b16 %v1846, %v1842
  %v1891 = vpack.c.b16 %v1847, %v1843
  %v1892 = vpack.c.b16 %v1848, %v1844
  %v1893 = vpack.c.b16 %v1849, %v1845
  %v1894 = vpack.c.b16 %v1854, %v1850
  %v1895 = vpack.c.b16 %v1855, %v1851
  %v1896 = vpack.c.b16 %v1856, %v1852
  %v1897 = vpack.c.b16 %v1857, %v1853
  %v1898 = vpack.c.b16 %v1862, %v1858
  %v1899 = vpack.c.b16 %v1863, %v1859
  %v1900 = vpack.c.b16 %v1864, %v1860
  %v1901 = vpack.c.b16 %v1865, %v1861
  %v1902 = vpack.c.b16 %v1870, %v1866
  %v1903 = vpack.c.b16 %v1871, %v1867
  %v1904 = vpack.c.b16 %v1872, %v1868
  %v1905 = vpack.c.b16 %v1873, %v1869
  %1938 = vmatprep.subr.bf16.mxu0 %v1875
  %1939 = vmatpush1.bf16.msra.mxu0 %v1874
  %1940 = vmatprep.subr.bf16.mxu0 %v1879
  %1941 = vmatpush1.bf16.msra.mxu0 %v1878
  %1942 = vmatprep.subr.bf16.mxu0 %v1883
  %1943 = vmatpush1.bf16.msra.mxu0 %v1882
  %1944 = vmatprep.subr.bf16.mxu0 %v1887
  %1945 = vmatpush1.bf16.msra.mxu0 %v1886
  %1946 = vmatprep.subr.bf16.mxu0 %v1891
  %1947 = vmatpush1.bf16.msra.mxu0 %v1890
  %1948 = vmatprep.subr.bf16.mxu0 %v1895
  %1949 = vmatpush1.bf16.msra.mxu0 %v1894
  %1950 = vmatprep.subr.bf16.mxu0 %v1899
  %1951 = vmatpush1.bf16.msra.mxu0 %v1898
  %1952 = vmatprep.subr.bf16.mxu0 %v1903
  %1953 = vmatpush1.bf16.msra.mxu0 %v1902
  %1954 = vmatprep.subr.bf16.mxu0 0
  %1955 = vmatpush1.bf16.msra.mxu0 0
  %1956 = vmatprep.subr.bf16.mxu0 0
  %1957 = vmatpush1.bf16.msra.mxu0 0
  %1958 = vmatprep.subr.bf16.mxu0 0
  %1959 = vmatpush1.bf16.msra.mxu0 0
  %1960 = vmatprep.subr.bf16.mxu0 0
  %1961 = vmatpush1.bf16.msra.mxu0 0
  %1962 = vmatprep.subr.bf16.mxu0 0
  %1963 = vmatpush1.bf16.msra.mxu0 0
  %1964 = vmatprep.subr.bf16.mxu0 0
  %1965 = vmatpush1.bf16.msra.mxu0 0
  %1966 = vmatprep.subr.bf16.mxu0 0
  %1967 = vmatpush1.bf16.msra.mxu0 0
  %1968 = vmatprep.subr.bf16.mxu0 0
  %1969 = vmatpush1.bf16.msra.mxu0 0
  %1970 = vmatprep.mubr.bf16.mxu0 0
  %1971 = vmatmul.mubr.bf16.gmra.mrb[0].mxu0 %v207
  %v1972 = vpop.f32.mrb[0].mxu0
  %v1973 = vadd.f32 %v1761, %v1972
  %v1974 = vpop.f32.mrb[0].mxu0
  %v1975 = vadd.f32 %v1765, %v1974
  %v1976 = vpop.f32.mrb[0].mxu0
  %v1977 = vadd.f32 %v1761, %v1976
  %v1978 = vpop.f32.mrb[0].mxu0
  %v1979 = vadd.f32 %v1765, %v1978
  %1980 = vmatprep.mubr.bf16.mxu0 0
  %1981 = vmatmul.mubr.bf16.gmra.mrb[0].mxu0 %v208
  %v1982 = vpop.f32.mrb[0].mxu0
  %v1983 = vadd.f32 %v1761, %v1982
  %v1984 = vpop.f32.mrb[0].mxu0
  %v1985 = vadd.f32 %v1765, %v1984
  %v1986 = vpop.f32.mrb[0].mxu0
  %v1987 = vadd.f32 %v1761, %v1986
  %v1988 = vpop.f32.mrb[0].mxu0
  %v1989 = vadd.f32 %v1765, %v1988
  %1990 = vmatprep.mubr.bf16.mxu0 0
  %1991 = vmatmul.mubr.bf16.gmra.mrb[0].mxu0 %v209
  %v1992 = vpop.f32.mrb[0].mxu0
  %v1993 = vadd.f32 %v1761, %v1992
  %v1994 = vpop.f32.mrb[0].mxu0
  %v1995 = vadd.f32 %v1765, %v1994
  %v1996 = vpop.f32.mrb[0].mxu0
  %v1997 = vadd.f32 %v1761, %v1996
  %v1998 = vpop.f32.mrb[0].mxu0
  %v1999 = vadd.f32 %v1765, %v1998
  %2000 = vmatprep.mubr.bf16.mxu0 0
  %2001 = vmatmul.mubr.bf16.gmra.mrb[0].mxu0 %v210
  %v2002 = vpop.f32.mrb[0].mxu0
  %v2003 = vadd.f32 %v1761, %v2002
  %v2004 = vpop.f32.mrb[0].mxu0
  %v2005 = vadd.f32 %v1765, %v2004
  %v2006 = vpop.f32.mrb[0].mxu0
  %v2007 = vadd.f32 %v1761, %v2006
  %v2008 = vpop.f32.mrb[0].mxu0
  %v2009 = vadd.f32 %v1765, %v2008
  %2010 = vdwg.mxu0
  %2011 = vmatprep.subr.bf16.mxu0 %v1877
  %2012 = vmatpush1.bf16.msra.mxu0 %v1876
  %2013 = vmatprep.subr.bf16.mxu0 %v1881
  %2014 = vmatpush1.bf16.msra.mxu0 %v1880
  %2015 = vmatprep.subr.bf16.mxu0 %v1885
  %2016 = vmatpush1.bf16.msra.mxu0 %v1884
  %2017 = vmatprep.subr.bf16.mxu0 %v1889
  %2018 = vmatpush1.bf16.msra.mxu0 %v1888
  %2019 = vmatprep.subr.bf16.mxu0 %v1893
  %2020 = vmatpush1.bf16.msra.mxu0 %v1892
  %2021 = vmatprep.subr.bf16.mxu0 %v1897
  %2022 = vmatpush1.bf16.msra.mxu0 %v1896
  %2023 = vmatprep.subr.bf16.mxu0 %v1901
  %2024 = vmatpush1.bf16.msra.mxu0 %v1900
  %2025 = vmatprep.subr.bf16.mxu0 %v1905
  %2026 = vmatpush1.bf16.msra.mxu0 %v1904
  %2027 = vmatprep.subr.bf16.mxu0 0
  %2028 = vmatpush1.bf16.msra.mxu0 0
  %2029 = vmatprep.subr.bf16.mxu0 0
  %2030 = vmatpush1.bf16.msra.mxu0 0
  %2031 = vmatprep.subr.bf16.mxu0 0
  %2032 = vmatpush1.bf16.msra.mxu0 0
  %2033 = vmatprep.subr.bf16.mxu0 0
  %2034 = vmatpush1.bf16.msra.mxu0 0
  %2035 = vmatprep.subr.bf16.mxu0 0
  %2036 = vmatpush1.bf16.msra.mxu0 0
  %2037 = vmatprep.subr.bf16.mxu0 0
  %2038 = vmatpush1.bf16.msra.mxu0 0
  %2039 = vmatprep.subr.bf16.mxu0 0
  %2040 = vmatpush1.bf16.msra.mxu0 0
  %2041 = vmatprep.subr.bf16.mxu0 0
  %2042 = vmatpush1.bf16.msra.mxu0 0
  %2043 = vmatprep.mubr.bf16.mxu0 0
  %2044 = vmatmul.mubr.bf16.gmra.mrb[0].mxu0 %v207
  %v2045 = vpop.f32.mrb[0].mxu0
  %v2046 = vadd.f32 %v1769, %v2045
  %v2047 = vpop.f32.mrb[0].mxu0
  %v2048 = vadd.f32 %v1773, %v2047
  %v2049 = vpop.f32.mrb[0].mxu0
  %v2050 = vadd.f32 %v1769, %v2049
  %v2051 = vpop.f32.mrb[0].mxu0
  %v2052 = vadd.f32 %v1773, %v2051
  %2053 = vmatprep.mubr.bf16.mxu0 0
  %2054 = vmatmul.mubr.bf16.gmra.mrb[0].mxu0 %v208
  %v2055 = vpop.f32.mrb[0].mxu0
  %v2056 = vadd.f32 %v1769, %v2055
  %v2057 = vpop.f32.mrb[0].mxu0
  %v2058 = vadd.f32 %v1773, %v2057
  %v2059 = vpop.f32.mrb[0].mxu0
  %v2060 = vadd.f32 %v1769, %v2059
  %v2061 = vpop.f32.mrb[0].mxu0
  %v2062 = vadd.f32 %v1773, %v2061
  %2063 = vmatprep.mubr.bf16.mxu0 0
  %2064 = vmatmul.mubr.bf16.gmra.mrb[0].mxu0 %v209
  %v2065 = vpop.f32.mrb[0].mxu0
  %v2066 = vadd.f32 %v1769, %v2065
  %v2067 = vpop.f32.mrb[0].mxu0
  %v2068 = vadd.f32 %v1773, %v2067
  %v2069 = vpop.f32.mrb[0].mxu0
  %v2070 = vadd.f32 %v1769, %v2069
  %v2071 = vpop.f32.mrb[0].mxu0
  %v2072 = vadd.f32 %v1773, %v2071
  %2073 = vmatprep.mubr.bf16.mxu0 0
  %2074 = vmatmul.mubr.bf16.gmra.mrb[0].mxu0 %v210
  %v2075 = vpop.f32.mrb[0].mxu0
  %v2076 = vadd.f32 %v1769, %v2075
  %v2077 = vpop.f32.mrb[0].mxu0
  %v2078 = vadd.f32 %v1773, %v2077
  %v2079 = vpop.f32.mrb[0].mxu0
  %v2080 = vadd.f32 %v1769, %v2079
  %v2081 = vpop.f32.mrb[0].mxu0
  %v2082 = vadd.f32 %v1773, %v2081
  %2083 = vdwg.mxu0
  %2084 = vst [vmem:[#allocation2] sm:$0xff] %v1973
  %2085 = vst [vmem:[#allocation2 + $0x8] sm:$0xff] %v1975
  %2086 = vst [vmem:[#allocation2 + $0x10] sm:$0xff] %v2046
  %2087 = vst [vmem:[#allocation2 + $0x18] sm:$0xff] %v2048
  %2088 = vst [vmem:[#allocation2 + $0x20] sm:$0xff] %v1977
  %2089 = vst [vmem:[#allocation2 + $0x28] sm:$0xff] %v1979
  %2090 = vst [vmem:[#allocation2 + $0x30] sm:$0xff] %v2050
  %2091 = vst [vmem:[#allocation2 + $0x38] sm:$0xff] %v2052
  %2092 = vst [vmem:[#allocation2 + $0x40] sm:$0xff] %v1983
  %2093 = vst [vmem:[#allocation2 + $0x48] sm:$0xff] %v1985
  %2094 = vst [vmem:[#allocation2 + $0x50] sm:$0xff] %v2056
  %2095 = vst [vmem:[#allocation2 + $0x58] sm:$0xff] %v2058
  %2096 = vst [vmem:[#allocation2 + $0x60] sm:$0xff] %v1987
  %2097 = vst [vmem:[#allocation2 + $0x68] sm:$0xff] %v1989
  %2098 = vst [vmem:[#allocation2 + $0x70] sm:$0xff] %v2060
  %2099 = vst [vmem:[#allocation2 + $0x78] sm:$0xff] %v2062
  %2100 = vst [vmem:[#allocation2 + $0x80] sm:$0xff] %v1993
  %2101 = vst [vmem:[#allocation2 + $0x88] sm:$0xff] %v1995
  %2102 = vst [vmem:[#allocation2 + $0x90] sm:$0xff] %v2066
  %2103 = vst [vmem:[#allocation2 + $0x98] sm:$0xff] %v2068
  %2104 = vst [vmem:[#allocation2 + $0xa0] sm:$0xff] %v1997
  %2105 = vst [vmem:[#allocation2 + $0xa8] sm:$0xff] %v1999
  %2106 = vst [vmem:[#allocation2 + $0xb0] sm:$0xff] %v2070
  %2107 = vst [vmem:[#allocation2 + $0xb8] sm:$0xff] %v2072
  %2108 = vst [vmem:[#allocation2 + $0xc0] sm:$0xff] %v2003
  %2109 = vst [vmem:[#allocation2 + $0xc8] sm:$0xff] %v2005
  %2110 = vst [vmem:[#allocation2 + $0xd0] sm:$0xff] %v2076
  %2111 = vst [vmem:[#allocation2 + $0xd8] sm:$0xff] %v2078
  %2112 = vst [vmem:[#allocation2 + $0xe0] sm:$0xff] %v2007
  %2113 = vst [vmem:[#allocation2 + $0xe8] sm:$0xff] %v2009
  %2114 = vst [vmem:[#allocation2 + $0xf0] sm:$0xff] %v2080
  %2115 = vst [vmem:[#allocation2 + $0xf8] sm:$0xff] %v2082
  %s2116 = scalar_lea.vmem %s3, 256
  %v2117 = vld [vmem:[%s2116] sm:$0xff]
  %v2118 = vld [vmem:[%s2116 + $0x8] sm:$0xff]
  %v2119 = vld [vmem:[%s2116 + $0x10] sm:$0xff]
  %v2120 = vld [vmem:[%s2116 + $0x18] sm:$0xff]
  %v2121 = vld [vmem:[%s2116 + $0x20] sm:$0xff]
  %v2122 = vld [vmem:[%s2116 + $0x28] sm:$0xff]
  %v2123 = vld [vmem:[%s2116 + $0x30] sm:$0xff]
  %v2124 = vld [vmem:[%s2116 + $0x38] sm:$0xff]
  %v2125 = vld [vmem:[%s2116 + $0x40] sm:$0xff]
  %v2126 = vld [vmem:[%s2116 + $0x48] sm:$0xff]
  %v2127 = vld [vmem:[%s2116 + $0x50] sm:$0xff]
  %v2128 = vld [vmem:[%s2116 + $0x58] sm:$0xff]
  %v2129 = vld [vmem:[%s2116 + $0x60] sm:$0xff]
  %v2130 = vld [vmem:[%s2116 + $0x68] sm:$0xff]
  %v2131 = vld [vmem:[%s2116 + $0x70] sm:$0xff]
  %v2132 = vld [vmem:[%s2116 + $0x78] sm:$0xff]
  %v2133 = vld [vmem:[%s2116 + $0x80] sm:$0xff]
  %v2134 = vld [vmem:[%s2116 + $0x88] sm:$0xff]
  %v2135 = vld [vmem:[%s2116 + $0x90] sm:$0xff]
  %v2136 = vld [vmem:[%s2116 + $0x98] sm:$0xff]
  %v2137 = vld [vmem:[%s2116 + $0xa0] sm:$0xff]
  %v2138 = vld [vmem:[%s2116 + $0xa8] sm:$0xff]
  %v2139 = vld [vmem:[%s2116 + $0xb0] sm:$0xff]
  %v2140 = vld [vmem:[%s2116 + $0xb8] sm:$0xff]
  %v2141 = vld [vmem:[%s2116 + $0xc0] sm:$0xff]
  %v2142 = vld [vmem:[%s2116 + $0xc8] sm:$0xff]
  %v2143 = vld [vmem:[%s2116 + $0xd0] sm:$0xff]
  %v2144 = vld [vmem:[%s2116 + $0xd8] sm:$0xff]
  %v2145 = vld [vmem:[%s2116 + $0xe0] sm:$0xff]
  %v2146 = vld [vmem:[%s2116 + $0xe8] sm:$0xff]
  %v2147 = vld [vmem:[%s2116 + $0xf0] sm:$0xff]
  %v2148 = vld [vmem:[%s2116 + $0xf8] sm:$0xff]
  %v2149 = vld [vmem:[#allocation2 + $0xe0] sm:$0xff]
  %v2150 = vld [vmem:[#allocation2 + $0xe8] sm:$0xff]
  %v2151 = vld [vmem:[#allocation2 + $0xf0] sm:$0xff]
  %v2152 = vld [vmem:[#allocation2 + $0xf8] sm:$0xff]
  %v2185 = vunpack.c.l.b16 %v2117
  %v2186 = vunpack.c.h.b16 %v2117
  %v2187 = vunpack.c.l.b16 %v2118
  %v2188 = vunpack.c.h.b16 %v2118
  %v2189 = vunpack.c.l.b16 %v2119
  %v2190 = vunpack.c.h.b16 %v2119
  %v2191 = vunpack.c.l.b16 %v2120
  %v2192 = vunpack.c.h.b16 %v2120
  %v2193 = vunpack.c.l.b16 %v2121
  %v2194 = vunpack.c.h.b16 %v2121
  %v2195 = vunpack.c.l.b16 %v2122
  %v2196 = vunpack.c.h.b16 %v2122
  %v2197 = vunpack.c.l.b16 %v2123
  %v2198 = vunpack.c.h.b16 %v2123
  %v2199 = vunpack.c.l.b16 %v2124
  %v2200 = vunpack.c.h.b16 %v2124
  %v2201 = vunpack.c.l.b16 %v2125
  %v2202 = vunpack.c.h.b16 %v2125
  %v2203 = vunpack.c.l.b16 %v2126
  %v2204 = vunpack.c.h.b16 %v2126
  %v2205 = vunpack.c.l.b16 %v2127
  %v2206 = vunpack.c.h.b16 %v2127
  %v2207 = vunpack.c.l.b16 %v2128
  %v2208 = vunpack.c.h.b16 %v2128
  %v2209 = vunpack.c.l.b16 %v2129
  %v2210 = vunpack.c.h.b16 %v2129
  %v2211 = vunpack.c.l.b16 %v2130
  %v2212 = vunpack.c.h.b16 %v2130
  %v2213 = vunpack.c.l.b16 %v2131
  %v2214 = vunpack.c.h.b16 %v2131
  %v2215 = vunpack.c.l.b16 %v2132
  %v2216 = vunpack.c.h.b16 %v2132
  %v2217 = vunpack.c.l.b16 %v2133
  %v2218 = vunpack.c.h.b16 %v2133
  %v2219 = vunpack.c.l.b16 %v2134
  %v2220 = vunpack.c.h.b16 %v2134
  %v2221 = vunpack.c.l.b16 %v2135
  %v2222 = vunpack.c.h.b16 %v2135
  %v2223 = vunpack.c.l.b16 %v2136
  %v2224 = vunpack.c.h.b16 %v2136
  %v2225 = vunpack.c.l.b16 %v2137
  %v2226 = vunpack.c.h.b16 %v2137
  %v2227 = vunpack.c.l.b16 %v2138
  %v2228 = vunpack.c.h.b16 %v2138
  %v2229 = vunpack.c.l.b16 %v2139
  %v2230 = vunpack.c.h.b16 %v2139
  %v2231 = vunpack.c.l.b16 %v2140
  %v2232 = vunpack.c.h.b16 %v2140
  %v2233 = vunpack.c.l.b16 %v2141
  %v2234 = vunpack.c.h.b16 %v2141
  %v2235 = vunpack.c.l.b16 %v2142
  %v2236 = vunpack.c.h.b16 %v2142
  %v2237 = vunpack.c.l.b16 %v2143
  %v2238 = vunpack.c.h.b16 %v2143
  %v2239 = vunpack.c.l.b16 %v2144
  %v2240 = vunpack.c.h.b16 %v2144
  %v2241 = vunpack.c.l.b16 %v2145
  %v2242 = vunpack.c.h.b16 %v2145
  %v2243 = vunpack.c.l.b16 %v2146
  %v2244 = vunpack.c.h.b16 %v2146
  %v2245 = vunpack.c.l.b16 %v2147
  %v2246 = vunpack.c.h.b16 %v2147
  %v2247 = vunpack.c.l.b16 %v2148
  %v2248 = vunpack.c.h.b16 %v2148
  %v2249 = vpack.c.b16 %v2189, %v2185
  %v2250 = vpack.c.b16 %v2190, %v2186
  %v2251 = vpack.c.b16 %v2191, %v2187
  %v2252 = vpack.c.b16 %v2192, %v2188
  %v2253 = vpack.c.b16 %v2197, %v2193
  %v2254 = vpack.c.b16 %v2198, %v2194
  %v2255 = vpack.c.b16 %v2199, %v2195
  %v2256 = vpack.c.b16 %v2200, %v2196
  %v2257 = vpack.c.b16 %v2205, %v2201
  %v2258 = vpack.c.b16 %v2206, %v2202
  %v2259 = vpack.c.b16 %v2207, %v2203
  %v2260 = vpack.c.b16 %v2208, %v2204
  %v2261 = vpack.c.b16 %v2213, %v2209
  %v2262 = vpack.c.b16 %v2214, %v2210
  %v2263 = vpack.c.b16 %v2215, %v2211
  %v2264 = vpack.c.b16 %v2216, %v2212
  %v2265 = vpack.c.b16 %v2221, %v2217
  %v2266 = vpack.c.b16 %v2222, %v2218
  %v2267 = vpack.c.b16 %v2223, %v2219
  %v2268 = vpack.c.b16 %v2224, %v2220
  %v2269 = vpack.c.b16 %v2229, %v2225
  %v2270 = vpack.c.b16 %v2230, %v2226
  %v2271 = vpack.c.b16 %v2231, %v2227
  %v2272 = vpack.c.b16 %v2232, %v2228
  %v2273 = vpack.c.b16 %v2237, %v2233
  %v2274 = vpack.c.b16 %v2238, %v2234
  %v2275 = vpack.c.b16 %v2239, %v2235
  %v2276 = vpack.c.b16 %v2240, %v2236
  %v2277 = vpack.c.b16 %v2245, %v2241
  %v2278 = vpack.c.b16 %v2246, %v2242
  %v2279 = vpack.c.b16 %v2247, %v2243
  %v2280 = vpack.c.b16 %v2248, %v2244
  %2313 = vmatprep.subr.bf16.mxu0 %v2250
  %2314 = vmatpush1.bf16.msra.mxu0 %v2249
  %2315 = vmatprep.subr.bf16.mxu0 %v2254
  %2316 = vmatpush1.bf16.msra.mxu0 %v2253
  %2317 = vmatprep.subr.bf16.mxu0 %v2258
  %2318 = vmatpush1.bf16.msra.mxu0 %v2257
  %2319 = vmatprep.subr.bf16.mxu0 %v2262
  %2320 = vmatpush1.bf16.msra.mxu0 %v2261
  %2321 = vmatprep.subr.bf16.mxu0 %v2266
  %2322 = vmatpush1.bf16.msra.mxu0 %v2265
  %2323 = vmatprep.subr.bf16.mxu0 %v2270
  %2324 = vmatpush1.bf16.msra.mxu0 %v2269
  %2325 = vmatprep.subr.bf16.mxu0 %v2274
  %2326 = vmatpush1.bf16.msra.mxu0 %v2273
  %2327 = vmatprep.subr.bf16.mxu0 %v2278
  %2328 = vmatpush1.bf16.msra.mxu0 %v2277
  %2329 = vmatprep.subr.bf16.mxu0 0
  %2330 = vmatpush1.bf16.msra.mxu0 0
  %2331 = vmatprep.subr.bf16.mxu0 0
  %2332 = vmatpush1.bf16.msra.mxu0 0
  %2333 = vmatprep.subr.bf16.mxu0 0
  %2334 = vmatpush1.bf16.msra.mxu0 0
  %2335 = vmatprep.subr.bf16.mxu0 0
  %2336 = vmatpush1.bf16.msra.mxu0 0
  %2337 = vmatprep.subr.bf16.mxu0 0
  %2338 = vmatpush1.bf16.msra.mxu0 0
  %2339 = vmatprep.subr.bf16.mxu0 0
  %2340 = vmatpush1.bf16.msra.mxu0 0
  %2341 = vmatprep.subr.bf16.mxu0 0
  %2342 = vmatpush1.bf16.msra.mxu0 0
  %2343 = vmatprep.subr.bf16.mxu0 0
  %2344 = vmatpush1.bf16.msra.mxu0 0
  %2345 = vmatprep.mubr.bf16.mxu0 0
  %2346 = vmatmul.mubr.bf16.gmra.mrb[0].mxu0 0
  %v2347 = vpop.f32.mrb[0].mxu0
  %v2348 = vadd.f32 0.0, %v2347
  %v2349 = vpop.f32.mrb[0].mxu0
  %v2350 = vadd.f32 0.0, %v2349
  %v2351 = vpop.f32.mrb[0].mxu0
  %v2352 = vpop.f32.mrb[0].mxu0
  %2353 = vdwg.mxu0
  %2354 = vmatprep.subr.bf16.mxu0 %v2252
  %2355 = vmatpush1.bf16.msra.mxu0 %v2251
  %2356 = vmatprep.subr.bf16.mxu0 %v2256
  %2357 = vmatpush1.bf16.msra.mxu0 %v2255
  %2358 = vmatprep.subr.bf16.mxu0 %v2260
  %2359 = vmatpush1.bf16.msra.mxu0 %v2259
  %2360 = vmatprep.subr.bf16.mxu0 %v2264
  %2361 = vmatpush1.bf16.msra.mxu0 %v2263
  %2362 = vmatprep.subr.bf16.mxu0 %v2268
  %2363 = vmatpush1.bf16.msra.mxu0 %v2267
  %2364 = vmatprep.subr.bf16.mxu0 %v2272
  %2365 = vmatpush1.bf16.msra.mxu0 %v2271
  %2366 = vmatprep.subr.bf16.mxu0 %v2276
  %2367 = vmatpush1.bf16.msra.mxu0 %v2275
  %2368 = vmatprep.subr.bf16.mxu0 %v2280
  %2369 = vmatpush1.bf16.msra.mxu0 %v2279
  %2370 = vmatprep.subr.bf16.mxu0 0
  %2371 = vmatpush1.bf16.msra.mxu0 0
  %2372 = vmatprep.subr.bf16.mxu0 0
  %2373 = vmatpush1.bf16.msra.mxu0 0
  %2374 = vmatprep.subr.bf16.mxu0 0
  %2375 = vmatpush1.bf16.msra.mxu0 0
  %2376 = vmatprep.subr.bf16.mxu0 0
  %2377 = vmatpush1.bf16.msra.mxu0 0
  %2378 = vmatprep.subr.bf16.mxu0 0
  %2379 = vmatpush1.bf16.msra.mxu0 0
  %2380 = vmatprep.subr.bf16.mxu0 0
  %2381 = vmatpush1.bf16.msra.mxu0 0
  %2382 = vmatprep.subr.bf16.mxu0 0
  %2383 = vmatpush1.bf16.msra.mxu0 0
  %2384 = vmatprep.subr.bf16.mxu0 0
  %2385 = vmatpush1.bf16.msra.mxu0 0
  %2386 = vmatprep.mubr.bf16.mxu0 0
  %2387 = vmatmul.mubr.bf16.gmra.mrb[0].mxu0 0
  %v2388 = vpop.f32.mrb[0].mxu0
  %v2389 = vadd.f32 0.0, %v2388
  %v2390 = vpop.f32.mrb[0].mxu0
  %v2391 = vadd.f32 0.0, %v2390
  %v2392 = vpop.f32.mrb[0].mxu0
  %v2393 = vpop.f32.mrb[0].mxu0
  %2394 = vdwg.mxu0
  %v2395 = vadd.f32 %v2149, %v2348
  %v2396 = vadd.f32 %v2150, %v2350
  %v2397 = vadd.f32 %v2151, %v2389
  %v2398 = vadd.f32 %v2152, %v2391
  %v2399 = vxor.u32 %v2395, 2147483648
  %v2400 = vmul.f32 %v2399, 1.442695
  %v2401 = vpow.pop %v2400
  %v2402 = vadd.f32 %v2401, 1.0
  %v2403 = vrcp.pop %v2402
  %v2404 = vmul.f32 1.0, %v2403
  %v2405 = vxor.u32 %v2396, 2147483648
  %v2406 = vmul.f32 %v2405, 1.442695
  %v2407 = vpow.pop %v2406
  %v2408 = vadd.f32 %v2407, 1.0
  %v2409 = vrcp.pop %v2408
  %v2410 = vmul.f32 1.0, %v2409
  %v2411 = vtanh.pop %v2397
  %v2412 = vxor.u32 %v2398, 2147483648
  %v2413 = vmul.f32 %v2412, 1.442695
  %v2414 = vpow.pop %v2413
  %v2415 = vadd.f32 %v2414, 1.0
  %v2416 = vrcp.pop %v2415
  %v2417 = vmul.f32 1.0, %v2416
  %v2418 = vmul.f32 %v2410, 0.0
  %v2419 = vmul.f32 %v2404, %v2411
  %v2420 = vadd.f32 %v2418, %v2419
  %v2421 = vtanh.pop %v2420
  %v2422 = vmul.f32 %v2417, %v2421
  %2423 = vst [vmem:[#allocation3 + $0x78] sm:$0xff] %v2422
  %v2424 = vld [vmem:[#allocation2 + $0xc0] sm:$0xff]
  %v2425 = vld [vmem:[#allocation2 + $0xc8] sm:$0xff]
  %v2426 = vld [vmem:[#allocation2 + $0xd0] sm:$0xff]
  %v2427 = vld [vmem:[#allocation2 + $0xd8] sm:$0xff]
  %v2428 = vpack.c.bf16 %v2422, %v2422
  %2429 = vmatprep.subr.bf16.mxu0 %v2250
  %2430 = vmatpush1.bf16.msra.mxu0 %v2249
  %2431 = vmatprep.subr.bf16.mxu0 %v2254
  %2432 = vmatpush1.bf16.msra.mxu0 %v2253
  %2433 = vmatprep.subr.bf16.mxu0 %v2258
  %2434 = vmatpush1.bf16.msra.mxu0 %v2257
  %2435 = vmatprep.subr.bf16.mxu0 %v2262
  %2436 = vmatpush1.bf16.msra.mxu0 %v2261
  %2437 = vmatprep.subr.bf16.mxu0 %v2266
  %2438 = vmatpush1.bf16.msra.mxu0 %v2265
  %2439 = vmatprep.subr.bf16.mxu0 %v2270
  %2440 = vmatpush1.bf16.msra.mxu0 %v2269
  %2441 = vmatprep.subr.bf16.mxu0 %v2274
  %2442 = vmatpush1.bf16.msra.mxu0 %v2273
  %2443 = vmatprep.subr.bf16.mxu0 %v2278
  %2444 = vmatpush1.bf16.msra.mxu0 %v2277
  %2445 = vmatprep.subr.bf16.mxu0 0
  %2446 = vmatpush1.bf16.msra.mxu0 0
  %2447 = vmatprep.subr.bf16.mxu0 0
  %2448 = vmatpush1.bf16.msra.mxu0 0
  %2449 = vmatprep.subr.bf16.mxu0 0
  %2450 = vmatpush1.bf16.msra.mxu0 0
  %2451 = vmatprep.subr.bf16.mxu0 0
  %2452 = vmatpush1.bf16.msra.mxu0 0
  %2453 = vmatprep.subr.bf16.mxu0 0
  %2454 = vmatpush1.bf16.msra.mxu0 0
  %2455 = vmatprep.subr.bf16.mxu0 0
  %2456 = vmatpush1.bf16.msra.mxu0 0
  %2457 = vmatprep.subr.bf16.mxu0 0
  %2458 = vmatpush1.bf16.msra.mxu0 0
  %2459 = vmatprep.subr.bf16.mxu0 0
  %2460 = vmatpush1.bf16.msra.mxu0 0
  %2461 = vmatprep.mubr.bf16.mxu0 0
  %2462 = vmatmul.mubr.bf16.gmra.mrb[0].mxu0 %v2428
  %v2463 = vpop.f32.mrb[0].mxu0
  %v2464 = vadd.f32 0.0, %v2463
  %v2465 = vpop.f32.mrb[0].mxu0
  %v2466 = vadd.f32 0.0, %v2465
  %v2467 = vpop.f32.mrb[0].mxu0
  %v2468 = vpop.f32.mrb[0].mxu0
  %2469 = vdwg.mxu0
  %2470 = vmatprep.subr.bf16.mxu0 %v2252
  %2471 = vmatpush1.bf16.msra.mxu0 %v2251
  %2472 = vmatprep.subr.bf16.mxu0 %v2256
  %2473 = vmatpush1.bf16.msra.mxu0 %v2255
  %2474 = vmatprep.subr.bf16.mxu0 %v2260
  %2475 = vmatpush1.bf16.msra.mxu0 %v2259
  %2476 = vmatprep.subr.bf16.mxu0 %v2264
  %2477 = vmatpush1.bf16.msra.mxu0 %v2263
  %2478 = vmatprep.subr.bf16.mxu0 %v2268
  %2479 = vmatpush1.bf16.msra.mxu0 %v2267
  %2480 = vmatprep.subr.bf16.mxu0 %v2272
  %2481 = vmatpush1.bf16.msra.mxu0 %v2271
  %2482 = vmatprep.subr.bf16.mxu0 %v2276
  %2483 = vmatpush1.bf16.msra.mxu0 %v2275
  %2484 = vmatprep.subr.bf16.mxu0 %v2280
  %2485 = vmatpush1.bf16.msra.mxu0 %v2279
  %2486 = vmatprep.subr.bf16.mxu0 0
  %2487 = vmatpush1.bf16.msra.mxu0 0
  %2488 = vmatprep.subr.bf16.mxu0 0
  %2489 = vmatpush1.bf16.msra.mxu0 0
  %2490 = vmatprep.subr.bf16.mxu0 0
  %2491 = vmatpush1.bf16.msra.mxu0 0
  %2492 = vmatprep.subr.bf16.mxu0 0
  %2493 = vmatpush1.bf16.msra.mxu0 0
  %2494 = vmatprep.subr.bf16.mxu0 0
  %2495 = vmatpush1.bf16.msra.mxu0 0
  %2496 = vmatprep.subr.bf16.mxu0 0
  %2497 = vmatpush1.bf16.msra.mxu0 0
  %2498 = vmatprep.subr.bf16.mxu0 0
  %2499 = vmatpush1.bf16.msra.mxu0 0
  %2500 = vmatprep.subr.bf16.mxu0 0
  %2501 = vmatpush1.bf16.msra.mxu0 0
  %2502 = vmatprep.mubr.bf16.mxu0 0
  %2503 = vmatmul.mubr.bf16.gmra.mrb[0].mxu0 %v2428
  %v2504 = vpop.f32.mrb[0].mxu0
  %v2505 = vadd.f32 0.0, %v2504
  %v2506 = vpop.f32.mrb[0].mxu0
  %v2507 = vadd.f32 0.0, %v2506
  %v2508 = vpop.f32.mrb[0].mxu0
  %v2509 = vpop.f32.mrb[0].mxu0
  %2510 = vdwg.mxu0
  %v2511 = vadd.f32 %v2424, %v2464
  %v2512 = vadd.f32 %v2425, %v2466
  %v2513 = vadd.f32 %v2426, %v2505
  %v2514 = vadd.f32 %v2427, %v2507
  %v2515 = vxor.u32 %v2511, 2147483648
  %v2516 = vmul.f32 %v2515, 1.442695
  %v2517 = vpow.pop %v2516
  %v2518 = vadd.f32 %v2517, 1.0
  %v2519 = vrcp.pop %v2518
  %v2520 = vmul.f32 1.0, %v2519
  %v2521 = vxor.u32 %v2512, 2147483648
  %v2522 = vmul.f32 %v2521, 1.442695
  %v2523 = vpow.pop %v2522
  %v2524 = vadd.f32 %v2523, 1.0
  %v2525 = vrcp.pop %v2524
  %v2526 = vmul.f32 1.0, %v2525
  %v2527 = vtanh.pop %v2513
  %v2528 = vxor.u32 %v2514, 2147483648
  %v2529 = vmul.f32 %v2528, 1.442695
  %v2530 = vpow.pop %v2529
  %v2531 = vadd.f32 %v2530, 1.0
  %v2532 = vrcp.pop %v2531
  %v2533 = vmul.f32 1.0, %v2532
  %v2534 = vmul.f32 %v2526, %v2420
  %v2535 = vmul.f32 %v2520, %v2527
  %v2536 = vadd.f32 %v2534, %v2535
  %v2537 = vtanh.pop %v2536
  %v2538 = vmul.f32 %v2533, %v2537
  %2539 = vst [vmem:[#allocation3 + $0x68] sm:$0xff] %v2538
  %v2540 = vld [vmem:[#allocation2 + $0xa0] sm:$0xff]
  %v2541 = vld [vmem:[#allocation2 + $0xa8] sm:$0xff]
  %v2542 = vld [vmem:[#allocation2 + $0xb0] sm:$0xff]
  %v2543 = vld [vmem:[#allocation2 + $0xb8] sm:$0xff]
  %v2544 = vpack.c.bf16 %v2538, %v2538
  %2545 = vmatprep.subr.bf16.mxu0 %v2250
  %2546 = vmatpush1.bf16.msra.mxu0 %v2249
  %2547 = vmatprep.subr.bf16.mxu0 %v2254
  %2548 = vmatpush1.bf16.msra.mxu0 %v2253
  %2549 = vmatprep.subr.bf16.mxu0 %v2258
  %2550 = vmatpush1.bf16.msra.mxu0 %v2257
  %2551 = vmatprep.subr.bf16.mxu0 %v2262
  %2552 = vmatpush1.bf16.msra.mxu0 %v2261
  %2553 = vmatprep.subr.bf16.mxu0 %v2266
  %2554 = vmatpush1.bf16.msra.mxu0 %v2265
  %2555 = vmatprep.subr.bf16.mxu0 %v2270
  %2556 = vmatpush1.bf16.msra.mxu0 %v2269
  %2557 = vmatprep.subr.bf16.mxu0 %v2274
  %2558 = vmatpush1.bf16.msra.mxu0 %v2273
  %2559 = vmatprep.subr.bf16.mxu0 %v2278
  %2560 = vmatpush1.bf16.msra.mxu0 %v2277
  %2561 = vmatprep.subr.bf16.mxu0 0
  %2562 = vmatpush1.bf16.msra.mxu0 0
  %2563 = vmatprep.subr.bf16.mxu0 0
  %2564 = vmatpush1.bf16.msra.mxu0 0
  %2565 = vmatprep.subr.bf16.mxu0 0
  %2566 = vmatpush1.bf16.msra.mxu0 0
  %2567 = vmatprep.subr.bf16.mxu0 0
  %2568 = vmatpush1.bf16.msra.mxu0 0
  %2569 = vmatprep.subr.bf16.mxu0 0
  %2570 = vmatpush1.bf16.msra.mxu0 0
  %2571 = vmatprep.subr.bf16.mxu0 0
  %2572 = vmatpush1.bf16.msra.mxu0 0
  %2573 = vmatprep.subr.bf16.mxu0 0
  %2574 = vmatpush1.bf16.msra.mxu0 0
  %2575 = vmatprep.subr.bf16.mxu0 0
  %2576 = vmatpush1.bf16.msra.mxu0 0
  %2577 = vmatprep.mubr.bf16.mxu0 0
  %2578 = vmatmul.mubr.bf16.gmra.mrb[0].mxu0 %v2544
  %v2579 = vpop.f32.mrb[0].mxu0
  %v2580 = vadd.f32 0.0, %v2579
  %v2581 = vpop.f32.mrb[0].mxu0
  %v2582 = vadd.f32 0.0, %v2581
  %v2583 = vpop.f32.mrb[0].mxu0
  %v2584 = vpop.f32.mrb[0].mxu0
  %2585 = vdwg.mxu0
  %2586 = vmatprep.subr.bf16.mxu0 %v2252
  %2587 = vmatpush1.bf16.msra.mxu0 %v2251
  %2588 = vmatprep.subr.bf16.mxu0 %v2256
  %2589 = vmatpush1.bf16.msra.mxu0 %v2255
  %2590 = vmatprep.subr.bf16.mxu0 %v2260
  %2591 = vmatpush1.bf16.msra.mxu0 %v2259
  %2592 = vmatprep.subr.bf16.mxu0 %v2264
  %2593 = vmatpush1.bf16.msra.mxu0 %v2263
  %2594 = vmatprep.subr.bf16.mxu0 %v2268
  %2595 = vmatpush1.bf16.msra.mxu0 %v2267
  %2596 = vmatprep.subr.bf16.mxu0 %v2272
  %2597 = vmatpush1.bf16.msra.mxu0 %v2271
  %2598 = vmatprep.subr.bf16.mxu0 %v2276
  %2599 = vmatpush1.bf16.msra.mxu0 %v2275
  %2600 = vmatprep.subr.bf16.mxu0 %v2280
  %2601 = vmatpush1.bf16.msra.mxu0 %v2279
  %2602 = vmatprep.subr.bf16.mxu0 0
  %2603 = vmatpush1.bf16.msra.mxu0 0
  %2604 = vmatprep.subr.bf16.mxu0 0
  %2605 = vmatpush1.bf16.msra.mxu0 0
  %2606 = vmatprep.subr.bf16.mxu0 0
  %2607 = vmatpush1.bf16.msra.mxu0 0
  %2608 = vmatprep.subr.bf16.mxu0 0
  %2609 = vmatpush1.bf16.msra.mxu0 0
  %2610 = vmatprep.subr.bf16.mxu0 0
  %2611 = vmatpush1.bf16.msra.mxu0 0
  %2612 = vmatprep.subr.bf16.mxu0 0
  %2613 = vmatpush1.bf16.msra.mxu0 0
  %2614 = vmatprep.subr.bf16.mxu0 0
  %2615 = vmatpush1.bf16.msra.mxu0 0
  %2616 = vmatprep.subr.bf16.mxu0 0
  %2617 = vmatpush1.bf16.msra.mxu0 0
  %2618 = vmatprep.mubr.bf16.mxu0 0
  %2619 = vmatmul.mubr.bf16.gmra.mrb[0].mxu0 %v2544
  %v2620 = vpop.f32.mrb[0].mxu0
  %v2621 = vadd.f32 0.0, %v2620
  %v2622 = vpop.f32.mrb[0].mxu0
  %v2623 = vadd.f32 0.0, %v2622
  %v2624 = vpop.f32.mrb[0].mxu0
  %v2625 = vpop.f32.mrb[0].mxu0
  %2626 = vdwg.mxu0
  %v2627 = vadd.f32 %v2540, %v2580
  %v2628 = vadd.f32 %v2541, %v2582
  %v2629 = vadd.f32 %v2542, %v2621
  %v2630 = vadd.f32 %v2543, %v2623
  %v2631 = vxor.u32 %v2627, 2147483648
  %v2632 = vmul.f32 %v2631, 1.442695
  %v2633 = vpow.pop %v2632
  %v2634 = vadd.f32 %v2633, 1.0
  %v2635 = vrcp.pop %v2634
  %v2636 = vmul.f32 1.0, %v2635
  %v2637 = vxor.u32 %v2628, 2147483648
  %v2638 = vmul.f32 %v2637, 1.442695
  %v2639 = vpow.pop %v2638
  %v2640 = vadd.f32 %v2639, 1.0
  %v2641 = vrcp.pop %v2640
  %v2642 = vmul.f32 1.0, %v2641
  %v2643 = vtanh.pop %v2629
  %v2644 = vxor.u32 %v2630, 2147483648
  %v2645 = vmul.f32 %v2644, 1.442695
  %v2646 = vpow.pop %v2645
  %v2647 = vadd.f32 %v2646, 1.0
  %v2648 = vrcp.pop %v2647
  %v2649 = vmul.f32 1.0, %v2648
  %v2650 = vmul.f32 %v2642, %v2536
  %v2651 = vmul.f32 %v2636, %v2643
  %v2652 = vadd.f32 %v2650, %v2651
  %v2653 = vtanh.pop %v2652
  %v2654 = vmul.f32 %v2649, %v2653
  %2655 = vst [vmem:[#allocation3 + $0x58] sm:$0xff] %v2654
  %v2656 = vld [vmem:[#allocation2 + $0x80] sm:$0xff]
  %v2657 = vld [vmem:[#allocation2 + $0x88] sm:$0xff]
  %v2658 = vld [vmem:[#allocation2 + $0x90] sm:$0xff]
  %v2659 = vld [vmem:[#allocation2 + $0x98] sm:$0xff]
  %v2660 = vpack.c.bf16 %v2654, %v2654
  %2661 = vmatprep.subr.bf16.mxu0 %v2250
  %2662 = vmatpush1.bf16.msra.mxu0 %v2249
  %2663 = vmatprep.subr.bf16.mxu0 %v2254
  %2664 = vmatpush1.bf16.msra.mxu0 %v2253
  %2665 = vmatprep.subr.bf16.mxu0 %v2258
  %2666 = vmatpush1.bf16.msra.mxu0 %v2257
  %2667 = vmatprep.subr.bf16.mxu0 %v2262
  %2668 = vmatpush1.bf16.msra.mxu0 %v2261
  %2669 = vmatprep.subr.bf16.mxu0 %v2266
  %2670 = vmatpush1.bf16.msra.mxu0 %v2265
  %2671 = vmatprep.subr.bf16.mxu0 %v2270
  %2672 = vmatpush1.bf16.msra.mxu0 %v2269
  %2673 = vmatprep.subr.bf16.mxu0 %v2274
  %2674 = vmatpush1.bf16.msra.mxu0 %v2273
  %2675 = vmatprep.subr.bf16.mxu0 %v2278
  %2676 = vmatpush1.bf16.msra.mxu0 %v2277
  %2677 = vmatprep.subr.bf16.mxu0 0
  %2678 = vmatpush1.bf16.msra.mxu0 0
  %2679 = vmatprep.subr.bf16.mxu0 0
  %2680 = vmatpush1.bf16.msra.mxu0 0
  %2681 = vmatprep.subr.bf16.mxu0 0
  %2682 = vmatpush1.bf16.msra.mxu0 0
  %2683 = vmatprep.subr.bf16.mxu0 0
  %2684 = vmatpush1.bf16.msra.mxu0 0
  %2685 = vmatprep.subr.bf16.mxu0 0
  %2686 = vmatpush1.bf16.msra.mxu0 0
  %2687 = vmatprep.subr.bf16.mxu0 0
  %2688 = vmatpush1.bf16.msra.mxu0 0
  %2689 = vmatprep.subr.bf16.mxu0 0
  %2690 = vmatpush1.bf16.msra.mxu0 0
  %2691 = vmatprep.subr.bf16.mxu0 0
  %2692 = vmatpush1.bf16.msra.mxu0 0
  %2693 = vmatprep.mubr.bf16.mxu0 0
  %2694 = vmatmul.mubr.bf16.gmra.mrb[0].mxu0 %v2660
  %v2695 = vpop.f32.mrb[0].mxu0
  %v2696 = vadd.f32 0.0, %v2695
  %v2697 = vpop.f32.mrb[0].mxu0
  %v2698 = vadd.f32 0.0, %v2697
  %v2699 = vpop.f32.mrb[0].mxu0
  %v2700 = vpop.f32.mrb[0].mxu0
  %2701 = vdwg.mxu0
  %2702 = vmatprep.subr.bf16.mxu0 %v2252
  %2703 = vmatpush1.bf16.msra.mxu0 %v2251
  %2704 = vmatprep.subr.bf16.mxu0 %v2256
  %2705 = vmatpush1.bf16.msra.mxu0 %v2255
  %2706 = vmatprep.subr.bf16.mxu0 %v2260
  %2707 = vmatpush1.bf16.msra.mxu0 %v2259
  %2708 = vmatprep.subr.bf16.mxu0 %v2264
  %2709 = vmatpush1.bf16.msra.mxu0 %v2263
  %2710 = vmatprep.subr.bf16.mxu0 %v2268
  %2711 = vmatpush1.bf16.msra.mxu0 %v2267
  %2712 = vmatprep.subr.bf16.mxu0 %v2272
  %2713 = vmatpush1.bf16.msra.mxu0 %v2271
  %2714 = vmatprep.subr.bf16.mxu0 %v2276
  %2715 = vmatpush1.bf16.msra.mxu0 %v2275
  %2716 = vmatprep.subr.bf16.mxu0 %v2280
  %2717 = vmatpush1.bf16.msra.mxu0 %v2279
  %2718 = vmatprep.subr.bf16.mxu0 0
  %2719 = vmatpush1.bf16.msra.mxu0 0
  %2720 = vmatprep.subr.bf16.mxu0 0
  %2721 = vmatpush1.bf16.msra.mxu0 0
  %2722 = vmatprep.subr.bf16.mxu0 0
  %2723 = vmatpush1.bf16.msra.mxu0 0
  %2724 = vmatprep.subr.bf16.mxu0 0
  %2725 = vmatpush1.bf16.msra.mxu0 0
  %2726 = vmatprep.subr.bf16.mxu0 0
  %2727 = vmatpush1.bf16.msra.mxu0 0
  %2728 = vmatprep.subr.bf16.mxu0 0
  %2729 = vmatpush1.bf16.msra.mxu0 0
  %2730 = vmatprep.subr.bf16.mxu0 0
  %2731 = vmatpush1.bf16.msra.mxu0 0
  %2732 = vmatprep.subr.bf16.mxu0 0
  %2733 = vmatpush1.bf16.msra.mxu0 0
  %2734 = vmatprep.mubr.bf16.mxu0 0
  %2735 = vmatmul.mubr.bf16.gmra.mrb[0].mxu0 %v2660
  %v2736 = vpop.f32.mrb[0].mxu0
  %v2737 = vadd.f32 0.0, %v2736
  %v2738 = vpop.f32.mrb[0].mxu0
  %v2739 = vadd.f32 0.0, %v2738
  %v2740 = vpop.f32.mrb[0].mxu0
  %v2741 = vpop.f32.mrb[0].mxu0
  %2742 = vdwg.mxu0
  %v2743 = vadd.f32 %v2656, %v2696
  %v2744 = vadd.f32 %v2657, %v2698
  %v2745 = vadd.f32 %v2658, %v2737
  %v2746 = vadd.f32 %v2659, %v2739
  %v2747 = vxor.u32 %v2743, 2147483648
  %v2748 = vmul.f32 %v2747, 1.442695
  %v2749 = vpow.pop %v2748
  %v2750 = vadd.f32 %v2749, 1.0
  %v2751 = vrcp.pop %v2750
  %v2752 = vmul.f32 1.0, %v2751
  %v2753 = vxor.u32 %v2744, 2147483648
  %v2754 = vmul.f32 %v2753, 1.442695
  %v2755 = vpow.pop %v2754
  %v2756 = vadd.f32 %v2755, 1.0
  %v2757 = vrcp.pop %v2756
  %v2758 = vmul.f32 1.0, %v2757
  %v2759 = vtanh.pop %v2745
  %v2760 = vxor.u32 %v2746, 2147483648
  %v2761 = vmul.f32 %v2760, 1.442695
  %v2762 = vpow.pop %v2761
  %v2763 = vadd.f32 %v2762, 1.0
  %v2764 = vrcp.pop %v2763
  %v2765 = vmul.f32 1.0, %v2764
  %v2766 = vmul.f32 %v2758, %v2652
  %v2767 = vmul.f32 %v2752, %v2759
  %v2768 = vadd.f32 %v2766, %v2767
  %v2769 = vtanh.pop %v2768
  %v2770 = vmul.f32 %v2765, %v2769
  %2771 = vst [vmem:[#allocation3 + $0x48] sm:$0xff] %v2770
  %v2772 = vld [vmem:[#allocation2 + $0x60] sm:$0xff]
  %v2773 = vld [vmem:[#allocation2 + $0x68] sm:$0xff]
  %v2774 = vld [vmem:[#allocation2 + $0x70] sm:$0xff]
  %v2775 = vld [vmem:[#allocation2 + $0x78] sm:$0xff]
  %v2776 = vpack.c.bf16 %v2770, %v2770
  %2777 = vmatprep.subr.bf16.mxu0 %v2250
  %2778 = vmatpush1.bf16.msra.mxu0 %v2249
  %2779 = vmatprep.subr.bf16.mxu0 %v2254
  %2780 = vmatpush1.bf16.msra.mxu0 %v2253
  %2781 = vmatprep.subr.bf16.mxu0 %v2258
  %2782 = vmatpush1.bf16.msra.mxu0 %v2257
  %2783 = vmatprep.subr.bf16.mxu0 %v2262
  %2784 = vmatpush1.bf16.msra.mxu0 %v2261
  %2785 = vmatprep.subr.bf16.mxu0 %v2266
  %2786 = vmatpush1.bf16.msra.mxu0 %v2265
  %2787 = vmatprep.subr.bf16.mxu0 %v2270
  %2788 = vmatpush1.bf16.msra.mxu0 %v2269
  %2789 = vmatprep.subr.bf16.mxu0 %v2274
  %2790 = vmatpush1.bf16.msra.mxu0 %v2273
  %2791 = vmatprep.subr.bf16.mxu0 %v2278
  %2792 = vmatpush1.bf16.msra.mxu0 %v2277
  %2793 = vmatprep.subr.bf16.mxu0 0
  %2794 = vmatpush1.bf16.msra.mxu0 0
  %2795 = vmatprep.subr.bf16.mxu0 0
  %2796 = vmatpush1.bf16.msra.mxu0 0
  %2797 = vmatprep.subr.bf16.mxu0 0
  %2798 = vmatpush1.bf16.msra.mxu0 0
  %2799 = vmatprep.subr.bf16.mxu0 0
  %2800 = vmatpush1.bf16.msra.mxu0 0
  %2801 = vmatprep.subr.bf16.mxu0 0
  %2802 = vmatpush1.bf16.msra.mxu0 0
  %2803 = vmatprep.subr.bf16.mxu0 0
  %2804 = vmatpush1.bf16.msra.mxu0 0
  %2805 = vmatprep.subr.bf16.mxu0 0
  %2806 = vmatpush1.bf16.msra.mxu0 0
  %2807 = vmatprep.subr.bf16.mxu0 0
  %2808 = vmatpush1.bf16.msra.mxu0 0
  %2809 = vmatprep.mubr.bf16.mxu0 0
  %2810 = vmatmul.mubr.bf16.gmra.mrb[0].mxu0 %v2776
  %v2811 = vpop.f32.mrb[0].mxu0
  %v2812 = vadd.f32 0.0, %v2811
  %v2813 = vpop.f32.mrb[0].mxu0
  %v2814 = vadd.f32 0.0, %v2813
  %v2815 = vpop.f32.mrb[0].mxu0
  %v2816 = vpop.f32.mrb[0].mxu0
  %2817 = vdwg.mxu0
  %2818 = vmatprep.subr.bf16.mxu0 %v2252
  %2819 = vmatpush1.bf16.msra.mxu0 %v2251
  %2820 = vmatprep.subr.bf16.mxu0 %v2256
  %2821 = vmatpush1.bf16.msra.mxu0 %v2255
  %2822 = vmatprep.subr.bf16.mxu0 %v2260
  %2823 = vmatpush1.bf16.msra.mxu0 %v2259
  %2824 = vmatprep.subr.bf16.mxu0 %v2264
  %2825 = vmatpush1.bf16.msra.mxu0 %v2263
  %2826 = vmatprep.subr.bf16.mxu0 %v2268
  %2827 = vmatpush1.bf16.msra.mxu0 %v2267
  %2828 = vmatprep.subr.bf16.mxu0 %v2272
  %2829 = vmatpush1.bf16.msra.mxu0 %v2271
  %2830 = vmatprep.subr.bf16.mxu0 %v2276
  %2831 = vmatpush1.bf16.msra.mxu0 %v2275
  %2832 = vmatprep.subr.bf16.mxu0 %v2280
  %2833 = vmatpush1.bf16.msra.mxu0 %v2279
  %2834 = vmatprep.subr.bf16.mxu0 0
  %2835 = vmatpush1.bf16.msra.mxu0 0
  %2836 = vmatprep.subr.bf16.mxu0 0
  %2837 = vmatpush1.bf16.msra.mxu0 0
  %2838 = vmatprep.subr.bf16.mxu0 0
  %2839 = vmatpush1.bf16.msra.mxu0 0
  %2840 = vmatprep.subr.bf16.mxu0 0
  %2841 = vmatpush1.bf16.msra.mxu0 0
  %2842 = vmatprep.subr.bf16.mxu0 0
  %2843 = vmatpush1.bf16.msra.mxu0 0
  %2844 = vmatprep.subr.bf16.mxu0 0
  %2845 = vmatpush1.bf16.msra.mxu0 0
  %2846 = vmatprep.subr.bf16.mxu0 0
  %2847 = vmatpush1.bf16.msra.mxu0 0
  %2848 = vmatprep.subr.bf16.mxu0 0
  %2849 = vmatpush1.bf16.msra.mxu0 0
  %2850 = vmatprep.mubr.bf16.mxu0 0
  %2851 = vmatmul.mubr.bf16.gmra.mrb[0].mxu0 %v2776
  %v2852 = vpop.f32.mrb[0].mxu0
  %v2853 = vadd.f32 0.0, %v2852
  %v2854 = vpop.f32.mrb[0].mxu0
  %v2855 = vadd.f32 0.0, %v2854
  %v2856 = vpop.f32.mrb[0].mxu0
  %v2857 = vpop.f32.mrb[0].mxu0
  %2858 = vdwg.mxu0
  %v2859 = vadd.f32 %v2772, %v2812
  %v2860 = vadd.f32 %v2773, %v2814
  %v2861 = vadd.f32 %v2774, %v2853
  %v2862 = vadd.f32 %v2775, %v2855
  %v2863 = vxor.u32 %v2859, 2147483648
  %v2864 = vmul.f32 %v2863, 1.442695
  %v2865 = vpow.pop %v2864
  %v2866 = vadd.f32 %v2865, 1.0
  %v2867 = vrcp.pop %v2866
  %v2868 = vmul.f32 1.0, %v2867
  %v2869 = vxor.u32 %v2860, 2147483648
  %v2870 = vmul.f32 %v2869, 1.442695
  %v2871 = vpow.pop %v2870
  %v2872 = vadd.f32 %v2871, 1.0
  %v2873 = vrcp.pop %v2872
  %v2874 = vmul.f32 1.0, %v2873
  %v2875 = vtanh.pop %v2861
  %v2876 = vxor.u32 %v2862, 2147483648
  %v2877 = vmul.f32 %v2876, 1.442695
  %v2878 = vpow.pop %v2877
  %v2879 = vadd.f32 %v2878, 1.0
  %v2880 = vrcp.pop %v2879
  %v2881 = vmul.f32 1.0, %v2880
  %v2882 = vmul.f32 %v2874, %v2768
  %v2883 = vmul.f32 %v2868, %v2875
  %v2884 = vadd.f32 %v2882, %v2883
  %v2885 = vtanh.pop %v2884
  %v2886 = vmul.f32 %v2881, %v2885
  %2887 = vst [vmem:[#allocation3 + $0x38] sm:$0xff] %v2886
  %v2888 = vld [vmem:[#allocation2 + $0x40] sm:$0xff]
  %v2889 = vld [vmem:[#allocation2 + $0x48] sm:$0xff]
  %v2890 = vld [vmem:[#allocation2 + $0x50] sm:$0xff]
  %v2891 = vld [vmem:[#allocation2 + $0x58] sm:$0xff]
  %v2892 = vpack.c.bf16 %v2886, %v2886
  %2893 = vmatprep.subr.bf16.mxu0 %v2250
  %2894 = vmatpush1.bf16.msra.mxu0 %v2249
  %2895 = vmatprep.subr.bf16.mxu0 %v2254
  %2896 = vmatpush1.bf16.msra.mxu0 %v2253
  %2897 = vmatprep.subr.bf16.mxu0 %v2258
  %2898 = vmatpush1.bf16.msra.mxu0 %v2257
  %2899 = vmatprep.subr.bf16.mxu0 %v2262
  %2900 = vmatpush1.bf16.msra.mxu0 %v2261
  %2901 = vmatprep.subr.bf16.mxu0 %v2266
  %2902 = vmatpush1.bf16.msra.mxu0 %v2265
  %2903 = vmatprep.subr.bf16.mxu0 %v2270
  %2904 = vmatpush1.bf16.msra.mxu0 %v2269
  %2905 = vmatprep.subr.bf16.mxu0 %v2274
  %2906 = vmatpush1.bf16.msra.mxu0 %v2273
  %2907 = vmatprep.subr.bf16.mxu0 %v2278
  %2908 = vmatpush1.bf16.msra.mxu0 %v2277
  %2909 = vmatprep.subr.bf16.mxu0 0
  %2910 = vmatpush1.bf16.msra.mxu0 0
  %2911 = vmatprep.subr.bf16.mxu0 0
  %2912 = vmatpush1.bf16.msra.mxu0 0
  %2913 = vmatprep.subr.bf16.mxu0 0
  %2914 = vmatpush1.bf16.msra.mxu0 0
  %2915 = vmatprep.subr.bf16.mxu0 0
  %2916 = vmatpush1.bf16.msra.mxu0 0
  %2917 = vmatprep.subr.bf16.mxu0 0
  %2918 = vmatpush1.bf16.msra.mxu0 0
  %2919 = vmatprep.subr.bf16.mxu0 0
  %2920 = vmatpush1.bf16.msra.mxu0 0
  %2921 = vmatprep.subr.bf16.mxu0 0
  %2922 = vmatpush1.bf16.msra.mxu0 0
  %2923 = vmatprep.subr.bf16.mxu0 0
  %2924 = vmatpush1.bf16.msra.mxu0 0
  %2925 = vmatprep.mubr.bf16.mxu0 0
  %2926 = vmatmul.mubr.bf16.gmra.mrb[0].mxu0 %v2892
  %v2927 = vpop.f32.mrb[0].mxu0
  %v2928 = vadd.f32 0.0, %v2927
  %v2929 = vpop.f32.mrb[0].mxu0
  %v2930 = vadd.f32 0.0, %v2929
  %v2931 = vpop.f32.mrb[0].mxu0
  %v2932 = vpop.f32.mrb[0].mxu0
  %2933 = vdwg.mxu0
  %2934 = vmatprep.subr.bf16.mxu0 %v2252
  %2935 = vmatpush1.bf16.msra.mxu0 %v2251
  %2936 = vmatprep.subr.bf16.mxu0 %v2256
  %2937 = vmatpush1.bf16.msra.mxu0 %v2255
  %2938 = vmatprep.subr.bf16.mxu0 %v2260
  %2939 = vmatpush1.bf16.msra.mxu0 %v2259
  %2940 = vmatprep.subr.bf16.mxu0 %v2264
  %2941 = vmatpush1.bf16.msra.mxu0 %v2263
  %2942 = vmatprep.subr.bf16.mxu0 %v2268
  %2943 = vmatpush1.bf16.msra.mxu0 %v2267
  %2944 = vmatprep.subr.bf16.mxu0 %v2272
  %2945 = vmatpush1.bf16.msra.mxu0 %v2271
  %2946 = vmatprep.subr.bf16.mxu0 %v2276
  %2947 = vmatpush1.bf16.msra.mxu0 %v2275
  %2948 = vmatprep.subr.bf16.mxu0 %v2280
  %2949 = vmatpush1.bf16.msra.mxu0 %v2279
  %2950 = vmatprep.subr.bf16.mxu0 0
  %2951 = vmatpush1.bf16.msra.mxu0 0
  %2952 = vmatprep.subr.bf16.mxu0 0
  %2953 = vmatpush1.bf16.msra.mxu0 0
  %2954 = vmatprep.subr.bf16.mxu0 0
  %2955 = vmatpush1.bf16.msra.mxu0 0
  %2956 = vmatprep.subr.bf16.mxu0 0
  %2957 = vmatpush1.bf16.msra.mxu0 0
  %2958 = vmatprep.subr.bf16.mxu0 0
  %2959 = vmatpush1.bf16.msra.mxu0 0
  %2960 = vmatprep.subr.bf16.mxu0 0
  %2961 = vmatpush1.bf16.msra.mxu0 0
  %2962 = vmatprep.subr.bf16.mxu0 0
  %2963 = vmatpush1.bf16.msra.mxu0 0
  %2964 = vmatprep.subr.bf16.mxu0 0
  %2965 = vmatpush1.bf16.msra.mxu0 0
  %2966 = vmatprep.mubr.bf16.mxu0 0
  %2967 = vmatmul.mubr.bf16.gmra.mrb[0].mxu0 %v2892
  %v2968 = vpop.f32.mrb[0].mxu0
  %v2969 = vadd.f32 0.0, %v2968
  %v2970 = vpop.f32.mrb[0].mxu0
  %v2971 = vadd.f32 0.0, %v2970
  %v2972 = vpop.f32.mrb[0].mxu0
  %v2973 = vpop.f32.mrb[0].mxu0
  %2974 = vdwg.mxu0
  %v2975 = vadd.f32 %v2888, %v2928
  %v2976 = vadd.f32 %v2889, %v2930
  %v2977 = vadd.f32 %v2890, %v2969
  %v2978 = vadd.f32 %v2891, %v2971
  %v2979 = vxor.u32 %v2975, 2147483648
  %v2980 = vmul.f32 %v2979, 1.442695
  %v2981 = vpow.pop %v2980
  %v2982 = vadd.f32 %v2981, 1.0
  %v2983 = vrcp.pop %v2982
  %v2984 = vmul.f32 1.0, %v2983
  %v2985 = vxor.u32 %v2976, 2147483648
  %v2986 = vmul.f32 %v2985, 1.442695
  %v2987 = vpow.pop %v2986
  %v2988 = vadd.f32 %v2987, 1.0
  %v2989 = vrcp.pop %v2988
  %v2990 = vmul.f32 1.0, %v2989
  %v2991 = vtanh.pop %v2977
  %v2992 = vxor.u32 %v2978, 2147483648
  %v2993 = vmul.f32 %v2992, 1.442695
  %v2994 = vpow.pop %v2993
  %v2995 = vadd.f32 %v2994, 1.0
  %v2996 = vrcp.pop %v2995
  %v2997 = vmul.f32 1.0, %v2996
  %v2998 = vmul.f32 %v2990, %v2884
  %v2999 = vmul.f32 %v2984, %v2991
  %v3000 = vadd.f32 %v2998, %v2999
  %v3001 = vtanh.pop %v3000
  %v3002 = vmul.f32 %v2997, %v3001
  %3003 = vst [vmem:[#allocation3 + $0x28] sm:$0xff] %v3002
  %v3004 = vld [vmem:[#allocation2 + $0x20] sm:$0xff]
  %v3005 = vld [vmem:[#allocation2 + $0x28] sm:$0xff]
  %v3006 = vld [vmem:[#allocation2 + $0x30] sm:$0xff]
  %v3007 = vld [vmem:[#allocation2 + $0x38] sm:$0xff]
  %v3008 = vpack.c.bf16 %v3002, %v3002
  %3009 = vmatprep.subr.bf16.mxu0 %v2250
  %3010 = vmatpush1.bf16.msra.mxu0 %v2249
  %3011 = vmatprep.subr.bf16.mxu0 %v2254
  %3012 = vmatpush1.bf16.msra.mxu0 %v2253
  %3013 = vmatprep.subr.bf16.mxu0 %v2258
  %3014 = vmatpush1.bf16.msra.mxu0 %v2257
  %3015 = vmatprep.subr.bf16.mxu0 %v2262
  %3016 = vmatpush1.bf16.msra.mxu0 %v2261
  %3017 = vmatprep.subr.bf16.mxu0 %v2266
  %3018 = vmatpush1.bf16.msra.mxu0 %v2265
  %3019 = vmatprep.subr.bf16.mxu0 %v2270
  %3020 = vmatpush1.bf16.msra.mxu0 %v2269
  %3021 = vmatprep.subr.bf16.mxu0 %v2274
  %3022 = vmatpush1.bf16.msra.mxu0 %v2273
  %3023 = vmatprep.subr.bf16.mxu0 %v2278
  %3024 = vmatpush1.bf16.msra.mxu0 %v2277
  %3025 = vmatprep.subr.bf16.mxu0 0
  %3026 = vmatpush1.bf16.msra.mxu0 0
  %3027 = vmatprep.subr.bf16.mxu0 0
  %3028 = vmatpush1.bf16.msra.mxu0 0
  %3029 = vmatprep.subr.bf16.mxu0 0
  %3030 = vmatpush1.bf16.msra.mxu0 0
  %3031 = vmatprep.subr.bf16.mxu0 0
  %3032 = vmatpush1.bf16.msra.mxu0 0
  %3033 = vmatprep.subr.bf16.mxu0 0
  %3034 = vmatpush1.bf16.msra.mxu0 0
  %3035 = vmatprep.subr.bf16.mxu0 0
  %3036 = vmatpush1.bf16.msra.mxu0 0
  %3037 = vmatprep.subr.bf16.mxu0 0
  %3038 = vmatpush1.bf16.msra.mxu0 0
  %3039 = vmatprep.subr.bf16.mxu0 0
  %3040 = vmatpush1.bf16.msra.mxu0 0
  %3041 = vmatprep.mubr.bf16.mxu0 0
  %3042 = vmatmul.mubr.bf16.gmra.mrb[0].mxu0 %v3008
  %v3043 = vpop.f32.mrb[0].mxu0
  %v3044 = vadd.f32 0.0, %v3043
  %v3045 = vpop.f32.mrb[0].mxu0
  %v3046 = vadd.f32 0.0, %v3045
  %v3047 = vpop.f32.mrb[0].mxu0
  %v3048 = vpop.f32.mrb[0].mxu0
  %3049 = vdwg.mxu0
  %3050 = vmatprep.subr.bf16.mxu0 %v2252
  %3051 = vmatpush1.bf16.msra.mxu0 %v2251
  %3052 = vmatprep.subr.bf16.mxu0 %v2256
  %3053 = vmatpush1.bf16.msra.mxu0 %v2255
  %3054 = vmatprep.subr.bf16.mxu0 %v2260
  %3055 = vmatpush1.bf16.msra.mxu0 %v2259
  %3056 = vmatprep.subr.bf16.mxu0 %v2264
  %3057 = vmatpush1.bf16.msra.mxu0 %v2263
  %3058 = vmatprep.subr.bf16.mxu0 %v2268
  %3059 = vmatpush1.bf16.msra.mxu0 %v2267
  %3060 = vmatprep.subr.bf16.mxu0 %v2272
  %3061 = vmatpush1.bf16.msra.mxu0 %v2271
  %3062 = vmatprep.subr.bf16.mxu0 %v2276
  %3063 = vmatpush1.bf16.msra.mxu0 %v2275
  %3064 = vmatprep.subr.bf16.mxu0 %v2280
  %3065 = vmatpush1.bf16.msra.mxu0 %v2279
  %3066 = vmatprep.subr.bf16.mxu0 0
  %3067 = vmatpush1.bf16.msra.mxu0 0
  %3068 = vmatprep.subr.bf16.mxu0 0
  %3069 = vmatpush1.bf16.msra.mxu0 0
  %3070 = vmatprep.subr.bf16.mxu0 0
  %3071 = vmatpush1.bf16.msra.mxu0 0
  %3072 = vmatprep.subr.bf16.mxu0 0
  %3073 = vmatpush1.bf16.msra.mxu0 0
  %3074 = vmatprep.subr.bf16.mxu0 0
  %3075 = vmatpush1.bf16.msra.mxu0 0
  %3076 = vmatprep.subr.bf16.mxu0 0
  %3077 = vmatpush1.bf16.msra.mxu0 0
  %3078 = vmatprep.subr.bf16.mxu0 0
  %3079 = vmatpush1.bf16.msra.mxu0 0
  %3080 = vmatprep.subr.bf16.mxu0 0
  %3081 = vmatpush1.bf16.msra.mxu0 0
  %3082 = vmatprep.mubr.bf16.mxu0 0
  %3083 = vmatmul.mubr.bf16.gmra.mrb[0].mxu0 %v3008
  %v3084 = vpop.f32.mrb[0].mxu0
  %v3085 = vadd.f32 0.0, %v3084
  %v3086 = vpop.f32.mrb[0].mxu0
  %v3087 = vadd.f32 0.0, %v3086
  %v3088 = vpop.f32.mrb[0].mxu0
  %v3089 = vpop.f32.mrb[0].mxu0
  %3090 = vdwg.mxu0
  %v3091 = vadd.f32 %v3004, %v3044
  %v3092 = vadd.f32 %v3005, %v3046
  %v3093 = vadd.f32 %v3006, %v3085
  %v3094 = vadd.f32 %v3007, %v3087
  %v3095 = vxor.u32 %v3091, 2147483648
  %v3096 = vmul.f32 %v3095, 1.442695
  %v3097 = vpow.pop %v3096
  %v3098 = vadd.f32 %v3097, 1.0
  %v3099 = vrcp.pop %v3098
  %v3100 = vmul.f32 1.0, %v3099
  %v3101 = vxor.u32 %v3092, 2147483648
  %v3102 = vmul.f32 %v3101, 1.442695
  %v3103 = vpow.pop %v3102
  %v3104 = vadd.f32 %v3103, 1.0
  %v3105 = vrcp.pop %v3104
  %v3106 = vmul.f32 1.0, %v3105
  %v3107 = vtanh.pop %v3093
  %v3108 = vxor.u32 %v3094, 2147483648
  %v3109 = vmul.f32 %v3108, 1.442695
  %v3110 = vpow.pop %v3109
  %v3111 = vadd.f32 %v3110, 1.0
  %v3112 = vrcp.pop %v3111
  %v3113 = vmul.f32 1.0, %v3112
  %v3114 = vmul.f32 %v3106, %v3000
  %v3115 = vmul.f32 %v3100, %v3107
  %v3116 = vadd.f32 %v3114, %v3115
  %v3117 = vtanh.pop %v3116
  %v3118 = vmul.f32 %v3113, %v3117
  %3119 = vst [vmem:[#allocation3 + $0x18] sm:$0xff] %v3118
  %v3120 = vld [vmem:[#allocation2] sm:$0xff]
  %v3121 = vld [vmem:[#allocation2 + $0x8] sm:$0xff]
  %v3122 = vld [vmem:[#allocation2 + $0x10] sm:$0xff]
  %v3123 = vld [vmem:[#allocation2 + $0x18] sm:$0xff]
  %v3124 = vpack.c.bf16 %v3118, %v3118
  %3125 = vmatprep.subr.bf16.mxu0 %v2250
  %3126 = vmatpush1.bf16.msra.mxu0 %v2249
  %3127 = vmatprep.subr.bf16.mxu0 %v2254
  %3128 = vmatpush1.bf16.msra.mxu0 %v2253
  %3129 = vmatprep.subr.bf16.mxu0 %v2258
  %3130 = vmatpush1.bf16.msra.mxu0 %v2257
  %3131 = vmatprep.subr.bf16.mxu0 %v2262
  %3132 = vmatpush1.bf16.msra.mxu0 %v2261
  %3133 = vmatprep.subr.bf16.mxu0 %v2266
  %3134 = vmatpush1.bf16.msra.mxu0 %v2265
  %3135 = vmatprep.subr.bf16.mxu0 %v2270
  %3136 = vmatpush1.bf16.msra.mxu0 %v2269
  %3137 = vmatprep.subr.bf16.mxu0 %v2274
  %3138 = vmatpush1.bf16.msra.mxu0 %v2273
  %3139 = vmatprep.subr.bf16.mxu0 %v2278
  %3140 = vmatpush1.bf16.msra.mxu0 %v2277
  %3141 = vmatprep.subr.bf16.mxu0 0
  %3142 = vmatpush1.bf16.msra.mxu0 0
  %3143 = vmatprep.subr.bf16.mxu0 0
  %3144 = vmatpush1.bf16.msra.mxu0 0
  %3145 = vmatprep.subr.bf16.mxu0 0
  %3146 = vmatpush1.bf16.msra.mxu0 0
  %3147 = vmatprep.subr.bf16.mxu0 0
  %3148 = vmatpush1.bf16.msra.mxu0 0
  %3149 = vmatprep.subr.bf16.mxu0 0
  %3150 = vmatpush1.bf16.msra.mxu0 0
  %3151 = vmatprep.subr.bf16.mxu0 0
  %3152 = vmatpush1.bf16.msra.mxu0 0
  %3153 = vmatprep.subr.bf16.mxu0 0
  %3154 = vmatpush1.bf16.msra.mxu0 0
  %3155 = vmatprep.subr.bf16.mxu0 0
  %3156 = vmatpush1.bf16.msra.mxu0 0
  %3157 = vmatprep.mubr.bf16.mxu0 0
  %3158 = vmatmul.mubr.bf16.gmra.mrb[0].mxu0 %v3124
  %v3159 = vpop.f32.mrb[0].mxu0
  %v3160 = vadd.f32 0.0, %v3159
  %v3161 = vpop.f32.mrb[0].mxu0
  %v3162 = vadd.f32 0.0, %v3161
  %v3163 = vpop.f32.mrb[0].mxu0
  %v3164 = vpop.f32.mrb[0].mxu0
  %3165 = vdwg.mxu0
  %3166 = vmatprep.subr.bf16.mxu0 %v2252
  %3167 = vmatpush1.bf16.msra.mxu0 %v2251
  %3168 = vmatprep.subr.bf16.mxu0 %v2256
  %3169 = vmatpush1.bf16.msra.mxu0 %v2255
  %3170 = vmatprep.subr.bf16.mxu0 %v2260
  %3171 = vmatpush1.bf16.msra.mxu0 %v2259
  %3172 = vmatprep.subr.bf16.mxu0 %v2264
  %3173 = vmatpush1.bf16.msra.mxu0 %v2263
  %3174 = vmatprep.subr.bf16.mxu0 %v2268
  %3175 = vmatpush1.bf16.msra.mxu0 %v2267
  %3176 = vmatprep.subr.bf16.mxu0 %v2272
  %3177 = vmatpush1.bf16.msra.mxu0 %v2271
  %3178 = vmatprep.subr.bf16.mxu0 %v2276
  %3179 = vmatpush1.bf16.msra.mxu0 %v2275
  %3180 = vmatprep.subr.bf16.mxu0 %v2280
  %3181 = vmatpush1.bf16.msra.mxu0 %v2279
  %3182 = vmatprep.subr.bf16.mxu0 0
  %3183 = vmatpush1.bf16.msra.mxu0 0
  %3184 = vmatprep.subr.bf16.mxu0 0
  %3185 = vmatpush1.bf16.msra.mxu0 0
  %3186 = vmatprep.subr.bf16.mxu0 0
  %3187 = vmatpush1.bf16.msra.mxu0 0
  %3188 = vmatprep.subr.bf16.mxu0 0
  %3189 = vmatpush1.bf16.msra.mxu0 0
  %3190 = vmatprep.subr.bf16.mxu0 0
  %3191 = vmatpush1.bf16.msra.mxu0 0
  %3192 = vmatprep.subr.bf16.mxu0 0
  %3193 = vmatpush1.bf16.msra.mxu0 0
  %3194 = vmatprep.subr.bf16.mxu0 0
  %3195 = vmatpush1.bf16.msra.mxu0 0
  %3196 = vmatprep.subr.bf16.mxu0 0
  %3197 = vmatpush1.bf16.msra.mxu0 0
  %3198 = vmatprep.mubr.bf16.mxu0 0
  %3199 = vmatmul.mubr.bf16.gmra.mrb[0].mxu0 %v3124
  %v3200 = vpop.f32.mrb[0].mxu0
  %v3201 = vadd.f32 0.0, %v3200
  %v3202 = vpop.f32.mrb[0].mxu0
  %v3203 = vadd.f32 0.0, %v3202
  %v3204 = vpop.f32.mrb[0].mxu0
  %v3205 = vpop.f32.mrb[0].mxu0
  %3206 = vdwg.mxu0
  %v3207 = vadd.f32 %v3120, %v3160
  %v3208 = vadd.f32 %v3121, %v3162
  %v3209 = vadd.f32 %v3122, %v3201
  %v3210 = vadd.f32 %v3123, %v3203
  %v3211 = vxor.u32 %v3207, 2147483648
  %v3212 = vmul.f32 %v3211, 1.442695
  %v3213 = vpow.pop %v3212
  %v3214 = vadd.f32 %v3213, 1.0
  %v3215 = vrcp.pop %v3214
  %v3216 = vmul.f32 1.0, %v3215
  %v3217 = vxor.u32 %v3208, 2147483648
  %v3218 = vmul.f32 %v3217, 1.442695
  %v3219 = vpow.pop %v3218
  %v3220 = vadd.f32 %v3219, 1.0
  %v3221 = vrcp.pop %v3220
  %v3222 = vmul.f32 1.0, %v3221
  %v3223 = vtanh.pop %v3209
  %v3224 = vxor.u32 %v3210, 2147483648
  %v3225 = vmul.f32 %v3224, 1.442695
  %v3226 = vpow.pop %v3225
  %v3227 = vadd.f32 %v3226, 1.0
  %v3228 = vrcp.pop %v3227
  %v3229 = vmul.f32 1.0, %v3228
  %v3230 = vmul.f32 %v3222, %v3116
  %v3231 = vmul.f32 %v3216, %v3223
  %v3232 = vadd.f32 %v3230, %v3231
  %v3233 = vtanh.pop %v3232
  %v3234 = vmul.f32 %v3229, %v3233
  %3235 = vst [vmem:[#allocation3 + $0x8] sm:$0xff] %v3234
  %v3236 = vld [vmem:[#allocation3] sm:$0xff]
  %v3237 = vld [vmem:[#allocation3 + $0x8] sm:$0xff]
  %v3238 = vld [vmem:[#allocation3 + $0x10] sm:$0xff]
  %v3239 = vld [vmem:[#allocation3 + $0x18] sm:$0xff]
  %v3240 = vld [vmem:[#allocation3 + $0x20] sm:$0xff]
  %v3241 = vld [vmem:[#allocation3 + $0x28] sm:$0xff]
  %v3242 = vld [vmem:[#allocation3 + $0x30] sm:$0xff]
  %v3243 = vld [vmem:[#allocation3 + $0x38] sm:$0xff]
  %v3244 = vld [vmem:[#allocation3 + $0x40] sm:$0xff]
  %v3245 = vld [vmem:[#allocation3 + $0x48] sm:$0xff]
  %v3246 = vld [vmem:[#allocation3 + $0x50] sm:$0xff]
  %v3247 = vld [vmem:[#allocation3 + $0x58] sm:$0xff]
  %v3248 = vld [vmem:[#allocation3 + $0x60] sm:$0xff]
  %v3249 = vld [vmem:[#allocation3 + $0x68] sm:$0xff]
  %v3250 = vld [vmem:[#allocation3 + $0x70] sm:$0xff]
  %v3251 = vld [vmem:[#allocation3 + $0x78] sm:$0xff]
  %v3252 = vpack.c.bf16 %v3238, %v3236
  %v3253 = vpack.c.bf16 %v3239, %v3237
  %v3254 = vpack.c.bf16 %v3242, %v3240
  %v3255 = vpack.c.bf16 %v3243, %v3241
  %v3256 = vpack.c.bf16 %v3246, %v3244
  %v3257 = vpack.c.bf16 %v3247, %v3245
  %v3258 = vpack.c.bf16 %v3250, %v3248
  %v3259 = vpack.c.bf16 %v3251, %v3249
  %v3260 = vld [vmem:[%s5] sm:$0xff]
  %v3261 = vld [vmem:[%s5 + $0x8] sm:$0xff]
  %v3262 = vld [vmem:[%s5 + $0x10] sm:$0xff]
  %v3263 = vld [vmem:[%s5 + $0x18] sm:$0xff]
  %v3264 = vld [vmem:[%s5 + $0x20] sm:$0xff]
  %v3265 = vld [vmem:[%s5 + $0x28] sm:$0xff]
  %v3266 = vld [vmem:[%s5 + $0x30] sm:$0xff]
  %v3267 = vld [vmem:[%s5 + $0x38] sm:$0xff]
  %v3268 = vld [vmem:[%s5 + $0x40] sm:$0xff]
  %v3269 = vld [vmem:[%s5 + $0x48] sm:$0xff]
  %v3270 = vld [vmem:[%s5 + $0x50] sm:$0xff]
  %v3271 = vld [vmem:[%s5 + $0x58] sm:$0xff]
  %v3272 = vld [vmem:[%s5 + $0x60] sm:$0xff]
  %v3273 = vld [vmem:[%s5 + $0x68] sm:$0xff]
  %v3274 = vld [vmem:[%s5 + $0x70] sm:$0xff]
  %v3275 = vld [vmem:[%s5 + $0x78] sm:$0xff]
  %v3276 = vld [vmem:[%s5 + $0x80] sm:$0xff]
  %v3277 = vld [vmem:[%s5 + $0x88] sm:$0xff]
  %v3278 = vld [vmem:[%s5 + $0x90] sm:$0xff]
  %v3279 = vld [vmem:[%s5 + $0x98] sm:$0xff]
  %v3280 = vld [vmem:[%s5 + $0xa0] sm:$0xff]
  %v3281 = vld [vmem:[%s5 + $0xa8] sm:$0xff]
  %v3282 = vld [vmem:[%s5 + $0xb0] sm:$0xff]
  %v3283 = vld [vmem:[%s5 + $0xb8] sm:$0xff]
  %v3284 = vld [vmem:[%s5 + $0xc0] sm:$0xff]
  %v3285 = vld [vmem:[%s5 + $0xc8] sm:$0xff]
  %v3286 = vld [vmem:[%s5 + $0xd0] sm:$0xff]
  %v3287 = vld [vmem:[%s5 + $0xd8] sm:$0xff]
  %v3288 = vld [vmem:[%s5 + $0xe0] sm:$0xff]
  %v3289 = vld [vmem:[%s5 + $0xe8] sm:$0xff]
  %v3290 = vld [vmem:[%s5 + $0xf0] sm:$0xff]
  %v3291 = vld [vmem:[%s5 + $0xf8] sm:$0xff]
  %v3292 = vld [vmem:[%s5 + $0x100] sm:$0xff]
  %v3293 = vld [vmem:[%s5 + $0x108] sm:$0xff]
  %v3294 = vld [vmem:[%s5 + $0x110] sm:$0xff]
  %v3295 = vld [vmem:[%s5 + $0x118] sm:$0xff]
  %v3296 = vld [vmem:[%s5 + $0x120] sm:$0xff]
  %v3297 = vld [vmem:[%s5 + $0x128] sm:$0xff]
  %v3298 = vld [vmem:[%s5 + $0x130] sm:$0xff]
  %v3299 = vld [vmem:[%s5 + $0x138] sm:$0xff]
  %v3300 = vld [vmem:[%s5 + $0x140] sm:$0xff]
  %v3301 = vld [vmem:[%s5 + $0x148] sm:$0xff]
  %v3302 = vld [vmem:[%s5 + $0x150] sm:$0xff]
  %v3303 = vld [vmem:[%s5 + $0x158] sm:$0xff]
  %v3304 = vld [vmem:[%s5 + $0x160] sm:$0xff]
  %v3305 = vld [vmem:[%s5 + $0x168] sm:$0xff]
  %v3306 = vld [vmem:[%s5 + $0x170] sm:$0xff]
  %v3307 = vld [vmem:[%s5 + $0x178] sm:$0xff]
  %v3308 = vld [vmem:[%s5 + $0x180] sm:$0xff]
  %v3309 = vld [vmem:[%s5 + $0x188] sm:$0xff]
  %v3310 = vld [vmem:[%s5 + $0x190] sm:$0xff]
  %v3311 = vld [vmem:[%s5 + $0x198] sm:$0xff]
  %v3312 = vld [vmem:[%s5 + $0x1a0] sm:$0xff]
  %v3313 = vld [vmem:[%s5 + $0x1a8] sm:$0xff]
  %v3314 = vld [vmem:[%s5 + $0x1b0] sm:$0xff]
  %v3315 = vld [vmem:[%s5 + $0x1b8] sm:$0xff]
  %v3316 = vld [vmem:[%s5 + $0x1c0] sm:$0xff]
  %v3317 = vld [vmem:[%s5 + $0x1c8] sm:$0xff]
  %v3318 = vld [vmem:[%s5 + $0x1d0] sm:$0xff]
  %v3319 = vld [vmem:[%s5 + $0x1d8] sm:$0xff]
  %v3320 = vld [vmem:[%s5 + $0x1e0] sm:$0xff]
  %v3321 = vld [vmem:[%s5 + $0x1e8] sm:$0xff]
  %v3322 = vld [vmem:[%s5 + $0x1f0] sm:$0xff]
  %v3323 = vld [vmem:[%s5 + $0x1f8] sm:$0xff]
  %v3324 = vld [vmem:[%s7] sm:$0xf]
  %v3326 = vlaneseq
  %v3327 = vshrl.u32 %v3326, 7
  %v3328 = vsub.s32 0, %v3327
  %v3329 = vrot.slane %v3324, %v3328
  %v3330 = vlaneseq
  %v3331 = vshrl.u32 %v3330, 7
  %v3332 = vsub.s32 1, %v3331
  %v3333 = vrot.slane %v3324, %v3332
  %v3334 = vlaneseq
  %v3335 = vshrl.u32 %v3334, 7
  %v3336 = vsub.s32 2, %v3335
  %v3337 = vrot.slane %v3324, %v3336
  %v3338 = vlaneseq
  %v3339 = vshrl.u32 %v3338, 7
  %v3340 = vsub.s32 3, %v3339
  %v3341 = vrot.slane %v3324, %v3340
  %v3410 = vunpack.c.l.b16 %v3260
  %v3411 = vunpack.c.h.b16 %v3260
  %v3412 = vunpack.c.l.b16 %v3261
  %v3413 = vunpack.c.h.b16 %v3261
  %v3414 = vunpack.c.l.b16 %v3262
  %v3415 = vunpack.c.h.b16 %v3262
  %v3416 = vunpack.c.l.b16 %v3263
  %v3417 = vunpack.c.h.b16 %v3263
  %v3418 = vunpack.c.l.b16 %v3264
  %v3419 = vunpack.c.h.b16 %v3264
  %v3420 = vunpack.c.l.b16 %v3265
  %v3421 = vunpack.c.h.b16 %v3265
  %v3422 = vunpack.c.l.b16 %v3266
  %v3423 = vunpack.c.h.b16 %v3266
  %v3424 = vunpack.c.l.b16 %v3267
  %v3425 = vunpack.c.h.b16 %v3267
  %v3426 = vunpack.c.l.b16 %v3268
  %v3427 = vunpack.c.h.b16 %v3268
  %v3428 = vunpack.c.l.b16 %v3269
  %v3429 = vunpack.c.h.b16 %v3269
  %v3430 = vunpack.c.l.b16 %v3270
  %v3431 = vunpack.c.h.b16 %v3270
  %v3432 = vunpack.c.l.b16 %v3271
  %v3433 = vunpack.c.h.b16 %v3271
  %v3434 = vunpack.c.l.b16 %v3272
  %v3435 = vunpack.c.h.b16 %v3272
  %v3436 = vunpack.c.l.b16 %v3273
  %v3437 = vunpack.c.h.b16 %v3273
  %v3438 = vunpack.c.l.b16 %v3274
  %v3439 = vunpack.c.h.b16 %v3274
  %v3440 = vunpack.c.l.b16 %v3275
  %v3441 = vunpack.c.h.b16 %v3275
  %v3442 = vunpack.c.l.b16 %v3276
  %v3443 = vunpack.c.h.b16 %v3276
  %v3444 = vunpack.c.l.b16 %v3277
  %v3445 = vunpack.c.h.b16 %v3277
  %v3446 = vunpack.c.l.b16 %v3278
  %v3447 = vunpack.c.h.b16 %v3278
  %v3448 = vunpack.c.l.b16 %v3279
  %v3449 = vunpack.c.h.b16 %v3279
  %v3450 = vunpack.c.l.b16 %v3280
  %v3451 = vunpack.c.h.b16 %v3280
  %v3452 = vunpack.c.l.b16 %v3281
  %v3453 = vunpack.c.h.b16 %v3281
  %v3454 = vunpack.c.l.b16 %v3282
  %v3455 = vunpack.c.h.b16 %v3282
  %v3456 = vunpack.c.l.b16 %v3283
  %v3457 = vunpack.c.h.b16 %v3283
  %v3458 = vunpack.c.l.b16 %v3284
  %v3459 = vunpack.c.h.b16 %v3284
  %v3460 = vunpack.c.l.b16 %v3285
  %v3461 = vunpack.c.h.b16 %v3285
  %v3462 = vunpack.c.l.b16 %v3286
  %v3463 = vunpack.c.h.b16 %v3286
  %v3464 = vunpack.c.l.b16 %v3287
  %v3465 = vunpack.c.h.b16 %v3287
  %v3466 = vunpack.c.l.b16 %v3288
  %v3467 = vunpack.c.h.b16 %v3288
  %v3468 = vunpack.c.l.b16 %v3289
  %v3469 = vunpack.c.h.b16 %v3289
  %v3470 = vunpack.c.l.b16 %v3290
  %v3471 = vunpack.c.h.b16 %v3290
  %v3472 = vunpack.c.l.b16 %v3291
  %v3473 = vunpack.c.h.b16 %v3291
  %v3474 = vunpack.c.l.b16 %v3292
  %v3475 = vunpack.c.h.b16 %v3292
  %v3476 = vunpack.c.l.b16 %v3293
  %v3477 = vunpack.c.h.b16 %v3293
  %v3478 = vunpack.c.l.b16 %v3294
  %v3479 = vunpack.c.h.b16 %v3294
  %v3480 = vunpack.c.l.b16 %v3295
  %v3481 = vunpack.c.h.b16 %v3295
  %v3482 = vunpack.c.l.b16 %v3296
  %v3483 = vunpack.c.h.b16 %v3296
  %v3484 = vunpack.c.l.b16 %v3297
  %v3485 = vunpack.c.h.b16 %v3297
  %v3486 = vunpack.c.l.b16 %v3298
  %v3487 = vunpack.c.h.b16 %v3298
  %v3488 = vunpack.c.l.b16 %v3299
  %v3489 = vunpack.c.h.b16 %v3299
  %v3490 = vunpack.c.l.b16 %v3300
  %v3491 = vunpack.c.h.b16 %v3300
  %v3492 = vunpack.c.l.b16 %v3301
  %v3493 = vunpack.c.h.b16 %v3301
  %v3494 = vunpack.c.l.b16 %v3302
  %v3495 = vunpack.c.h.b16 %v3302
  %v3496 = vunpack.c.l.b16 %v3303
  %v3497 = vunpack.c.h.b16 %v3303
  %v3498 = vunpack.c.l.b16 %v3304
  %v3499 = vunpack.c.h.b16 %v3304
  %v3500 = vunpack.c.l.b16 %v3305
  %v3501 = vunpack.c.h.b16 %v3305
  %v3502 = vunpack.c.l.b16 %v3306
  %v3503 = vunpack.c.h.b16 %v3306
  %v3504 = vunpack.c.l.b16 %v3307
  %v3505 = vunpack.c.h.b16 %v3307
  %v3506 = vunpack.c.l.b16 %v3308
  %v3507 = vunpack.c.h.b16 %v3308
  %v3508 = vunpack.c.l.b16 %v3309
  %v3509 = vunpack.c.h.b16 %v3309
  %v3510 = vunpack.c.l.b16 %v3310
  %v3511 = vunpack.c.h.b16 %v3310
  %v3512 = vunpack.c.l.b16 %v3311
  %v3513 = vunpack.c.h.b16 %v3311
  %v3514 = vunpack.c.l.b16 %v3312
  %v3515 = vunpack.c.h.b16 %v3312
  %v3516 = vunpack.c.l.b16 %v3313
  %v3517 = vunpack.c.h.b16 %v3313
  %v3518 = vunpack.c.l.b16 %v3314
  %v3519 = vunpack.c.h.b16 %v3314
  %v3520 = vunpack.c.l.b16 %v3315
  %v3521 = vunpack.c.h.b16 %v3315
  %v3522 = vunpack.c.l.b16 %v3316
  %v3523 = vunpack.c.h.b16 %v3316
  %v3524 = vunpack.c.l.b16 %v3317
  %v3525 = vunpack.c.h.b16 %v3317
  %v3526 = vunpack.c.l.b16 %v3318
  %v3527 = vunpack.c.h.b16 %v3318
  %v3528 = vunpack.c.l.b16 %v3319
  %v3529 = vunpack.c.h.b16 %v3319
  %v3530 = vunpack.c.l.b16 %v3320
  %v3531 = vunpack.c.h.b16 %v3320
  %v3532 = vunpack.c.l.b16 %v3321
  %v3533 = vunpack.c.h.b16 %v3321
  %v3534 = vunpack.c.l.b16 %v3322
  %v3535 = vunpack.c.h.b16 %v3322
  %v3536 = vunpack.c.l.b16 %v3323
  %v3537 = vunpack.c.h.b16 %v3323
  %v3538 = vpack.c.b16 %v3414, %v3410
  %v3539 = vpack.c.b16 %v3415, %v3411
  %v3540 = vpack.c.b16 %v3416, %v3412
  %v3541 = vpack.c.b16 %v3417, %v3413
  %v3542 = vpack.c.b16 %v3422, %v3418
  %v3543 = vpack.c.b16 %v3423, %v3419
  %v3544 = vpack.c.b16 %v3424, %v3420
  %v3545 = vpack.c.b16 %v3425, %v3421
  %v3546 = vpack.c.b16 %v3430, %v3426
  %v3547 = vpack.c.b16 %v3431, %v3427
  %v3548 = vpack.c.b16 %v3432, %v3428
  %v3549 = vpack.c.b16 %v3433, %v3429
  %v3550 = vpack.c.b16 %v3438, %v3434
  %v3551 = vpack.c.b16 %v3439, %v3435
  %v3552 = vpack.c.b16 %v3440, %v3436
  %v3553 = vpack.c.b16 %v3441, %v3437
  %v3554 = vpack.c.b16 %v3446, %v3442
  %v3555 = vpack.c.b16 %v3447, %v3443
  %v3556 = vpack.c.b16 %v3448, %v3444
  %v3557 = vpack.c.b16 %v3449, %v3445
  %v3558 = vpack.c.b16 %v3454, %v3450
  %v3559 = vpack.c.b16 %v3455, %v3451
  %v3560 = vpack.c.b16 %v3456, %v3452
  %v3561 = vpack.c.b16 %v3457, %v3453
  %v3562 = vpack.c.b16 %v3462, %v3458
  %v3563 = vpack.c.b16 %v3463, %v3459
  %v3564 = vpack.c.b16 %v3464, %v3460
  %v3565 = vpack.c.b16 %v3465, %v3461
  %v3566 = vpack.c.b16 %v3470, %v3466
  %v3567 = vpack.c.b16 %v3471, %v3467
  %v3568 = vpack.c.b16 %v3472, %v3468
  %v3569 = vpack.c.b16 %v3473, %v3469
  %v3570 = vpack.c.b16 %v3478, %v3474
  %v3571 = vpack.c.b16 %v3479, %v3475
  %v3572 = vpack.c.b16 %v3480, %v3476
  %v3573 = vpack.c.b16 %v3481, %v3477
  %v3574 = vpack.c.b16 %v3486, %v3482
  %v3575 = vpack.c.b16 %v3487, %v3483
  %v3576 = vpack.c.b16 %v3488, %v3484
  %v3577 = vpack.c.b16 %v3489, %v3485
  %v3578 = vpack.c.b16 %v3494, %v3490
  %v3579 = vpack.c.b16 %v3495, %v3491
  %v3580 = vpack.c.b16 %v3496, %v3492
  %v3581 = vpack.c.b16 %v3497, %v3493
  %v3582 = vpack.c.b16 %v3502, %v3498
  %v3583 = vpack.c.b16 %v3503, %v3499
  %v3584 = vpack.c.b16 %v3504, %v3500
  %v3585 = vpack.c.b16 %v3505, %v3501
  %v3586 = vpack.c.b16 %v3510, %v3506
  %v3587 = vpack.c.b16 %v3511, %v3507
  %v3588 = vpack.c.b16 %v3512, %v3508
  %v3589 = vpack.c.b16 %v3513, %v3509
  %v3590 = vpack.c.b16 %v3518, %v3514
  %v3591 = vpack.c.b16 %v3519, %v3515
  %v3592 = vpack.c.b16 %v3520, %v3516
  %v3593 = vpack.c.b16 %v3521, %v3517
  %v3594 = vpack.c.b16 %v3526, %v3522
  %v3595 = vpack.c.b16 %v3527, %v3523
  %v3596 = vpack.c.b16 %v3528, %v3524
  %v3597 = vpack.c.b16 %v3529, %v3525
  %v3598 = vpack.c.b16 %v3534, %v3530
  %v3599 = vpack.c.b16 %v3535, %v3531
  %v3600 = vpack.c.b16 %v3536, %v3532
  %v3601 = vpack.c.b16 %v3537, %v3533
  %3666 = vmatprep.subr.bf16.mxu0 %v3539
  %3667 = vmatpush1.bf16.msra.mxu0 %v3538
  %3668 = vmatprep.subr.bf16.mxu0 %v3543
  %3669 = vmatpush1.bf16.msra.mxu0 %v3542
  %3670 = vmatprep.subr.bf16.mxu0 %v3547
  %3671 = vmatpush1.bf16.msra.mxu0 %v3546
  %3672 = vmatprep.subr.bf16.mxu0 %v3551
  %3673 = vmatpush1.bf16.msra.mxu0 %v3550
  %3674 = vmatprep.subr.bf16.mxu0 %v3555
  %3675 = vmatpush1.bf16.msra.mxu0 %v3554
  %3676 = vmatprep.subr.bf16.mxu0 %v3559
  %3677 = vmatpush1.bf16.msra.mxu0 %v3558
  %3678 = vmatprep.subr.bf16.mxu0 %v3563
  %3679 = vmatpush1.bf16.msra.mxu0 %v3562
  %3680 = vmatprep.subr.bf16.mxu0 %v3567
  %3681 = vmatpush1.bf16.msra.mxu0 %v3566
  %3682 = vmatprep.subr.bf16.mxu0 %v3571
  %3683 = vmatpush1.bf16.msra.mxu0 %v3570
  %3684 = vmatprep.subr.bf16.mxu0 %v3575
  %3685 = vmatpush1.bf16.msra.mxu0 %v3574
  %3686 = vmatprep.subr.bf16.mxu0 %v3579
  %3687 = vmatpush1.bf16.msra.mxu0 %v3578
  %3688 = vmatprep.subr.bf16.mxu0 %v3583
  %3689 = vmatpush1.bf16.msra.mxu0 %v3582
  %3690 = vmatprep.subr.bf16.mxu0 %v3587
  %3691 = vmatpush1.bf16.msra.mxu0 %v3586
  %3692 = vmatprep.subr.bf16.mxu0 %v3591
  %3693 = vmatpush1.bf16.msra.mxu0 %v3590
  %3694 = vmatprep.subr.bf16.mxu0 %v3595
  %3695 = vmatpush1.bf16.msra.mxu0 %v3594
  %3696 = vmatprep.subr.bf16.mxu0 %v3599
  %3697 = vmatpush1.bf16.msra.mxu0 %v3598
  %3698 = vmatprep.mubr.bf16.mxu0 %v3253
  %3699 = vmatmul.mubr.bf16.gmra.mrb[0].mxu0 %v3252
  %v3700 = vpop.f32.mrb[0].mxu0
  %v3701 = vadd.f32 %v3329, %v3700
  %v3702 = vpop.f32.mrb[0].mxu0
  %v3703 = vadd.f32 %v3333, %v3702
  %v3704 = vpop.f32.mrb[0].mxu0
  %v3705 = vadd.f32 %v3329, %v3704
  %v3706 = vpop.f32.mrb[0].mxu0
  %v3707 = vadd.f32 %v3333, %v3706
  %3708 = vmatprep.mubr.bf16.mxu0 %v3255
  %3709 = vmatmul.mubr.bf16.gmra.mrb[0].mxu0 %v3254
  %v3710 = vpop.f32.mrb[0].mxu0
  %v3711 = vadd.f32 %v3329, %v3710
  %v3712 = vpop.f32.mrb[0].mxu0
  %v3713 = vadd.f32 %v3333, %v3712
  %v3714 = vpop.f32.mrb[0].mxu0
  %v3715 = vadd.f32 %v3329, %v3714
  %v3716 = vpop.f32.mrb[0].mxu0
  %v3717 = vadd.f32 %v3333, %v3716
  %3718 = vmatprep.mubr.bf16.mxu0 %v3257
  %3719 = vmatmul.mubr.bf16.gmra.mrb[0].mxu0 %v3256
  %v3720 = vpop.f32.mrb[0].mxu0
  %v3721 = vadd.f32 %v3329, %v3720
  %v3722 = vpop.f32.mrb[0].mxu0
  %v3723 = vadd.f32 %v3333, %v3722
  %v3724 = vpop.f32.mrb[0].mxu0
  %v3725 = vadd.f32 %v3329, %v3724
  %v3726 = vpop.f32.mrb[0].mxu0
  %v3727 = vadd.f32 %v3333, %v3726
  %3728 = vmatprep.mubr.bf16.mxu0 %v3259
  %3729 = vmatmul.mubr.bf16.gmra.mrb[0].mxu0 %v3258
  %v3730 = vpop.f32.mrb[0].mxu0
  %v3731 = vadd.f32 %v3329, %v3730
  %v3732 = vpop.f32.mrb[0].mxu0
  %v3733 = vadd.f32 %v3333, %v3732
  %v3734 = vpop.f32.mrb[0].mxu0
  %v3735 = vadd.f32 %v3329, %v3734
  %v3736 = vpop.f32.mrb[0].mxu0
  %v3737 = vadd.f32 %v3333, %v3736
  %3738 = vdwg.mxu0
  %3739 = vmatprep.subr.bf16.mxu0 %v3541
  %3740 = vmatpush1.bf16.msra.mxu0 %v3540
  %3741 = vmatprep.subr.bf16.mxu0 %v3545
  %3742 = vmatpush1.bf16.msra.mxu0 %v3544
  %3743 = vmatprep.subr.bf16.mxu0 %v3549
  %3744 = vmatpush1.bf16.msra.mxu0 %v3548
  %3745 = vmatprep.subr.bf16.mxu0 %v3553
  %3746 = vmatpush1.bf16.msra.mxu0 %v3552
  %3747 = vmatprep.subr.bf16.mxu0 %v3557
  %3748 = vmatpush1.bf16.msra.mxu0 %v3556
  %3749 = vmatprep.subr.bf16.mxu0 %v3561
  %3750 = vmatpush1.bf16.msra.mxu0 %v3560
  %3751 = vmatprep.subr.bf16.mxu0 %v3565
  %3752 = vmatpush1.bf16.msra.mxu0 %v3564
  %3753 = vmatprep.subr.bf16.mxu0 %v3569
  %3754 = vmatpush1.bf16.msra.mxu0 %v3568
  %3755 = vmatprep.subr.bf16.mxu0 %v3573
  %3756 = vmatpush1.bf16.msra.mxu0 %v3572
  %3757 = vmatprep.subr.bf16.mxu0 %v3577
  %3758 = vmatpush1.bf16.msra.mxu0 %v3576
  %3759 = vmatprep.subr.bf16.mxu0 %v3581
  %3760 = vmatpush1.bf16.msra.mxu0 %v3580
  %3761 = vmatprep.subr.bf16.mxu0 %v3585
  %3762 = vmatpush1.bf16.msra.mxu0 %v3584
  %3763 = vmatprep.subr.bf16.mxu0 %v3589
  %3764 = vmatpush1.bf16.msra.mxu0 %v3588
  %3765 = vmatprep.subr.bf16.mxu0 %v3593
  %3766 = vmatpush1.bf16.msra.mxu0 %v3592
  %3767 = vmatprep.subr.bf16.mxu0 %v3597
  %3768 = vmatpush1.bf16.msra.mxu0 %v3596
  %3769 = vmatprep.subr.bf16.mxu0 %v3601
  %3770 = vmatpush1.bf16.msra.mxu0 %v3600
  %3771 = vmatprep.mubr.bf16.mxu0 %v3253
  %3772 = vmatmul.mubr.bf16.gmra.mrb[0].mxu0 %v3252
  %v3773 = vpop.f32.mrb[0].mxu0
  %v3774 = vadd.f32 %v3337, %v3773
  %v3775 = vpop.f32.mrb[0].mxu0
  %v3776 = vadd.f32 %v3341, %v3775
  %v3777 = vpop.f32.mrb[0].mxu0
  %v3778 = vadd.f32 %v3337, %v3777
  %v3779 = vpop.f32.mrb[0].mxu0
  %v3780 = vadd.f32 %v3341, %v3779
  %3781 = vmatprep.mubr.bf16.mxu0 %v3255
  %3782 = vmatmul.mubr.bf16.gmra.mrb[0].mxu0 %v3254
  %v3783 = vpop.f32.mrb[0].mxu0
  %v3784 = vadd.f32 %v3337, %v3783
  %v3785 = vpop.f32.mrb[0].mxu0
  %v3786 = vadd.f32 %v3341, %v3785
  %v3787 = vpop.f32.mrb[0].mxu0
  %v3788 = vadd.f32 %v3337, %v3787
  %v3789 = vpop.f32.mrb[0].mxu0
  %v3790 = vadd.f32 %v3341, %v3789
  %3791 = vmatprep.mubr.bf16.mxu0 %v3257
  %3792 = vmatmul.mubr.bf16.gmra.mrb[0].mxu0 %v3256
  %v3793 = vpop.f32.mrb[0].mxu0
  %v3794 = vadd.f32 %v3337, %v3793
  %v3795 = vpop.f32.mrb[0].mxu0
  %v3796 = vadd.f32 %v3341, %v3795
  %v3797 = vpop.f32.mrb[0].mxu0
  %v3798 = vadd.f32 %v3337, %v3797
  %v3799 = vpop.f32.mrb[0].mxu0
  %v3800 = vadd.f32 %v3341, %v3799
  %3801 = vmatprep.mubr.bf16.mxu0 %v3259
  %3802 = vmatmul.mubr.bf16.gmra.mrb[0].mxu0 %v3258
  %v3803 = vpop.f32.mrb[0].mxu0
  %v3804 = vadd.f32 %v3337, %v3803
  %v3805 = vpop.f32.mrb[0].mxu0
  %v3806 = vadd.f32 %v3341, %v3805
  %v3807 = vpop.f32.mrb[0].mxu0
  %v3808 = vadd.f32 %v3337, %v3807
  %v3809 = vpop.f32.mrb[0].mxu0
  %v3810 = vadd.f32 %v3341, %v3809
  %3811 = vdwg.mxu0
  %3812 = vst [vmem:[#allocation2] sm:$0xff] %v3701
  %3813 = vst [vmem:[#allocation2 + $0x8] sm:$0xff] %v3703
  %3814 = vst [vmem:[#allocation2 + $0x10] sm:$0xff] %v3774
  %3815 = vst [vmem:[#allocation2 + $0x18] sm:$0xff] %v3776
  %3816 = vst [vmem:[#allocation2 + $0x20] sm:$0xff] %v3705
  %3817 = vst [vmem:[#allocation2 + $0x28] sm:$0xff] %v3707
  %3818 = vst [vmem:[#allocation2 + $0x30] sm:$0xff] %v3778
  %3819 = vst [vmem:[#allocation2 + $0x38] sm:$0xff] %v3780
  %3820 = vst [vmem:[#allocation2 + $0x40] sm:$0xff] %v3711
  %3821 = vst [vmem:[#allocation2 + $0x48] sm:$0xff] %v3713
  %3822 = vst [vmem:[#allocation2 + $0x50] sm:$0xff] %v3784
  %3823 = vst [vmem:[#allocation2 + $0x58] sm:$0xff] %v3786
  %3824 = vst [vmem:[#allocation2 + $0x60] sm:$0xff] %v3715
  %3825 = vst [vmem:[#allocation2 + $0x68] sm:$0xff] %v3717
  %3826 = vst [vmem:[#allocation2 + $0x70] sm:$0xff] %v3788
  %3827 = vst [vmem:[#allocation2 + $0x78] sm:$0xff] %v3790
  %3828 = vst [vmem:[#allocation2 + $0x80] sm:$0xff] %v3721
  %3829 = vst [vmem:[#allocation2 + $0x88] sm:$0xff] %v3723
  %3830 = vst [vmem:[#allocation2 + $0x90] sm:$0xff] %v3794
  %3831 = vst [vmem:[#allocation2 + $0x98] sm:$0xff] %v3796
  %3832 = vst [vmem:[#allocation2 + $0xa0] sm:$0xff] %v3725
  %3833 = vst [vmem:[#allocation2 + $0xa8] sm:$0xff] %v3727
  %3834 = vst [vmem:[#allocation2 + $0xb0] sm:$0xff] %v3798
  %3835 = vst [vmem:[#allocation2 + $0xb8] sm:$0xff] %v3800
  %3836 = vst [vmem:[#allocation2 + $0xc0] sm:$0xff] %v3731
  %3837 = vst [vmem:[#allocation2 + $0xc8] sm:$0xff] %v3733
  %3838 = vst [vmem:[#allocation2 + $0xd0] sm:$0xff] %v3804
  %3839 = vst [vmem:[#allocation2 + $0xd8] sm:$0xff] %v3806
  %3840 = vst [vmem:[#allocation2 + $0xe0] sm:$0xff] %v3735
  %3841 = vst [vmem:[#allocation2 + $0xe8] sm:$0xff] %v3737
  %3842 = vst [vmem:[#allocation2 + $0xf0] sm:$0xff] %v3808
  %3843 = vst [vmem:[#allocation2 + $0xf8] sm:$0xff] %v3810
  %v3844 = vld [vmem:[%s6] sm:$0xff]
  %v3845 = vld [vmem:[%s6 + $0x8] sm:$0xff]
  %v3846 = vld [vmem:[%s6 + $0x10] sm:$0xff]
  %v3847 = vld [vmem:[%s6 + $0x18] sm:$0xff]
  %v3848 = vld [vmem:[%s6 + $0x20] sm:$0xff]
  %v3849 = vld [vmem:[%s6 + $0x28] sm:$0xff]
  %v3850 = vld [vmem:[%s6 + $0x30] sm:$0xff]
  %v3851 = vld [vmem:[%s6 + $0x38] sm:$0xff]
  %v3852 = vld [vmem:[%s6 + $0x40] sm:$0xff]
  %v3853 = vld [vmem:[%s6 + $0x48] sm:$0xff]
  %v3854 = vld [vmem:[%s6 + $0x50] sm:$0xff]
  %v3855 = vld [vmem:[%s6 + $0x58] sm:$0xff]
  %v3856 = vld [vmem:[%s6 + $0x60] sm:$0xff]
  %v3857 = vld [vmem:[%s6 + $0x68] sm:$0xff]
  %v3858 = vld [vmem:[%s6 + $0x70] sm:$0xff]
  %v3859 = vld [vmem:[%s6 + $0x78] sm:$0xff]
  %v3860 = vld [vmem:[%s6 + $0x80] sm:$0xff]
  %v3861 = vld [vmem:[%s6 + $0x88] sm:$0xff]
  %v3862 = vld [vmem:[%s6 + $0x90] sm:$0xff]
  %v3863 = vld [vmem:[%s6 + $0x98] sm:$0xff]
  %v3864 = vld [vmem:[%s6 + $0xa0] sm:$0xff]
  %v3865 = vld [vmem:[%s6 + $0xa8] sm:$0xff]
  %v3866 = vld [vmem:[%s6 + $0xb0] sm:$0xff]
  %v3867 = vld [vmem:[%s6 + $0xb8] sm:$0xff]
  %v3868 = vld [vmem:[%s6 + $0xc0] sm:$0xff]
  %v3869 = vld [vmem:[%s6 + $0xc8] sm:$0xff]
  %v3870 = vld [vmem:[%s6 + $0xd0] sm:$0xff]
  %v3871 = vld [vmem:[%s6 + $0xd8] sm:$0xff]
  %v3872 = vld [vmem:[%s6 + $0xe0] sm:$0xff]
  %v3873 = vld [vmem:[%s6 + $0xe8] sm:$0xff]
  %v3874 = vld [vmem:[%s6 + $0xf0] sm:$0xff]
  %v3875 = vld [vmem:[%s6 + $0xf8] sm:$0xff]
  %v3876 = vld [vmem:[#allocation2] sm:$0xff]
  %v3877 = vld [vmem:[#allocation2 + $0x8] sm:$0xff]
  %v3878 = vld [vmem:[#allocation2 + $0x10] sm:$0xff]
  %v3879 = vld [vmem:[#allocation2 + $0x18] sm:$0xff]
  %v3912 = vunpack.c.l.b16 %v3844
  %v3913 = vunpack.c.h.b16 %v3844
  %v3914 = vunpack.c.l.b16 %v3845
  %v3915 = vunpack.c.h.b16 %v3845
  %v3916 = vunpack.c.l.b16 %v3846
  %v3917 = vunpack.c.h.b16 %v3846
  %v3918 = vunpack.c.l.b16 %v3847
  %v3919 = vunpack.c.h.b16 %v3847
  %v3920 = vunpack.c.l.b16 %v3848
  %v3921 = vunpack.c.h.b16 %v3848
  %v3922 = vunpack.c.l.b16 %v3849
  %v3923 = vunpack.c.h.b16 %v3849
  %v3924 = vunpack.c.l.b16 %v3850
  %v3925 = vunpack.c.h.b16 %v3850
  %v3926 = vunpack.c.l.b16 %v3851
  %v3927 = vunpack.c.h.b16 %v3851
  %v3928 = vunpack.c.l.b16 %v3852
  %v3929 = vunpack.c.h.b16 %v3852
  %v3930 = vunpack.c.l.b16 %v3853
  %v3931 = vunpack.c.h.b16 %v3853
  %v3932 = vunpack.c.l.b16 %v3854
  %v3933 = vunpack.c.h.b16 %v3854
  %v3934 = vunpack.c.l.b16 %v3855
  %v3935 = vunpack.c.h.b16 %v3855
  %v3936 = vunpack.c.l.b16 %v3856
  %v3937 = vunpack.c.h.b16 %v3856
  %v3938 = vunpack.c.l.b16 %v3857
  %v3939 = vunpack.c.h.b16 %v3857
  %v3940 = vunpack.c.l.b16 %v3858
  %v3941 = vunpack.c.h.b16 %v3858
  %v3942 = vunpack.c.l.b16 %v3859
  %v3943 = vunpack.c.h.b16 %v3859
  %v3944 = vunpack.c.l.b16 %v3860
  %v3945 = vunpack.c.h.b16 %v3860
  %v3946 = vunpack.c.l.b16 %v3861
  %v3947 = vunpack.c.h.b16 %v3861
  %v3948 = vunpack.c.l.b16 %v3862
  %v3949 = vunpack.c.h.b16 %v3862
  %v3950 = vunpack.c.l.b16 %v3863
  %v3951 = vunpack.c.h.b16 %v3863
  %v3952 = vunpack.c.l.b16 %v3864
  %v3953 = vunpack.c.h.b16 %v3864
  %v3954 = vunpack.c.l.b16 %v3865
  %v3955 = vunpack.c.h.b16 %v3865
  %v3956 = vunpack.c.l.b16 %v3866
  %v3957 = vunpack.c.h.b16 %v3866
  %v3958 = vunpack.c.l.b16 %v3867
  %v3959 = vunpack.c.h.b16 %v3867
  %v3960 = vunpack.c.l.b16 %v3868
  %v3961 = vunpack.c.h.b16 %v3868
  %v3962 = vunpack.c.l.b16 %v3869
  %v3963 = vunpack.c.h.b16 %v3869
  %v3964 = vunpack.c.l.b16 %v3870
  %v3965 = vunpack.c.h.b16 %v3870
  %v3966 = vunpack.c.l.b16 %v3871
  %v3967 = vunpack.c.h.b16 %v3871
  %v3968 = vunpack.c.l.b16 %v3872
  %v3969 = vunpack.c.h.b16 %v3872
  %v3970 = vunpack.c.l.b16 %v3873
  %v3971 = vunpack.c.h.b16 %v3873
  %v3972 = vunpack.c.l.b16 %v3874
  %v3973 = vunpack.c.h.b16 %v3874
  %v3974 = vunpack.c.l.b16 %v3875
  %v3975 = vunpack.c.h.b16 %v3875
  %v3976 = vpack.c.b16 %v3916, %v3912
  %v3977 = vpack.c.b16 %v3917, %v3913
  %v3978 = vpack.c.b16 %v3918, %v3914
  %v3979 = vpack.c.b16 %v3919, %v3915
  %v3980 = vpack.c.b16 %v3924, %v3920
  %v3981 = vpack.c.b16 %v3925, %v3921
  %v3982 = vpack.c.b16 %v3926, %v3922
  %v3983 = vpack.c.b16 %v3927, %v3923
  %v3984 = vpack.c.b16 %v3932, %v3928
  %v3985 = vpack.c.b16 %v3933, %v3929
  %v3986 = vpack.c.b16 %v3934, %v3930
  %v3987 = vpack.c.b16 %v3935, %v3931
  %v3988 = vpack.c.b16 %v3940, %v3936
  %v3989 = vpack.c.b16 %v3941, %v3937
  %v3990 = vpack.c.b16 %v3942, %v3938
  %v3991 = vpack.c.b16 %v3943, %v3939
  %v3992 = vpack.c.b16 %v3948, %v3944
  %v3993 = vpack.c.b16 %v3949, %v3945
  %v3994 = vpack.c.b16 %v3950, %v3946
  %v3995 = vpack.c.b16 %v3951, %v3947
  %v3996 = vpack.c.b16 %v3956, %v3952
  %v3997 = vpack.c.b16 %v3957, %v3953
  %v3998 = vpack.c.b16 %v3958, %v3954
  %v3999 = vpack.c.b16 %v3959, %v3955
  %v4000 = vpack.c.b16 %v3964, %v3960
  %v4001 = vpack.c.b16 %v3965, %v3961
  %v4002 = vpack.c.b16 %v3966, %v3962
  %v4003 = vpack.c.b16 %v3967, %v3963
  %v4004 = vpack.c.b16 %v3972, %v3968
  %v4005 = vpack.c.b16 %v3973, %v3969
  %v4006 = vpack.c.b16 %v3974, %v3970
  %v4007 = vpack.c.b16 %v3975, %v3971
  %4040 = vmatprep.subr.bf16.mxu0 %v3977
  %4041 = vmatpush1.bf16.msra.mxu0 %v3976
  %4042 = vmatprep.subr.bf16.mxu0 %v3981
  %4043 = vmatpush1.bf16.msra.mxu0 %v3980
  %4044 = vmatprep.subr.bf16.mxu0 %v3985
  %4045 = vmatpush1.bf16.msra.mxu0 %v3984
  %4046 = vmatprep.subr.bf16.mxu0 %v3989
  %4047 = vmatpush1.bf16.msra.mxu0 %v3988
  %4048 = vmatprep.subr.bf16.mxu0 %v3993
  %4049 = vmatpush1.bf16.msra.mxu0 %v3992
  %4050 = vmatprep.subr.bf16.mxu0 %v3997
  %4051 = vmatpush1.bf16.msra.mxu0 %v3996
  %4052 = vmatprep.subr.bf16.mxu0 %v4001
  %4053 = vmatpush1.bf16.msra.mxu0 %v4000
  %4054 = vmatprep.subr.bf16.mxu0 %v4005
  %4055 = vmatpush1.bf16.msra.mxu0 %v4004
  %4056 = vmatprep.subr.bf16.mxu0 0
  %4057 = vmatpush1.bf16.msra.mxu0 0
  %4058 = vmatprep.subr.bf16.mxu0 0
  %4059 = vmatpush1.bf16.msra.mxu0 0
  %4060 = vmatprep.subr.bf16.mxu0 0
  %4061 = vmatpush1.bf16.msra.mxu0 0
  %4062 = vmatprep.subr.bf16.mxu0 0
  %4063 = vmatpush1.bf16.msra.mxu0 0
  %4064 = vmatprep.subr.bf16.mxu0 0
  %4065 = vmatpush1.bf16.msra.mxu0 0
  %4066 = vmatprep.subr.bf16.mxu0 0
  %4067 = vmatpush1.bf16.msra.mxu0 0
  %4068 = vmatprep.subr.bf16.mxu0 0
  %4069 = vmatpush1.bf16.msra.mxu0 0
  %4070 = vmatprep.subr.bf16.mxu0 0
  %4071 = vmatpush1.bf16.msra.mxu0 0
  %4072 = vmatprep.mubr.bf16.mxu0 0
  %4073 = vmatmul.mubr.bf16.gmra.mrb[0].mxu0 0
  %v4074 = vpop.f32.mrb[0].mxu0
  %v4075 = vadd.f32 0.0, %v4074
  %v4076 = vpop.f32.mrb[0].mxu0
  %v4077 = vadd.f32 0.0, %v4076
  %v4078 = vpop.f32.mrb[0].mxu0
  %v4079 = vpop.f32.mrb[0].mxu0
  %4080 = vdwg.mxu0
  %4081 = vmatprep.subr.bf16.mxu0 %v3979
  %4082 = vmatpush1.bf16.msra.mxu0 %v3978
  %4083 = vmatprep.subr.bf16.mxu0 %v3983
  %4084 = vmatpush1.bf16.msra.mxu0 %v3982
  %4085 = vmatprep.subr.bf16.mxu0 %v3987
  %4086 = vmatpush1.bf16.msra.mxu0 %v3986
  %4087 = vmatprep.subr.bf16.mxu0 %v3991
  %4088 = vmatpush1.bf16.msra.mxu0 %v3990
  %4089 = vmatprep.subr.bf16.mxu0 %v3995
  %4090 = vmatpush1.bf16.msra.mxu0 %v3994
  %4091 = vmatprep.subr.bf16.mxu0 %v3999
  %4092 = vmatpush1.bf16.msra.mxu0 %v3998
  %4093 = vmatprep.subr.bf16.mxu0 %v4003
  %4094 = vmatpush1.bf16.msra.mxu0 %v4002
  %4095 = vmatprep.subr.bf16.mxu0 %v4007
  %4096 = vmatpush1.bf16.msra.mxu0 %v4006
  %4097 = vmatprep.subr.bf16.mxu0 0
  %4098 = vmatpush1.bf16.msra.mxu0 0
  %4099 = vmatprep.subr.bf16.mxu0 0
  %4100 = vmatpush1.bf16.msra.mxu0 0
  %4101 = vmatprep.subr.bf16.mxu0 0
  %4102 = vmatpush1.bf16.msra.mxu0 0
  %4103 = vmatprep.subr.bf16.mxu0 0
  %4104 = vmatpush1.bf16.msra.mxu0 0
  %4105 = vmatprep.subr.bf16.mxu0 0
  %4106 = vmatpush1.bf16.msra.mxu0 0
  %4107 = vmatprep.subr.bf16.mxu0 0
  %4108 = vmatpush1.bf16.msra.mxu0 0
  %4109 = vmatprep.subr.bf16.mxu0 0
  %4110 = vmatpush1.bf16.msra.mxu0 0
  %4111 = vmatprep.subr.bf16.mxu0 0
  %4112 = vmatpush1.bf16.msra.mxu0 0
  %4113 = vmatprep.mubr.bf16.mxu0 0
  %4114 = vmatmul.mubr.bf16.gmra.mrb[0].mxu0 0
  %v4115 = vpop.f32.mrb[0].mxu0
  %v4116 = vadd.f32 0.0, %v4115
  %v4117 = vpop.f32.mrb[0].mxu0
  %v4118 = vadd.f32 0.0, %v4117
  %v4119 = vpop.f32.mrb[0].mxu0
  %v4120 = vpop.f32.mrb[0].mxu0
  %4121 = vdwg.mxu0
  %v4122 = vadd.f32 %v3876, %v4075
  %v4123 = vadd.f32 %v3877, %v4077
  %v4124 = vadd.f32 %v3878, %v4116
  %v4125 = vadd.f32 %v3879, %v4118
  %v4126 = vxor.u32 %v4122, 2147483648
  %v4127 = vmul.f32 %v4126, 1.442695
  %v4128 = vpow.pop %v4127
  %v4129 = vadd.f32 %v4128, 1.0
  %v4130 = vrcp.pop %v4129
  %v4131 = vmul.f32 1.0, %v4130
  %v4132 = vxor.u32 %v4123, 2147483648
  %v4133 = vmul.f32 %v4132, 1.442695
  %v4134 = vpow.pop %v4133
  %v4135 = vadd.f32 %v4134, 1.0
  %v4136 = vrcp.pop %v4135
  %v4137 = vmul.f32 1.0, %v4136
  %v4138 = vtanh.pop %v4124
  %v4139 = vxor.u32 %v4125, 2147483648
  %v4140 = vmul.f32 %v4139, 1.442695
  %v4141 = vpow.pop %v4140
  %v4142 = vadd.f32 %v4141, 1.0
  %v4143 = vrcp.pop %v4142
  %v4144 = vmul.f32 1.0, %v4143
  %v4145 = vmul.f32 %v4137, 0.0
  %v4146 = vmul.f32 %v4131, %v4138
  %v4147 = vadd.f32 %v4145, %v4146
  %v4148 = vtanh.pop %v4147
  %v4149 = vmul.f32 %v4144, %v4148
  %4150 = vst [vmem:[#allocation4] sm:$0xff] %v4149
  %v4151 = vld [vmem:[#allocation2 + $0x20] sm:$0xff]
  %v4152 = vld [vmem:[#allocation2 + $0x28] sm:$0xff]
  %v4153 = vld [vmem:[#allocation2 + $0x30] sm:$0xff]
  %v4154 = vld [vmem:[#allocation2 + $0x38] sm:$0xff]
  %v4155 = vpack.c.bf16 %v4149, %v4149
  %4156 = vmatprep.subr.bf16.mxu0 %v3977
  %4157 = vmatpush1.bf16.msra.mxu0 %v3976
  %4158 = vmatprep.subr.bf16.mxu0 %v3981
  %4159 = vmatpush1.bf16.msra.mxu0 %v3980
  %4160 = vmatprep.subr.bf16.mxu0 %v3985
  %4161 = vmatpush1.bf16.msra.mxu0 %v3984
  %4162 = vmatprep.subr.bf16.mxu0 %v3989
  %4163 = vmatpush1.bf16.msra.mxu0 %v3988
  %4164 = vmatprep.subr.bf16.mxu0 %v3993
  %4165 = vmatpush1.bf16.msra.mxu0 %v3992
  %4166 = vmatprep.subr.bf16.mxu0 %v3997
  %4167 = vmatpush1.bf16.msra.mxu0 %v3996
  %4168 = vmatprep.subr.bf16.mxu0 %v4001
  %4169 = vmatpush1.bf16.msra.mxu0 %v4000
  %4170 = vmatprep.subr.bf16.mxu0 %v4005
  %4171 = vmatpush1.bf16.msra.mxu0 %v4004
  %4172 = vmatprep.subr.bf16.mxu0 0
  %4173 = vmatpush1.bf16.msra.mxu0 0
  %4174 = vmatprep.subr.bf16.mxu0 0
  %4175 = vmatpush1.bf16.msra.mxu0 0
  %4176 = vmatprep.subr.bf16.mxu0 0
  %4177 = vmatpush1.bf16.msra.mxu0 0
  %4178 = vmatprep.subr.bf16.mxu0 0
  %4179 = vmatpush1.bf16.msra.mxu0 0
  %4180 = vmatprep.subr.bf16.mxu0 0
  %4181 = vmatpush1.bf16.msra.mxu0 0
  %4182 = vmatprep.subr.bf16.mxu0 0
  %4183 = vmatpush1.bf16.msra.mxu0 0
  %4184 = vmatprep.subr.bf16.mxu0 0
  %4185 = vmatpush1.bf16.msra.mxu0 0
  %4186 = vmatprep.subr.bf16.mxu0 0
  %4187 = vmatpush1.bf16.msra.mxu0 0
  %4188 = vmatprep.mubr.bf16.mxu0 0
  %4189 = vmatmul.mubr.bf16.gmra.mrb[0].mxu0 %v4155
  %v4190 = vpop.f32.mrb[0].mxu0
  %v4191 = vadd.f32 0.0, %v4190
  %v4192 = vpop.f32.mrb[0].mxu0
  %v4193 = vadd.f32 0.0, %v4192
  %v4194 = vpop.f32.mrb[0].mxu0
  %v4195 = vpop.f32.mrb[0].mxu0
  %4196 = vdwg.mxu0
  %4197 = vmatprep.subr.bf16.mxu0 %v3979
  %4198 = vmatpush1.bf16.msra.mxu0 %v3978
  %4199 = vmatprep.subr.bf16.mxu0 %v3983
  %4200 = vmatpush1.bf16.msra.mxu0 %v3982
  %4201 = vmatprep.subr.bf16.mxu0 %v3987
  %4202 = vmatpush1.bf16.msra.mxu0 %v3986
  %4203 = vmatprep.subr.bf16.mxu0 %v3991
  %4204 = vmatpush1.bf16.msra.mxu0 %v3990
  %4205 = vmatprep.subr.bf16.mxu0 %v3995
  %4206 = vmatpush1.bf16.msra.mxu0 %v3994
  %4207 = vmatprep.subr.bf16.mxu0 %v3999
  %4208 = vmatpush1.bf16.msra.mxu0 %v3998
  %4209 = vmatprep.subr.bf16.mxu0 %v4003
  %4210 = vmatpush1.bf16.msra.mxu0 %v4002
  %4211 = vmatprep.subr.bf16.mxu0 %v4007
  %4212 = vmatpush1.bf16.msra.mxu0 %v4006
  %4213 = vmatprep.subr.bf16.mxu0 0
  %4214 = vmatpush1.bf16.msra.mxu0 0
  %4215 = vmatprep.subr.bf16.mxu0 0
  %4216 = vmatpush1.bf16.msra.mxu0 0
  %4217 = vmatprep.subr.bf16.mxu0 0
  %4218 = vmatpush1.bf16.msra.mxu0 0
  %4219 = vmatprep.subr.bf16.mxu0 0
  %4220 = vmatpush1.bf16.msra.mxu0 0
  %4221 = vmatprep.subr.bf16.mxu0 0
  %4222 = vmatpush1.bf16.msra.mxu0 0
  %4223 = vmatprep.subr.bf16.mxu0 0
  %4224 = vmatpush1.bf16.msra.mxu0 0
  %4225 = vmatprep.subr.bf16.mxu0 0
  %4226 = vmatpush1.bf16.msra.mxu0 0
  %4227 = vmatprep.subr.bf16.mxu0 0
  %4228 = vmatpush1.bf16.msra.mxu0 0
  %4229 = vmatprep.mubr.bf16.mxu0 0
  %4230 = vmatmul.mubr.bf16.gmra.mrb[0].mxu0 %v4155
  %v4231 = vpop.f32.mrb[0].mxu0
  %v4232 = vadd.f32 0.0, %v4231
  %v4233 = vpop.f32.mrb[0].mxu0
  %v4234 = vadd.f32 0.0, %v4233
  %v4235 = vpop.f32.mrb[0].mxu0
  %v4236 = vpop.f32.mrb[0].mxu0
  %4237 = vdwg.mxu0
  %v4238 = vadd.f32 %v4151, %v4191
  %v4239 = vadd.f32 %v4152, %v4193
  %v4240 = vadd.f32 %v4153, %v4232
  %v4241 = vadd.f32 %v4154, %v4234
  %v4242 = vxor.u32 %v4238, 2147483648
  %v4243 = vmul.f32 %v4242, 1.442695
  %v4244 = vpow.pop %v4243
  %v4245 = vadd.f32 %v4244, 1.0
  %v4246 = vrcp.pop %v4245
  %v4247 = vmul.f32 1.0, %v4246
  %v4248 = vxor.u32 %v4239, 2147483648
  %v4249 = vmul.f32 %v4248, 1.442695
  %v4250 = vpow.pop %v4249
  %v4251 = vadd.f32 %v4250, 1.0
  %v4252 = vrcp.pop %v4251
  %v4253 = vmul.f32 1.0, %v4252
  %v4254 = vtanh.pop %v4240
  %v4255 = vxor.u32 %v4241, 2147483648
  %v4256 = vmul.f32 %v4255, 1.442695
  %v4257 = vpow.pop %v4256
  %v4258 = vadd.f32 %v4257, 1.0
  %v4259 = vrcp.pop %v4258
  %v4260 = vmul.f32 1.0, %v4259
  %v4261 = vmul.f32 %v4253, %v4147
  %v4262 = vmul.f32 %v4247, %v4254
  %v4263 = vadd.f32 %v4261, %v4262
  %v4264 = vtanh.pop %v4263
  %v4265 = vmul.f32 %v4260, %v4264
  %4266 = vst [vmem:[#allocation4 + $0x10] sm:$0xff] %v4265
  %v4267 = vld [vmem:[#allocation2 + $0x40] sm:$0xff]
  %v4268 = vld [vmem:[#allocation2 + $0x48] sm:$0xff]
  %v4269 = vld [vmem:[#allocation2 + $0x50] sm:$0xff]
  %v4270 = vld [vmem:[#allocation2 + $0x58] sm:$0xff]
  %v4271 = vpack.c.bf16 %v4265, %v4265
  %4272 = vmatprep.subr.bf16.mxu0 %v3977
  %4273 = vmatpush1.bf16.msra.mxu0 %v3976
  %4274 = vmatprep.subr.bf16.mxu0 %v3981
  %4275 = vmatpush1.bf16.msra.mxu0 %v3980
  %4276 = vmatprep.subr.bf16.mxu0 %v3985
  %4277 = vmatpush1.bf16.msra.mxu0 %v3984
  %4278 = vmatprep.subr.bf16.mxu0 %v3989
  %4279 = vmatpush1.bf16.msra.mxu0 %v3988
  %4280 = vmatprep.subr.bf16.mxu0 %v3993
  %4281 = vmatpush1.bf16.msra.mxu0 %v3992
  %4282 = vmatprep.subr.bf16.mxu0 %v3997
  %4283 = vmatpush1.bf16.msra.mxu0 %v3996
  %4284 = vmatprep.subr.bf16.mxu0 %v4001
  %4285 = vmatpush1.bf16.msra.mxu0 %v4000
  %4286 = vmatprep.subr.bf16.mxu0 %v4005
  %4287 = vmatpush1.bf16.msra.mxu0 %v4004
  %4288 = vmatprep.subr.bf16.mxu0 0
  %4289 = vmatpush1.bf16.msra.mxu0 0
  %4290 = vmatprep.subr.bf16.mxu0 0
  %4291 = vmatpush1.bf16.msra.mxu0 0
  %4292 = vmatprep.subr.bf16.mxu0 0
  %4293 = vmatpush1.bf16.msra.mxu0 0
  %4294 = vmatprep.subr.bf16.mxu0 0
  %4295 = vmatpush1.bf16.msra.mxu0 0
  %4296 = vmatprep.subr.bf16.mxu0 0
  %4297 = vmatpush1.bf16.msra.mxu0 0
  %4298 = vmatprep.subr.bf16.mxu0 0
  %4299 = vmatpush1.bf16.msra.mxu0 0
  %4300 = vmatprep.subr.bf16.mxu0 0
  %4301 = vmatpush1.bf16.msra.mxu0 0
  %4302 = vmatprep.subr.bf16.mxu0 0
  %4303 = vmatpush1.bf16.msra.mxu0 0
  %4304 = vmatprep.mubr.bf16.mxu0 0
  %4305 = vmatmul.mubr.bf16.gmra.mrb[0].mxu0 %v4271
  %v4306 = vpop.f32.mrb[0].mxu0
  %v4307 = vadd.f32 0.0, %v4306
  %v4308 = vpop.f32.mrb[0].mxu0
  %v4309 = vadd.f32 0.0, %v4308
  %v4310 = vpop.f32.mrb[0].mxu0
  %v4311 = vpop.f32.mrb[0].mxu0
  %4312 = vdwg.mxu0
  %4313 = vmatprep.subr.bf16.mxu0 %v3979
  %4314 = vmatpush1.bf16.msra.mxu0 %v3978
  %4315 = vmatprep.subr.bf16.mxu0 %v3983
  %4316 = vmatpush1.bf16.msra.mxu0 %v3982
  %4317 = vmatprep.subr.bf16.mxu0 %v3987
  %4318 = vmatpush1.bf16.msra.mxu0 %v3986
  %4319 = vmatprep.subr.bf16.mxu0 %v3991
  %4320 = vmatpush1.bf16.msra.mxu0 %v3990
  %4321 = vmatprep.subr.bf16.mxu0 %v3995
  %4322 = vmatpush1.bf16.msra.mxu0 %v3994
  %4323 = vmatprep.subr.bf16.mxu0 %v3999
  %4324 = vmatpush1.bf16.msra.mxu0 %v3998
  %4325 = vmatprep.subr.bf16.mxu0 %v4003
  %4326 = vmatpush1.bf16.msra.mxu0 %v4002
  %4327 = vmatprep.subr.bf16.mxu0 %v4007
  %4328 = vmatpush1.bf16.msra.mxu0 %v4006
  %4329 = vmatprep.subr.bf16.mxu0 0
  %4330 = vmatpush1.bf16.msra.mxu0 0
  %4331 = vmatprep.subr.bf16.mxu0 0
  %4332 = vmatpush1.bf16.msra.mxu0 0
  %4333 = vmatprep.subr.bf16.mxu0 0
  %4334 = vmatpush1.bf16.msra.mxu0 0
  %4335 = vmatprep.subr.bf16.mxu0 0
  %4336 = vmatpush1.bf16.msra.mxu0 0
  %4337 = vmatprep.subr.bf16.mxu0 0
  %4338 = vmatpush1.bf16.msra.mxu0 0
  %4339 = vmatprep.subr.bf16.mxu0 0
  %4340 = vmatpush1.bf16.msra.mxu0 0
  %4341 = vmatprep.subr.bf16.mxu0 0
  %4342 = vmatpush1.bf16.msra.mxu0 0
  %4343 = vmatprep.subr.bf16.mxu0 0
  %4344 = vmatpush1.bf16.msra.mxu0 0
  %4345 = vmatprep.mubr.bf16.mxu0 0
  %4346 = vmatmul.mubr.bf16.gmra.mrb[0].mxu0 %v4271
  %v4347 = vpop.f32.mrb[0].mxu0
  %v4348 = vadd.f32 0.0, %v4347
  %v4349 = vpop.f32.mrb[0].mxu0
  %v4350 = vadd.f32 0.0, %v4349
  %v4351 = vpop.f32.mrb[0].mxu0
  %v4352 = vpop.f32.mrb[0].mxu0
  %4353 = vdwg.mxu0
  %v4354 = vadd.f32 %v4267, %v4307
  %v4355 = vadd.f32 %v4268, %v4309
  %v4356 = vadd.f32 %v4269, %v4348
  %v4357 = vadd.f32 %v4270, %v4350
  %v4358 = vxor.u32 %v4354, 2147483648
  %v4359 = vmul.f32 %v4358, 1.442695
  %v4360 = vpow.pop %v4359
  %v4361 = vadd.f32 %v4360, 1.0
  %v4362 = vrcp.pop %v4361
  %v4363 = vmul.f32 1.0, %v4362
  %v4364 = vxor.u32 %v4355, 2147483648
  %v4365 = vmul.f32 %v4364, 1.442695
  %v4366 = vpow.pop %v4365
  %v4367 = vadd.f32 %v4366, 1.0
  %v4368 = vrcp.pop %v4367
  %v4369 = vmul.f32 1.0, %v4368
  %v4370 = vtanh.pop %v4356
  %v4371 = vxor.u32 %v4357, 2147483648
  %v4372 = vmul.f32 %v4371, 1.442695
  %v4373 = vpow.pop %v4372
  %v4374 = vadd.f32 %v4373, 1.0
  %v4375 = vrcp.pop %v4374
  %v4376 = vmul.f32 1.0, %v4375
  %v4377 = vmul.f32 %v4369, %v4263
  %v4378 = vmul.f32 %v4363, %v4370
  %v4379 = vadd.f32 %v4377, %v4378
  %v4380 = vtanh.pop %v4379
  %v4381 = vmul.f32 %v4376, %v4380
  %4382 = vst [vmem:[#allocation4 + $0x20] sm:$0xff] %v4381
  %v4383 = vld [vmem:[#allocation2 + $0x60] sm:$0xff]
  %v4384 = vld [vmem:[#allocation2 + $0x68] sm:$0xff]
  %v4385 = vld [vmem:[#allocation2 + $0x70] sm:$0xff]
  %v4386 = vld [vmem:[#allocation2 + $0x78] sm:$0xff]
  %v4387 = vpack.c.bf16 %v4381, %v4381
  %4388 = vmatprep.subr.bf16.mxu0 %v3977
  %4389 = vmatpush1.bf16.msra.mxu0 %v3976
  %4390 = vmatprep.subr.bf16.mxu0 %v3981
  %4391 = vmatpush1.bf16.msra.mxu0 %v3980
  %4392 = vmatprep.subr.bf16.mxu0 %v3985
  %4393 = vmatpush1.bf16.msra.mxu0 %v3984
  %4394 = vmatprep.subr.bf16.mxu0 %v3989
  %4395 = vmatpush1.bf16.msra.mxu0 %v3988
  %4396 = vmatprep.subr.bf16.mxu0 %v3993
  %4397 = vmatpush1.bf16.msra.mxu0 %v3992
  %4398 = vmatprep.subr.bf16.mxu0 %v3997
  %4399 = vmatpush1.bf16.msra.mxu0 %v3996
  %4400 = vmatprep.subr.bf16.mxu0 %v4001
  %4401 = vmatpush1.bf16.msra.mxu0 %v4000
  %4402 = vmatprep.subr.bf16.mxu0 %v4005
  %4403 = vmatpush1.bf16.msra.mxu0 %v4004
  %4404 = vmatprep.subr.bf16.mxu0 0
  %4405 = vmatpush1.bf16.msra.mxu0 0
  %4406 = vmatprep.subr.bf16.mxu0 0
  %4407 = vmatpush1.bf16.msra.mxu0 0
  %4408 = vmatprep.subr.bf16.mxu0 0
  %4409 = vmatpush1.bf16.msra.mxu0 0
  %4410 = vmatprep.subr.bf16.mxu0 0
  %4411 = vmatpush1.bf16.msra.mxu0 0
  %4412 = vmatprep.subr.bf16.mxu0 0
  %4413 = vmatpush1.bf16.msra.mxu0 0
  %4414 = vmatprep.subr.bf16.mxu0 0
  %4415 = vmatpush1.bf16.msra.mxu0 0
  %4416 = vmatprep.subr.bf16.mxu0 0
  %4417 = vmatpush1.bf16.msra.mxu0 0
  %4418 = vmatprep.subr.bf16.mxu0 0
  %4419 = vmatpush1.bf16.msra.mxu0 0
  %4420 = vmatprep.mubr.bf16.mxu0 0
  %4421 = vmatmul.mubr.bf16.gmra.mrb[0].mxu0 %v4387
  %v4422 = vpop.f32.mrb[0].mxu0
  %v4423 = vadd.f32 0.0, %v4422
  %v4424 = vpop.f32.mrb[0].mxu0
  %v4425 = vadd.f32 0.0, %v4424
  %v4426 = vpop.f32.mrb[0].mxu0
  %v4427 = vpop.f32.mrb[0].mxu0
  %4428 = vdwg.mxu0
  %4429 = vmatprep.subr.bf16.mxu0 %v3979
  %4430 = vmatpush1.bf16.msra.mxu0 %v3978
  %4431 = vmatprep.subr.bf16.mxu0 %v3983
  %4432 = vmatpush1.bf16.msra.mxu0 %v3982
  %4433 = vmatprep.subr.bf16.mxu0 %v3987
  %4434 = vmatpush1.bf16.msra.mxu0 %v3986
  %4435 = vmatprep.subr.bf16.mxu0 %v3991
  %4436 = vmatpush1.bf16.msra.mxu0 %v3990
  %4437 = vmatprep.subr.bf16.mxu0 %v3995
  %4438 = vmatpush1.bf16.msra.mxu0 %v3994
  %4439 = vmatprep.subr.bf16.mxu0 %v3999
  %4440 = vmatpush1.bf16.msra.mxu0 %v3998
  %4441 = vmatprep.subr.bf16.mxu0 %v4003
  %4442 = vmatpush1.bf16.msra.mxu0 %v4002
  %4443 = vmatprep.subr.bf16.mxu0 %v4007
  %4444 = vmatpush1.bf16.msra.mxu0 %v4006
  %4445 = vmatprep.subr.bf16.mxu0 0
  %4446 = vmatpush1.bf16.msra.mxu0 0
  %4447 = vmatprep.subr.bf16.mxu0 0
  %4448 = vmatpush1.bf16.msra.mxu0 0
  %4449 = vmatprep.subr.bf16.mxu0 0
  %4450 = vmatpush1.bf16.msra.mxu0 0
  %4451 = vmatprep.subr.bf16.mxu0 0
  %4452 = vmatpush1.bf16.msra.mxu0 0
  %4453 = vmatprep.subr.bf16.mxu0 0
  %4454 = vmatpush1.bf16.msra.mxu0 0
  %4455 = vmatprep.subr.bf16.mxu0 0
  %4456 = vmatpush1.bf16.msra.mxu0 0
  %4457 = vmatprep.subr.bf16.mxu0 0
  %4458 = vmatpush1.bf16.msra.mxu0 0
  %4459 = vmatprep.subr.bf16.mxu0 0
  %4460 = vmatpush1.bf16.msra.mxu0 0
  %4461 = vmatprep.mubr.bf16.mxu0 0
  %4462 = vmatmul.mubr.bf16.gmra.mrb[0].mxu0 %v4387
  %v4463 = vpop.f32.mrb[0].mxu0
  %v4464 = vadd.f32 0.0, %v4463
  %v4465 = vpop.f32.mrb[0].mxu0
  %v4466 = vadd.f32 0.0, %v4465
  %v4467 = vpop.f32.mrb[0].mxu0
  %v4468 = vpop.f32.mrb[0].mxu0
  %4469 = vdwg.mxu0
  %v4470 = vadd.f32 %v4383, %v4423
  %v4471 = vadd.f32 %v4384, %v4425
  %v4472 = vadd.f32 %v4385, %v4464
  %v4473 = vadd.f32 %v4386, %v4466
  %v4474 = vxor.u32 %v4470, 2147483648
  %v4475 = vmul.f32 %v4474, 1.442695
  %v4476 = vpow.pop %v4475
  %v4477 = vadd.f32 %v4476, 1.0
  %v4478 = vrcp.pop %v4477
  %v4479 = vmul.f32 1.0, %v4478
  %v4480 = vxor.u32 %v4471, 2147483648
  %v4481 = vmul.f32 %v4480, 1.442695
  %v4482 = vpow.pop %v4481
  %v4483 = vadd.f32 %v4482, 1.0
  %v4484 = vrcp.pop %v4483
  %v4485 = vmul.f32 1.0, %v4484
  %v4486 = vtanh.pop %v4472
  %v4487 = vxor.u32 %v4473, 2147483648
  %v4488 = vmul.f32 %v4487, 1.442695
  %v4489 = vpow.pop %v4488
  %v4490 = vadd.f32 %v4489, 1.0
  %v4491 = vrcp.pop %v4490
  %v4492 = vmul.f32 1.0, %v4491
  %v4493 = vmul.f32 %v4485, %v4379
  %v4494 = vmul.f32 %v4479, %v4486
  %v4495 = vadd.f32 %v4493, %v4494
  %v4496 = vtanh.pop %v4495
  %v4497 = vmul.f32 %v4492, %v4496
  %4498 = vst [vmem:[#allocation4 + $0x30] sm:$0xff] %v4497
  %v4499 = vld [vmem:[#allocation2 + $0x80] sm:$0xff]
  %v4500 = vld [vmem:[#allocation2 + $0x88] sm:$0xff]
  %v4501 = vld [vmem:[#allocation2 + $0x90] sm:$0xff]
  %v4502 = vld [vmem:[#allocation2 + $0x98] sm:$0xff]
  %v4503 = vpack.c.bf16 %v4497, %v4497
  %4504 = vmatprep.subr.bf16.mxu0 %v3977
  %4505 = vmatpush1.bf16.msra.mxu0 %v3976
  %4506 = vmatprep.subr.bf16.mxu0 %v3981
  %4507 = vmatpush1.bf16.msra.mxu0 %v3980
  %4508 = vmatprep.subr.bf16.mxu0 %v3985
  %4509 = vmatpush1.bf16.msra.mxu0 %v3984
  %4510 = vmatprep.subr.bf16.mxu0 %v3989
  %4511 = vmatpush1.bf16.msra.mxu0 %v3988
  %4512 = vmatprep.subr.bf16.mxu0 %v3993
  %4513 = vmatpush1.bf16.msra.mxu0 %v3992
  %4514 = vmatprep.subr.bf16.mxu0 %v3997
  %4515 = vmatpush1.bf16.msra.mxu0 %v3996
  %4516 = vmatprep.subr.bf16.mxu0 %v4001
  %4517 = vmatpush1.bf16.msra.mxu0 %v4000
  %4518 = vmatprep.subr.bf16.mxu0 %v4005
  %4519 = vmatpush1.bf16.msra.mxu0 %v4004
  %4520 = vmatprep.subr.bf16.mxu0 0
  %4521 = vmatpush1.bf16.msra.mxu0 0
  %4522 = vmatprep.subr.bf16.mxu0 0
  %4523 = vmatpush1.bf16.msra.mxu0 0
  %4524 = vmatprep.subr.bf16.mxu0 0
  %4525 = vmatpush1.bf16.msra.mxu0 0
  %4526 = vmatprep.subr.bf16.mxu0 0
  %4527 = vmatpush1.bf16.msra.mxu0 0
  %4528 = vmatprep.subr.bf16.mxu0 0
  %4529 = vmatpush1.bf16.msra.mxu0 0
  %4530 = vmatprep.subr.bf16.mxu0 0
  %4531 = vmatpush1.bf16.msra.mxu0 0
  %4532 = vmatprep.subr.bf16.mxu0 0
  %4533 = vmatpush1.bf16.msra.mxu0 0
  %4534 = vmatprep.subr.bf16.mxu0 0
  %4535 = vmatpush1.bf16.msra.mxu0 0
  %4536 = vmatprep.mubr.bf16.mxu0 0
  %4537 = vmatmul.mubr.bf16.gmra.mrb[0].mxu0 %v4503
  %v4538 = vpop.f32.mrb[0].mxu0
  %v4539 = vadd.f32 0.0, %v4538
  %v4540 = vpop.f32.mrb[0].mxu0
  %v4541 = vadd.f32 0.0, %v4540
  %v4542 = vpop.f32.mrb[0].mxu0
  %v4543 = vpop.f32.mrb[0].mxu0
  %4544 = vdwg.mxu0
  %4545 = vmatprep.subr.bf16.mxu0 %v3979
  %4546 = vmatpush1.bf16.msra.mxu0 %v3978
  %4547 = vmatprep.subr.bf16.mxu0 %v3983
  %4548 = vmatpush1.bf16.msra.mxu0 %v3982
  %4549 = vmatprep.subr.bf16.mxu0 %v3987
  %4550 = vmatpush1.bf16.msra.mxu0 %v3986
  %4551 = vmatprep.subr.bf16.mxu0 %v3991
  %4552 = vmatpush1.bf16.msra.mxu0 %v3990
  %4553 = vmatprep.subr.bf16.mxu0 %v3995
  %4554 = vmatpush1.bf16.msra.mxu0 %v3994
  %4555 = vmatprep.subr.bf16.mxu0 %v3999
  %4556 = vmatpush1.bf16.msra.mxu0 %v3998
  %4557 = vmatprep.subr.bf16.mxu0 %v4003
  %4558 = vmatpush1.bf16.msra.mxu0 %v4002
  %4559 = vmatprep.subr.bf16.mxu0 %v4007
  %4560 = vmatpush1.bf16.msra.mxu0 %v4006
  %4561 = vmatprep.subr.bf16.mxu0 0
  %4562 = vmatpush1.bf16.msra.mxu0 0
  %4563 = vmatprep.subr.bf16.mxu0 0
  %4564 = vmatpush1.bf16.msra.mxu0 0
  %4565 = vmatprep.subr.bf16.mxu0 0
  %4566 = vmatpush1.bf16.msra.mxu0 0
  %4567 = vmatprep.subr.bf16.mxu0 0
  %4568 = vmatpush1.bf16.msra.mxu0 0
  %4569 = vmatprep.subr.bf16.mxu0 0
  %4570 = vmatpush1.bf16.msra.mxu0 0
  %4571 = vmatprep.subr.bf16.mxu0 0
  %4572 = vmatpush1.bf16.msra.mxu0 0
  %4573 = vmatprep.subr.bf16.mxu0 0
  %4574 = vmatpush1.bf16.msra.mxu0 0
  %4575 = vmatprep.subr.bf16.mxu0 0
  %4576 = vmatpush1.bf16.msra.mxu0 0
  %4577 = vmatprep.mubr.bf16.mxu0 0
  %4578 = vmatmul.mubr.bf16.gmra.mrb[0].mxu0 %v4503
  %v4579 = vpop.f32.mrb[0].mxu0
  %v4580 = vadd.f32 0.0, %v4579
  %v4581 = vpop.f32.mrb[0].mxu0
  %v4582 = vadd.f32 0.0, %v4581
  %v4583 = vpop.f32.mrb[0].mxu0
  %v4584 = vpop.f32.mrb[0].mxu0
  %4585 = vdwg.mxu0
  %v4586 = vadd.f32 %v4499, %v4539
  %v4587 = vadd.f32 %v4500, %v4541
  %v4588 = vadd.f32 %v4501, %v4580
  %v4589 = vadd.f32 %v4502, %v4582
  %v4590 = vxor.u32 %v4586, 2147483648
  %v4591 = vmul.f32 %v4590, 1.442695
  %v4592 = vpow.pop %v4591
  %v4593 = vadd.f32 %v4592, 1.0
  %v4594 = vrcp.pop %v4593
  %v4595 = vmul.f32 1.0, %v4594
  %v4596 = vxor.u32 %v4587, 2147483648
  %v4597 = vmul.f32 %v4596, 1.442695
  %v4598 = vpow.pop %v4597
  %v4599 = vadd.f32 %v4598, 1.0
  %v4600 = vrcp.pop %v4599
  %v4601 = vmul.f32 1.0, %v4600
  %v4602 = vtanh.pop %v4588
  %v4603 = vxor.u32 %v4589, 2147483648
  %v4604 = vmul.f32 %v4603, 1.442695
  %v4605 = vpow.pop %v4604
  %v4606 = vadd.f32 %v4605, 1.0
  %v4607 = vrcp.pop %v4606
  %v4608 = vmul.f32 1.0, %v4607
  %v4609 = vmul.f32 %v4601, %v4495
  %v4610 = vmul.f32 %v4595, %v4602
  %v4611 = vadd.f32 %v4609, %v4610
  %v4612 = vtanh.pop %v4611
  %v4613 = vmul.f32 %v4608, %v4612
  %4614 = vst [vmem:[#allocation4 + $0x40] sm:$0xff] %v4613
  %v4615 = vld [vmem:[#allocation2 + $0xa0] sm:$0xff]
  %v4616 = vld [vmem:[#allocation2 + $0xa8] sm:$0xff]
  %v4617 = vld [vmem:[#allocation2 + $0xb0] sm:$0xff]
  %v4618 = vld [vmem:[#allocation2 + $0xb8] sm:$0xff]
  %v4619 = vpack.c.bf16 %v4613, %v4613
  %4620 = vmatprep.subr.bf16.mxu0 %v3977
  %4621 = vmatpush1.bf16.msra.mxu0 %v3976
  %4622 = vmatprep.subr.bf16.mxu0 %v3981
  %4623 = vmatpush1.bf16.msra.mxu0 %v3980
  %4624 = vmatprep.subr.bf16.mxu0 %v3985
  %4625 = vmatpush1.bf16.msra.mxu0 %v3984
  %4626 = vmatprep.subr.bf16.mxu0 %v3989
  %4627 = vmatpush1.bf16.msra.mxu0 %v3988
  %4628 = vmatprep.subr.bf16.mxu0 %v3993
  %4629 = vmatpush1.bf16.msra.mxu0 %v3992
  %4630 = vmatprep.subr.bf16.mxu0 %v3997
  %4631 = vmatpush1.bf16.msra.mxu0 %v3996
  %4632 = vmatprep.subr.bf16.mxu0 %v4001
  %4633 = vmatpush1.bf16.msra.mxu0 %v4000
  %4634 = vmatprep.subr.bf16.mxu0 %v4005
  %4635 = vmatpush1.bf16.msra.mxu0 %v4004
  %4636 = vmatprep.subr.bf16.mxu0 0
  %4637 = vmatpush1.bf16.msra.mxu0 0
  %4638 = vmatprep.subr.bf16.mxu0 0
  %4639 = vmatpush1.bf16.msra.mxu0 0
  %4640 = vmatprep.subr.bf16.mxu0 0
  %4641 = vmatpush1.bf16.msra.mxu0 0
  %4642 = vmatprep.subr.bf16.mxu0 0
  %4643 = vmatpush1.bf16.msra.mxu0 0
  %4644 = vmatprep.subr.bf16.mxu0 0
  %4645 = vmatpush1.bf16.msra.mxu0 0
  %4646 = vmatprep.subr.bf16.mxu0 0
  %4647 = vmatpush1.bf16.msra.mxu0 0
  %4648 = vmatprep.subr.bf16.mxu0 0
  %4649 = vmatpush1.bf16.msra.mxu0 0
  %4650 = vmatprep.subr.bf16.mxu0 0
  %4651 = vmatpush1.bf16.msra.mxu0 0
  %4652 = vmatprep.mubr.bf16.mxu0 0
  %4653 = vmatmul.mubr.bf16.gmra.mrb[0].mxu0 %v4619
  %v4654 = vpop.f32.mrb[0].mxu0
  %v4655 = vadd.f32 0.0, %v4654
  %v4656 = vpop.f32.mrb[0].mxu0
  %v4657 = vadd.f32 0.0, %v4656
  %v4658 = vpop.f32.mrb[0].mxu0
  %v4659 = vpop.f32.mrb[0].mxu0
  %4660 = vdwg.mxu0
  %4661 = vmatprep.subr.bf16.mxu0 %v3979
  %4662 = vmatpush1.bf16.msra.mxu0 %v3978
  %4663 = vmatprep.subr.bf16.mxu0 %v3983
  %4664 = vmatpush1.bf16.msra.mxu0 %v3982
  %4665 = vmatprep.subr.bf16.mxu0 %v3987
  %4666 = vmatpush1.bf16.msra.mxu0 %v3986
  %4667 = vmatprep.subr.bf16.mxu0 %v3991
  %4668 = vmatpush1.bf16.msra.mxu0 %v3990
  %4669 = vmatprep.subr.bf16.mxu0 %v3995
  %4670 = vmatpush1.bf16.msra.mxu0 %v3994
  %4671 = vmatprep.subr.bf16.mxu0 %v3999
  %4672 = vmatpush1.bf16.msra.mxu0 %v3998
  %4673 = vmatprep.subr.bf16.mxu0 %v4003
  %4674 = vmatpush1.bf16.msra.mxu0 %v4002
  %4675 = vmatprep.subr.bf16.mxu0 %v4007
  %4676 = vmatpush1.bf16.msra.mxu0 %v4006
  %4677 = vmatprep.subr.bf16.mxu0 0
  %4678 = vmatpush1.bf16.msra.mxu0 0
  %4679 = vmatprep.subr.bf16.mxu0 0
  %4680 = vmatpush1.bf16.msra.mxu0 0
  %4681 = vmatprep.subr.bf16.mxu0 0
  %4682 = vmatpush1.bf16.msra.mxu0 0
  %4683 = vmatprep.subr.bf16.mxu0 0
  %4684 = vmatpush1.bf16.msra.mxu0 0
  %4685 = vmatprep.subr.bf16.mxu0 0
  %4686 = vmatpush1.bf16.msra.mxu0 0
  %4687 = vmatprep.subr.bf16.mxu0 0
  %4688 = vmatpush1.bf16.msra.mxu0 0
  %4689 = vmatprep.subr.bf16.mxu0 0
  %4690 = vmatpush1.bf16.msra.mxu0 0
  %4691 = vmatprep.subr.bf16.mxu0 0
  %4692 = vmatpush1.bf16.msra.mxu0 0
  %4693 = vmatprep.mubr.bf16.mxu0 0
  %4694 = vmatmul.mubr.bf16.gmra.mrb[0].mxu0 %v4619
  %v4695 = vpop.f32.mrb[0].mxu0
  %v4696 = vadd.f32 0.0, %v4695
  %v4697 = vpop.f32.mrb[0].mxu0
  %v4698 = vadd.f32 0.0, %v4697
  %v4699 = vpop.f32.mrb[0].mxu0
  %v4700 = vpop.f32.mrb[0].mxu0
  %4701 = vdwg.mxu0
  %v4702 = vadd.f32 %v4615, %v4655
  %v4703 = vadd.f32 %v4616, %v4657
  %v4704 = vadd.f32 %v4617, %v4696
  %v4705 = vadd.f32 %v4618, %v4698
  %v4706 = vxor.u32 %v4702, 2147483648
  %v4707 = vmul.f32 %v4706, 1.442695
  %v4708 = vpow.pop %v4707
  %v4709 = vadd.f32 %v4708, 1.0
  %v4710 = vrcp.pop %v4709
  %v4711 = vmul.f32 1.0, %v4710
  %v4712 = vxor.u32 %v4703, 2147483648
  %v4713 = vmul.f32 %v4712, 1.442695
  %v4714 = vpow.pop %v4713
  %v4715 = vadd.f32 %v4714, 1.0
  %v4716 = vrcp.pop %v4715
  %v4717 = vmul.f32 1.0, %v4716
  %v4718 = vtanh.pop %v4704
  %v4719 = vxor.u32 %v4705, 2147483648
  %v4720 = vmul.f32 %v4719, 1.442695
  %v4721 = vpow.pop %v4720
  %v4722 = vadd.f32 %v4721, 1.0
  %v4723 = vrcp.pop %v4722
  %v4724 = vmul.f32 1.0, %v4723
  %v4725 = vmul.f32 %v4717, %v4611
  %v4726 = vmul.f32 %v4711, %v4718
  %v4727 = vadd.f32 %v4725, %v4726
  %v4728 = vtanh.pop %v4727
  %v4729 = vmul.f32 %v4724, %v4728
  %4730 = vst [vmem:[#allocation4 + $0x50] sm:$0xff] %v4729
  %v4731 = vld [vmem:[#allocation2 + $0xc0] sm:$0xff]
  %v4732 = vld [vmem:[#allocation2 + $0xc8] sm:$0xff]
  %v4733 = vld [vmem:[#allocation2 + $0xd0] sm:$0xff]
  %v4734 = vld [vmem:[#allocation2 + $0xd8] sm:$0xff]
  %v4735 = vpack.c.bf16 %v4729, %v4729
  %4736 = vmatprep.subr.bf16.mxu0 %v3977
  %4737 = vmatpush1.bf16.msra.mxu0 %v3976
  %4738 = vmatprep.subr.bf16.mxu0 %v3981
  %4739 = vmatpush1.bf16.msra.mxu0 %v3980
  %4740 = vmatprep.subr.bf16.mxu0 %v3985
  %4741 = vmatpush1.bf16.msra.mxu0 %v3984
  %4742 = vmatprep.subr.bf16.mxu0 %v3989
  %4743 = vmatpush1.bf16.msra.mxu0 %v3988
  %4744 = vmatprep.subr.bf16.mxu0 %v3993
  %4745 = vmatpush1.bf16.msra.mxu0 %v3992
  %4746 = vmatprep.subr.bf16.mxu0 %v3997
  %4747 = vmatpush1.bf16.msra.mxu0 %v3996
  %4748 = vmatprep.subr.bf16.mxu0 %v4001
  %4749 = vmatpush1.bf16.msra.mxu0 %v4000
  %4750 = vmatprep.subr.bf16.mxu0 %v4005
  %4751 = vmatpush1.bf16.msra.mxu0 %v4004
  %4752 = vmatprep.subr.bf16.mxu0 0
  %4753 = vmatpush1.bf16.msra.mxu0 0
  %4754 = vmatprep.subr.bf16.mxu0 0
  %4755 = vmatpush1.bf16.msra.mxu0 0
  %4756 = vmatprep.subr.bf16.mxu0 0
  %4757 = vmatpush1.bf16.msra.mxu0 0
  %4758 = vmatprep.subr.bf16.mxu0 0
  %4759 = vmatpush1.bf16.msra.mxu0 0
  %4760 = vmatprep.subr.bf16.mxu0 0
  %4761 = vmatpush1.bf16.msra.mxu0 0
  %4762 = vmatprep.subr.bf16.mxu0 0
  %4763 = vmatpush1.bf16.msra.mxu0 0
  %4764 = vmatprep.subr.bf16.mxu0 0
  %4765 = vmatpush1.bf16.msra.mxu0 0
  %4766 = vmatprep.subr.bf16.mxu0 0
  %4767 = vmatpush1.bf16.msra.mxu0 0
  %4768 = vmatprep.mubr.bf16.mxu0 0
  %4769 = vmatmul.mubr.bf16.gmra.mrb[0].mxu0 %v4735
  %v4770 = vpop.f32.mrb[0].mxu0
  %v4771 = vadd.f32 0.0, %v4770
  %v4772 = vpop.f32.mrb[0].mxu0
  %v4773 = vadd.f32 0.0, %v4772
  %v4774 = vpop.f32.mrb[0].mxu0
  %v4775 = vpop.f32.mrb[0].mxu0
  %4776 = vdwg.mxu0
  %4777 = vmatprep.subr.bf16.mxu0 %v3979
  %4778 = vmatpush1.bf16.msra.mxu0 %v3978
  %4779 = vmatprep.subr.bf16.mxu0 %v3983
  %4780 = vmatpush1.bf16.msra.mxu0 %v3982
  %4781 = vmatprep.subr.bf16.mxu0 %v3987
  %4782 = vmatpush1.bf16.msra.mxu0 %v3986
  %4783 = vmatprep.subr.bf16.mxu0 %v3991
  %4784 = vmatpush1.bf16.msra.mxu0 %v3990
  %4785 = vmatprep.subr.bf16.mxu0 %v3995
  %4786 = vmatpush1.bf16.msra.mxu0 %v3994
  %4787 = vmatprep.subr.bf16.mxu0 %v3999
  %4788 = vmatpush1.bf16.msra.mxu0 %v3998
  %4789 = vmatprep.subr.bf16.mxu0 %v4003
  %4790 = vmatpush1.bf16.msra.mxu0 %v4002
  %4791 = vmatprep.subr.bf16.mxu0 %v4007
  %4792 = vmatpush1.bf16.msra.mxu0 %v4006
  %4793 = vmatprep.subr.bf16.mxu0 0
  %4794 = vmatpush1.bf16.msra.mxu0 0
  %4795 = vmatprep.subr.bf16.mxu0 0
  %4796 = vmatpush1.bf16.msra.mxu0 0
  %4797 = vmatprep.subr.bf16.mxu0 0
  %4798 = vmatpush1.bf16.msra.mxu0 0
  %4799 = vmatprep.subr.bf16.mxu0 0
  %4800 = vmatpush1.bf16.msra.mxu0 0
  %4801 = vmatprep.subr.bf16.mxu0 0
  %4802 = vmatpush1.bf16.msra.mxu0 0
  %4803 = vmatprep.subr.bf16.mxu0 0
  %4804 = vmatpush1.bf16.msra.mxu0 0
  %4805 = vmatprep.subr.bf16.mxu0 0
  %4806 = vmatpush1.bf16.msra.mxu0 0
  %4807 = vmatprep.subr.bf16.mxu0 0
  %4808 = vmatpush1.bf16.msra.mxu0 0
  %4809 = vmatprep.mubr.bf16.mxu0 0
  %4810 = vmatmul.mubr.bf16.gmra.mrb[0].mxu0 %v4735
  %v4811 = vpop.f32.mrb[0].mxu0
  %v4812 = vadd.f32 0.0, %v4811
  %v4813 = vpop.f32.mrb[0].mxu0
  %v4814 = vadd.f32 0.0, %v4813
  %v4815 = vpop.f32.mrb[0].mxu0
  %v4816 = vpop.f32.mrb[0].mxu0
  %4817 = vdwg.mxu0
  %v4818 = vadd.f32 %v4731, %v4771
  %v4819 = vadd.f32 %v4732, %v4773
  %v4820 = vadd.f32 %v4733, %v4812
  %v4821 = vadd.f32 %v4734, %v4814
  %v4822 = vxor.u32 %v4818, 2147483648
  %v4823 = vmul.f32 %v4822, 1.442695
  %v4824 = vpow.pop %v4823
  %v4825 = vadd.f32 %v4824, 1.0
  %v4826 = vrcp.pop %v4825
  %v4827 = vmul.f32 1.0, %v4826
  %v4828 = vxor.u32 %v4819, 2147483648
  %v4829 = vmul.f32 %v4828, 1.442695
  %v4830 = vpow.pop %v4829
  %v4831 = vadd.f32 %v4830, 1.0
  %v4832 = vrcp.pop %v4831
  %v4833 = vmul.f32 1.0, %v4832
  %v4834 = vtanh.pop %v4820
  %v4835 = vxor.u32 %v4821, 2147483648
  %v4836 = vmul.f32 %v4835, 1.442695
  %v4837 = vpow.pop %v4836
  %v4838 = vadd.f32 %v4837, 1.0
  %v4839 = vrcp.pop %v4838
  %v4840 = vmul.f32 1.0, %v4839
  %v4841 = vmul.f32 %v4833, %v4727
  %v4842 = vmul.f32 %v4827, %v4834
  %v4843 = vadd.f32 %v4841, %v4842
  %v4844 = vtanh.pop %v4843
  %v4845 = vmul.f32 %v4840, %v4844
  %4846 = vst [vmem:[#allocation4 + $0x60] sm:$0xff] %v4845
  %v4847 = vld [vmem:[#allocation2 + $0xe0] sm:$0xff]
  %v4848 = vld [vmem:[#allocation2 + $0xe8] sm:$0xff]
  %v4849 = vld [vmem:[#allocation2 + $0xf0] sm:$0xff]
  %v4850 = vld [vmem:[#allocation2 + $0xf8] sm:$0xff]
  %v4851 = vpack.c.bf16 %v4845, %v4845
  %4852 = vmatprep.subr.bf16.mxu0 %v3977
  %4853 = vmatpush1.bf16.msra.mxu0 %v3976
  %4854 = vmatprep.subr.bf16.mxu0 %v3981
  %4855 = vmatpush1.bf16.msra.mxu0 %v3980
  %4856 = vmatprep.subr.bf16.mxu0 %v3985
  %4857 = vmatpush1.bf16.msra.mxu0 %v3984
  %4858 = vmatprep.subr.bf16.mxu0 %v3989
  %4859 = vmatpush1.bf16.msra.mxu0 %v3988
  %4860 = vmatprep.subr.bf16.mxu0 %v3993
  %4861 = vmatpush1.bf16.msra.mxu0 %v3992
  %4862 = vmatprep.subr.bf16.mxu0 %v3997
  %4863 = vmatpush1.bf16.msra.mxu0 %v3996
  %4864 = vmatprep.subr.bf16.mxu0 %v4001
  %4865 = vmatpush1.bf16.msra.mxu0 %v4000
  %4866 = vmatprep.subr.bf16.mxu0 %v4005
  %4867 = vmatpush1.bf16.msra.mxu0 %v4004
  %4868 = vmatprep.subr.bf16.mxu0 0
  %4869 = vmatpush1.bf16.msra.mxu0 0
  %4870 = vmatprep.subr.bf16.mxu0 0
  %4871 = vmatpush1.bf16.msra.mxu0 0
  %4872 = vmatprep.subr.bf16.mxu0 0
  %4873 = vmatpush1.bf16.msra.mxu0 0
  %4874 = vmatprep.subr.bf16.mxu0 0
  %4875 = vmatpush1.bf16.msra.mxu0 0
  %4876 = vmatprep.subr.bf16.mxu0 0
  %4877 = vmatpush1.bf16.msra.mxu0 0
  %4878 = vmatprep.subr.bf16.mxu0 0
  %4879 = vmatpush1.bf16.msra.mxu0 0
  %4880 = vmatprep.subr.bf16.mxu0 0
  %4881 = vmatpush1.bf16.msra.mxu0 0
  %4882 = vmatprep.subr.bf16.mxu0 0
  %4883 = vmatpush1.bf16.msra.mxu0 0
  %4884 = vmatprep.mubr.bf16.mxu0 0
  %4885 = vmatmul.mubr.bf16.gmra.mrb[0].mxu0 %v4851
  %v4886 = vpop.f32.mrb[0].mxu0
  %v4887 = vadd.f32 0.0, %v4886
  %v4888 = vpop.f32.mrb[0].mxu0
  %v4889 = vadd.f32 0.0, %v4888
  %v4890 = vpop.f32.mrb[0].mxu0
  %v4891 = vpop.f32.mrb[0].mxu0
  %4892 = vdwg.mxu0
  %4893 = vmatprep.subr.bf16.mxu0 %v3979
  %4894 = vmatpush1.bf16.msra.mxu0 %v3978
  %4895 = vmatprep.subr.bf16.mxu0 %v3983
  %4896 = vmatpush1.bf16.msra.mxu0 %v3982
  %4897 = vmatprep.subr.bf16.mxu0 %v3987
  %4898 = vmatpush1.bf16.msra.mxu0 %v3986
  %4899 = vmatprep.subr.bf16.mxu0 %v3991
  %4900 = vmatpush1.bf16.msra.mxu0 %v3990
  %4901 = vmatprep.subr.bf16.mxu0 %v3995
  %4902 = vmatpush1.bf16.msra.mxu0 %v3994
  %4903 = vmatprep.subr.bf16.mxu0 %v3999
  %4904 = vmatpush1.bf16.msra.mxu0 %v3998
  %4905 = vmatprep.subr.bf16.mxu0 %v4003
  %4906 = vmatpush1.bf16.msra.mxu0 %v4002
  %4907 = vmatprep.subr.bf16.mxu0 %v4007
  %4908 = vmatpush1.bf16.msra.mxu0 %v4006
  %4909 = vmatprep.subr.bf16.mxu0 0
  %4910 = vmatpush1.bf16.msra.mxu0 0
  %4911 = vmatprep.subr.bf16.mxu0 0
  %4912 = vmatpush1.bf16.msra.mxu0 0
  %4913 = vmatprep.subr.bf16.mxu0 0
  %4914 = vmatpush1.bf16.msra.mxu0 0
  %4915 = vmatprep.subr.bf16.mxu0 0
  %4916 = vmatpush1.bf16.msra.mxu0 0
  %4917 = vmatprep.subr.bf16.mxu0 0
  %4918 = vmatpush1.bf16.msra.mxu0 0
  %4919 = vmatprep.subr.bf16.mxu0 0
  %4920 = vmatpush1.bf16.msra.mxu0 0
  %4921 = vmatprep.subr.bf16.mxu0 0
  %4922 = vmatpush1.bf16.msra.mxu0 0
  %4923 = vmatprep.subr.bf16.mxu0 0
  %4924 = vmatpush1.bf16.msra.mxu0 0
  %4925 = vmatprep.mubr.bf16.mxu0 0
  %4926 = vmatmul.mubr.bf16.gmra.mrb[0].mxu0 %v4851
  %v4927 = vpop.f32.mrb[0].mxu0
  %v4928 = vadd.f32 0.0, %v4927
  %v4929 = vpop.f32.mrb[0].mxu0
  %v4930 = vadd.f32 0.0, %v4929
  %v4931 = vpop.f32.mrb[0].mxu0
  %v4932 = vpop.f32.mrb[0].mxu0
  %4933 = vdwg.mxu0
  %v4934 = vadd.f32 %v4847, %v4887
  %v4935 = vadd.f32 %v4848, %v4889
  %v4936 = vadd.f32 %v4849, %v4928
  %v4937 = vadd.f32 %v4850, %v4930
  %v4938 = vxor.u32 %v4934, 2147483648
  %v4939 = vmul.f32 %v4938, 1.442695
  %v4940 = vpow.pop %v4939
  %v4941 = vadd.f32 %v4940, 1.0
  %v4942 = vrcp.pop %v4941
  %v4943 = vmul.f32 1.0, %v4942
  %v4944 = vxor.u32 %v4935, 2147483648
  %v4945 = vmul.f32 %v4944, 1.442695
  %v4946 = vpow.pop %v4945
  %v4947 = vadd.f32 %v4946, 1.0
  %v4948 = vrcp.pop %v4947
  %v4949 = vmul.f32 1.0, %v4948
  %v4950 = vtanh.pop %v4936
  %v4951 = vxor.u32 %v4937, 2147483648
  %v4952 = vmul.f32 %v4951, 1.442695
  %v4953 = vpow.pop %v4952
  %v4954 = vadd.f32 %v4953, 1.0
  %v4955 = vrcp.pop %v4954
  %v4956 = vmul.f32 1.0, %v4955
  %v4957 = vmul.f32 %v4949, %v4843
  %v4958 = vmul.f32 %v4943, %v4950
  %v4959 = vadd.f32 %v4957, %v4958
  %v4960 = vtanh.pop %v4959
  %v4961 = vmul.f32 %v4956, %v4960
  %4962 = vst [vmem:[#allocation4 + $0x70] sm:$0xff] %v4961
  %s4963 = scalar_lea.vmem %s5, 512
  %v4964 = vld [vmem:[%s4963] sm:$0xff]
  %v4965 = vld [vmem:[%s4963 + $0x8] sm:$0xff]
  %v4966 = vld [vmem:[%s4963 + $0x10] sm:$0xff]
  %v4967 = vld [vmem:[%s4963 + $0x18] sm:$0xff]
  %v4968 = vld [vmem:[%s4963 + $0x20] sm:$0xff]
  %v4969 = vld [vmem:[%s4963 + $0x28] sm:$0xff]
  %v4970 = vld [vmem:[%s4963 + $0x30] sm:$0xff]
  %v4971 = vld [vmem:[%s4963 + $0x38] sm:$0xff]
  %v4972 = vld [vmem:[%s4963 + $0x40] sm:$0xff]
  %v4973 = vld [vmem:[%s4963 + $0x48] sm:$0xff]
  %v4974 = vld [vmem:[%s4963 + $0x50] sm:$0xff]
  %v4975 = vld [vmem:[%s4963 + $0x58] sm:$0xff]
  %v4976 = vld [vmem:[%s4963 + $0x60] sm:$0xff]
  %v4977 = vld [vmem:[%s4963 + $0x68] sm:$0xff]
  %v4978 = vld [vmem:[%s4963 + $0x70] sm:$0xff]
  %v4979 = vld [vmem:[%s4963 + $0x78] sm:$0xff]
  %v4980 = vld [vmem:[%s4963 + $0x80] sm:$0xff]
  %v4981 = vld [vmem:[%s4963 + $0x88] sm:$0xff]
  %v4982 = vld [vmem:[%s4963 + $0x90] sm:$0xff]
  %v4983 = vld [vmem:[%s4963 + $0x98] sm:$0xff]
  %v4984 = vld [vmem:[%s4963 + $0xa0] sm:$0xff]
  %v4985 = vld [vmem:[%s4963 + $0xa8] sm:$0xff]
  %v4986 = vld [vmem:[%s4963 + $0xb0] sm:$0xff]
  %v4987 = vld [vmem:[%s4963 + $0xb8] sm:$0xff]
  %v4988 = vld [vmem:[%s4963 + $0xc0] sm:$0xff]
  %v4989 = vld [vmem:[%s4963 + $0xc8] sm:$0xff]
  %v4990 = vld [vmem:[%s4963 + $0xd0] sm:$0xff]
  %v4991 = vld [vmem:[%s4963 + $0xd8] sm:$0xff]
  %v4992 = vld [vmem:[%s4963 + $0xe0] sm:$0xff]
  %v4993 = vld [vmem:[%s4963 + $0xe8] sm:$0xff]
  %v4994 = vld [vmem:[%s4963 + $0xf0] sm:$0xff]
  %v4995 = vld [vmem:[%s4963 + $0xf8] sm:$0xff]
  %v4996 = vld [vmem:[%s4963 + $0x100] sm:$0xff]
  %v4997 = vld [vmem:[%s4963 + $0x108] sm:$0xff]
  %v4998 = vld [vmem:[%s4963 + $0x110] sm:$0xff]
  %v4999 = vld [vmem:[%s4963 + $0x118] sm:$0xff]
  %v5000 = vld [vmem:[%s4963 + $0x120] sm:$0xff]
  %v5001 = vld [vmem:[%s4963 + $0x128] sm:$0xff]
  %v5002 = vld [vmem:[%s4963 + $0x130] sm:$0xff]
  %v5003 = vld [vmem:[%s4963 + $0x138] sm:$0xff]
  %v5004 = vld [vmem:[%s4963 + $0x140] sm:$0xff]
  %v5005 = vld [vmem:[%s4963 + $0x148] sm:$0xff]
  %v5006 = vld [vmem:[%s4963 + $0x150] sm:$0xff]
  %v5007 = vld [vmem:[%s4963 + $0x158] sm:$0xff]
  %v5008 = vld [vmem:[%s4963 + $0x160] sm:$0xff]
  %v5009 = vld [vmem:[%s4963 + $0x168] sm:$0xff]
  %v5010 = vld [vmem:[%s4963 + $0x170] sm:$0xff]
  %v5011 = vld [vmem:[%s4963 + $0x178] sm:$0xff]
  %v5012 = vld [vmem:[%s4963 + $0x180] sm:$0xff]
  %v5013 = vld [vmem:[%s4963 + $0x188] sm:$0xff]
  %v5014 = vld [vmem:[%s4963 + $0x190] sm:$0xff]
  %v5015 = vld [vmem:[%s4963 + $0x198] sm:$0xff]
  %v5016 = vld [vmem:[%s4963 + $0x1a0] sm:$0xff]
  %v5017 = vld [vmem:[%s4963 + $0x1a8] sm:$0xff]
  %v5018 = vld [vmem:[%s4963 + $0x1b0] sm:$0xff]
  %v5019 = vld [vmem:[%s4963 + $0x1b8] sm:$0xff]
  %v5020 = vld [vmem:[%s4963 + $0x1c0] sm:$0xff]
  %v5021 = vld [vmem:[%s4963 + $0x1c8] sm:$0xff]
  %v5022 = vld [vmem:[%s4963 + $0x1d0] sm:$0xff]
  %v5023 = vld [vmem:[%s4963 + $0x1d8] sm:$0xff]
  %v5024 = vld [vmem:[%s4963 + $0x1e0] sm:$0xff]
  %v5025 = vld [vmem:[%s4963 + $0x1e8] sm:$0xff]
  %v5026 = vld [vmem:[%s4963 + $0x1f0] sm:$0xff]
  %v5027 = vld [vmem:[%s4963 + $0x1f8] sm:$0xff]
  %s5028 = scalar_lea.vmem %s7, 4
  %v5029 = vld [vmem:[%s5028] sm:$0xf]
  %v5031 = vlaneseq
  %v5032 = vshrl.u32 %v5031, 7
  %v5033 = vsub.s32 0, %v5032
  %v5034 = vrot.slane %v5029, %v5033
  %v5035 = vlaneseq
  %v5036 = vshrl.u32 %v5035, 7
  %v5037 = vsub.s32 1, %v5036
  %v5038 = vrot.slane %v5029, %v5037
  %v5039 = vlaneseq
  %v5040 = vshrl.u32 %v5039, 7
  %v5041 = vsub.s32 2, %v5040
  %v5042 = vrot.slane %v5029, %v5041
  %v5043 = vlaneseq
  %v5044 = vshrl.u32 %v5043, 7
  %v5045 = vsub.s32 3, %v5044
  %v5046 = vrot.slane %v5029, %v5045
  %v5115 = vunpack.c.l.b16 %v4964
  %v5116 = vunpack.c.h.b16 %v4964
  %v5117 = vunpack.c.l.b16 %v4965
  %v5118 = vunpack.c.h.b16 %v4965
  %v5119 = vunpack.c.l.b16 %v4966
  %v5120 = vunpack.c.h.b16 %v4966
  %v5121 = vunpack.c.l.b16 %v4967
  %v5122 = vunpack.c.h.b16 %v4967
  %v5123 = vunpack.c.l.b16 %v4968
  %v5124 = vunpack.c.h.b16 %v4968
  %v5125 = vunpack.c.l.b16 %v4969
  %v5126 = vunpack.c.h.b16 %v4969
  %v5127 = vunpack.c.l.b16 %v4970
  %v5128 = vunpack.c.h.b16 %v4970
  %v5129 = vunpack.c.l.b16 %v4971
  %v5130 = vunpack.c.h.b16 %v4971
  %v5131 = vunpack.c.l.b16 %v4972
  %v5132 = vunpack.c.h.b16 %v4972
  %v5133 = vunpack.c.l.b16 %v4973
  %v5134 = vunpack.c.h.b16 %v4973
  %v5135 = vunpack.c.l.b16 %v4974
  %v5136 = vunpack.c.h.b16 %v4974
  %v5137 = vunpack.c.l.b16 %v4975
  %v5138 = vunpack.c.h.b16 %v4975
  %v5139 = vunpack.c.l.b16 %v4976
  %v5140 = vunpack.c.h.b16 %v4976
  %v5141 = vunpack.c.l.b16 %v4977
  %v5142 = vunpack.c.h.b16 %v4977
  %v5143 = vunpack.c.l.b16 %v4978
  %v5144 = vunpack.c.h.b16 %v4978
  %v5145 = vunpack.c.l.b16 %v4979
  %v5146 = vunpack.c.h.b16 %v4979
  %v5147 = vunpack.c.l.b16 %v4980
  %v5148 = vunpack.c.h.b16 %v4980
  %v5149 = vunpack.c.l.b16 %v4981
  %v5150 = vunpack.c.h.b16 %v4981
  %v5151 = vunpack.c.l.b16 %v4982
  %v5152 = vunpack.c.h.b16 %v4982
  %v5153 = vunpack.c.l.b16 %v4983
  %v5154 = vunpack.c.h.b16 %v4983
  %v5155 = vunpack.c.l.b16 %v4984
  %v5156 = vunpack.c.h.b16 %v4984
  %v5157 = vunpack.c.l.b16 %v4985
  %v5158 = vunpack.c.h.b16 %v4985
  %v5159 = vunpack.c.l.b16 %v4986
  %v5160 = vunpack.c.h.b16 %v4986
  %v5161 = vunpack.c.l.b16 %v4987
  %v5162 = vunpack.c.h.b16 %v4987
  %v5163 = vunpack.c.l.b16 %v4988
  %v5164 = vunpack.c.h.b16 %v4988
  %v5165 = vunpack.c.l.b16 %v4989
  %v5166 = vunpack.c.h.b16 %v4989
  %v5167 = vunpack.c.l.b16 %v4990
  %v5168 = vunpack.c.h.b16 %v4990
  %v5169 = vunpack.c.l.b16 %v4991
  %v5170 = vunpack.c.h.b16 %v4991
  %v5171 = vunpack.c.l.b16 %v4992
  %v5172 = vunpack.c.h.b16 %v4992
  %v5173 = vunpack.c.l.b16 %v4993
  %v5174 = vunpack.c.h.b16 %v4993
  %v5175 = vunpack.c.l.b16 %v4994
  %v5176 = vunpack.c.h.b16 %v4994
  %v5177 = vunpack.c.l.b16 %v4995
  %v5178 = vunpack.c.h.b16 %v4995
  %v5179 = vunpack.c.l.b16 %v4996
  %v5180 = vunpack.c.h.b16 %v4996
  %v5181 = vunpack.c.l.b16 %v4997
  %v5182 = vunpack.c.h.b16 %v4997
  %v5183 = vunpack.c.l.b16 %v4998
  %v5184 = vunpack.c.h.b16 %v4998
  %v5185 = vunpack.c.l.b16 %v4999
  %v5186 = vunpack.c.h.b16 %v4999
  %v5187 = vunpack.c.l.b16 %v5000
  %v5188 = vunpack.c.h.b16 %v5000
  %v5189 = vunpack.c.l.b16 %v5001
  %v5190 = vunpack.c.h.b16 %v5001
  %v5191 = vunpack.c.l.b16 %v5002
  %v5192 = vunpack.c.h.b16 %v5002
  %v5193 = vunpack.c.l.b16 %v5003
  %v5194 = vunpack.c.h.b16 %v5003
  %v5195 = vunpack.c.l.b16 %v5004
  %v5196 = vunpack.c.h.b16 %v5004
  %v5197 = vunpack.c.l.b16 %v5005
  %v5198 = vunpack.c.h.b16 %v5005
  %v5199 = vunpack.c.l.b16 %v5006
  %v5200 = vunpack.c.h.b16 %v5006
  %v5201 = vunpack.c.l.b16 %v5007
  %v5202 = vunpack.c.h.b16 %v5007
  %v5203 = vunpack.c.l.b16 %v5008
  %v5204 = vunpack.c.h.b16 %v5008
  %v5205 = vunpack.c.l.b16 %v5009
  %v5206 = vunpack.c.h.b16 %v5009
  %v5207 = vunpack.c.l.b16 %v5010
  %v5208 = vunpack.c.h.b16 %v5010
  %v5209 = vunpack.c.l.b16 %v5011
  %v5210 = vunpack.c.h.b16 %v5011
  %v5211 = vunpack.c.l.b16 %v5012
  %v5212 = vunpack.c.h.b16 %v5012
  %v5213 = vunpack.c.l.b16 %v5013
  %v5214 = vunpack.c.h.b16 %v5013
  %v5215 = vunpack.c.l.b16 %v5014
  %v5216 = vunpack.c.h.b16 %v5014
  %v5217 = vunpack.c.l.b16 %v5015
  %v5218 = vunpack.c.h.b16 %v5015
  %v5219 = vunpack.c.l.b16 %v5016
  %v5220 = vunpack.c.h.b16 %v5016
  %v5221 = vunpack.c.l.b16 %v5017
  %v5222 = vunpack.c.h.b16 %v5017
  %v5223 = vunpack.c.l.b16 %v5018
  %v5224 = vunpack.c.h.b16 %v5018
  %v5225 = vunpack.c.l.b16 %v5019
  %v5226 = vunpack.c.h.b16 %v5019
  %v5227 = vunpack.c.l.b16 %v5020
  %v5228 = vunpack.c.h.b16 %v5020
  %v5229 = vunpack.c.l.b16 %v5021
  %v5230 = vunpack.c.h.b16 %v5021
  %v5231 = vunpack.c.l.b16 %v5022
  %v5232 = vunpack.c.h.b16 %v5022
  %v5233 = vunpack.c.l.b16 %v5023
  %v5234 = vunpack.c.h.b16 %v5023
  %v5235 = vunpack.c.l.b16 %v5024
  %v5236 = vunpack.c.h.b16 %v5024
  %v5237 = vunpack.c.l.b16 %v5025
  %v5238 = vunpack.c.h.b16 %v5025
  %v5239 = vunpack.c.l.b16 %v5026
  %v5240 = vunpack.c.h.b16 %v5026
  %v5241 = vunpack.c.l.b16 %v5027
  %v5242 = vunpack.c.h.b16 %v5027
  %v5243 = vpack.c.b16 %v5119, %v5115
  %v5244 = vpack.c.b16 %v5120, %v5116
  %v5245 = vpack.c.b16 %v5121, %v5117
  %v5246 = vpack.c.b16 %v5122, %v5118
  %v5247 = vpack.c.b16 %v5127, %v5123
  %v5248 = vpack.c.b16 %v5128, %v5124
  %v5249 = vpack.c.b16 %v5129, %v5125
  %v5250 = vpack.c.b16 %v5130, %v5126
  %v5251 = vpack.c.b16 %v5135, %v5131
  %v5252 = vpack.c.b16 %v5136, %v5132
  %v5253 = vpack.c.b16 %v5137, %v5133
  %v5254 = vpack.c.b16 %v5138, %v5134
  %v5255 = vpack.c.b16 %v5143, %v5139
  %v5256 = vpack.c.b16 %v5144, %v5140
  %v5257 = vpack.c.b16 %v5145, %v5141
  %v5258 = vpack.c.b16 %v5146, %v5142
  %v5259 = vpack.c.b16 %v5151, %v5147
  %v5260 = vpack.c.b16 %v5152, %v5148
  %v5261 = vpack.c.b16 %v5153, %v5149
  %v5262 = vpack.c.b16 %v5154, %v5150
  %v5263 = vpack.c.b16 %v5159, %v5155
  %v5264 = vpack.c.b16 %v5160, %v5156
  %v5265 = vpack.c.b16 %v5161, %v5157
  %v5266 = vpack.c.b16 %v5162, %v5158
  %v5267 = vpack.c.b16 %v5167, %v5163
  %v5268 = vpack.c.b16 %v5168, %v5164
  %v5269 = vpack.c.b16 %v5169, %v5165
  %v5270 = vpack.c.b16 %v5170, %v5166
  %v5271 = vpack.c.b16 %v5175, %v5171
  %v5272 = vpack.c.b16 %v5176, %v5172
  %v5273 = vpack.c.b16 %v5177, %v5173
  %v5274 = vpack.c.b16 %v5178, %v5174
  %v5275 = vpack.c.b16 %v5183, %v5179
  %v5276 = vpack.c.b16 %v5184, %v5180
  %v5277 = vpack.c.b16 %v5185, %v5181
  %v5278 = vpack.c.b16 %v5186, %v5182
  %v5279 = vpack.c.b16 %v5191, %v5187
  %v5280 = vpack.c.b16 %v5192, %v5188
  %v5281 = vpack.c.b16 %v5193, %v5189
  %v5282 = vpack.c.b16 %v5194, %v5190
  %v5283 = vpack.c.b16 %v5199, %v5195
  %v5284 = vpack.c.b16 %v5200, %v5196
  %v5285 = vpack.c.b16 %v5201, %v5197
  %v5286 = vpack.c.b16 %v5202, %v5198
  %v5287 = vpack.c.b16 %v5207, %v5203
  %v5288 = vpack.c.b16 %v5208, %v5204
  %v5289 = vpack.c.b16 %v5209, %v5205
  %v5290 = vpack.c.b16 %v5210, %v5206
  %v5291 = vpack.c.b16 %v5215, %v5211
  %v5292 = vpack.c.b16 %v5216, %v5212
  %v5293 = vpack.c.b16 %v5217, %v5213
  %v5294 = vpack.c.b16 %v5218, %v5214
  %v5295 = vpack.c.b16 %v5223, %v5219
  %v5296 = vpack.c.b16 %v5224, %v5220
  %v5297 = vpack.c.b16 %v5225, %v5221
  %v5298 = vpack.c.b16 %v5226, %v5222
  %v5299 = vpack.c.b16 %v5231, %v5227
  %v5300 = vpack.c.b16 %v5232, %v5228
  %v5301 = vpack.c.b16 %v5233, %v5229
  %v5302 = vpack.c.b16 %v5234, %v5230
  %v5303 = vpack.c.b16 %v5239, %v5235
  %v5304 = vpack.c.b16 %v5240, %v5236
  %v5305 = vpack.c.b16 %v5241, %v5237
  %v5306 = vpack.c.b16 %v5242, %v5238
  %5371 = vmatprep.subr.bf16.mxu0 %v5244
  %5372 = vmatpush1.bf16.msra.mxu0 %v5243
  %5373 = vmatprep.subr.bf16.mxu0 %v5248
  %5374 = vmatpush1.bf16.msra.mxu0 %v5247
  %5375 = vmatprep.subr.bf16.mxu0 %v5252
  %5376 = vmatpush1.bf16.msra.mxu0 %v5251
  %5377 = vmatprep.subr.bf16.mxu0 %v5256
  %5378 = vmatpush1.bf16.msra.mxu0 %v5255
  %5379 = vmatprep.subr.bf16.mxu0 %v5260
  %5380 = vmatpush1.bf16.msra.mxu0 %v5259
  %5381 = vmatprep.subr.bf16.mxu0 %v5264
  %5382 = vmatpush1.bf16.msra.mxu0 %v5263
  %5383 = vmatprep.subr.bf16.mxu0 %v5268
  %5384 = vmatpush1.bf16.msra.mxu0 %v5267
  %5385 = vmatprep.subr.bf16.mxu0 %v5272
  %5386 = vmatpush1.bf16.msra.mxu0 %v5271
  %5387 = vmatprep.subr.bf16.mxu0 %v5276
  %5388 = vmatpush1.bf16.msra.mxu0 %v5275
  %5389 = vmatprep.subr.bf16.mxu0 %v5280
  %5390 = vmatpush1.bf16.msra.mxu0 %v5279
  %5391 = vmatprep.subr.bf16.mxu0 %v5284
  %5392 = vmatpush1.bf16.msra.mxu0 %v5283
  %5393 = vmatprep.subr.bf16.mxu0 %v5288
  %5394 = vmatpush1.bf16.msra.mxu0 %v5287
  %5395 = vmatprep.subr.bf16.mxu0 %v5292
  %5396 = vmatpush1.bf16.msra.mxu0 %v5291
  %5397 = vmatprep.subr.bf16.mxu0 %v5296
  %5398 = vmatpush1.bf16.msra.mxu0 %v5295
  %5399 = vmatprep.subr.bf16.mxu0 %v5300
  %5400 = vmatpush1.bf16.msra.mxu0 %v5299
  %5401 = vmatprep.subr.bf16.mxu0 %v5304
  %5402 = vmatpush1.bf16.msra.mxu0 %v5303
  %5403 = vmatprep.mubr.bf16.mxu0 %v3253
  %5404 = vmatmul.mubr.bf16.gmra.mrb[0].mxu0 %v3252
  %v5405 = vpop.f32.mrb[0].mxu0
  %v5406 = vadd.f32 %v5034, %v5405
  %v5407 = vpop.f32.mrb[0].mxu0
  %v5408 = vadd.f32 %v5038, %v5407
  %v5409 = vpop.f32.mrb[0].mxu0
  %v5410 = vadd.f32 %v5034, %v5409
  %v5411 = vpop.f32.mrb[0].mxu0
  %v5412 = vadd.f32 %v5038, %v5411
  %5413 = vmatprep.mubr.bf16.mxu0 %v3255
  %5414 = vmatmul.mubr.bf16.gmra.mrb[0].mxu0 %v3254
  %v5415 = vpop.f32.mrb[0].mxu0
  %v5416 = vadd.f32 %v5034, %v5415
  %v5417 = vpop.f32.mrb[0].mxu0
  %v5418 = vadd.f32 %v5038, %v5417
  %v5419 = vpop.f32.mrb[0].mxu0
  %v5420 = vadd.f32 %v5034, %v5419
  %v5421 = vpop.f32.mrb[0].mxu0
  %v5422 = vadd.f32 %v5038, %v5421
  %5423 = vmatprep.mubr.bf16.mxu0 %v3257
  %5424 = vmatmul.mubr.bf16.gmra.mrb[0].mxu0 %v3256
  %v5425 = vpop.f32.mrb[0].mxu0
  %v5426 = vadd.f32 %v5034, %v5425
  %v5427 = vpop.f32.mrb[0].mxu0
  %v5428 = vadd.f32 %v5038, %v5427
  %v5429 = vpop.f32.mrb[0].mxu0
  %v5430 = vadd.f32 %v5034, %v5429
  %v5431 = vpop.f32.mrb[0].mxu0
  %v5432 = vadd.f32 %v5038, %v5431
  %5433 = vmatprep.mubr.bf16.mxu0 %v3259
  %5434 = vmatmul.mubr.bf16.gmra.mrb[0].mxu0 %v3258
  %v5435 = vpop.f32.mrb[0].mxu0
  %v5436 = vadd.f32 %v5034, %v5435
  %v5437 = vpop.f32.mrb[0].mxu0
  %v5438 = vadd.f32 %v5038, %v5437
  %v5439 = vpop.f32.mrb[0].mxu0
  %v5440 = vadd.f32 %v5034, %v5439
  %v5441 = vpop.f32.mrb[0].mxu0
  %v5442 = vadd.f32 %v5038, %v5441
  %5443 = vdwg.mxu0
  %5444 = vmatprep.subr.bf16.mxu0 %v5246
  %5445 = vmatpush1.bf16.msra.mxu0 %v5245
  %5446 = vmatprep.subr.bf16.mxu0 %v5250
  %5447 = vmatpush1.bf16.msra.mxu0 %v5249
  %5448 = vmatprep.subr.bf16.mxu0 %v5254
  %5449 = vmatpush1.bf16.msra.mxu0 %v5253
  %5450 = vmatprep.subr.bf16.mxu0 %v5258
  %5451 = vmatpush1.bf16.msra.mxu0 %v5257
  %5452 = vmatprep.subr.bf16.mxu0 %v5262
  %5453 = vmatpush1.bf16.msra.mxu0 %v5261
  %5454 = vmatprep.subr.bf16.mxu0 %v5266
  %5455 = vmatpush1.bf16.msra.mxu0 %v5265
  %5456 = vmatprep.subr.bf16.mxu0 %v5270
  %5457 = vmatpush1.bf16.msra.mxu0 %v5269
  %5458 = vmatprep.subr.bf16.mxu0 %v5274
  %5459 = vmatpush1.bf16.msra.mxu0 %v5273
  %5460 = vmatprep.subr.bf16.mxu0 %v5278
  %5461 = vmatpush1.bf16.msra.mxu0 %v5277
  %5462 = vmatprep.subr.bf16.mxu0 %v5282
  %5463 = vmatpush1.bf16.msra.mxu0 %v5281
  %5464 = vmatprep.subr.bf16.mxu0 %v5286
  %5465 = vmatpush1.bf16.msra.mxu0 %v5285
  %5466 = vmatprep.subr.bf16.mxu0 %v5290
  %5467 = vmatpush1.bf16.msra.mxu0 %v5289
  %5468 = vmatprep.subr.bf16.mxu0 %v5294
  %5469 = vmatpush1.bf16.msra.mxu0 %v5293
  %5470 = vmatprep.subr.bf16.mxu0 %v5298
  %5471 = vmatpush1.bf16.msra.mxu0 %v5297
  %5472 = vmatprep.subr.bf16.mxu0 %v5302
  %5473 = vmatpush1.bf16.msra.mxu0 %v5301
  %5474 = vmatprep.subr.bf16.mxu0 %v5306
  %5475 = vmatpush1.bf16.msra.mxu0 %v5305
  %5476 = vmatprep.mubr.bf16.mxu0 %v3253
  %5477 = vmatmul.mubr.bf16.gmra.mrb[0].mxu0 %v3252
  %v5478 = vpop.f32.mrb[0].mxu0
  %v5479 = vadd.f32 %v5042, %v5478
  %v5480 = vpop.f32.mrb[0].mxu0
  %v5481 = vadd.f32 %v5046, %v5480
  %v5482 = vpop.f32.mrb[0].mxu0
  %v5483 = vadd.f32 %v5042, %v5482
  %v5484 = vpop.f32.mrb[0].mxu0
  %v5485 = vadd.f32 %v5046, %v5484
  %5486 = vmatprep.mubr.bf16.mxu0 %v3255
  %5487 = vmatmul.mubr.bf16.gmra.mrb[0].mxu0 %v3254
  %v5488 = vpop.f32.mrb[0].mxu0
  %v5489 = vadd.f32 %v5042, %v5488
  %v5490 = vpop.f32.mrb[0].mxu0
  %v5491 = vadd.f32 %v5046, %v5490
  %v5492 = vpop.f32.mrb[0].mxu0
  %v5493 = vadd.f32 %v5042, %v5492
  %v5494 = vpop.f32.mrb[0].mxu0
  %v5495 = vadd.f32 %v5046, %v5494
  %5496 = vmatprep.mubr.bf16.mxu0 %v3257
  %5497 = vmatmul.mubr.bf16.gmra.mrb[0].mxu0 %v3256
  %v5498 = vpop.f32.mrb[0].mxu0
  %v5499 = vadd.f32 %v5042, %v5498
  %v5500 = vpop.f32.mrb[0].mxu0
  %v5501 = vadd.f32 %v5046, %v5500
  %v5502 = vpop.f32.mrb[0].mxu0
  %v5503 = vadd.f32 %v5042, %v5502
  %v5504 = vpop.f32.mrb[0].mxu0
  %v5505 = vadd.f32 %v5046, %v5504
  %5506 = vmatprep.mubr.bf16.mxu0 %v3259
  %5507 = vmatmul.mubr.bf16.gmra.mrb[0].mxu0 %v3258
  %v5508 = vpop.f32.mrb[0].mxu0
  %v5509 = vadd.f32 %v5042, %v5508
  %v5510 = vpop.f32.mrb[0].mxu0
  %v5511 = vadd.f32 %v5046, %v5510
  %v5512 = vpop.f32.mrb[0].mxu0
  %v5513 = vadd.f32 %v5042, %v5512
  %v5514 = vpop.f32.mrb[0].mxu0
  %v5515 = vadd.f32 %v5046, %v5514
  %5516 = vdwg.mxu0
  %5517 = vst [vmem:[#allocation2] sm:$0xff] %v5406
  %5518 = vst [vmem:[#allocation2 + $0x8] sm:$0xff] %v5408
  %5519 = vst [vmem:[#allocation2 + $0x10] sm:$0xff] %v5479
  %5520 = vst [vmem:[#allocation2 + $0x18] sm:$0xff] %v5481
  %5521 = vst [vmem:[#allocation2 + $0x20] sm:$0xff] %v5410
  %5522 = vst [vmem:[#allocation2 + $0x28] sm:$0xff] %v5412
  %5523 = vst [vmem:[#allocation2 + $0x30] sm:$0xff] %v5483
  %5524 = vst [vmem:[#allocation2 + $0x38] sm:$0xff] %v5485
  %5525 = vst [vmem:[#allocation2 + $0x40] sm:$0xff] %v5416
  %5526 = vst [vmem:[#allocation2 + $0x48] sm:$0xff] %v5418
  %5527 = vst [vmem:[#allocation2 + $0x50] sm:$0xff] %v5489
  %5528 = vst [vmem:[#allocation2 + $0x58] sm:$0xff] %v5491
  %5529 = vst [vmem:[#allocation2 + $0x60] sm:$0xff] %v5420
  %5530 = vst [vmem:[#allocation2 + $0x68] sm:$0xff] %v5422
  %5531 = vst [vmem:[#allocation2 + $0x70] sm:$0xff] %v5493
  %5532 = vst [vmem:[#allocation2 + $0x78] sm:$0xff] %v5495
  %5533 = vst [vmem:[#allocation2 + $0x80] sm:$0xff] %v5426
  %5534 = vst [vmem:[#allocation2 + $0x88] sm:$0xff] %v5428
  %5535 = vst [vmem:[#allocation2 + $0x90] sm:$0xff] %v5499
  %5536 = vst [vmem:[#allocation2 + $0x98] sm:$0xff] %v5501
  %5537 = vst [vmem:[#allocation2 + $0xa0] sm:$0xff] %v5430
  %5538 = vst [vmem:[#allocation2 + $0xa8] sm:$0xff] %v5432
  %5539 = vst [vmem:[#allocation2 + $0xb0] sm:$0xff] %v5503
  %5540 = vst [vmem:[#allocation2 + $0xb8] sm:$0xff] %v5505
  %5541 = vst [vmem:[#allocation2 + $0xc0] sm:$0xff] %v5436
  %5542 = vst [vmem:[#allocation2 + $0xc8] sm:$0xff] %v5438
  %5543 = vst [vmem:[#allocation2 + $0xd0] sm:$0xff] %v5509
  %5544 = vst [vmem:[#allocation2 + $0xd8] sm:$0xff] %v5511
  %5545 = vst [vmem:[#allocation2 + $0xe0] sm:$0xff] %v5440
  %5546 = vst [vmem:[#allocation2 + $0xe8] sm:$0xff] %v5442
  %5547 = vst [vmem:[#allocation2 + $0xf0] sm:$0xff] %v5513
  %5548 = vst [vmem:[#allocation2 + $0xf8] sm:$0xff] %v5515
  %s5549 = scalar_lea.vmem %s6, 256
  %v5550 = vld [vmem:[%s5549] sm:$0xff]
  %v5551 = vld [vmem:[%s5549 + $0x8] sm:$0xff]
  %v5552 = vld [vmem:[%s5549 + $0x10] sm:$0xff]
  %v5553 = vld [vmem:[%s5549 + $0x18] sm:$0xff]
  %v5554 = vld [vmem:[%s5549 + $0x20] sm:$0xff]
  %v5555 = vld [vmem:[%s5549 + $0x28] sm:$0xff]
  %v5556 = vld [vmem:[%s5549 + $0x30] sm:$0xff]
  %v5557 = vld [vmem:[%s5549 + $0x38] sm:$0xff]
  %v5558 = vld [vmem:[%s5549 + $0x40] sm:$0xff]
  %v5559 = vld [vmem:[%s5549 + $0x48] sm:$0xff]
  %v5560 = vld [vmem:[%s5549 + $0x50] sm:$0xff]
  %v5561 = vld [vmem:[%s5549 + $0x58] sm:$0xff]
  %v5562 = vld [vmem:[%s5549 + $0x60] sm:$0xff]
  %v5563 = vld [vmem:[%s5549 + $0x68] sm:$0xff]
  %v5564 = vld [vmem:[%s5549 + $0x70] sm:$0xff]
  %v5565 = vld [vmem:[%s5549 + $0x78] sm:$0xff]
  %v5566 = vld [vmem:[%s5549 + $0x80] sm:$0xff]
  %v5567 = vld [vmem:[%s5549 + $0x88] sm:$0xff]
  %v5568 = vld [vmem:[%s5549 + $0x90] sm:$0xff]
  %v5569 = vld [vmem:[%s5549 + $0x98] sm:$0xff]
  %v5570 = vld [vmem:[%s5549 + $0xa0] sm:$0xff]
  %v5571 = vld [vmem:[%s5549 + $0xa8] sm:$0xff]
  %v5572 = vld [vmem:[%s5549 + $0xb0] sm:$0xff]
  %v5573 = vld [vmem:[%s5549 + $0xb8] sm:$0xff]
  %v5574 = vld [vmem:[%s5549 + $0xc0] sm:$0xff]
  %v5575 = vld [vmem:[%s5549 + $0xc8] sm:$0xff]
  %v5576 = vld [vmem:[%s5549 + $0xd0] sm:$0xff]
  %v5577 = vld [vmem:[%s5549 + $0xd8] sm:$0xff]
  %v5578 = vld [vmem:[%s5549 + $0xe0] sm:$0xff]
  %v5579 = vld [vmem:[%s5549 + $0xe8] sm:$0xff]
  %v5580 = vld [vmem:[%s5549 + $0xf0] sm:$0xff]
  %v5581 = vld [vmem:[%s5549 + $0xf8] sm:$0xff]
  %v5582 = vld [vmem:[#allocation2 + $0xe0] sm:$0xff]
  %v5583 = vld [vmem:[#allocation2 + $0xe8] sm:$0xff]
  %v5584 = vld [vmem:[#allocation2 + $0xf0] sm:$0xff]
  %v5585 = vld [vmem:[#allocation2 + $0xf8] sm:$0xff]
  %v5618 = vunpack.c.l.b16 %v5550
  %v5619 = vunpack.c.h.b16 %v5550
  %v5620 = vunpack.c.l.b16 %v5551
  %v5621 = vunpack.c.h.b16 %v5551
  %v5622 = vunpack.c.l.b16 %v5552
  %v5623 = vunpack.c.h.b16 %v5552
  %v5624 = vunpack.c.l.b16 %v5553
  %v5625 = vunpack.c.h.b16 %v5553
  %v5626 = vunpack.c.l.b16 %v5554
  %v5627 = vunpack.c.h.b16 %v5554
  %v5628 = vunpack.c.l.b16 %v5555
  %v5629 = vunpack.c.h.b16 %v5555
  %v5630 = vunpack.c.l.b16 %v5556
  %v5631 = vunpack.c.h.b16 %v5556
  %v5632 = vunpack.c.l.b16 %v5557
  %v5633 = vunpack.c.h.b16 %v5557
  %v5634 = vunpack.c.l.b16 %v5558
  %v5635 = vunpack.c.h.b16 %v5558
  %v5636 = vunpack.c.l.b16 %v5559
  %v5637 = vunpack.c.h.b16 %v5559
  %v5638 = vunpack.c.l.b16 %v5560
  %v5639 = vunpack.c.h.b16 %v5560
  %v5640 = vunpack.c.l.b16 %v5561
  %v5641 = vunpack.c.h.b16 %v5561
  %v5642 = vunpack.c.l.b16 %v5562
  %v5643 = vunpack.c.h.b16 %v5562
  %v5644 = vunpack.c.l.b16 %v5563
  %v5645 = vunpack.c.h.b16 %v5563
  %v5646 = vunpack.c.l.b16 %v5564
  %v5647 = vunpack.c.h.b16 %v5564
  %v5648 = vunpack.c.l.b16 %v5565
  %v5649 = vunpack.c.h.b16 %v5565
  %v5650 = vunpack.c.l.b16 %v5566
  %v5651 = vunpack.c.h.b16 %v5566
  %v5652 = vunpack.c.l.b16 %v5567
  %v5653 = vunpack.c.h.b16 %v5567
  %v5654 = vunpack.c.l.b16 %v5568
  %v5655 = vunpack.c.h.b16 %v5568
  %v5656 = vunpack.c.l.b16 %v5569
  %v5657 = vunpack.c.h.b16 %v5569
  %v5658 = vunpack.c.l.b16 %v5570
  %v5659 = vunpack.c.h.b16 %v5570
  %v5660 = vunpack.c.l.b16 %v5571
  %v5661 = vunpack.c.h.b16 %v5571
  %v5662 = vunpack.c.l.b16 %v5572
  %v5663 = vunpack.c.h.b16 %v5572
  %v5664 = vunpack.c.l.b16 %v5573
  %v5665 = vunpack.c.h.b16 %v5573
  %v5666 = vunpack.c.l.b16 %v5574
  %v5667 = vunpack.c.h.b16 %v5574
  %v5668 = vunpack.c.l.b16 %v5575
  %v5669 = vunpack.c.h.b16 %v5575
  %v5670 = vunpack.c.l.b16 %v5576
  %v5671 = vunpack.c.h.b16 %v5576
  %v5672 = vunpack.c.l.b16 %v5577
  %v5673 = vunpack.c.h.b16 %v5577
  %v5674 = vunpack.c.l.b16 %v5578
  %v5675 = vunpack.c.h.b16 %v5578
  %v5676 = vunpack.c.l.b16 %v5579
  %v5677 = vunpack.c.h.b16 %v5579
  %v5678 = vunpack.c.l.b16 %v5580
  %v5679 = vunpack.c.h.b16 %v5580
  %v5680 = vunpack.c.l.b16 %v5581
  %v5681 = vunpack.c.h.b16 %v5581
  %v5682 = vpack.c.b16 %v5622, %v5618
  %v5683 = vpack.c.b16 %v5623, %v5619
  %v5684 = vpack.c.b16 %v5624, %v5620
  %v5685 = vpack.c.b16 %v5625, %v5621
  %v5686 = vpack.c.b16 %v5630, %v5626
  %v5687 = vpack.c.b16 %v5631, %v5627
  %v5688 = vpack.c.b16 %v5632, %v5628
  %v5689 = vpack.c.b16 %v5633, %v5629
  %v5690 = vpack.c.b16 %v5638, %v5634
  %v5691 = vpack.c.b16 %v5639, %v5635
  %v5692 = vpack.c.b16 %v5640, %v5636
  %v5693 = vpack.c.b16 %v5641, %v5637
  %v5694 = vpack.c.b16 %v5646, %v5642
  %v5695 = vpack.c.b16 %v5647, %v5643
  %v5696 = vpack.c.b16 %v5648, %v5644
  %v5697 = vpack.c.b16 %v5649, %v5645
  %v5698 = vpack.c.b16 %v5654, %v5650
  %v5699 = vpack.c.b16 %v5655, %v5651
  %v5700 = vpack.c.b16 %v5656, %v5652
  %v5701 = vpack.c.b16 %v5657, %v5653
  %v5702 = vpack.c.b16 %v5662, %v5658
  %v5703 = vpack.c.b16 %v5663, %v5659
  %v5704 = vpack.c.b16 %v5664, %v5660
  %v5705 = vpack.c.b16 %v5665, %v5661
  %v5706 = vpack.c.b16 %v5670, %v5666
  %v5707 = vpack.c.b16 %v5671, %v5667
  %v5708 = vpack.c.b16 %v5672, %v5668
  %v5709 = vpack.c.b16 %v5673, %v5669
  %v5710 = vpack.c.b16 %v5678, %v5674
  %v5711 = vpack.c.b16 %v5679, %v5675
  %v5712 = vpack.c.b16 %v5680, %v5676
  %v5713 = vpack.c.b16 %v5681, %v5677
  %5746 = vmatprep.subr.bf16.mxu0 %v5683
  %5747 = vmatpush1.bf16.msra.mxu0 %v5682
  %5748 = vmatprep.subr.bf16.mxu0 %v5687
  %5749 = vmatpush1.bf16.msra.mxu0 %v5686
  %5750 = vmatprep.subr.bf16.mxu0 %v5691
  %5751 = vmatpush1.bf16.msra.mxu0 %v5690
  %5752 = vmatprep.subr.bf16.mxu0 %v5695
  %5753 = vmatpush1.bf16.msra.mxu0 %v5694
  %5754 = vmatprep.subr.bf16.mxu0 %v5699
  %5755 = vmatpush1.bf16.msra.mxu0 %v5698
  %5756 = vmatprep.subr.bf16.mxu0 %v5703
  %5757 = vmatpush1.bf16.msra.mxu0 %v5702
  %5758 = vmatprep.subr.bf16.mxu0 %v5707
  %5759 = vmatpush1.bf16.msra.mxu0 %v5706
  %5760 = vmatprep.subr.bf16.mxu0 %v5711
  %5761 = vmatpush1.bf16.msra.mxu0 %v5710
  %5762 = vmatprep.subr.bf16.mxu0 0
  %5763 = vmatpush1.bf16.msra.mxu0 0
  %5764 = vmatprep.subr.bf16.mxu0 0
  %5765 = vmatpush1.bf16.msra.mxu0 0
  %5766 = vmatprep.subr.bf16.mxu0 0
  %5767 = vmatpush1.bf16.msra.mxu0 0
  %5768 = vmatprep.subr.bf16.mxu0 0
  %5769 = vmatpush1.bf16.msra.mxu0 0
  %5770 = vmatprep.subr.bf16.mxu0 0
  %5771 = vmatpush1.bf16.msra.mxu0 0
  %5772 = vmatprep.subr.bf16.mxu0 0
  %5773 = vmatpush1.bf16.msra.mxu0 0
  %5774 = vmatprep.subr.bf16.mxu0 0
  %5775 = vmatpush1.bf16.msra.mxu0 0
  %5776 = vmatprep.subr.bf16.mxu0 0
  %5777 = vmatpush1.bf16.msra.mxu0 0
  %5778 = vmatprep.mubr.bf16.mxu0 0
  %5779 = vmatmul.mubr.bf16.gmra.mrb[0].mxu0 0
  %v5780 = vpop.f32.mrb[0].mxu0
  %v5781 = vadd.f32 0.0, %v5780
  %v5782 = vpop.f32.mrb[0].mxu0
  %v5783 = vadd.f32 0.0, %v5782
  %v5784 = vpop.f32.mrb[0].mxu0
  %v5785 = vpop.f32.mrb[0].mxu0
  %5786 = vdwg.mxu0
  %5787 = vmatprep.subr.bf16.mxu0 %v5685
  %5788 = vmatpush1.bf16.msra.mxu0 %v5684
  %5789 = vmatprep.subr.bf16.mxu0 %v5689
  %5790 = vmatpush1.bf16.msra.mxu0 %v5688
  %5791 = vmatprep.subr.bf16.mxu0 %v5693
  %5792 = vmatpush1.bf16.msra.mxu0 %v5692
  %5793 = vmatprep.subr.bf16.mxu0 %v5697
  %5794 = vmatpush1.bf16.msra.mxu0 %v5696
  %5795 = vmatprep.subr.bf16.mxu0 %v5701
  %5796 = vmatpush1.bf16.msra.mxu0 %v5700
  %5797 = vmatprep.subr.bf16.mxu0 %v5705
  %5798 = vmatpush1.bf16.msra.mxu0 %v5704
  %5799 = vmatprep.subr.bf16.mxu0 %v5709
  %5800 = vmatpush1.bf16.msra.mxu0 %v5708
  %5801 = vmatprep.subr.bf16.mxu0 %v5713
  %5802 = vmatpush1.bf16.msra.mxu0 %v5712
  %5803 = vmatprep.subr.bf16.mxu0 0
  %5804 = vmatpush1.bf16.msra.mxu0 0
  %5805 = vmatprep.subr.bf16.mxu0 0
  %5806 = vmatpush1.bf16.msra.mxu0 0
  %5807 = vmatprep.subr.bf16.mxu0 0
  %5808 = vmatpush1.bf16.msra.mxu0 0
  %5809 = vmatprep.subr.bf16.mxu0 0
  %5810 = vmatpush1.bf16.msra.mxu0 0
  %5811 = vmatprep.subr.bf16.mxu0 0
  %5812 = vmatpush1.bf16.msra.mxu0 0
  %5813 = vmatprep.subr.bf16.mxu0 0
  %5814 = vmatpush1.bf16.msra.mxu0 0
  %5815 = vmatprep.subr.bf16.mxu0 0
  %5816 = vmatpush1.bf16.msra.mxu0 0
  %5817 = vmatprep.subr.bf16.mxu0 0
  %5818 = vmatpush1.bf16.msra.mxu0 0
  %5819 = vmatprep.mubr.bf16.mxu0 0
  %5820 = vmatmul.mubr.bf16.gmra.mrb[0].mxu0 0
  %v5821 = vpop.f32.mrb[0].mxu0
  %v5822 = vadd.f32 0.0, %v5821
  %v5823 = vpop.f32.mrb[0].mxu0
  %v5824 = vadd.f32 0.0, %v5823
  %v5825 = vpop.f32.mrb[0].mxu0
  %v5826 = vpop.f32.mrb[0].mxu0
  %5827 = vdwg.mxu0
  %v5828 = vadd.f32 %v5582, %v5781
  %v5829 = vadd.f32 %v5583, %v5783
  %v5830 = vadd.f32 %v5584, %v5822
  %v5831 = vadd.f32 %v5585, %v5824
  %v5832 = vxor.u32 %v5828, 2147483648
  %v5833 = vmul.f32 %v5832, 1.442695
  %v5834 = vpow.pop %v5833
  %v5835 = vadd.f32 %v5834, 1.0
  %v5836 = vrcp.pop %v5835
  %v5837 = vmul.f32 1.0, %v5836
  %v5838 = vxor.u32 %v5829, 2147483648
  %v5839 = vmul.f32 %v5838, 1.442695
  %v5840 = vpow.pop %v5839
  %v5841 = vadd.f32 %v5840, 1.0
  %v5842 = vrcp.pop %v5841
  %v5843 = vmul.f32 1.0, %v5842
  %v5844 = vtanh.pop %v5830
  %v5845 = vxor.u32 %v5831, 2147483648
  %v5846 = vmul.f32 %v5845, 1.442695
  %v5847 = vpow.pop %v5846
  %v5848 = vadd.f32 %v5847, 1.0
  %v5849 = vrcp.pop %v5848
  %v5850 = vmul.f32 1.0, %v5849
  %v5851 = vmul.f32 %v5843, 0.0
  %v5852 = vmul.f32 %v5837, %v5844
  %v5853 = vadd.f32 %v5851, %v5852
  %v5854 = vtanh.pop %v5853
  %v5855 = vmul.f32 %v5850, %v5854
  %5856 = vst [vmem:[#allocation4 + $0x78] sm:$0xff] %v5855
  %v5857 = vld [vmem:[#allocation2 + $0xc0] sm:$0xff]
  %v5858 = vld [vmem:[#allocation2 + $0xc8] sm:$0xff]
  %v5859 = vld [vmem:[#allocation2 + $0xd0] sm:$0xff]
  %v5860 = vld [vmem:[#allocation2 + $0xd8] sm:$0xff]
  %v5861 = vpack.c.bf16 %v5855, %v5855
  %5862 = vmatprep.subr.bf16.mxu0 %v5683
  %5863 = vmatpush1.bf16.msra.mxu0 %v5682
  %5864 = vmatprep.subr.bf16.mxu0 %v5687
  %5865 = vmatpush1.bf16.msra.mxu0 %v5686
  %5866 = vmatprep.subr.bf16.mxu0 %v5691
  %5867 = vmatpush1.bf16.msra.mxu0 %v5690
  %5868 = vmatprep.subr.bf16.mxu0 %v5695
  %5869 = vmatpush1.bf16.msra.mxu0 %v5694
  %5870 = vmatprep.subr.bf16.mxu0 %v5699
  %5871 = vmatpush1.bf16.msra.mxu0 %v5698
  %5872 = vmatprep.subr.bf16.mxu0 %v5703
  %5873 = vmatpush1.bf16.msra.mxu0 %v5702
  %5874 = vmatprep.subr.bf16.mxu0 %v5707
  %5875 = vmatpush1.bf16.msra.mxu0 %v5706
  %5876 = vmatprep.subr.bf16.mxu0 %v5711
  %5877 = vmatpush1.bf16.msra.mxu0 %v5710
  %5878 = vmatprep.subr.bf16.mxu0 0
  %5879 = vmatpush1.bf16.msra.mxu0 0
  %5880 = vmatprep.subr.bf16.mxu0 0
  %5881 = vmatpush1.bf16.msra.mxu0 0
  %5882 = vmatprep.subr.bf16.mxu0 0
  %5883 = vmatpush1.bf16.msra.mxu0 0
  %5884 = vmatprep.subr.bf16.mxu0 0
  %5885 = vmatpush1.bf16.msra.mxu0 0
  %5886 = vmatprep.subr.bf16.mxu0 0
  %5887 = vmatpush1.bf16.msra.mxu0 0
  %5888 = vmatprep.subr.bf16.mxu0 0
  %5889 = vmatpush1.bf16.msra.mxu0 0
  %5890 = vmatprep.subr.bf16.mxu0 0
  %5891 = vmatpush1.bf16.msra.mxu0 0
  %5892 = vmatprep.subr.bf16.mxu0 0
  %5893 = vmatpush1.bf16.msra.mxu0 0
  %5894 = vmatprep.mubr.bf16.mxu0 0
  %5895 = vmatmul.mubr.bf16.gmra.mrb[0].mxu0 %v5861
  %v5896 = vpop.f32.mrb[0].mxu0
  %v5897 = vadd.f32 0.0, %v5896
  %v5898 = vpop.f32.mrb[0].mxu0
  %v5899 = vadd.f32 0.0, %v5898
  %v5900 = vpop.f32.mrb[0].mxu0
  %v5901 = vpop.f32.mrb[0].mxu0
  %5902 = vdwg.mxu0
  %5903 = vmatprep.subr.bf16.mxu0 %v5685
  %5904 = vmatpush1.bf16.msra.mxu0 %v5684
  %5905 = vmatprep.subr.bf16.mxu0 %v5689
  %5906 = vmatpush1.bf16.msra.mxu0 %v5688
  %5907 = vmatprep.subr.bf16.mxu0 %v5693
  %5908 = vmatpush1.bf16.msra.mxu0 %v5692
  %5909 = vmatprep.subr.bf16.mxu0 %v5697
  %5910 = vmatpush1.bf16.msra.mxu0 %v5696
  %5911 = vmatprep.subr.bf16.mxu0 %v5701
  %5912 = vmatpush1.bf16.msra.mxu0 %v5700
  %5913 = vmatprep.subr.bf16.mxu0 %v5705
  %5914 = vmatpush1.bf16.msra.mxu0 %v5704
  %5915 = vmatprep.subr.bf16.mxu0 %v5709
  %5916 = vmatpush1.bf16.msra.mxu0 %v5708
  %5917 = vmatprep.subr.bf16.mxu0 %v5713
  %5918 = vmatpush1.bf16.msra.mxu0 %v5712
  %5919 = vmatprep.subr.bf16.mxu0 0
  %5920 = vmatpush1.bf16.msra.mxu0 0
  %5921 = vmatprep.subr.bf16.mxu0 0
  %5922 = vmatpush1.bf16.msra.mxu0 0
  %5923 = vmatprep.subr.bf16.mxu0 0
  %5924 = vmatpush1.bf16.msra.mxu0 0
  %5925 = vmatprep.subr.bf16.mxu0 0
  %5926 = vmatpush1.bf16.msra.mxu0 0
  %5927 = vmatprep.subr.bf16.mxu0 0
  %5928 = vmatpush1.bf16.msra.mxu0 0
  %5929 = vmatprep.subr.bf16.mxu0 0
  %5930 = vmatpush1.bf16.msra.mxu0 0
  %5931 = vmatprep.subr.bf16.mxu0 0
  %5932 = vmatpush1.bf16.msra.mxu0 0
  %5933 = vmatprep.subr.bf16.mxu0 0
  %5934 = vmatpush1.bf16.msra.mxu0 0
  %5935 = vmatprep.mubr.bf16.mxu0 0
  %5936 = vmatmul.mubr.bf16.gmra.mrb[0].mxu0 %v5861
  %v5937 = vpop.f32.mrb[0].mxu0
  %v5938 = vadd.f32 0.0, %v5937
  %v5939 = vpop.f32.mrb[0].mxu0
  %v5940 = vadd.f32 0.0, %v5939
  %v5941 = vpop.f32.mrb[0].mxu0
  %v5942 = vpop.f32.mrb[0].mxu0
  %5943 = vdwg.mxu0
  %v5944 = vadd.f32 %v5857, %v5897
  %v5945 = vadd.f32 %v5858, %v5899
  %v5946 = vadd.f32 %v5859, %v5938
  %v5947 = vadd.f32 %v5860, %v5940
  %v5948 = vxor.u32 %v5944, 2147483648
  %v5949 = vmul.f32 %v5948, 1.442695
  %v5950 = vpow.pop %v5949
  %v5951 = vadd.f32 %v5950, 1.0
  %v5952 = vrcp.pop %v5951
  %v5953 = vmul.f32 1.0, %v5952
  %v5954 = vxor.u32 %v5945, 2147483648
  %v5955 = vmul.f32 %v5954, 1.442695
  %v5956 = vpow.pop %v5955
  %v5957 = vadd.f32 %v5956, 1.0
  %v5958 = vrcp.pop %v5957
  %v5959 = vmul.f32 1.0, %v5958
  %v5960 = vtanh.pop %v5946
  %v5961 = vxor.u32 %v5947, 2147483648
  %v5962 = vmul.f32 %v5961, 1.442695
  %v5963 = vpow.pop %v5962
  %v5964 = vadd.f32 %v5963, 1.0
  %v5965 = vrcp.pop %v5964
  %v5966 = vmul.f32 1.0, %v5965
  %v5967 = vmul.f32 %v5959, %v5853
  %v5968 = vmul.f32 %v5953, %v5960
  %v5969 = vadd.f32 %v5967, %v5968
  %v5970 = vtanh.pop %v5969
  %v5971 = vmul.f32 %v5966, %v5970
  %5972 = vst [vmem:[#allocation4 + $0x68] sm:$0xff] %v5971
  %v5973 = vld [vmem:[#allocation2 + $0xa0] sm:$0xff]
  %v5974 = vld [vmem:[#allocation2 + $0xa8] sm:$0xff]
  %v5975 = vld [vmem:[#allocation2 + $0xb0] sm:$0xff]
  %v5976 = vld [vmem:[#allocation2 + $0xb8] sm:$0xff]
  %v5977 = vpack.c.bf16 %v5971, %v5971
  %5978 = vmatprep.subr.bf16.mxu0 %v5683
  %5979 = vmatpush1.bf16.msra.mxu0 %v5682
  %5980 = vmatprep.subr.bf16.mxu0 %v5687
  %5981 = vmatpush1.bf16.msra.mxu0 %v5686
  %5982 = vmatprep.subr.bf16.mxu0 %v5691
  %5983 = vmatpush1.bf16.msra.mxu0 %v5690
  %5984 = vmatprep.subr.bf16.mxu0 %v5695
  %5985 = vmatpush1.bf16.msra.mxu0 %v5694
  %5986 = vmatprep.subr.bf16.mxu0 %v5699
  %5987 = vmatpush1.bf16.msra.mxu0 %v5698
  %5988 = vmatprep.subr.bf16.mxu0 %v5703
  %5989 = vmatpush1.bf16.msra.mxu0 %v5702
  %5990 = vmatprep.subr.bf16.mxu0 %v5707
  %5991 = vmatpush1.bf16.msra.mxu0 %v5706
  %5992 = vmatprep.subr.bf16.mxu0 %v5711
  %5993 = vmatpush1.bf16.msra.mxu0 %v5710
  %5994 = vmatprep.subr.bf16.mxu0 0
  %5995 = vmatpush1.bf16.msra.mxu0 0
  %5996 = vmatprep.subr.bf16.mxu0 0
  %5997 = vmatpush1.bf16.msra.mxu0 0
  %5998 = vmatprep.subr.bf16.mxu0 0
  %5999 = vmatpush1.bf16.msra.mxu0 0
  %6000 = vmatprep.subr.bf16.mxu0 0
  %6001 = vmatpush1.bf16.msra.mxu0 0
  %6002 = vmatprep.subr.bf16.mxu0 0
  %6003 = vmatpush1.bf16.msra.mxu0 0
  %6004 = vmatprep.subr.bf16.mxu0 0
  %6005 = vmatpush1.bf16.msra.mxu0 0
  %6006 = vmatprep.subr.bf16.mxu0 0
  %6007 = vmatpush1.bf16.msra.mxu0 0
  %6008 = vmatprep.subr.bf16.mxu0 0
  %6009 = vmatpush1.bf16.msra.mxu0 0
  %6010 = vmatprep.mubr.bf16.mxu0 0
  %6011 = vmatmul.mubr.bf16.gmra.mrb[0].mxu0 %v5977
  %v6012 = vpop.f32.mrb[0].mxu0
  %v6013 = vadd.f32 0.0, %v6012
  %v6014 = vpop.f32.mrb[0].mxu0
  %v6015 = vadd.f32 0.0, %v6014
  %v6016 = vpop.f32.mrb[0].mxu0
  %v6017 = vpop.f32.mrb[0].mxu0
  %6018 = vdwg.mxu0
  %6019 = vmatprep.subr.bf16.mxu0 %v5685
  %6020 = vmatpush1.bf16.msra.mxu0 %v5684
  %6021 = vmatprep.subr.bf16.mxu0 %v5689
  %6022 = vmatpush1.bf16.msra.mxu0 %v5688
  %6023 = vmatprep.subr.bf16.mxu0 %v5693
  %6024 = vmatpush1.bf16.msra.mxu0 %v5692
  %6025 = vmatprep.subr.bf16.mxu0 %v5697
  %6026 = vmatpush1.bf16.msra.mxu0 %v5696
  %6027 = vmatprep.subr.bf16.mxu0 %v5701
  %6028 = vmatpush1.bf16.msra.mxu0 %v5700
  %6029 = vmatprep.subr.bf16.mxu0 %v5705
  %6030 = vmatpush1.bf16.msra.mxu0 %v5704
  %6031 = vmatprep.subr.bf16.mxu0 %v5709
  %6032 = vmatpush1.bf16.msra.mxu0 %v5708
  %6033 = vmatprep.subr.bf16.mxu0 %v5713
  %6034 = vmatpush1.bf16.msra.mxu0 %v5712
  %6035 = vmatprep.subr.bf16.mxu0 0
  %6036 = vmatpush1.bf16.msra.mxu0 0
  %6037 = vmatprep.subr.bf16.mxu0 0
  %6038 = vmatpush1.bf16.msra.mxu0 0
  %6039 = vmatprep.subr.bf16.mxu0 0
  %6040 = vmatpush1.bf16.msra.mxu0 0
  %6041 = vmatprep.subr.bf16.mxu0 0
  %6042 = vmatpush1.bf16.msra.mxu0 0
  %6043 = vmatprep.subr.bf16.mxu0 0
  %6044 = vmatpush1.bf16.msra.mxu0 0
  %6045 = vmatprep.subr.bf16.mxu0 0
  %6046 = vmatpush1.bf16.msra.mxu0 0
  %6047 = vmatprep.subr.bf16.mxu0 0
  %6048 = vmatpush1.bf16.msra.mxu0 0
  %6049 = vmatprep.subr.bf16.mxu0 0
  %6050 = vmatpush1.bf16.msra.mxu0 0
  %6051 = vmatprep.mubr.bf16.mxu0 0
  %6052 = vmatmul.mubr.bf16.gmra.mrb[0].mxu0 %v5977
  %v6053 = vpop.f32.mrb[0].mxu0
  %v6054 = vadd.f32 0.0, %v6053
  %v6055 = vpop.f32.mrb[0].mxu0
  %v6056 = vadd.f32 0.0, %v6055
  %v6057 = vpop.f32.mrb[0].mxu0
  %v6058 = vpop.f32.mrb[0].mxu0
  %6059 = vdwg.mxu0
  %v6060 = vadd.f32 %v5973, %v6013
  %v6061 = vadd.f32 %v5974, %v6015
  %v6062 = vadd.f32 %v5975, %v6054
  %v6063 = vadd.f32 %v5976, %v6056
  %v6064 = vxor.u32 %v6060, 2147483648
  %v6065 = vmul.f32 %v6064, 1.442695
  %v6066 = vpow.pop %v6065
  %v6067 = vadd.f32 %v6066, 1.0
  %v6068 = vrcp.pop %v6067
  %v6069 = vmul.f32 1.0, %v6068
  %v6070 = vxor.u32 %v6061, 2147483648
  %v6071 = vmul.f32 %v6070, 1.442695
  %v6072 = vpow.pop %v6071
  %v6073 = vadd.f32 %v6072, 1.0
  %v6074 = vrcp.pop %v6073
  %v6075 = vmul.f32 1.0, %v6074
  %v6076 = vtanh.pop %v6062
  %v6077 = vxor.u32 %v6063, 2147483648
  %v6078 = vmul.f32 %v6077, 1.442695
  %v6079 = vpow.pop %v6078
  %v6080 = vadd.f32 %v6079, 1.0
  %v6081 = vrcp.pop %v6080
  %v6082 = vmul.f32 1.0, %v6081
  %v6083 = vmul.f32 %v6075, %v5969
  %v6084 = vmul.f32 %v6069, %v6076
  %v6085 = vadd.f32 %v6083, %v6084
  %v6086 = vtanh.pop %v6085
  %v6087 = vmul.f32 %v6082, %v6086
  %6088 = vst [vmem:[#allocation4 + $0x58] sm:$0xff] %v6087
  %v6089 = vld [vmem:[#allocation2 + $0x80] sm:$0xff]
  %v6090 = vld [vmem:[#allocation2 + $0x88] sm:$0xff]
  %v6091 = vld [vmem:[#allocation2 + $0x90] sm:$0xff]
  %v6092 = vld [vmem:[#allocation2 + $0x98] sm:$0xff]
  %v6093 = vpack.c.bf16 %v6087, %v6087
  %6094 = vmatprep.subr.bf16.mxu0 %v5683
  %6095 = vmatpush1.bf16.msra.mxu0 %v5682
  %6096 = vmatprep.subr.bf16.mxu0 %v5687
  %6097 = vmatpush1.bf16.msra.mxu0 %v5686
  %6098 = vmatprep.subr.bf16.mxu0 %v5691
  %6099 = vmatpush1.bf16.msra.mxu0 %v5690
  %6100 = vmatprep.subr.bf16.mxu0 %v5695
  %6101 = vmatpush1.bf16.msra.mxu0 %v5694
  %6102 = vmatprep.subr.bf16.mxu0 %v5699
  %6103 = vmatpush1.bf16.msra.mxu0 %v5698
  %6104 = vmatprep.subr.bf16.mxu0 %v5703
  %6105 = vmatpush1.bf16.msra.mxu0 %v5702
  %6106 = vmatprep.subr.bf16.mxu0 %v5707
  %6107 = vmatpush1.bf16.msra.mxu0 %v5706
  %6108 = vmatprep.subr.bf16.mxu0 %v5711
  %6109 = vmatpush1.bf16.msra.mxu0 %v5710
  %6110 = vmatprep.subr.bf16.mxu0 0
  %6111 = vmatpush1.bf16.msra.mxu0 0
  %6112 = vmatprep.subr.bf16.mxu0 0
  %6113 = vmatpush1.bf16.msra.mxu0 0
  %6114 = vmatprep.subr.bf16.mxu0 0
  %6115 = vmatpush1.bf16.msra.mxu0 0
  %6116 = vmatprep.subr.bf16.mxu0 0
  %6117 = vmatpush1.bf16.msra.mxu0 0
  %6118 = vmatprep.subr.bf16.mxu0 0
  %6119 = vmatpush1.bf16.msra.mxu0 0
  %6120 = vmatprep.subr.bf16.mxu0 0
  %6121 = vmatpush1.bf16.msra.mxu0 0
  %6122 = vmatprep.subr.bf16.mxu0 0
  %6123 = vmatpush1.bf16.msra.mxu0 0
  %6124 = vmatprep.subr.bf16.mxu0 0
  %6125 = vmatpush1.bf16.msra.mxu0 0
  %6126 = vmatprep.mubr.bf16.mxu0 0
  %6127 = vmatmul.mubr.bf16.gmra.mrb[0].mxu0 %v6093
  %v6128 = vpop.f32.mrb[0].mxu0
  %v6129 = vadd.f32 0.0, %v6128
  %v6130 = vpop.f32.mrb[0].mxu0
  %v6131 = vadd.f32 0.0, %v6130
  %v6132 = vpop.f32.mrb[0].mxu0
  %v6133 = vpop.f32.mrb[0].mxu0
  %6134 = vdwg.mxu0
  %6135 = vmatprep.subr.bf16.mxu0 %v5685
  %6136 = vmatpush1.bf16.msra.mxu0 %v5684
  %6137 = vmatprep.subr.bf16.mxu0 %v5689
  %6138 = vmatpush1.bf16.msra.mxu0 %v5688
  %6139 = vmatprep.subr.bf16.mxu0 %v5693
  %6140 = vmatpush1.bf16.msra.mxu0 %v5692
  %6141 = vmatprep.subr.bf16.mxu0 %v5697
  %6142 = vmatpush1.bf16.msra.mxu0 %v5696
  %6143 = vmatprep.subr.bf16.mxu0 %v5701
  %6144 = vmatpush1.bf16.msra.mxu0 %v5700
  %6145 = vmatprep.subr.bf16.mxu0 %v5705
  %6146 = vmatpush1.bf16.msra.mxu0 %v5704
  %6147 = vmatprep.subr.bf16.mxu0 %v5709
  %6148 = vmatpush1.bf16.msra.mxu0 %v5708
  %6149 = vmatprep.subr.bf16.mxu0 %v5713
  %6150 = vmatpush1.bf16.msra.mxu0 %v5712
  %6151 = vmatprep.subr.bf16.mxu0 0
  %6152 = vmatpush1.bf16.msra.mxu0 0
  %6153 = vmatprep.subr.bf16.mxu0 0
  %6154 = vmatpush1.bf16.msra.mxu0 0
  %6155 = vmatprep.subr.bf16.mxu0 0
  %6156 = vmatpush1.bf16.msra.mxu0 0
  %6157 = vmatprep.subr.bf16.mxu0 0
  %6158 = vmatpush1.bf16.msra.mxu0 0
  %6159 = vmatprep.subr.bf16.mxu0 0
  %6160 = vmatpush1.bf16.msra.mxu0 0
  %6161 = vmatprep.subr.bf16.mxu0 0
  %6162 = vmatpush1.bf16.msra.mxu0 0
  %6163 = vmatprep.subr.bf16.mxu0 0
  %6164 = vmatpush1.bf16.msra.mxu0 0
  %6165 = vmatprep.subr.bf16.mxu0 0
  %6166 = vmatpush1.bf16.msra.mxu0 0
  %6167 = vmatprep.mubr.bf16.mxu0 0
  %6168 = vmatmul.mubr.bf16.gmra.mrb[0].mxu0 %v6093
  %v6169 = vpop.f32.mrb[0].mxu0
  %v6170 = vadd.f32 0.0, %v6169
  %v6171 = vpop.f32.mrb[0].mxu0
  %v6172 = vadd.f32 0.0, %v6171
  %v6173 = vpop.f32.mrb[0].mxu0
  %v6174 = vpop.f32.mrb[0].mxu0
  %6175 = vdwg.mxu0
  %v6176 = vadd.f32 %v6089, %v6129
  %v6177 = vadd.f32 %v6090, %v6131
  %v6178 = vadd.f32 %v6091, %v6170
  %v6179 = vadd.f32 %v6092, %v6172
  %v6180 = vxor.u32 %v6176, 2147483648
  %v6181 = vmul.f32 %v6180, 1.442695
  %v6182 = vpow.pop %v6181
  %v6183 = vadd.f32 %v6182, 1.0
  %v6184 = vrcp.pop %v6183
  %v6185 = vmul.f32 1.0, %v6184
  %v6186 = vxor.u32 %v6177, 2147483648
  %v6187 = vmul.f32 %v6186, 1.442695
  %v6188 = vpow.pop %v6187
  %v6189 = vadd.f32 %v6188, 1.0
  %v6190 = vrcp.pop %v6189
  %v6191 = vmul.f32 1.0, %v6190
  %v6192 = vtanh.pop %v6178
  %v6193 = vxor.u32 %v6179, 2147483648
  %v6194 = vmul.f32 %v6193, 1.442695
  %v6195 = vpow.pop %v6194
  %v6196 = vadd.f32 %v6195, 1.0
  %v6197 = vrcp.pop %v6196
  %v6198 = vmul.f32 1.0, %v6197
  %v6199 = vmul.f32 %v6191, %v6085
  %v6200 = vmul.f32 %v6185, %v6192
  %v6201 = vadd.f32 %v6199, %v6200
  %v6202 = vtanh.pop %v6201
  %v6203 = vmul.f32 %v6198, %v6202
  %6204 = vst [vmem:[#allocation4 + $0x48] sm:$0xff] %v6203
  %v6205 = vld [vmem:[#allocation2 + $0x60] sm:$0xff]
  %v6206 = vld [vmem:[#allocation2 + $0x68] sm:$0xff]
  %v6207 = vld [vmem:[#allocation2 + $0x70] sm:$0xff]
  %v6208 = vld [vmem:[#allocation2 + $0x78] sm:$0xff]
  %v6209 = vpack.c.bf16 %v6203, %v6203
  %6210 = vmatprep.subr.bf16.mxu0 %v5683
  %6211 = vmatpush1.bf16.msra.mxu0 %v5682
  %6212 = vmatprep.subr.bf16.mxu0 %v5687
  %6213 = vmatpush1.bf16.msra.mxu0 %v5686
  %6214 = vmatprep.subr.bf16.mxu0 %v5691
  %6215 = vmatpush1.bf16.msra.mxu0 %v5690
  %6216 = vmatprep.subr.bf16.mxu0 %v5695
  %6217 = vmatpush1.bf16.msra.mxu0 %v5694
  %6218 = vmatprep.subr.bf16.mxu0 %v5699
  %6219 = vmatpush1.bf16.msra.mxu0 %v5698
  %6220 = vmatprep.subr.bf16.mxu0 %v5703
  %6221 = vmatpush1.bf16.msra.mxu0 %v5702
  %6222 = vmatprep.subr.bf16.mxu0 %v5707
  %6223 = vmatpush1.bf16.msra.mxu0 %v5706
  %6224 = vmatprep.subr.bf16.mxu0 %v5711
  %6225 = vmatpush1.bf16.msra.mxu0 %v5710
  %6226 = vmatprep.subr.bf16.mxu0 0
  %6227 = vmatpush1.bf16.msra.mxu0 0
  %6228 = vmatprep.subr.bf16.mxu0 0
  %6229 = vmatpush1.bf16.msra.mxu0 0
  %6230 = vmatprep.subr.bf16.mxu0 0
  %6231 = vmatpush1.bf16.msra.mxu0 0
  %6232 = vmatprep.subr.bf16.mxu0 0
  %6233 = vmatpush1.bf16.msra.mxu0 0
  %6234 = vmatprep.subr.bf16.mxu0 0
  %6235 = vmatpush1.bf16.msra.mxu0 0
  %6236 = vmatprep.subr.bf16.mxu0 0
  %6237 = vmatpush1.bf16.msra.mxu0 0
  %6238 = vmatprep.subr.bf16.mxu0 0
  %6239 = vmatpush1.bf16.msra.mxu0 0
  %6240 = vmatprep.subr.bf16.mxu0 0
  %6241 = vmatpush1.bf16.msra.mxu0 0
  %6242 = vmatprep.mubr.bf16.mxu0 0
  %6243 = vmatmul.mubr.bf16.gmra.mrb[0].mxu0 %v6209
  %v6244 = vpop.f32.mrb[0].mxu0
  %v6245 = vadd.f32 0.0, %v6244
  %v6246 = vpop.f32.mrb[0].mxu0
  %v6247 = vadd.f32 0.0, %v6246
  %v6248 = vpop.f32.mrb[0].mxu0
  %v6249 = vpop.f32.mrb[0].mxu0
  %6250 = vdwg.mxu0
  %6251 = vmatprep.subr.bf16.mxu0 %v5685
  %6252 = vmatpush1.bf16.msra.mxu0 %v5684
  %6253 = vmatprep.subr.bf16.mxu0 %v5689
  %6254 = vmatpush1.bf16.msra.mxu0 %v5688
  %6255 = vmatprep.subr.bf16.mxu0 %v5693
  %6256 = vmatpush1.bf16.msra.mxu0 %v5692
  %6257 = vmatprep.subr.bf16.mxu0 %v5697
  %6258 = vmatpush1.bf16.msra.mxu0 %v5696
  %6259 = vmatprep.subr.bf16.mxu0 %v5701
  %6260 = vmatpush1.bf16.msra.mxu0 %v5700
  %6261 = vmatprep.subr.bf16.mxu0 %v5705
  %6262 = vmatpush1.bf16.msra.mxu0 %v5704
  %6263 = vmatprep.subr.bf16.mxu0 %v5709
  %6264 = vmatpush1.bf16.msra.mxu0 %v5708
  %6265 = vmatprep.subr.bf16.mxu0 %v5713
  %6266 = vmatpush1.bf16.msra.mxu0 %v5712
  %6267 = vmatprep.subr.bf16.mxu0 0
  %6268 = vmatpush1.bf16.msra.mxu0 0
  %6269 = vmatprep.subr.bf16.mxu0 0
  %6270 = vmatpush1.bf16.msra.mxu0 0
  %6271 = vmatprep.subr.bf16.mxu0 0
  %6272 = vmatpush1.bf16.msra.mxu0 0
  %6273 = vmatprep.subr.bf16.mxu0 0
  %6274 = vmatpush1.bf16.msra.mxu0 0
  %6275 = vmatprep.subr.bf16.mxu0 0
  %6276 = vmatpush1.bf16.msra.mxu0 0
  %6277 = vmatprep.subr.bf16.mxu0 0
  %6278 = vmatpush1.bf16.msra.mxu0 0
  %6279 = vmatprep.subr.bf16.mxu0 0
  %6280 = vmatpush1.bf16.msra.mxu0 0
  %6281 = vmatprep.subr.bf16.mxu0 0
  %6282 = vmatpush1.bf16.msra.mxu0 0
  %6283 = vmatprep.mubr.bf16.mxu0 0
  %6284 = vmatmul.mubr.bf16.gmra.mrb[0].mxu0 %v6209
  %v6285 = vpop.f32.mrb[0].mxu0
  %v6286 = vadd.f32 0.0, %v6285
  %v6287 = vpop.f32.mrb[0].mxu0
  %v6288 = vadd.f32 0.0, %v6287
  %v6289 = vpop.f32.mrb[0].mxu0
  %v6290 = vpop.f32.mrb[0].mxu0
  %6291 = vdwg.mxu0
  %v6292 = vadd.f32 %v6205, %v6245
  %v6293 = vadd.f32 %v6206, %v6247
  %v6294 = vadd.f32 %v6207, %v6286
  %v6295 = vadd.f32 %v6208, %v6288
  %v6296 = vxor.u32 %v6292, 2147483648
  %v6297 = vmul.f32 %v6296, 1.442695
  %v6298 = vpow.pop %v6297
  %v6299 = vadd.f32 %v6298, 1.0
  %v6300 = vrcp.pop %v6299
  %v6301 = vmul.f32 1.0, %v6300
  %v6302 = vxor.u32 %v6293, 2147483648
  %v6303 = vmul.f32 %v6302, 1.442695
  %v6304 = vpow.pop %v6303
  %v6305 = vadd.f32 %v6304, 1.0
  %v6306 = vrcp.pop %v6305
  %v6307 = vmul.f32 1.0, %v6306
  %v6308 = vtanh.pop %v6294
  %v6309 = vxor.u32 %v6295, 2147483648
  %v6310 = vmul.f32 %v6309, 1.442695
  %v6311 = vpow.pop %v6310
  %v6312 = vadd.f32 %v6311, 1.0
  %v6313 = vrcp.pop %v6312
  %v6314 = vmul.f32 1.0, %v6313
  %v6315 = vmul.f32 %v6307, %v6201
  %v6316 = vmul.f32 %v6301, %v6308
  %v6317 = vadd.f32 %v6315, %v6316
  %v6318 = vtanh.pop %v6317
  %v6319 = vmul.f32 %v6314, %v6318
  %6320 = vst [vmem:[#allocation4 + $0x38] sm:$0xff] %v6319
  %v6321 = vld [vmem:[#allocation2 + $0x40] sm:$0xff]
  %v6322 = vld [vmem:[#allocation2 + $0x48] sm:$0xff]
  %v6323 = vld [vmem:[#allocation2 + $0x50] sm:$0xff]
  %v6324 = vld [vmem:[#allocation2 + $0x58] sm:$0xff]
  %v6325 = vpack.c.bf16 %v6319, %v6319
  %6326 = vmatprep.subr.bf16.mxu0 %v5683
  %6327 = vmatpush1.bf16.msra.mxu0 %v5682
  %6328 = vmatprep.subr.bf16.mxu0 %v5687
  %6329 = vmatpush1.bf16.msra.mxu0 %v5686
  %6330 = vmatprep.subr.bf16.mxu0 %v5691
  %6331 = vmatpush1.bf16.msra.mxu0 %v5690
  %6332 = vmatprep.subr.bf16.mxu0 %v5695
  %6333 = vmatpush1.bf16.msra.mxu0 %v5694
  %6334 = vmatprep.subr.bf16.mxu0 %v5699
  %6335 = vmatpush1.bf16.msra.mxu0 %v5698
  %6336 = vmatprep.subr.bf16.mxu0 %v5703
  %6337 = vmatpush1.bf16.msra.mxu0 %v5702
  %6338 = vmatprep.subr.bf16.mxu0 %v5707
  %6339 = vmatpush1.bf16.msra.mxu0 %v5706
  %6340 = vmatprep.subr.bf16.mxu0 %v5711
  %6341 = vmatpush1.bf16.msra.mxu0 %v5710
  %6342 = vmatprep.subr.bf16.mxu0 0
  %6343 = vmatpush1.bf16.msra.mxu0 0
  %6344 = vmatprep.subr.bf16.mxu0 0
  %6345 = vmatpush1.bf16.msra.mxu0 0
  %6346 = vmatprep.subr.bf16.mxu0 0
  %6347 = vmatpush1.bf16.msra.mxu0 0
  %6348 = vmatprep.subr.bf16.mxu0 0
  %6349 = vmatpush1.bf16.msra.mxu0 0
  %6350 = vmatprep.subr.bf16.mxu0 0
  %6351 = vmatpush1.bf16.msra.mxu0 0
  %6352 = vmatprep.subr.bf16.mxu0 0
  %6353 = vmatpush1.bf16.msra.mxu0 0
  %6354 = vmatprep.subr.bf16.mxu0 0
  %6355 = vmatpush1.bf16.msra.mxu0 0
  %6356 = vmatprep.subr.bf16.mxu0 0
  %6357 = vmatpush1.bf16.msra.mxu0 0
  %6358 = vmatprep.mubr.bf16.mxu0 0
  %6359 = vmatmul.mubr.bf16.gmra.mrb[0].mxu0 %v6325
  %v6360 = vpop.f32.mrb[0].mxu0
  %v6361 = vadd.f32 0.0, %v6360
  %v6362 = vpop.f32.mrb[0].mxu0
  %v6363 = vadd.f32 0.0, %v6362
  %v6364 = vpop.f32.mrb[0].mxu0
  %v6365 = vpop.f32.mrb[0].mxu0
  %6366 = vdwg.mxu0
  %6367 = vmatprep.subr.bf16.mxu0 %v5685
  %6368 = vmatpush1.bf16.msra.mxu0 %v5684
  %6369 = vmatprep.subr.bf16.mxu0 %v5689
  %6370 = vmatpush1.bf16.msra.mxu0 %v5688
  %6371 = vmatprep.subr.bf16.mxu0 %v5693
  %6372 = vmatpush1.bf16.msra.mxu0 %v5692
  %6373 = vmatprep.subr.bf16.mxu0 %v5697
  %6374 = vmatpush1.bf16.msra.mxu0 %v5696
  %6375 = vmatprep.subr.bf16.mxu0 %v5701
  %6376 = vmatpush1.bf16.msra.mxu0 %v5700
  %6377 = vmatprep.subr.bf16.mxu0 %v5705
  %6378 = vmatpush1.bf16.msra.mxu0 %v5704
  %6379 = vmatprep.subr.bf16.mxu0 %v5709
  %6380 = vmatpush1.bf16.msra.mxu0 %v5708
  %6381 = vmatprep.subr.bf16.mxu0 %v5713
  %6382 = vmatpush1.bf16.msra.mxu0 %v5712
  %6383 = vmatprep.subr.bf16.mxu0 0
  %6384 = vmatpush1.bf16.msra.mxu0 0
  %6385 = vmatprep.subr.bf16.mxu0 0
  %6386 = vmatpush1.bf16.msra.mxu0 0
  %6387 = vmatprep.subr.bf16.mxu0 0
  %6388 = vmatpush1.bf16.msra.mxu0 0
  %6389 = vmatprep.subr.bf16.mxu0 0
  %6390 = vmatpush1.bf16.msra.mxu0 0
  %6391 = vmatprep.subr.bf16.mxu0 0
  %6392 = vmatpush1.bf16.msra.mxu0 0
  %6393 = vmatprep.subr.bf16.mxu0 0
  %6394 = vmatpush1.bf16.msra.mxu0 0
  %6395 = vmatprep.subr.bf16.mxu0 0
  %6396 = vmatpush1.bf16.msra.mxu0 0
  %6397 = vmatprep.subr.bf16.mxu0 0
  %6398 = vmatpush1.bf16.msra.mxu0 0
  %6399 = vmatprep.mubr.bf16.mxu0 0
  %6400 = vmatmul.mubr.bf16.gmra.mrb[0].mxu0 %v6325
  %v6401 = vpop.f32.mrb[0].mxu0
  %v6402 = vadd.f32 0.0, %v6401
  %v6403 = vpop.f32.mrb[0].mxu0
  %v6404 = vadd.f32 0.0, %v6403
  %v6405 = vpop.f32.mrb[0].mxu0
  %v6406 = vpop.f32.mrb[0].mxu0
  %6407 = vdwg.mxu0
  %v6408 = vadd.f32 %v6321, %v6361
  %v6409 = vadd.f32 %v6322, %v6363
  %v6410 = vadd.f32 %v6323, %v6402
  %v6411 = vadd.f32 %v6324, %v6404
  %v6412 = vxor.u32 %v6408, 2147483648
  %v6413 = vmul.f32 %v6412, 1.442695
  %v6414 = vpow.pop %v6413
  %v6415 = vadd.f32 %v6414, 1.0
  %v6416 = vrcp.pop %v6415
  %v6417 = vmul.f32 1.0, %v6416
  %v6418 = vxor.u32 %v6409, 2147483648
  %v6419 = vmul.f32 %v6418, 1.442695
  %v6420 = vpow.pop %v6419
  %v6421 = vadd.f32 %v6420, 1.0
  %v6422 = vrcp.pop %v6421
  %v6423 = vmul.f32 1.0, %v6422
  %v6424 = vtanh.pop %v6410
  %v6425 = vxor.u32 %v6411, 2147483648
  %v6426 = vmul.f32 %v6425, 1.442695
  %v6427 = vpow.pop %v6426
  %v6428 = vadd.f32 %v6427, 1.0
  %v6429 = vrcp.pop %v6428
  %v6430 = vmul.f32 1.0, %v6429
  %v6431 = vmul.f32 %v6423, %v6317
  %v6432 = vmul.f32 %v6417, %v6424
  %v6433 = vadd.f32 %v6431, %v6432
  %v6434 = vtanh.pop %v6433
  %v6435 = vmul.f32 %v6430, %v6434
  %6436 = vst [vmem:[#allocation4 + $0x28] sm:$0xff] %v6435
  %v6437 = vld [vmem:[#allocation2 + $0x20] sm:$0xff]
  %v6438 = vld [vmem:[#allocation2 + $0x28] sm:$0xff]
  %v6439 = vld [vmem:[#allocation2 + $0x30] sm:$0xff]
  %v6440 = vld [vmem:[#allocation2 + $0x38] sm:$0xff]
  %v6441 = vpack.c.bf16 %v6435, %v6435
  %6442 = vmatprep.subr.bf16.mxu0 %v5683
  %6443 = vmatpush1.bf16.msra.mxu0 %v5682
  %6444 = vmatprep.subr.bf16.mxu0 %v5687
  %6445 = vmatpush1.bf16.msra.mxu0 %v5686
  %6446 = vmatprep.subr.bf16.mxu0 %v5691
  %6447 = vmatpush1.bf16.msra.mxu0 %v5690
  %6448 = vmatprep.subr.bf16.mxu0 %v5695
  %6449 = vmatpush1.bf16.msra.mxu0 %v5694
  %6450 = vmatprep.subr.bf16.mxu0 %v5699
  %6451 = vmatpush1.bf16.msra.mxu0 %v5698
  %6452 = vmatprep.subr.bf16.mxu0 %v5703
  %6453 = vmatpush1.bf16.msra.mxu0 %v5702
  %6454 = vmatprep.subr.bf16.mxu0 %v5707
  %6455 = vmatpush1.bf16.msra.mxu0 %v5706
  %6456 = vmatprep.subr.bf16.mxu0 %v5711
  %6457 = vmatpush1.bf16.msra.mxu0 %v5710
  %6458 = vmatprep.subr.bf16.mxu0 0
  %6459 = vmatpush1.bf16.msra.mxu0 0
  %6460 = vmatprep.subr.bf16.mxu0 0
  %6461 = vmatpush1.bf16.msra.mxu0 0
  %6462 = vmatprep.subr.bf16.mxu0 0
  %6463 = vmatpush1.bf16.msra.mxu0 0
  %6464 = vmatprep.subr.bf16.mxu0 0
  %6465 = vmatpush1.bf16.msra.mxu0 0
  %6466 = vmatprep.subr.bf16.mxu0 0
  %6467 = vmatpush1.bf16.msra.mxu0 0
  %6468 = vmatprep.subr.bf16.mxu0 0
  %6469 = vmatpush1.bf16.msra.mxu0 0
  %6470 = vmatprep.subr.bf16.mxu0 0
  %6471 = vmatpush1.bf16.msra.mxu0 0
  %6472 = vmatprep.subr.bf16.mxu0 0
  %6473 = vmatpush1.bf16.msra.mxu0 0
  %6474 = vmatprep.mubr.bf16.mxu0 0
  %6475 = vmatmul.mubr.bf16.gmra.mrb[0].mxu0 %v6441
  %v6476 = vpop.f32.mrb[0].mxu0
  %v6477 = vadd.f32 0.0, %v6476
  %v6478 = vpop.f32.mrb[0].mxu0
  %v6479 = vadd.f32 0.0, %v6478
  %v6480 = vpop.f32.mrb[0].mxu0
  %v6481 = vpop.f32.mrb[0].mxu0
  %6482 = vdwg.mxu0
  %6483 = vmatprep.subr.bf16.mxu0 %v5685
  %6484 = vmatpush1.bf16.msra.mxu0 %v5684
  %6485 = vmatprep.subr.bf16.mxu0 %v5689
  %6486 = vmatpush1.bf16.msra.mxu0 %v5688
  %6487 = vmatprep.subr.bf16.mxu0 %v5693
  %6488 = vmatpush1.bf16.msra.mxu0 %v5692
  %6489 = vmatprep.subr.bf16.mxu0 %v5697
  %6490 = vmatpush1.bf16.msra.mxu0 %v5696
  %6491 = vmatprep.subr.bf16.mxu0 %v5701
  %6492 = vmatpush1.bf16.msra.mxu0 %v5700
  %6493 = vmatprep.subr.bf16.mxu0 %v5705
  %6494 = vmatpush1.bf16.msra.mxu0 %v5704
  %6495 = vmatprep.subr.bf16.mxu0 %v5709
  %6496 = vmatpush1.bf16.msra.mxu0 %v5708
  %6497 = vmatprep.subr.bf16.mxu0 %v5713
  %6498 = vmatpush1.bf16.msra.mxu0 %v5712
  %6499 = vmatprep.subr.bf16.mxu0 0
  %6500 = vmatpush1.bf16.msra.mxu0 0
  %6501 = vmatprep.subr.bf16.mxu0 0
  %6502 = vmatpush1.bf16.msra.mxu0 0
  %6503 = vmatprep.subr.bf16.mxu0 0
  %6504 = vmatpush1.bf16.msra.mxu0 0
  %6505 = vmatprep.subr.bf16.mxu0 0
  %6506 = vmatpush1.bf16.msra.mxu0 0
  %6507 = vmatprep.subr.bf16.mxu0 0
  %6508 = vmatpush1.bf16.msra.mxu0 0
  %6509 = vmatprep.subr.bf16.mxu0 0
  %6510 = vmatpush1.bf16.msra.mxu0 0
  %6511 = vmatprep.subr.bf16.mxu0 0
  %6512 = vmatpush1.bf16.msra.mxu0 0
  %6513 = vmatprep.subr.bf16.mxu0 0
  %6514 = vmatpush1.bf16.msra.mxu0 0
  %6515 = vmatprep.mubr.bf16.mxu0 0
  %6516 = vmatmul.mubr.bf16.gmra.mrb[0].mxu0 %v6441
  %v6517 = vpop.f32.mrb[0].mxu0
  %v6518 = vadd.f32 0.0, %v6517
  %v6519 = vpop.f32.mrb[0].mxu0
  %v6520 = vadd.f32 0.0, %v6519
  %v6521 = vpop.f32.mrb[0].mxu0
  %v6522 = vpop.f32.mrb[0].mxu0
  %6523 = vdwg.mxu0
  %v6524 = vadd.f32 %v6437, %v6477
  %v6525 = vadd.f32 %v6438, %v6479
  %v6526 = vadd.f32 %v6439, %v6518
  %v6527 = vadd.f32 %v6440, %v6520
  %v6528 = vxor.u32 %v6524, 2147483648
  %v6529 = vmul.f32 %v6528, 1.442695
  %v6530 = vpow.pop %v6529
  %v6531 = vadd.f32 %v6530, 1.0
  %v6532 = vrcp.pop %v6531
  %v6533 = vmul.f32 1.0, %v6532
  %v6534 = vxor.u32 %v6525, 2147483648
  %v6535 = vmul.f32 %v6534, 1.442695
  %v6536 = vpow.pop %v6535
  %v6537 = vadd.f32 %v6536, 1.0
  %v6538 = vrcp.pop %v6537
  %v6539 = vmul.f32 1.0, %v6538
  %v6540 = vtanh.pop %v6526
  %v6541 = vxor.u32 %v6527, 2147483648
  %v6542 = vmul.f32 %v6541, 1.442695
  %v6543 = vpow.pop %v6542
  %v6544 = vadd.f32 %v6543, 1.0
  %v6545 = vrcp.pop %v6544
  %v6546 = vmul.f32 1.0, %v6545
  %v6547 = vmul.f32 %v6539, %v6433
  %v6548 = vmul.f32 %v6533, %v6540
  %v6549 = vadd.f32 %v6547, %v6548
  %v6550 = vtanh.pop %v6549
  %v6551 = vmul.f32 %v6546, %v6550
  %6552 = vst [vmem:[#allocation4 + $0x18] sm:$0xff] %v6551
  %v6553 = vld [vmem:[#allocation2] sm:$0xff]
  %v6554 = vld [vmem:[#allocation2 + $0x8] sm:$0xff]
  %v6555 = vld [vmem:[#allocation2 + $0x10] sm:$0xff]
  %v6556 = vld [vmem:[#allocation2 + $0x18] sm:$0xff]
  %v6557 = vpack.c.bf16 %v6551, %v6551
  %6558 = vmatprep.subr.bf16.mxu0 %v5683
  %6559 = vmatpush1.bf16.msra.mxu0 %v5682
  %6560 = vmatprep.subr.bf16.mxu0 %v5687
  %6561 = vmatpush1.bf16.msra.mxu0 %v5686
  %6562 = vmatprep.subr.bf16.mxu0 %v5691
  %6563 = vmatpush1.bf16.msra.mxu0 %v5690
  %6564 = vmatprep.subr.bf16.mxu0 %v5695
  %6565 = vmatpush1.bf16.msra.mxu0 %v5694
  %6566 = vmatprep.subr.bf16.mxu0 %v5699
  %6567 = vmatpush1.bf16.msra.mxu0 %v5698
  %6568 = vmatprep.subr.bf16.mxu0 %v5703
  %6569 = vmatpush1.bf16.msra.mxu0 %v5702
  %6570 = vmatprep.subr.bf16.mxu0 %v5707
  %6571 = vmatpush1.bf16.msra.mxu0 %v5706
  %6572 = vmatprep.subr.bf16.mxu0 %v5711
  %6573 = vmatpush1.bf16.msra.mxu0 %v5710
  %6574 = vmatprep.subr.bf16.mxu0 0
  %6575 = vmatpush1.bf16.msra.mxu0 0
  %6576 = vmatprep.subr.bf16.mxu0 0
  %6577 = vmatpush1.bf16.msra.mxu0 0
  %6578 = vmatprep.subr.bf16.mxu0 0
  %6579 = vmatpush1.bf16.msra.mxu0 0
  %6580 = vmatprep.subr.bf16.mxu0 0
  %6581 = vmatpush1.bf16.msra.mxu0 0
  %6582 = vmatprep.subr.bf16.mxu0 0
  %6583 = vmatpush1.bf16.msra.mxu0 0
  %6584 = vmatprep.subr.bf16.mxu0 0
  %6585 = vmatpush1.bf16.msra.mxu0 0
  %6586 = vmatprep.subr.bf16.mxu0 0
  %6587 = vmatpush1.bf16.msra.mxu0 0
  %6588 = vmatprep.subr.bf16.mxu0 0
  %6589 = vmatpush1.bf16.msra.mxu0 0
  %6590 = vmatprep.mubr.bf16.mxu0 0
  %6591 = vmatmul.mubr.bf16.gmra.mrb[0].mxu0 %v6557
  %v6592 = vpop.f32.mrb[0].mxu0
  %v6593 = vadd.f32 0.0, %v6592
  %v6594 = vpop.f32.mrb[0].mxu0
  %v6595 = vadd.f32 0.0, %v6594
  %v6596 = vpop.f32.mrb[0].mxu0
  %v6597 = vpop.f32.mrb[0].mxu0
  %6598 = vdwg.mxu0
  %6599 = vmatprep.subr.bf16.mxu0 %v5685
  %6600 = vmatpush1.bf16.msra.mxu0 %v5684
  %6601 = vmatprep.subr.bf16.mxu0 %v5689
  %6602 = vmatpush1.bf16.msra.mxu0 %v5688
  %6603 = vmatprep.subr.bf16.mxu0 %v5693
  %6604 = vmatpush1.bf16.msra.mxu0 %v5692
  %6605 = vmatprep.subr.bf16.mxu0 %v5697
  %6606 = vmatpush1.bf16.msra.mxu0 %v5696
  %6607 = vmatprep.subr.bf16.mxu0 %v5701
  %6608 = vmatpush1.bf16.msra.mxu0 %v5700
  %6609 = vmatprep.subr.bf16.mxu0 %v5705
  %6610 = vmatpush1.bf16.msra.mxu0 %v5704
  %6611 = vmatprep.subr.bf16.mxu0 %v5709
  %6612 = vmatpush1.bf16.msra.mxu0 %v5708
  %6613 = vmatprep.subr.bf16.mxu0 %v5713
  %6614 = vmatpush1.bf16.msra.mxu0 %v5712
  %6615 = vmatprep.subr.bf16.mxu0 0
  %6616 = vmatpush1.bf16.msra.mxu0 0
  %6617 = vmatprep.subr.bf16.mxu0 0
  %6618 = vmatpush1.bf16.msra.mxu0 0
  %6619 = vmatprep.subr.bf16.mxu0 0
  %6620 = vmatpush1.bf16.msra.mxu0 0
  %6621 = vmatprep.subr.bf16.mxu0 0
  %6622 = vmatpush1.bf16.msra.mxu0 0
  %6623 = vmatprep.subr.bf16.mxu0 0
  %6624 = vmatpush1.bf16.msra.mxu0 0
  %6625 = vmatprep.subr.bf16.mxu0 0
  %6626 = vmatpush1.bf16.msra.mxu0 0
  %6627 = vmatprep.subr.bf16.mxu0 0
  %6628 = vmatpush1.bf16.msra.mxu0 0
  %6629 = vmatprep.subr.bf16.mxu0 0
  %6630 = vmatpush1.bf16.msra.mxu0 0
  %6631 = vmatprep.mubr.bf16.mxu0 0
  %6632 = vmatmul.mubr.bf16.gmra.mrb[0].mxu0 %v6557
  %v6633 = vpop.f32.mrb[0].mxu0
  %v6634 = vadd.f32 0.0, %v6633
  %v6635 = vpop.f32.mrb[0].mxu0
  %v6636 = vadd.f32 0.0, %v6635
  %v6637 = vpop.f32.mrb[0].mxu0
  %v6638 = vpop.f32.mrb[0].mxu0
  %6639 = vdwg.mxu0
  %v6640 = vadd.f32 %v6553, %v6593
  %v6641 = vadd.f32 %v6554, %v6595
  %v6642 = vadd.f32 %v6555, %v6634
  %v6643 = vadd.f32 %v6556, %v6636
  %v6644 = vxor.u32 %v6640, 2147483648
  %v6645 = vmul.f32 %v6644, 1.442695
  %v6646 = vpow.pop %v6645
  %v6647 = vadd.f32 %v6646, 1.0
  %v6648 = vrcp.pop %v6647
  %v6649 = vmul.f32 1.0, %v6648
  %v6650 = vxor.u32 %v6641, 2147483648
  %v6651 = vmul.f32 %v6650, 1.442695
  %v6652 = vpow.pop %v6651
  %v6653 = vadd.f32 %v6652, 1.0
  %v6654 = vrcp.pop %v6653
  %v6655 = vmul.f32 1.0, %v6654
  %v6656 = vtanh.pop %v6642
  %v6657 = vxor.u32 %v6643, 2147483648
  %v6658 = vmul.f32 %v6657, 1.442695
  %v6659 = vpow.pop %v6658
  %v6660 = vadd.f32 %v6659, 1.0
  %v6661 = vrcp.pop %v6660
  %v6662 = vmul.f32 1.0, %v6661
  %v6663 = vmul.f32 %v6655, %v6549
  %v6664 = vmul.f32 %v6649, %v6656
  %v6665 = vadd.f32 %v6663, %v6664
  %v6666 = vtanh.pop %v6665
  %v6667 = vmul.f32 %v6662, %v6666
  %6668 = vst [vmem:[#allocation4 + $0x8] sm:$0xff] %v6667
  %v6669 = vld [vmem:[#allocation4] sm:$0xff]
  %v6670 = vld [vmem:[#allocation4 + $0x8] sm:$0xff]
  %v6671 = vld [vmem:[#allocation4 + $0x10] sm:$0xff]
  %v6672 = vld [vmem:[#allocation4 + $0x18] sm:$0xff]
  %v6673 = vld [vmem:[#allocation4 + $0x20] sm:$0xff]
  %v6674 = vld [vmem:[#allocation4 + $0x28] sm:$0xff]
  %v6675 = vld [vmem:[#allocation4 + $0x30] sm:$0xff]
  %v6676 = vld [vmem:[#allocation4 + $0x38] sm:$0xff]
  %v6677 = vld [vmem:[#allocation4 + $0x40] sm:$0xff]
  %v6678 = vld [vmem:[#allocation4 + $0x48] sm:$0xff]
  %v6679 = vld [vmem:[#allocation4 + $0x50] sm:$0xff]
  %v6680 = vld [vmem:[#allocation4 + $0x58] sm:$0xff]
  %v6681 = vld [vmem:[#allocation4 + $0x60] sm:$0xff]
  %v6682 = vld [vmem:[#allocation4 + $0x68] sm:$0xff]
  %v6683 = vld [vmem:[#allocation4 + $0x70] sm:$0xff]
  %v6684 = vld [vmem:[#allocation4 + $0x78] sm:$0xff]
  %v6685 = vpack.c.bf16 %v6671, %v6669
  %v6686 = vpack.c.bf16 %v6672, %v6670
  %v6687 = vpack.c.bf16 %v6675, %v6673
  %v6688 = vpack.c.bf16 %v6676, %v6674
  %v6689 = vpack.c.bf16 %v6679, %v6677
  %v6690 = vpack.c.bf16 %v6680, %v6678
  %v6691 = vpack.c.bf16 %v6683, %v6681
  %v6692 = vpack.c.bf16 %v6684, %v6682
  %v6693 = vld [vmem:[%s8] sm:$0xf]
  %v6694 = vld [vmem:[%s8 + $0x4] sm:$0xf]
  %v6695 = vld [vmem:[%s8 + $0x8] sm:$0xf]
  %v6696 = vld [vmem:[%s8 + $0xc] sm:$0xf]
  %v6697 = vld [vmem:[%s8 + $0x10] sm:$0xf]
  %v6698 = vld [vmem:[%s8 + $0x14] sm:$0xf]
  %v6699 = vld [vmem:[%s8 + $0x18] sm:$0xf]
  %v6700 = vld [vmem:[%s8 + $0x1c] sm:$0xf]
  %v6701 = vld [vmem:[%s8 + $0x20] sm:$0xf]
  %v6702 = vld [vmem:[%s8 + $0x24] sm:$0xf]
  %v6703 = vld [vmem:[%s8 + $0x28] sm:$0xf]
  %v6704 = vld [vmem:[%s8 + $0x2c] sm:$0xf]
  %v6705 = vld [vmem:[%s8 + $0x30] sm:$0xf]
  %v6706 = vld [vmem:[%s8 + $0x34] sm:$0xf]
  %v6707 = vld [vmem:[%s8 + $0x38] sm:$0xf]
  %v6708 = vld [vmem:[%s8 + $0x3c] sm:$0xf]
  %v6709 = vld [vmem:[%s8 + $0x40] sm:$0xf]
  %v6710 = vld [vmem:[%s8 + $0x44] sm:$0xf]
  %v6711 = vld [vmem:[%s8 + $0x48] sm:$0xf]
  %v6712 = vld [vmem:[%s8 + $0x4c] sm:$0xf]
  %v6713 = vld [vmem:[%s8 + $0x50] sm:$0xf]
  %v6714 = vld [vmem:[%s8 + $0x54] sm:$0xf]
  %v6715 = vld [vmem:[%s8 + $0x58] sm:$0xf]
  %v6716 = vld [vmem:[%s8 + $0x5c] sm:$0xf]
  %v6717 = vld [vmem:[%s8 + $0x60] sm:$0xf]
  %v6718 = vld [vmem:[%s8 + $0x64] sm:$0xf]
  %v6719 = vld [vmem:[%s8 + $0x68] sm:$0xf]
  %v6720 = vld [vmem:[%s8 + $0x6c] sm:$0xf]
  %v6721 = vld [vmem:[%s8 + $0x70] sm:$0xf]
  %v6722 = vld [vmem:[%s8 + $0x74] sm:$0xf]
  %v6723 = vld [vmem:[%s8 + $0x78] sm:$0xf]
  %v6724 = vld [vmem:[%s8 + $0x7c] sm:$0xf]
  %v6725 = vld [vmem:[%s9] sm:$0x1]
  %v6727 = vlaneseq
  %v6728 = vshrl.u32 %v6727, 7
  %v6729 = vsub.s32 0, %v6728
  %v6730 = vrot.slane %v6725, %v6729
  %v6764 = vunpack.c.l.b16 %v6693
  %v6765 = vunpack.c.l.b16 %v6694
  %v6766 = vunpack.c.l.b16 %v6695
  %v6767 = vunpack.c.l.b16 %v6696
  %v6768 = vunpack.c.l.b16 %v6697
  %v6769 = vunpack.c.l.b16 %v6698
  %v6770 = vunpack.c.l.b16 %v6699
  %v6771 = vunpack.c.l.b16 %v6700
  %v6772 = vunpack.c.l.b16 %v6701
  %v6773 = vunpack.c.l.b16 %v6702
  %v6774 = vunpack.c.l.b16 %v6703
  %v6775 = vunpack.c.l.b16 %v6704
  %v6776 = vunpack.c.l.b16 %v6705
  %v6777 = vunpack.c.l.b16 %v6706
  %v6778 = vunpack.c.l.b16 %v6707
  %v6779 = vunpack.c.l.b16 %v6708
  %v6780 = vunpack.c.l.b16 %v6709
  %v6781 = vunpack.c.l.b16 %v6710
  %v6782 = vunpack.c.l.b16 %v6711
  %v6783 = vunpack.c.l.b16 %v6712
  %v6784 = vunpack.c.l.b16 %v6713
  %v6785 = vunpack.c.l.b16 %v6714
  %v6786 = vunpack.c.l.b16 %v6715
  %v6787 = vunpack.c.l.b16 %v6716
  %v6788 = vunpack.c.l.b16 %v6717
  %v6789 = vunpack.c.l.b16 %v6718
  %v6790 = vunpack.c.l.b16 %v6719
  %v6791 = vunpack.c.l.b16 %v6720
  %v6792 = vunpack.c.l.b16 %v6721
  %v6793 = vunpack.c.l.b16 %v6722
  %v6794 = vunpack.c.l.b16 %v6723
  %v6795 = vunpack.c.l.b16 %v6724
  %v6796 = vpack.c.b16 %v6765, %v6764
  %v6797 = vpack.c.b16 %v6767, %v6766
  %v6798 = vpack.c.b16 %v6769, %v6768
  %v6799 = vpack.c.b16 %v6771, %v6770
  %v6800 = vpack.c.b16 %v6773, %v6772
  %v6801 = vpack.c.b16 %v6775, %v6774
  %v6802 = vpack.c.b16 %v6777, %v6776
  %v6803 = vpack.c.b16 %v6779, %v6778
  %v6804 = vpack.c.b16 %v6781, %v6780
  %v6805 = vpack.c.b16 %v6783, %v6782
  %v6806 = vpack.c.b16 %v6785, %v6784
  %v6807 = vpack.c.b16 %v6787, %v6786
  %v6808 = vpack.c.b16 %v6789, %v6788
  %v6809 = vpack.c.b16 %v6791, %v6790
  %v6810 = vpack.c.b16 %v6793, %v6792
  %v6811 = vpack.c.b16 %v6795, %v6794
  %6828 = vmatprep.subr.bf16.mxu0 0
  %6829 = vmatpush1.bf16.msra.mxu0 %v6796
  %6830 = vmatprep.subr.bf16.mxu0 0
  %6831 = vmatpush1.bf16.msra.mxu0 %v6797
  %6832 = vmatprep.subr.bf16.mxu0 0
  %6833 = vmatpush1.bf16.msra.mxu0 %v6798
  %6834 = vmatprep.subr.bf16.mxu0 0
  %6835 = vmatpush1.bf16.msra.mxu0 %v6799
  %6836 = vmatprep.subr.bf16.mxu0 0
  %6837 = vmatpush1.bf16.msra.mxu0 %v6800
  %6838 = vmatprep.subr.bf16.mxu0 0
  %6839 = vmatpush1.bf16.msra.mxu0 %v6801
  %6840 = vmatprep.subr.bf16.mxu0 0
  %6841 = vmatpush1.bf16.msra.mxu0 %v6802
  %6842 = vmatprep.subr.bf16.mxu0 0
  %6843 = vmatpush1.bf16.msra.mxu0 %v6803
  %6844 = vmatprep.subr.bf16.mxu0 0
  %6845 = vmatpush1.bf16.msra.mxu0 %v6804
  %6846 = vmatprep.subr.bf16.mxu0 0
  %6847 = vmatpush1.bf16.msra.mxu0 %v6805
  %6848 = vmatprep.subr.bf16.mxu0 0
  %6849 = vmatpush1.bf16.msra.mxu0 %v6806
  %6850 = vmatprep.subr.bf16.mxu0 0
  %6851 = vmatpush1.bf16.msra.mxu0 %v6807
  %6852 = vmatprep.subr.bf16.mxu0 0
  %6853 = vmatpush1.bf16.msra.mxu0 %v6808
  %6854 = vmatprep.subr.bf16.mxu0 0
  %6855 = vmatpush1.bf16.msra.mxu0 %v6809
  %6856 = vmatprep.subr.bf16.mxu0 0
  %6857 = vmatpush1.bf16.msra.mxu0 %v6810
  %6858 = vmatprep.subr.bf16.mxu0 0
  %6859 = vmatpush1.bf16.msra.mxu0 %v6811
  %6860 = vmatprep.mubr.bf16.mxu0 %v6686
  %6861 = vmatmul.mubr.bf16.gmra.mrb[0].mxu0 %v6685
  %v6862 = vpop.f32.mrb[0].mxu0
  %v6863 = vadd.f32 %v6730, %v6862
  %v6864 = vpop.f32.mrb[0].mxu0
  %v6865 = vpop.f32.mrb[0].mxu0
  %v6866 = vadd.f32 %v6730, %v6865
  %v6867 = vpop.f32.mrb[0].mxu0
  %6868 = vmatprep.mubr.bf16.mxu0 %v6688
  %6869 = vmatmul.mubr.bf16.gmra.mrb[0].mxu0 %v6687
  %v6870 = vpop.f32.mrb[0].mxu0
  %v6871 = vadd.f32 %v6730, %v6870
  %v6872 = vpop.f32.mrb[0].mxu0
  %v6873 = vpop.f32.mrb[0].mxu0
  %v6874 = vadd.f32 %v6730, %v6873
  %v6875 = vpop.f32.mrb[0].mxu0
  %6876 = vmatprep.mubr.bf16.mxu0 %v6690
  %6877 = vmatmul.mubr.bf16.gmra.mrb[0].mxu0 %v6689
  %v6878 = vpop.f32.mrb[0].mxu0
  %v6879 = vadd.f32 %v6730, %v6878
  %v6880 = vpop.f32.mrb[0].mxu0
  %v6881 = vpop.f32.mrb[0].mxu0
  %v6882 = vadd.f32 %v6730, %v6881
  %v6883 = vpop.f32.mrb[0].mxu0
  %6884 = vmatprep.mubr.bf16.mxu0 %v6692
  %6885 = vmatmul.mubr.bf16.gmra.mrb[0].mxu0 %v6691
  %v6886 = vpop.f32.mrb[0].mxu0
  %v6887 = vadd.f32 %v6730, %v6886
  %v6888 = vpop.f32.mrb[0].mxu0
  %v6889 = vpop.f32.mrb[0].mxu0
  %v6890 = vadd.f32 %v6730, %v6889
  %v6891 = vpop.f32.mrb[0].mxu0
  %6892 = vdwg.mxu0
  %6893 = vst [vmem:[%s10] sm:$0xff] %v6863
  %6894 = vst [vmem:[%s10 + $0x8] sm:$0xff] %v6866
  %6895 = vst [vmem:[%s10 + $0x10] sm:$0xff] %v6871
  %6896 = vst [vmem:[%s10 + $0x18] sm:$0xff] %v6874
  %6897 = vst [vmem:[%s10 + $0x20] sm:$0xff] %v6879
  %6898 = vst [vmem:[%s10 + $0x28] sm:$0xff] %v6882
  %6899 = vst [vmem:[%s10 + $0x30] sm:$0xff] %v6887
  %6900 = vst [vmem:[%s10 + $0x38] sm:$0xff] %v6890
  // Predicated region
  $region42: #{lstm_model_forward.1} parent=0 // pred_check
    _
  $region43: #{lstm_model_forward.1} parent=0 // pred_check_branch
    %6902 = sbr.rel (0) target = $region45
  $region44: #{lstm_model_forward.1} parent=0 // pred_region
    _
  $region45: #{lstm_model_forward.1} parent=0 // pred_fallthru
    _
  // Predicated region
  $region46: #{lstm_model_forward.1} parent=0 // pred_check
    _
  $region47: #{lstm_model_forward.1} parent=0 // pred_check_branch
    %6904 = sbr.rel (0) target = $region49
  $region48: #{lstm_model_forward.1} parent=0 // pred_region
    _
  $region49: #{lstm_model_forward.1} parent=0 // pred_fallthru
    _

</llo_original>
